<compile_context>
chip_gen: v7x
topology: tpu7x:2x2x1
jax: 0.10.0
libtpu: 0.0.40
codegen_flags: <defaults>
</compile_context>

<pallas_src>
import functools

import jax
import jax.numpy as jnp
from jax.experimental import pallas as pl
from jax.experimental.pallas import tpu as pltpu

# Autoencoder layer sizes (encoder then decoder), matching the PyTorch module.
ENC_DIMS = [28 * 28, 392, 196, 98, 49, 2]
DEC_DIMS = [2, 49, 98, 196, 392, 28 * 28]


def _autoencoder_kernel(x_ref, *refs):
    """Single batch-tile kernel: runs the (fused) 9-layer MLP on one tile.

    refs = (w0, b0, w1, b1, ..., w8, b8, out_ref)

    After fusing encoder-last (49->2) and decoder-first (2->49) — exact, since
    there is no nonlinearity between them — the network is:
      L0..L7: Linear + ReLU   (784->392->196->98->49->49->98->196->392)
      L8    : Linear + Tanh   (392->784)
    Weights are bf16 (MXU fast path); accumulation and activations stay f32.
    """
    out_ref = refs[-1]
    param_refs = refs[:-1]
    n_layers = len(param_refs) // 2  # 9

    h = x_ref[...]  # bf16 input tile (block_b, 784)
    for li in range(n_layers):
        w = param_refs[2 * li][...]        # bf16 (in, out)
        b = param_refs[2 * li + 1][...]    # f32  (1, out) -> broadcasts over batch
        z = jnp.dot(h.astype(jnp.bfloat16), w,
                    preferred_element_type=jnp.float32) + b
        if li == n_layers - 1:
            h = jnp.tanh(z)                # f32 tanh on the EUP
        else:
            h = jnp.maximum(z, 0.0)        # f32 ReLU on the VPU (v5e has no bf16 VPU)
    out_ref[...] = h.astype(out_ref.dtype)


def init_params(key):
    """Deterministic parameter init (uniform, roughly PyTorch default scale).

    Weights are stored as (in_features, out_features) so the kernel does x @ W.
    """
    dims = list(zip(ENC_DIMS[:-1], ENC_DIMS[1:])) + list(zip(DEC_DIMS[:-1], DEC_DIMS[1:]))
    params = []
    for fan_in, fan_out in dims:
        key, kw, kb = jax.random.split(key, 3)
        bound = 1.0 / jnp.sqrt(jnp.float32(fan_in))
        w = jax.random.uniform(kw, (fan_in, fan_out), jnp.float32, -bound, bound)
        b = jax.random.uniform(kb, (1, fan_out), jnp.float32, -bound, bound)
        params.append((w, b))
    return params


def prepare_params(params):
    """Fuse the activation-free bottleneck pair and cast weights to bf16.

    Encoder-last (49->2, no activation) followed by decoder-first (2->49) is a
    single 49->49 affine map:  W45 = W4 @ W5,  b45 = b4 @ W5 + b5  (exact).
    Weights go to bf16 for the MXU; biases stay f32 (added to the f32 accumulator).
    """
    (w4, b4), (w5, b5) = params[4], params[5]
    w45 = w4 @ w5
    b45 = b4 @ w5 + b5
    fused = list(params[:4]) + [(w45, b45)] + list(params[6:])

    flat = []
    for w, b in fused:
        flat.append(w.astype(jnp.bfloat16))
        flat.append(b.astype(jnp.float32))
    return tuple(flat)


@functools.partial(jax.jit, static_argnames=("block_b",))
def autoencoder_forward(x, params_flat, block_b=256):
    """x: [B, 784] float32. Returns [B, 784] float32.

    block_b is the batch tile (the M dim of every matmul). 256 fully feeds the
    256-row MXU on v6e/v7x; total VMEM (bf16 weights double-buffered + in/out
    tiles + unrolled activations) is ~10 MB, well under the 48 MiB limit below
    and under v7x's 64 MiB per-TC VMEM.
    """
    B, D = x.shape
    assert D == 28 * 28

    # Halve input HBM->VMEM traffic; the MXU consumes bf16 anyway.
    x_in = x.astype(jnp.bfloat16)

    # Pad the batch up to a multiple of the tile so any B works; padded rows are
    # computed (cheap) and sliced off afterwards.
    pad = (-B) % block_b
    if pad:
        x_in = jnp.pad(x_in, ((0, pad), (0, 0)))
    b_padded = B + pad
    grid = (b_padded // block_b,)

    # Named function (not `lambda i: (0,) * p.ndim`): avoids the late-binding
    # closure over the loop variable flagged in review.
    def _const_block(i):
        return (0, 0)

    in_specs = [pl.BlockSpec((block_b, D), lambda i: (i, 0))]
    for p in params_flat:
        # Full-extent blocks: every weight/bias stays resident in VMEM each step.
        # (Single-buffering these constant blocks via pipeline_mode=pl.Buffered(1)
        # would reclaim ~1.7 MB more VMEM; skipped here for compile portability.)
        in_specs.append(pl.BlockSpec(p.shape, _const_block))

    out_spec = pl.BlockSpec((block_b, D), lambda i: (i, 0))

    # Advisory cost estimate so XLA schedules around the custom call sensibly.
    flops = 0
    weight_bytes = 0
    for li in range(len(params_flat) // 2):
        w = params_flat[2 * li]
        bias = params_flat[2 * li + 1]
        flops += 2 * b_padded * w.shape[0] * w.shape[1]
        weight_bytes += w.size * w.dtype.itemsize + bias.size * bias.dtype.itemsize
    cost = pl.CostEstimate(
        flops=flops,
        transcendentals=b_padded * D,  # final tanh
        bytes_accessed=b_padded * D * 2 + b_padded * D * 4 + weight_bytes,
    )

    out = pl.pallas_call(
        _autoencoder_kernel,
        out_shape=jax.ShapeDtypeStruct((b_padded, D), jnp.float32),
        grid_spec=pltpu.PrefetchScalarGridSpec(
            num_scalar_prefetch=0,
            grid=grid,
            in_specs=in_specs,
            out_specs=out_spec,
        ),
        compiler_params=pltpu.CompilerParams(
            dimension_semantics=("parallel",),   # batch tiles are independent
            vmem_limit_bytes=48 * 1024 * 1024,   # headroom for larger block_b
        ),
        cost_estimate=cost,
    )(x_in, *params_flat)

    if pad:
        out = out[:B]
    return out


def reference_forward(x, params_flat):
    """Pure-JAX reference with the same (fused, bf16-weight) numerics as the kernel."""
    h = x.astype(jnp.bfloat16)
    n_layers = len(params_flat) // 2
    for li in range(n_layers):
        w = params_flat[2 * li]
        b = params_flat[2 * li + 1]
        z = jnp.dot(h.astype(jnp.bfloat16), w, preferred_element_type=jnp.float32) + b
        if li == n_layers - 1:
            h = jnp.tanh(z)
        else:
            h = jnp.maximum(z, 0.0)
    return h


if __name__ == "__main__":
    key = jax.random.PRNGKey(0)
    kx, kp = jax.random.split(key)

    # 512 rows -> grid of 2 tiles of 256: pipelined, and both v7x TensorCores busy.
    B = 512
    x = jax.random.normal(kx, (B, 28 * 28), jnp.float32)

    params = init_params(kp)
    params_flat = prepare_params(params)

    out = autoencoder_forward(x, params_flat, block_b=256)
    out = jax.block_until_ready(out)

    ref = reference_forward(x, params_flat)
    assert out.shape == (B, 28 * 28)
    assert jnp.allclose(out, ref, atol=5e-3, rtol=5e-3), (
        f"mismatch vs reference, max abs err {jnp.max(jnp.abs(out - ref)):.3e}"
    )

    print("KERNEL_OK")
</pallas_src>

<mosaic_0001>
module attributes {stable_mosaic.version = 11 : i64} {
  func.func @_autoencoder_kernel(%arg0: i32, %arg1: memref<256x784xbf16, #tpu.memory_space<vmem>>, %arg2: memref<784x392xbf16, #tpu.memory_space<vmem>>, %arg3: memref<1x392xf32, #tpu.memory_space<vmem>>, %arg4: memref<392x196xbf16, #tpu.memory_space<vmem>>, %arg5: memref<1x196xf32, #tpu.memory_space<vmem>>, %arg6: memref<196x98xbf16, #tpu.memory_space<vmem>>, %arg7: memref<1x98xf32, #tpu.memory_space<vmem>>, %arg8: memref<98x49xbf16, #tpu.memory_space<vmem>>, %arg9: memref<1x49xf32, #tpu.memory_space<vmem>>, %arg10: memref<49x49xbf16, #tpu.memory_space<vmem>>, %arg11: memref<1x49xf32, #tpu.memory_space<vmem>>, %arg12: memref<49x98xbf16, #tpu.memory_space<vmem>>, %arg13: memref<1x98xf32, #tpu.memory_space<vmem>>, %arg14: memref<98x196xbf16, #tpu.memory_space<vmem>>, %arg15: memref<1x196xf32, #tpu.memory_space<vmem>>, %arg16: memref<196x392xbf16, #tpu.memory_space<vmem>>, %arg17: memref<1x392xf32, #tpu.memory_space<vmem>>, %arg18: memref<392x784xbf16, #tpu.memory_space<vmem>>, %arg19: memref<1x784xf32, #tpu.memory_space<vmem>>, %arg20: memref<256x784xf32, #tpu.memory_space<vmem>>) attributes {dimension_semantics = [#tpu.dimension_semantics<parallel>], iteration_bounds = array<i64: 2>, scalar_prefetch = 0 : i64, scratch_operands = 0 : i64, tpu.core_type = #tpu.core_type<tc>, window_params = [{transform_indices = @transform_0, window_bounds = array<i64: 256, 784>}, {pipeline_mode = #tpu.pipeline_mode<synchronous>, transform_indices = @transform_1, window_bounds = array<i64: 784, 392>}, {pipeline_mode = #tpu.pipeline_mode<synchronous>, transform_indices = @transform_2, window_bounds = array<i64: 1, 392>}, {pipeline_mode = #tpu.pipeline_mode<synchronous>, transform_indices = @transform_3, window_bounds = array<i64: 392, 196>}, {pipeline_mode = #tpu.pipeline_mode<synchronous>, transform_indices = @transform_4, window_bounds = array<i64: 1, 196>}, {pipeline_mode = #tpu.pipeline_mode<synchronous>, transform_indices = @transform_5, window_bounds = array<i64: 196, 98>}, {pipeline_mode = #tpu.pipeline_mode<synchronous>, transform_indices = @transform_6, window_bounds = array<i64: 1, 98>}, {pipeline_mode = #tpu.pipeline_mode<synchronous>, transform_indices = @transform_7, window_bounds = array<i64: 98, 49>}, {pipeline_mode = #tpu.pipeline_mode<synchronous>, transform_indices = @transform_8, window_bounds = array<i64: 1, 49>}, {pipeline_mode = #tpu.pipeline_mode<synchronous>, transform_indices = @transform_9, window_bounds = array<i64: 49, 49>}, {pipeline_mode = #tpu.pipeline_mode<synchronous>, transform_indices = @transform_10, window_bounds = array<i64: 1, 49>}, {pipeline_mode = #tpu.pipeline_mode<synchronous>, transform_indices = @transform_11, window_bounds = array<i64: 49, 98>}, {pipeline_mode = #tpu.pipeline_mode<synchronous>, transform_indices = @transform_12, window_bounds = array<i64: 1, 98>}, {pipeline_mode = #tpu.pipeline_mode<synchronous>, transform_indices = @transform_13, window_bounds = array<i64: 98, 196>}, {pipeline_mode = #tpu.pipeline_mode<synchronous>, transform_indices = @transform_14, window_bounds = array<i64: 1, 196>}, {pipeline_mode = #tpu.pipeline_mode<synchronous>, transform_indices = @transform_15, window_bounds = array<i64: 196, 392>}, {pipeline_mode = #tpu.pipeline_mode<synchronous>, transform_indices = @transform_16, window_bounds = array<i64: 1, 392>}, {pipeline_mode = #tpu.pipeline_mode<synchronous>, transform_indices = @transform_17, window_bounds = array<i64: 392, 784>}, {pipeline_mode = #tpu.pipeline_mode<synchronous>, transform_indices = @transform_18, window_bounds = array<i64: 1, 784>}, {transform_indices = @transform_19, window_bounds = array<i64: 256, 784>}]} {
    %c0 = arith.constant 0 : index
    %c0_0 = arith.constant 0 : index
    %0 = vector.load %arg1[%c0, %c0_0] : memref<256x784xbf16, #tpu.memory_space<vmem>>, vector<256x784xbf16>
    %c0_1 = arith.constant 0 : index
    %c0_2 = arith.constant 0 : index
    %1 = vector.load %arg2[%c0_1, %c0_2] : memref<784x392xbf16, #tpu.memory_space<vmem>>, vector<784x392xbf16>
    %c0_3 = arith.constant 0 : index
    %c0_4 = arith.constant 0 : index
    %2 = vector.load %arg3[%c0_3, %c0_4] : memref<1x392xf32, #tpu.memory_space<vmem>>, vector<1x392xf32>
    %cst = arith.constant dense<0.000000e+00> : vector<256x392xf32>
    %3 = tpu.matmul %0, %1, %cst {dimension_numbers = #tpu.dot_dimension_numbers<[1], [0], [0], [1], [0, 0, 1, 1], [], []>} : vector<256x784xbf16>, vector<784x392xbf16>, vector<256x392xf32> -> vector<256x392xf32>
    %4 = vector.broadcast %2 : vector<1x392xf32> to vector<256x392xf32>
    %5 = arith.addf %3, %4 : vector<256x392xf32>
    %cst_5 = arith.constant 0.000000e+00 : f32
    %6 = vector.broadcast %cst_5 : f32 to vector<256x392xf32>
    %7 = arith.maximumf %5, %6 : vector<256x392xf32>
    %c0_6 = arith.constant 0 : index
    %c0_7 = arith.constant 0 : index
    %8 = vector.load %arg4[%c0_6, %c0_7] : memref<392x196xbf16, #tpu.memory_space<vmem>>, vector<392x196xbf16>
    %c0_8 = arith.constant 0 : index
    %c0_9 = arith.constant 0 : index
    %9 = vector.load %arg5[%c0_8, %c0_9] : memref<1x196xf32, #tpu.memory_space<vmem>>, vector<1x196xf32>
    %10 = arith.truncf %7 : vector<256x392xf32> to vector<256x392xbf16>
    %cst_10 = arith.constant dense<0.000000e+00> : vector<256x196xf32>
    %11 = tpu.matmul %10, %8, %cst_10 {dimension_numbers = #tpu.dot_dimension_numbers<[1], [0], [0], [1], [0, 0, 1, 1], [], []>} : vector<256x392xbf16>, vector<392x196xbf16>, vector<256x196xf32> -> vector<256x196xf32>
    %12 = vector.broadcast %9 : vector<1x196xf32> to vector<256x196xf32>
    %13 = arith.addf %11, %12 : vector<256x196xf32>
    %cst_11 = arith.constant 0.000000e+00 : f32
    %14 = vector.broadcast %cst_11 : f32 to vector<256x196xf32>
    %15 = arith.maximumf %13, %14 : vector<256x196xf32>
    %c0_12 = arith.constant 0 : index
    %c0_13 = arith.constant 0 : index
    %16 = vector.load %arg6[%c0_12, %c0_13] : memref<196x98xbf16, #tpu.memory_space<vmem>>, vector<196x98xbf16>
    %c0_14 = arith.constant 0 : index
    %c0_15 = arith.constant 0 : index
    %17 = vector.load %arg7[%c0_14, %c0_15] : memref<1x98xf32, #tpu.memory_space<vmem>>, vector<1x98xf32>
    %18 = arith.truncf %15 : vector<256x196xf32> to vector<256x196xbf16>
    %cst_16 = arith.constant dense<0.000000e+00> : vector<256x98xf32>
    %19 = tpu.matmul %18, %16, %cst_16 {dimension_numbers = #tpu.dot_dimension_numbers<[1], [0], [0], [1], [0, 0, 1, 1], [], []>} : vector<256x196xbf16>, vector<196x98xbf16>, vector<256x98xf32> -> vector<256x98xf32>
    %20 = vector.broadcast %17 : vector<1x98xf32> to vector<256x98xf32>
    %21 = arith.addf %19, %20 : vector<256x98xf32>
    %cst_17 = arith.constant 0.000000e+00 : f32
    %22 = vector.broadcast %cst_17 : f32 to vector<256x98xf32>
    %23 = arith.maximumf %21, %22 : vector<256x98xf32>
    %c0_18 = arith.constant 0 : index
    %c0_19 = arith.constant 0 : index
    %24 = vector.load %arg8[%c0_18, %c0_19] : memref<98x49xbf16, #tpu.memory_space<vmem>>, vector<98x49xbf16>
    %c0_20 = arith.constant 0 : index
    %c0_21 = arith.constant 0 : index
    %25 = vector.load %arg9[%c0_20, %c0_21] : memref<1x49xf32, #tpu.memory_space<vmem>>, vector<1x49xf32>
    %26 = arith.truncf %23 : vector<256x98xf32> to vector<256x98xbf16>
    %cst_22 = arith.constant dense<0.000000e+00> : vector<256x49xf32>
    %27 = tpu.matmul %26, %24, %cst_22 {dimension_numbers = #tpu.dot_dimension_numbers<[1], [0], [0], [1], [0, 0, 1, 1], [], []>} : vector<256x98xbf16>, vector<98x49xbf16>, vector<256x49xf32> -> vector<256x49xf32>
    %28 = vector.broadcast %25 : vector<1x49xf32> to vector<256x49xf32>
    %29 = arith.addf %27, %28 : vector<256x49xf32>
    %cst_23 = arith.constant 0.000000e+00 : f32
    %30 = vector.broadcast %cst_23 : f32 to vector<256x49xf32>
    %31 = arith.maximumf %29, %30 : vector<256x49xf32>
    %c0_24 = arith.constant 0 : index
    %c0_25 = arith.constant 0 : index
    %32 = vector.load %arg10[%c0_24, %c0_25] : memref<49x49xbf16, #tpu.memory_space<vmem>>, vector<49x49xbf16>
    %c0_26 = arith.constant 0 : index
    %c0_27 = arith.constant 0 : index
    %33 = vector.load %arg11[%c0_26, %c0_27] : memref<1x49xf32, #tpu.memory_space<vmem>>, vector<1x49xf32>
    %34 = arith.truncf %31 : vector<256x49xf32> to vector<256x49xbf16>
    %cst_28 = arith.constant dense<0.000000e+00> : vector<256x49xf32>
    %35 = tpu.matmul %34, %32, %cst_28 {dimension_numbers = #tpu.dot_dimension_numbers<[1], [0], [0], [1], [0, 0, 1, 1], [], []>} : vector<256x49xbf16>, vector<49x49xbf16>, vector<256x49xf32> -> vector<256x49xf32>
    %36 = vector.broadcast %33 : vector<1x49xf32> to vector<256x49xf32>
    %37 = arith.addf %35, %36 : vector<256x49xf32>
    %cst_29 = arith.constant 0.000000e+00 : f32
    %38 = vector.broadcast %cst_29 : f32 to vector<256x49xf32>
    %39 = arith.maximumf %37, %38 : vector<256x49xf32>
    %c0_30 = arith.constant 0 : index
    %c0_31 = arith.constant 0 : index
    %40 = vector.load %arg12[%c0_30, %c0_31] : memref<49x98xbf16, #tpu.memory_space<vmem>>, vector<49x98xbf16>
    %c0_32 = arith.constant 0 : index
    %c0_33 = arith.constant 0 : index
    %41 = vector.load %arg13[%c0_32, %c0_33] : memref<1x98xf32, #tpu.memory_space<vmem>>, vector<1x98xf32>
    %42 = arith.truncf %39 : vector<256x49xf32> to vector<256x49xbf16>
    %cst_34 = arith.constant dense<0.000000e+00> : vector<256x98xf32>
    %43 = tpu.matmul %42, %40, %cst_34 {dimension_numbers = #tpu.dot_dimension_numbers<[1], [0], [0], [1], [0, 0, 1, 1], [], []>} : vector<256x49xbf16>, vector<49x98xbf16>, vector<256x98xf32> -> vector<256x98xf32>
    %44 = vector.broadcast %41 : vector<1x98xf32> to vector<256x98xf32>
    %45 = arith.addf %43, %44 : vector<256x98xf32>
    %cst_35 = arith.constant 0.000000e+00 : f32
    %46 = vector.broadcast %cst_35 : f32 to vector<256x98xf32>
    %47 = arith.maximumf %45, %46 : vector<256x98xf32>
    %c0_36 = arith.constant 0 : index
    %c0_37 = arith.constant 0 : index
    %48 = vector.load %arg14[%c0_36, %c0_37] : memref<98x196xbf16, #tpu.memory_space<vmem>>, vector<98x196xbf16>
    %c0_38 = arith.constant 0 : index
    %c0_39 = arith.constant 0 : index
    %49 = vector.load %arg15[%c0_38, %c0_39] : memref<1x196xf32, #tpu.memory_space<vmem>>, vector<1x196xf32>
    %50 = arith.truncf %47 : vector<256x98xf32> to vector<256x98xbf16>
    %cst_40 = arith.constant dense<0.000000e+00> : vector<256x196xf32>
    %51 = tpu.matmul %50, %48, %cst_40 {dimension_numbers = #tpu.dot_dimension_numbers<[1], [0], [0], [1], [0, 0, 1, 1], [], []>} : vector<256x98xbf16>, vector<98x196xbf16>, vector<256x196xf32> -> vector<256x196xf32>
    %52 = vector.broadcast %49 : vector<1x196xf32> to vector<256x196xf32>
    %53 = arith.addf %51, %52 : vector<256x196xf32>
    %cst_41 = arith.constant 0.000000e+00 : f32
    %54 = vector.broadcast %cst_41 : f32 to vector<256x196xf32>
    %55 = arith.maximumf %53, %54 : vector<256x196xf32>
    %c0_42 = arith.constant 0 : index
    %c0_43 = arith.constant 0 : index
    %56 = vector.load %arg16[%c0_42, %c0_43] : memref<196x392xbf16, #tpu.memory_space<vmem>>, vector<196x392xbf16>
    %c0_44 = arith.constant 0 : index
    %c0_45 = arith.constant 0 : index
    %57 = vector.load %arg17[%c0_44, %c0_45] : memref<1x392xf32, #tpu.memory_space<vmem>>, vector<1x392xf32>
    %58 = arith.truncf %55 : vector<256x196xf32> to vector<256x196xbf16>
    %cst_46 = arith.constant dense<0.000000e+00> : vector<256x392xf32>
    %59 = tpu.matmul %58, %56, %cst_46 {dimension_numbers = #tpu.dot_dimension_numbers<[1], [0], [0], [1], [0, 0, 1, 1], [], []>} : vector<256x196xbf16>, vector<196x392xbf16>, vector<256x392xf32> -> vector<256x392xf32>
    %60 = vector.broadcast %57 : vector<1x392xf32> to vector<256x392xf32>
    %61 = arith.addf %59, %60 : vector<256x392xf32>
    %cst_47 = arith.constant 0.000000e+00 : f32
    %62 = vector.broadcast %cst_47 : f32 to vector<256x392xf32>
    %63 = arith.maximumf %61, %62 : vector<256x392xf32>
    %c0_48 = arith.constant 0 : index
    %c0_49 = arith.constant 0 : index
    %64 = vector.load %arg18[%c0_48, %c0_49] : memref<392x784xbf16, #tpu.memory_space<vmem>>, vector<392x784xbf16>
    %c0_50 = arith.constant 0 : index
    %c0_51 = arith.constant 0 : index
    %65 = vector.load %arg19[%c0_50, %c0_51] : memref<1x784xf32, #tpu.memory_space<vmem>>, vector<1x784xf32>
    %66 = arith.truncf %63 : vector<256x392xf32> to vector<256x392xbf16>
    %cst_52 = arith.constant dense<0.000000e+00> : vector<256x784xf32>
    %67 = tpu.matmul %66, %64, %cst_52 {dimension_numbers = #tpu.dot_dimension_numbers<[1], [0], [0], [1], [0, 0, 1, 1], [], []>} : vector<256x392xbf16>, vector<392x784xbf16>, vector<256x784xf32> -> vector<256x784xf32>
    %68 = vector.broadcast %65 : vector<1x784xf32> to vector<256x784xf32>
    %69 = arith.addf %67, %68 : vector<256x784xf32>
    %70 = math.tanh %69 : vector<256x784xf32>
    %c0_53 = arith.constant 0 : index
    %c0_54 = arith.constant 0 : index
    %71 = vector.load %arg20[%c0_53, %c0_54] : memref<256x784xf32, #tpu.memory_space<vmem>>, vector<256x784xf32>
    tpu.vector_store %arg20[%c0_53, %c0_54], %70 {strides = array<i32>} : memref<256x784xf32, #tpu.memory_space<vmem>>, vector<256x784xf32>,
    return
  }
  func.func @transform_0(%arg0: i32) -> (i32, i32) {
    %c0_i32 = arith.constant 0 : i32
    %c0_i32_0 = arith.constant 0 : i32
    return %arg0, %c0_i32 : i32, i32
  }
  func.func @transform_1(%arg0: i32) -> (i32, i32) {
    %c0_i32 = arith.constant 0 : i32
    %c0_i32_0 = arith.constant 0 : i32
    %c0_i32_1 = arith.constant 0 : i32
    return %c0_i32, %c0_i32_0 : i32, i32
  }
  func.func @transform_2(%arg0: i32) -> (i32, i32) {
    %c0_i32 = arith.constant 0 : i32
    %c0_i32_0 = arith.constant 0 : i32
    %c0_i32_1 = arith.constant 0 : i32
    return %c0_i32, %c0_i32_0 : i32, i32
  }
  func.func @transform_3(%arg0: i32) -> (i32, i32) {
    %c0_i32 = arith.constant 0 : i32
    %c0_i32_0 = arith.constant 0 : i32
    %c0_i32_1 = arith.constant 0 : i32
    return %c0_i32, %c0_i32_0 : i32, i32
  }
  func.func @transform_4(%arg0: i32) -> (i32, i32) {
    %c0_i32 = arith.constant 0 : i32
    %c0_i32_0 = arith.constant 0 : i32
    %c0_i32_1 = arith.constant 0 : i32
    return %c0_i32, %c0_i32_0 : i32, i32
  }
  func.func @transform_5(%arg0: i32) -> (i32, i32) {
    %c0_i32 = arith.constant 0 : i32
    %c0_i32_0 = arith.constant 0 : i32
    %c0_i32_1 = arith.constant 0 : i32
    return %c0_i32, %c0_i32_0 : i32, i32
  }
  func.func @transform_6(%arg0: i32) -> (i32, i32) {
    %c0_i32 = arith.constant 0 : i32
    %c0_i32_0 = arith.constant 0 : i32
    %c0_i32_1 = arith.constant 0 : i32
    return %c0_i32, %c0_i32_0 : i32, i32
  }
  func.func @transform_7(%arg0: i32) -> (i32, i32) {
    %c0_i32 = arith.constant 0 : i32
    %c0_i32_0 = arith.constant 0 : i32
    %c0_i32_1 = arith.constant 0 : i32
    return %c0_i32, %c0_i32_0 : i32, i32
  }
  func.func @transform_8(%arg0: i32) -> (i32, i32) {
    %c0_i32 = arith.constant 0 : i32
    %c0_i32_0 = arith.constant 0 : i32
    %c0_i32_1 = arith.constant 0 : i32
    return %c0_i32, %c0_i32_0 : i32, i32
  }
  func.func @transform_9(%arg0: i32) -> (i32, i32) {
    %c0_i32 = arith.constant 0 : i32
    %c0_i32_0 = arith.constant 0 : i32
    %c0_i32_1 = arith.constant 0 : i32
    return %c0_i32, %c0_i32_0 : i32, i32
  }
  func.func @transform_10(%arg0: i32) -> (i32, i32) {
    %c0_i32 = arith.constant 0 : i32
    %c0_i32_0 = arith.constant 0 : i32
    %c0_i32_1 = arith.constant 0 : i32
    return %c0_i32, %c0_i32_0 : i32, i32
  }
  func.func @transform_11(%arg0: i32) -> (i32, i32) {
    %c0_i32 = arith.constant 0 : i32
    %c0_i32_0 = arith.constant 0 : i32
    %c0_i32_1 = arith.constant 0 : i32
    return %c0_i32, %c0_i32_0 : i32, i32
  }
  func.func @transform_12(%arg0: i32) -> (i32, i32) {
    %c0_i32 = arith.constant 0 : i32
    %c0_i32_0 = arith.constant 0 : i32
    %c0_i32_1 = arith.constant 0 : i32
    return %c0_i32, %c0_i32_0 : i32, i32
  }
  func.func @transform_13(%arg0: i32) -> (i32, i32) {
    %c0_i32 = arith.constant 0 : i32
    %c0_i32_0 = arith.constant 0 : i32
    %c0_i32_1 = arith.constant 0 : i32
    return %c0_i32, %c0_i32_0 : i32, i32
  }
  func.func @transform_14(%arg0: i32) -> (i32, i32) {
    %c0_i32 = arith.constant 0 : i32
    %c0_i32_0 = arith.constant 0 : i32
    %c0_i32_1 = arith.constant 0 : i32
    return %c0_i32, %c0_i32_0 : i32, i32
  }
  func.func @transform_15(%arg0: i32) -> (i32, i32) {
    %c0_i32 = arith.constant 0 : i32
    %c0_i32_0 = arith.constant 0 : i32
    %c0_i32_1 = arith.constant 0 : i32
    return %c0_i32, %c0_i32_0 : i32, i32
  }
  func.func @transform_16(%arg0: i32) -> (i32, i32) {
    %c0_i32 = arith.constant 0 : i32
    %c0_i32_0 = arith.constant 0 : i32
    %c0_i32_1 = arith.constant 0 : i32
    return %c0_i32, %c0_i32_0 : i32, i32
  }
  func.func @transform_17(%arg0: i32) -> (i32, i32) {
    %c0_i32 = arith.constant 0 : i32
    %c0_i32_0 = arith.constant 0 : i32
    %c0_i32_1 = arith.constant 0 : i32
    return %c0_i32, %c0_i32_0 : i32, i32
  }
  func.func @transform_18(%arg0: i32) -> (i32, i32) {
    %c0_i32 = arith.constant 0 : i32
    %c0_i32_0 = arith.constant 0 : i32
    %c0_i32_1 = arith.constant 0 : i32
    return %c0_i32, %c0_i32_0 : i32, i32
  }
  func.func @transform_19(%arg0: i32) -> (i32, i32) {
    %c0_i32 = arith.constant 0 : i32
    %c0_i32_0 = arith.constant 0 : i32
    return %arg0, %c0_i32 : i32, i32
  }
}

</mosaic_0001>

<llo_original>
// kernel: autoencoder_forward.1
$region0: #{autoencoder_forward.1}
  #allocation0 [shape = 'u32[]', space=smem, size = 0x4, offset = 0x4, fixed_abs, tag = 'smem constant byte address 0x4 - core index']
  #allocation1 [shape = 'u32[144,128]{1,0:T(1,128)}', space=vmem, size = 0x12000, scoped, tag = 'internal scratch']
  %s0 = inlined_call_operand.vmem [shape: bf16[512,784], index: 0, kind: input, shape index: {}]
  %s1 = inlined_call_operand.vmem [shape: bf16[784,392], index: 1, kind: input, shape index: {}]
  %s2 = inlined_call_operand.vmem [shape: f32[1,392], index: 2, kind: input, shape index: {}]
  %s3 = inlined_call_operand.vmem [shape: bf16[392,196], index: 3, kind: input, shape index: {}]
  %s4 = inlined_call_operand.vmem [shape: f32[1,196], index: 4, kind: input, shape index: {}]
  %s5 = inlined_call_operand.vmem [shape: bf16[196,98], index: 5, kind: input, shape index: {}]
  %s6 = inlined_call_operand.vmem [shape: f32[1,98], index: 6, kind: input, shape index: {}]
  %s7 = inlined_call_operand.vmem [shape: bf16[98,49], index: 7, kind: input, shape index: {}]
  %s8 = inlined_call_operand.vmem [shape: f32[1,49], index: 8, kind: input, shape index: {}]
  %s9 = inlined_call_operand.vmem [shape: bf16[49,49], index: 9, kind: input, shape index: {}]
  %s10 = inlined_call_operand.vmem [shape: f32[1,49], index: 10, kind: input, shape index: {}]
  %s11 = inlined_call_operand.vmem [shape: bf16[49,98], index: 11, kind: input, shape index: {}]
  %s12 = inlined_call_operand.vmem [shape: f32[1,98], index: 12, kind: input, shape index: {}]
  %s13 = inlined_call_operand.vmem [shape: bf16[98,196], index: 13, kind: input, shape index: {}]
  %s14 = inlined_call_operand.vmem [shape: f32[1,196], index: 14, kind: input, shape index: {}]
  %s15 = inlined_call_operand.vmem [shape: bf16[196,392], index: 15, kind: input, shape index: {}]
  %s16 = inlined_call_operand.vmem [shape: f32[1,392], index: 16, kind: input, shape index: {}]
  %s17 = inlined_call_operand.vmem [shape: bf16[392,784], index: 17, kind: input, shape index: {}]
  %s18 = inlined_call_operand.vmem [shape: f32[1,784], index: 18, kind: input, shape index: {}]
  %s19 = inlined_call_operand.vmem [shape: f32[512,784], index: 19, kind: output, shape index: {}]
  %s20 = sld [smem:[#allocation0]]
  $region109: #{autoencoder_forward.1} parent=0
    _
  %s22 = ssub.s32 1, %s20
  %s23 = scalar_select 0, %s22, %s20
  loop: start=0, step=1, limit=4
  $region2: #{autoencoder_forward.1} parent=0 // loop_pre_header
    _
  $region3: #{autoencoder_forward.1} parent=0 // loop_header
    %s25 = sphi 0, %s29
    %p26 = scmp.ge.s32.totalorder %s25, 4
    %s35 = sphi 0, %s37
    %s38 = sphi 0, %s35
    %s39 = sphi 0, %s38
    %s55 = sphi 0, %s39
    %s59 = sphi 0, %s59
    %s61 = sphi 0, %s59
    %s62 = sphi 0, %s61
    %s76 = sphi 0, %s62
    %s80 = sphi 0, %s80
    %s82 = sphi 0, %s80
    %s83 = sphi 0, %s82
    %s97 = sphi 0, %s83
    %s101 = sphi 0, %s101
    %s103 = sphi 0, %s101
    %s104 = sphi 0, %s103
    %s118 = sphi 0, %s104
    %s122 = sphi 0, %s122
    %s124 = sphi 0, %s122
    %s125 = sphi 0, %s124
    %s139 = sphi 0, %s125
    %s143 = sphi 0, %s143
    %s145 = sphi 0, %s143
    %s146 = sphi 0, %s145
    %s160 = sphi 0, %s146
    %s164 = sphi 0, %s164
    %s166 = sphi 0, %s164
    %s167 = sphi 0, %s166
    %s181 = sphi 0, %s167
    %s185 = sphi 0, %s185
    %s187 = sphi 0, %s185
    %s188 = sphi 0, %s187
    %s202 = sphi 0, %s188
    %s206 = sphi 0, %s206
    %s208 = sphi 0, %s206
    %s209 = sphi 0, %s208
    %s223 = sphi 0, %s209
    %s227 = sphi 0, %s227
    %s229 = sphi 0, %s227
    %s230 = sphi 0, %s229
    %s244 = sphi 0, %s230
    %s248 = sphi 0, %s248
    %s250 = sphi 0, %s248
    %s251 = sphi 0, %s250
    %s265 = sphi 0, %s251
    %s269 = sphi 0, %s269
    %s271 = sphi 0, %s269
    %s272 = sphi 0, %s271
    %s286 = sphi 0, %s272
    %s290 = sphi 0, %s290
    %s292 = sphi 0, %s290
    %s293 = sphi 0, %s292
    %s307 = sphi 0, %s293
    %s311 = sphi 0, %s311
    %s313 = sphi 0, %s311
    %s314 = sphi 0, %s313
    %s328 = sphi 0, %s314
    %s332 = sphi 0, %s332
    %s334 = sphi 0, %s332
    %s335 = sphi 0, %s334
    %s349 = sphi 0, %s335
    %s353 = sphi 0, %s353
    %s355 = sphi 0, %s353
    %s356 = sphi 0, %s355
    %s370 = sphi 0, %s356
    %s374 = sphi 0, %s374
    %s376 = sphi 0, %s374
    %s377 = sphi 0, %s376
    %s391 = sphi 0, %s377
    %s395 = sphi 0, %s395
    %s397 = sphi 0, %s395
    %s398 = sphi 0, %s397
    %s412 = sphi 0, %s398
    %s416 = sphi 0, %s416
    %s418 = sphi 0, %s416
    %s419 = sphi 0, %s418
    %s433 = sphi 0, %s419
    %s439 = sphi 0, %s441
    %s442 = sphi 0, %s439
    %s443 = sphi 0, %s442
    %s459 = sphi 0, %s443
  $region4: #{autoencoder_forward.1} parent=0 // loop_header_branch
    %28 = sbr.rel (%p26) target = $region8
  $region5: #{autoencoder_forward.1} parent=0 // loop_body
    %s30 = ssub.s32 %s25, 1
    %s31 = ssub.s32 %s25, 2
    %s32 = sadd.s32 %s25, 1
    %s33 = ssub.s32 %s25, %s32
    %p34 = scmp.eq.s32.totalorder %s33, 0
    %s36 = sadd.s32 %s35, 1
    %s37 = scalar_select %p34, %s35, %s36
    %p40 = pneg %p34
    %p41 = scmp.eq.s32.totalorder %s25, 1
    %p42 = por %p40, %p41
    %p43 = scmp.ne.s32.totalorder %s35, %s38
    %p44 = scmp.eq.s32.totalorder %s25, 0
    %p45 = por %p43, %p44
    %p46 = scmp.ne.s32.totalorder %s35, %s38
    %p47 = scmp.eq.s32.totalorder %s30, 1
    %p48 = por %p46, %p47
    %p49 = scmp.ne.s32.totalorder %s38, %s39
    %p50 = scmp.eq.s32.totalorder %s30, 0
    %p51 = por %p49, %p50
    %p52 = scmp.ne.s32.totalorder %s38, %s39
    %p53 = scmp.eq.s32.totalorder %s31, 1
    %p54 = por %p52, %p53
    %p56 = scmp.ne.s32.totalorder %s39, %s55
    %p57 = scmp.eq.s32.totalorder %s31, 0
    %p58 = por %p56, %p57
    %s60 = sadd.s32 %s59, 1
    %p63 = scmp.eq.s32.totalorder %s25, 1
    %p64 = scmp.ne.s32.totalorder %s59, %s61
    %p65 = scmp.eq.s32.totalorder %s25, 0
    %p66 = por %p64, %p65
    %p67 = scmp.ne.s32.totalorder %s59, %s61
    %p68 = scmp.eq.s32.totalorder %s30, 1
    %p69 = por %p67, %p68
    %p70 = scmp.ne.s32.totalorder %s61, %s62
    %p71 = scmp.eq.s32.totalorder %s30, 0
    %p72 = por %p70, %p71
    %p73 = scmp.ne.s32.totalorder %s61, %s62
    %p74 = scmp.eq.s32.totalorder %s31, 1
    %p75 = por %p73, %p74
    %p77 = scmp.ne.s32.totalorder %s62, %s76
    %p78 = scmp.eq.s32.totalorder %s31, 0
    %p79 = por %p77, %p78
    %s81 = sadd.s32 %s80, 1
    %p84 = scmp.eq.s32.totalorder %s25, 1
    %p85 = scmp.ne.s32.totalorder %s80, %s82
    %p86 = scmp.eq.s32.totalorder %s25, 0
    %p87 = por %p85, %p86
    %p88 = scmp.ne.s32.totalorder %s80, %s82
    %p89 = scmp.eq.s32.totalorder %s30, 1
    %p90 = por %p88, %p89
    %p91 = scmp.ne.s32.totalorder %s82, %s83
    %p92 = scmp.eq.s32.totalorder %s30, 0
    %p93 = por %p91, %p92
    %p94 = scmp.ne.s32.totalorder %s82, %s83
    %p95 = scmp.eq.s32.totalorder %s31, 1
    %p96 = por %p94, %p95
    %p98 = scmp.ne.s32.totalorder %s83, %s97
    %p99 = scmp.eq.s32.totalorder %s31, 0
    %p100 = por %p98, %p99
    %s102 = sadd.s32 %s101, 1
    %p105 = scmp.eq.s32.totalorder %s25, 1
    %p106 = scmp.ne.s32.totalorder %s101, %s103
    %p107 = scmp.eq.s32.totalorder %s25, 0
    %p108 = por %p106, %p107
    %p109 = scmp.ne.s32.totalorder %s101, %s103
    %p110 = scmp.eq.s32.totalorder %s30, 1
    %p111 = por %p109, %p110
    %p112 = scmp.ne.s32.totalorder %s103, %s104
    %p113 = scmp.eq.s32.totalorder %s30, 0
    %p114 = por %p112, %p113
    %p115 = scmp.ne.s32.totalorder %s103, %s104
    %p116 = scmp.eq.s32.totalorder %s31, 1
    %p117 = por %p115, %p116
    %p119 = scmp.ne.s32.totalorder %s104, %s118
    %p120 = scmp.eq.s32.totalorder %s31, 0
    %p121 = por %p119, %p120
    %s123 = sadd.s32 %s122, 1
    %p126 = scmp.eq.s32.totalorder %s25, 1
    %p127 = scmp.ne.s32.totalorder %s122, %s124
    %p128 = scmp.eq.s32.totalorder %s25, 0
    %p129 = por %p127, %p128
    %p130 = scmp.ne.s32.totalorder %s122, %s124
    %p131 = scmp.eq.s32.totalorder %s30, 1
    %p132 = por %p130, %p131
    %p133 = scmp.ne.s32.totalorder %s124, %s125
    %p134 = scmp.eq.s32.totalorder %s30, 0
    %p135 = por %p133, %p134
    %p136 = scmp.ne.s32.totalorder %s124, %s125
    %p137 = scmp.eq.s32.totalorder %s31, 1
    %p138 = por %p136, %p137
    %p140 = scmp.ne.s32.totalorder %s125, %s139
    %p141 = scmp.eq.s32.totalorder %s31, 0
    %p142 = por %p140, %p141
    %s144 = sadd.s32 %s143, 1
    %p147 = scmp.eq.s32.totalorder %s25, 1
    %p148 = scmp.ne.s32.totalorder %s143, %s145
    %p149 = scmp.eq.s32.totalorder %s25, 0
    %p150 = por %p148, %p149
    %p151 = scmp.ne.s32.totalorder %s143, %s145
    %p152 = scmp.eq.s32.totalorder %s30, 1
    %p153 = por %p151, %p152
    %p154 = scmp.ne.s32.totalorder %s145, %s146
    %p155 = scmp.eq.s32.totalorder %s30, 0
    %p156 = por %p154, %p155
    %p157 = scmp.ne.s32.totalorder %s145, %s146
    %p158 = scmp.eq.s32.totalorder %s31, 1
    %p159 = por %p157, %p158
    %p161 = scmp.ne.s32.totalorder %s146, %s160
    %p162 = scmp.eq.s32.totalorder %s31, 0
    %p163 = por %p161, %p162
    %s165 = sadd.s32 %s164, 1
    %p168 = scmp.eq.s32.totalorder %s25, 1
    %p169 = scmp.ne.s32.totalorder %s164, %s166
    %p170 = scmp.eq.s32.totalorder %s25, 0
    %p171 = por %p169, %p170
    %p172 = scmp.ne.s32.totalorder %s164, %s166
    %p173 = scmp.eq.s32.totalorder %s30, 1
    %p174 = por %p172, %p173
    %p175 = scmp.ne.s32.totalorder %s166, %s167
    %p176 = scmp.eq.s32.totalorder %s30, 0
    %p177 = por %p175, %p176
    %p178 = scmp.ne.s32.totalorder %s166, %s167
    %p179 = scmp.eq.s32.totalorder %s31, 1
    %p180 = por %p178, %p179
    %p182 = scmp.ne.s32.totalorder %s167, %s181
    %p183 = scmp.eq.s32.totalorder %s31, 0
    %p184 = por %p182, %p183
    %s186 = sadd.s32 %s185, 1
    %p189 = scmp.eq.s32.totalorder %s25, 1
    %p190 = scmp.ne.s32.totalorder %s185, %s187
    %p191 = scmp.eq.s32.totalorder %s25, 0
    %p192 = por %p190, %p191
    %p193 = scmp.ne.s32.totalorder %s185, %s187
    %p194 = scmp.eq.s32.totalorder %s30, 1
    %p195 = por %p193, %p194
    %p196 = scmp.ne.s32.totalorder %s187, %s188
    %p197 = scmp.eq.s32.totalorder %s30, 0
    %p198 = por %p196, %p197
    %p199 = scmp.ne.s32.totalorder %s187, %s188
    %p200 = scmp.eq.s32.totalorder %s31, 1
    %p201 = por %p199, %p200
    %p203 = scmp.ne.s32.totalorder %s188, %s202
    %p204 = scmp.eq.s32.totalorder %s31, 0
    %p205 = por %p203, %p204
    %s207 = sadd.s32 %s206, 1
    %p210 = scmp.eq.s32.totalorder %s25, 1
    %p211 = scmp.ne.s32.totalorder %s206, %s208
    %p212 = scmp.eq.s32.totalorder %s25, 0
    %p213 = por %p211, %p212
    %p214 = scmp.ne.s32.totalorder %s206, %s208
    %p215 = scmp.eq.s32.totalorder %s30, 1
    %p216 = por %p214, %p215
    %p217 = scmp.ne.s32.totalorder %s208, %s209
    %p218 = scmp.eq.s32.totalorder %s30, 0
    %p219 = por %p217, %p218
    %p220 = scmp.ne.s32.totalorder %s208, %s209
    %p221 = scmp.eq.s32.totalorder %s31, 1
    %p222 = por %p220, %p221
    %p224 = scmp.ne.s32.totalorder %s209, %s223
    %p225 = scmp.eq.s32.totalorder %s31, 0
    %p226 = por %p224, %p225
    %s228 = sadd.s32 %s227, 1
    %p231 = scmp.eq.s32.totalorder %s25, 1
    %p232 = scmp.ne.s32.totalorder %s227, %s229
    %p233 = scmp.eq.s32.totalorder %s25, 0
    %p234 = por %p232, %p233
    %p235 = scmp.ne.s32.totalorder %s227, %s229
    %p236 = scmp.eq.s32.totalorder %s30, 1
    %p237 = por %p235, %p236
    %p238 = scmp.ne.s32.totalorder %s229, %s230
    %p239 = scmp.eq.s32.totalorder %s30, 0
    %p240 = por %p238, %p239
    %p241 = scmp.ne.s32.totalorder %s229, %s230
    %p242 = scmp.eq.s32.totalorder %s31, 1
    %p243 = por %p241, %p242
    %p245 = scmp.ne.s32.totalorder %s230, %s244
    %p246 = scmp.eq.s32.totalorder %s31, 0
    %p247 = por %p245, %p246
    %s249 = sadd.s32 %s248, 1
    %p252 = scmp.eq.s32.totalorder %s25, 1
    %p253 = scmp.ne.s32.totalorder %s248, %s250
    %p254 = scmp.eq.s32.totalorder %s25, 0
    %p255 = por %p253, %p254
    %p256 = scmp.ne.s32.totalorder %s248, %s250
    %p257 = scmp.eq.s32.totalorder %s30, 1
    %p258 = por %p256, %p257
    %p259 = scmp.ne.s32.totalorder %s250, %s251
    %p260 = scmp.eq.s32.totalorder %s30, 0
    %p261 = por %p259, %p260
    %p262 = scmp.ne.s32.totalorder %s250, %s251
    %p263 = scmp.eq.s32.totalorder %s31, 1
    %p264 = por %p262, %p263
    %p266 = scmp.ne.s32.totalorder %s251, %s265
    %p267 = scmp.eq.s32.totalorder %s31, 0
    %p268 = por %p266, %p267
    %s270 = sadd.s32 %s269, 1
    %p273 = scmp.eq.s32.totalorder %s25, 1
    %p274 = scmp.ne.s32.totalorder %s269, %s271
    %p275 = scmp.eq.s32.totalorder %s25, 0
    %p276 = por %p274, %p275
    %p277 = scmp.ne.s32.totalorder %s269, %s271
    %p278 = scmp.eq.s32.totalorder %s30, 1
    %p279 = por %p277, %p278
    %p280 = scmp.ne.s32.totalorder %s271, %s272
    %p281 = scmp.eq.s32.totalorder %s30, 0
    %p282 = por %p280, %p281
    %p283 = scmp.ne.s32.totalorder %s271, %s272
    %p284 = scmp.eq.s32.totalorder %s31, 1
    %p285 = por %p283, %p284
    %p287 = scmp.ne.s32.totalorder %s272, %s286
    %p288 = scmp.eq.s32.totalorder %s31, 0
    %p289 = por %p287, %p288
    %s291 = sadd.s32 %s290, 1
    %p294 = scmp.eq.s32.totalorder %s25, 1
    %p295 = scmp.ne.s32.totalorder %s290, %s292
    %p296 = scmp.eq.s32.totalorder %s25, 0
    %p297 = por %p295, %p296
    %p298 = scmp.ne.s32.totalorder %s290, %s292
    %p299 = scmp.eq.s32.totalorder %s30, 1
    %p300 = por %p298, %p299
    %p301 = scmp.ne.s32.totalorder %s292, %s293
    %p302 = scmp.eq.s32.totalorder %s30, 0
    %p303 = por %p301, %p302
    %p304 = scmp.ne.s32.totalorder %s292, %s293
    %p305 = scmp.eq.s32.totalorder %s31, 1
    %p306 = por %p304, %p305
    %p308 = scmp.ne.s32.totalorder %s293, %s307
    %p309 = scmp.eq.s32.totalorder %s31, 0
    %p310 = por %p308, %p309
    %s312 = sadd.s32 %s311, 1
    %p315 = scmp.eq.s32.totalorder %s25, 1
    %p316 = scmp.ne.s32.totalorder %s311, %s313
    %p317 = scmp.eq.s32.totalorder %s25, 0
    %p318 = por %p316, %p317
    %p319 = scmp.ne.s32.totalorder %s311, %s313
    %p320 = scmp.eq.s32.totalorder %s30, 1
    %p321 = por %p319, %p320
    %p322 = scmp.ne.s32.totalorder %s313, %s314
    %p323 = scmp.eq.s32.totalorder %s30, 0
    %p324 = por %p322, %p323
    %p325 = scmp.ne.s32.totalorder %s313, %s314
    %p326 = scmp.eq.s32.totalorder %s31, 1
    %p327 = por %p325, %p326
    %p329 = scmp.ne.s32.totalorder %s314, %s328
    %p330 = scmp.eq.s32.totalorder %s31, 0
    %p331 = por %p329, %p330
    %s333 = sadd.s32 %s332, 1
    %p336 = scmp.eq.s32.totalorder %s25, 1
    %p337 = scmp.ne.s32.totalorder %s332, %s334
    %p338 = scmp.eq.s32.totalorder %s25, 0
    %p339 = por %p337, %p338
    %p340 = scmp.ne.s32.totalorder %s332, %s334
    %p341 = scmp.eq.s32.totalorder %s30, 1
    %p342 = por %p340, %p341
    %p343 = scmp.ne.s32.totalorder %s334, %s335
    %p344 = scmp.eq.s32.totalorder %s30, 0
    %p345 = por %p343, %p344
    %p346 = scmp.ne.s32.totalorder %s334, %s335
    %p347 = scmp.eq.s32.totalorder %s31, 1
    %p348 = por %p346, %p347
    %p350 = scmp.ne.s32.totalorder %s335, %s349
    %p351 = scmp.eq.s32.totalorder %s31, 0
    %p352 = por %p350, %p351
    %s354 = sadd.s32 %s353, 1
    %p357 = scmp.eq.s32.totalorder %s25, 1
    %p358 = scmp.ne.s32.totalorder %s353, %s355
    %p359 = scmp.eq.s32.totalorder %s25, 0
    %p360 = por %p358, %p359
    %p361 = scmp.ne.s32.totalorder %s353, %s355
    %p362 = scmp.eq.s32.totalorder %s30, 1
    %p363 = por %p361, %p362
    %p364 = scmp.ne.s32.totalorder %s355, %s356
    %p365 = scmp.eq.s32.totalorder %s30, 0
    %p366 = por %p364, %p365
    %p367 = scmp.ne.s32.totalorder %s355, %s356
    %p368 = scmp.eq.s32.totalorder %s31, 1
    %p369 = por %p367, %p368
    %p371 = scmp.ne.s32.totalorder %s356, %s370
    %p372 = scmp.eq.s32.totalorder %s31, 0
    %p373 = por %p371, %p372
    %s375 = sadd.s32 %s374, 1
    %p378 = scmp.eq.s32.totalorder %s25, 1
    %p379 = scmp.ne.s32.totalorder %s374, %s376
    %p380 = scmp.eq.s32.totalorder %s25, 0
    %p381 = por %p379, %p380
    %p382 = scmp.ne.s32.totalorder %s374, %s376
    %p383 = scmp.eq.s32.totalorder %s30, 1
    %p384 = por %p382, %p383
    %p385 = scmp.ne.s32.totalorder %s376, %s377
    %p386 = scmp.eq.s32.totalorder %s30, 0
    %p387 = por %p385, %p386
    %p388 = scmp.ne.s32.totalorder %s376, %s377
    %p389 = scmp.eq.s32.totalorder %s31, 1
    %p390 = por %p388, %p389
    %p392 = scmp.ne.s32.totalorder %s377, %s391
    %p393 = scmp.eq.s32.totalorder %s31, 0
    %p394 = por %p392, %p393
    %s396 = sadd.s32 %s395, 1
    %p399 = scmp.eq.s32.totalorder %s25, 1
    %p400 = scmp.ne.s32.totalorder %s395, %s397
    %p401 = scmp.eq.s32.totalorder %s25, 0
    %p402 = por %p400, %p401
    %p403 = scmp.ne.s32.totalorder %s395, %s397
    %p404 = scmp.eq.s32.totalorder %s30, 1
    %p405 = por %p403, %p404
    %p406 = scmp.ne.s32.totalorder %s397, %s398
    %p407 = scmp.eq.s32.totalorder %s30, 0
    %p408 = por %p406, %p407
    %p409 = scmp.ne.s32.totalorder %s397, %s398
    %p410 = scmp.eq.s32.totalorder %s31, 1
    %p411 = por %p409, %p410
    %p413 = scmp.ne.s32.totalorder %s398, %s412
    %p414 = scmp.eq.s32.totalorder %s31, 0
    %p415 = por %p413, %p414
    %s417 = sadd.s32 %s416, 1
    %p420 = scmp.eq.s32.totalorder %s25, 1
    %p421 = scmp.ne.s32.totalorder %s416, %s418
    %p422 = scmp.eq.s32.totalorder %s25, 0
    %p423 = por %p421, %p422
    %p424 = scmp.ne.s32.totalorder %s416, %s418
    %p425 = scmp.eq.s32.totalorder %s30, 1
    %p426 = por %p424, %p425
    %p427 = scmp.ne.s32.totalorder %s418, %s419
    %p428 = scmp.eq.s32.totalorder %s30, 0
    %p429 = por %p427, %p428
    %p430 = scmp.ne.s32.totalorder %s418, %s419
    %p431 = scmp.eq.s32.totalorder %s31, 1
    %p432 = por %p430, %p431
    %p434 = scmp.ne.s32.totalorder %s419, %s433
    %p435 = scmp.eq.s32.totalorder %s31, 0
    %p436 = por %p434, %p435
    %s437 = ssub.s32 %s25, %s32
    %p438 = scmp.eq.s32.totalorder %s437, 0
    %s440 = sadd.s32 %s439, 1
    %s441 = scalar_select %p438, %s439, %s440
    %p444 = pneg %p438
    %p445 = scmp.eq.s32.totalorder %s25, 1
    %p446 = por %p444, %p445
    %p447 = scmp.ne.s32.totalorder %s439, %s442
    %p448 = scmp.eq.s32.totalorder %s25, 0
    %p449 = por %p447, %p448
    %p450 = scmp.ne.s32.totalorder %s439, %s442
    %p451 = scmp.eq.s32.totalorder %s30, 1
    %p452 = por %p450, %p451
    %p453 = scmp.ne.s32.totalorder %s442, %s443
    %p454 = scmp.eq.s32.totalorder %s30, 0
    %p455 = por %p453, %p454
    %p456 = scmp.ne.s32.totalorder %s442, %s443
    %p457 = scmp.eq.s32.totalorder %s31, 1
    %p458 = por %p456, %p457
    %p460 = scmp.ne.s32.totalorder %s443, %s459
    %p461 = scmp.eq.s32.totalorder %s31, 0
    %p462 = por %p460, %p461
    %p463 = scmp.le.s32.totalorder 1, %s25
    %p464 = scmp.lt.s32.totalorder %s25, 3
    %p465 = pnand %p463, %p464
    %p466 = pneg %p465
    // Predicated region
    $region9: #{autoencoder_forward.1} parent=5 // pred_check
      _
    $region10: #{autoencoder_forward.1} parent=5 // pred_check_branch
      %468 = sbr.rel (%p465) target = $region12
    $region11: #{autoencoder_forward.1} parent=5 // pred_region
      %s469 = ssub.s32 %s25, 1
      // Predicated region
      $region13: #{autoencoder_forward.1} parent=11 // pred_check
        %p470 = pneg %p72
      $region14: #{autoencoder_forward.1} parent=11 // pred_check_branch
        %472 = sbr.rel (%p470) target = $region16
      $region15: #{autoencoder_forward.1} parent=11 // pred_region
        _
      $region16: #{autoencoder_forward.1} parent=11 // pred_fallthru
        _
      // Predicated region
      $region17: #{autoencoder_forward.1} parent=11 // pred_check
        %p473 = pneg %p93
      $region18: #{autoencoder_forward.1} parent=11 // pred_check_branch
        %475 = sbr.rel (%p473) target = $region20
      $region19: #{autoencoder_forward.1} parent=11 // pred_region
        _
      $region20: #{autoencoder_forward.1} parent=11 // pred_fallthru
        _
      // Predicated region
      $region21: #{autoencoder_forward.1} parent=11 // pred_check
        %p476 = pneg %p114
      $region22: #{autoencoder_forward.1} parent=11 // pred_check_branch
        %478 = sbr.rel (%p476) target = $region24
      $region23: #{autoencoder_forward.1} parent=11 // pred_region
        _
      $region24: #{autoencoder_forward.1} parent=11 // pred_fallthru
        _
      // Predicated region
      $region25: #{autoencoder_forward.1} parent=11 // pred_check
        %p479 = pneg %p135
      $region26: #{autoencoder_forward.1} parent=11 // pred_check_branch
        %481 = sbr.rel (%p479) target = $region28
      $region27: #{autoencoder_forward.1} parent=11 // pred_region
        _
      $region28: #{autoencoder_forward.1} parent=11 // pred_fallthru
        _
      // Predicated region
      $region29: #{autoencoder_forward.1} parent=11 // pred_check
        %p482 = pneg %p156
      $region30: #{autoencoder_forward.1} parent=11 // pred_check_branch
        %484 = sbr.rel (%p482) target = $region32
      $region31: #{autoencoder_forward.1} parent=11 // pred_region
        _
      $region32: #{autoencoder_forward.1} parent=11 // pred_fallthru
        _
      // Predicated region
      $region33: #{autoencoder_forward.1} parent=11 // pred_check
        %p485 = pneg %p177
      $region34: #{autoencoder_forward.1} parent=11 // pred_check_branch
        %487 = sbr.rel (%p485) target = $region36
      $region35: #{autoencoder_forward.1} parent=11 // pred_region
        _
      $region36: #{autoencoder_forward.1} parent=11 // pred_fallthru
        _
      // Predicated region
      $region37: #{autoencoder_forward.1} parent=11 // pred_check
        %p488 = pneg %p198
      $region38: #{autoencoder_forward.1} parent=11 // pred_check_branch
        %490 = sbr.rel (%p488) target = $region40
      $region39: #{autoencoder_forward.1} parent=11 // pred_region
        _
      $region40: #{autoencoder_forward.1} parent=11 // pred_fallthru
        _
      // Predicated region
      $region41: #{autoencoder_forward.1} parent=11 // pred_check
        %p491 = pneg %p219
      $region42: #{autoencoder_forward.1} parent=11 // pred_check_branch
        %493 = sbr.rel (%p491) target = $region44
      $region43: #{autoencoder_forward.1} parent=11 // pred_region
        _
      $region44: #{autoencoder_forward.1} parent=11 // pred_fallthru
        _
      // Predicated region
      $region45: #{autoencoder_forward.1} parent=11 // pred_check
        %p494 = pneg %p240
      $region46: #{autoencoder_forward.1} parent=11 // pred_check_branch
        %496 = sbr.rel (%p494) target = $region48
      $region47: #{autoencoder_forward.1} parent=11 // pred_region
        _
      $region48: #{autoencoder_forward.1} parent=11 // pred_fallthru
        _
      // Predicated region
      $region49: #{autoencoder_forward.1} parent=11 // pred_check
        %p497 = pneg %p261
      $region50: #{autoencoder_forward.1} parent=11 // pred_check_branch
        %499 = sbr.rel (%p497) target = $region52
      $region51: #{autoencoder_forward.1} parent=11 // pred_region
        _
      $region52: #{autoencoder_forward.1} parent=11 // pred_fallthru
        _
      // Predicated region
      $region53: #{autoencoder_forward.1} parent=11 // pred_check
        %p500 = pneg %p282
      $region54: #{autoencoder_forward.1} parent=11 // pred_check_branch
        %502 = sbr.rel (%p500) target = $region56
      $region55: #{autoencoder_forward.1} parent=11 // pred_region
        _
      $region56: #{autoencoder_forward.1} parent=11 // pred_fallthru
        _
      // Predicated region
      $region57: #{autoencoder_forward.1} parent=11 // pred_check
        %p503 = pneg %p303
      $region58: #{autoencoder_forward.1} parent=11 // pred_check_branch
        %505 = sbr.rel (%p503) target = $region60
      $region59: #{autoencoder_forward.1} parent=11 // pred_region
        _
      $region60: #{autoencoder_forward.1} parent=11 // pred_fallthru
        _
      // Predicated region
      $region61: #{autoencoder_forward.1} parent=11 // pred_check
        %p506 = pneg %p324
      $region62: #{autoencoder_forward.1} parent=11 // pred_check_branch
        %508 = sbr.rel (%p506) target = $region64
      $region63: #{autoencoder_forward.1} parent=11 // pred_region
        _
      $region64: #{autoencoder_forward.1} parent=11 // pred_fallthru
        _
      // Predicated region
      $region65: #{autoencoder_forward.1} parent=11 // pred_check
        %p509 = pneg %p345
      $region66: #{autoencoder_forward.1} parent=11 // pred_check_branch
        %511 = sbr.rel (%p509) target = $region68
      $region67: #{autoencoder_forward.1} parent=11 // pred_region
        _
      $region68: #{autoencoder_forward.1} parent=11 // pred_fallthru
        _
      // Predicated region
      $region69: #{autoencoder_forward.1} parent=11 // pred_check
        %p512 = pneg %p366
      $region70: #{autoencoder_forward.1} parent=11 // pred_check_branch
        %514 = sbr.rel (%p512) target = $region72
      $region71: #{autoencoder_forward.1} parent=11 // pred_region
        _
      $region72: #{autoencoder_forward.1} parent=11 // pred_fallthru
        _
      // Predicated region
      $region73: #{autoencoder_forward.1} parent=11 // pred_check
        %p515 = pneg %p387
      $region74: #{autoencoder_forward.1} parent=11 // pred_check_branch
        %517 = sbr.rel (%p515) target = $region76
      $region75: #{autoencoder_forward.1} parent=11 // pred_region
        _
      $region76: #{autoencoder_forward.1} parent=11 // pred_fallthru
        _
      // Predicated region
      $region77: #{autoencoder_forward.1} parent=11 // pred_check
        %p518 = pneg %p408
      $region78: #{autoencoder_forward.1} parent=11 // pred_check_branch
        %520 = sbr.rel (%p518) target = $region80
      $region79: #{autoencoder_forward.1} parent=11 // pred_region
        _
      $region80: #{autoencoder_forward.1} parent=11 // pred_fallthru
        _
      // Predicated region
      $region81: #{autoencoder_forward.1} parent=11 // pred_check
        %p521 = pneg %p429
      $region82: #{autoencoder_forward.1} parent=11 // pred_check_branch
        %523 = sbr.rel (%p521) target = $region84
      $region83: #{autoencoder_forward.1} parent=11 // pred_region
        _
      $region84: #{autoencoder_forward.1} parent=11 // pred_fallthru
        _
    $region12: #{autoencoder_forward.1} parent=5 // pred_fallthru
      _
    %p524 = scmp.lt.s32.totalorder %s25, 2
    // Predicated region
    $region85: #{autoencoder_forward.1} parent=5 // pred_check
      %p525 = pneg %p524
    $region86: #{autoencoder_forward.1} parent=5 // pred_check_branch
      %527 = sbr.rel (%p525) target = $region88
    $region87: #{autoencoder_forward.1} parent=5 // pred_region
      // Predicated region
      $region89: #{autoencoder_forward.1} parent=87 // pred_check
        %p528 = pneg %p45
      $region90: #{autoencoder_forward.1} parent=87 // pred_check_branch
        %530 = sbr.rel (%p528) target = $region92
      $region91: #{autoencoder_forward.1} parent=87 // pred_region
        %s531 = smul.u32 32, %s25
        %p532 = scmp.lt.s32.totalorder %s531, 63
        %s533 = scalar_select %p532, %s531, 63
        %s534 = smul.addr %s533, 7
        %s535 = smul.addr %s534, 4
        %s536 = scalar_lea.vmem %s0, %s535
        %s537 = smul.u32 32, %s25
      $region92: #{autoencoder_forward.1} parent=87 // pred_fallthru
        _
    $region88: #{autoencoder_forward.1} parent=5 // pred_fallthru
      _
    %p538 = scmp.le.s32.totalorder 1, %s25
    %p539 = scmp.lt.s32.totalorder %s25, 3
    %p540 = pnand %p538, %p539
    %p541 = pneg %p540
    // Predicated region
    $region93: #{autoencoder_forward.1} parent=5 // pred_check
      _
    $region94: #{autoencoder_forward.1} parent=5 // pred_check_branch
      %543 = sbr.rel (%p540) target = $region96
    $region95: #{autoencoder_forward.1} parent=5 // pred_region
      %s544 = ssub.s32 %s25, 1
      %s545 = smul.u32 32, %s30
      %p546 = scmp.lt.s32.totalorder %s545, 63
      %s547 = scalar_select %p546, %s545, 63
      %s548 = smul.addr %s547, 7
      %s549 = smul.addr %s548, 4
      %s550 = scalar_lea.vmem %s0, %s549
      %p551 = pneg %p51
      %p552 = pneg %p48
      %p553 = pneg %p72
      %p554 = pneg %p69
      %p555 = pneg %p93
      %p556 = pneg %p90
      %p557 = pneg %p114
      %p558 = pneg %p111
      %p559 = pneg %p135
      %p560 = pneg %p132
      %p561 = pneg %p156
      %p562 = pneg %p153
      %p563 = pneg %p177
      %p564 = pneg %p174
      %p565 = pneg %p198
      %p566 = pneg %p195
      %p567 = pneg %p219
      %p568 = pneg %p216
      %p569 = pneg %p240
      %p570 = pneg %p237
      %p571 = pneg %p261
      %p572 = pneg %p258
      %p573 = pneg %p282
      %p574 = pneg %p279
      %p575 = pneg %p303
      %p576 = pneg %p300
      %p577 = pneg %p324
      %p578 = pneg %p321
      %p579 = pneg %p345
      %p580 = pneg %p342
      %p581 = pneg %p366
      %p582 = pneg %p363
      %p583 = pneg %p387
      %p584 = pneg %p384
      %p585 = pneg %p408
      %p586 = pneg %p405
      %p587 = pneg %p429
      %p588 = pneg %p426
      %p589 = pneg %p455
      %p590 = pneg %p452
      %s591 = smul.u32 32, %s30
      %p592 = scmp.lt.s32.totalorder %s591, 63
      %s593 = scalar_select %p592, %s591, 63
      %s594 = smul.addr %s593, 7
      %s595 = smul.addr %s594, 8
      %s596 = scalar_lea.vmem %s19, %s595
      %s597 = smul.u32 32, %s30
      %p598 = scmp.lt.s32.totalorder %s597, 63
      %s599 = scalar_select %p598, %s597, 63
      %s600 = smul.addr %s599, 7
      %s601 = smul.addr %s600, 4
      %s602 = scalar_lea.vmem %s0, %s601
      %s603 = smul.u32 32, %s30
      %s604 = smul.u32 32, %s30
      %p605 = scmp.lt.s32.totalorder %s604, 63
      %s606 = scalar_select %p605, %s604, 63
      %s607 = smul.addr %s606, 7
      %s608 = smul.addr %s607, 8
      %s609 = scalar_lea.vmem %s19, %s608
      %s610 = smul.u32 32, %s30
      %v612 = vld [vmem:[%s602] sm:$0xff]
      %v613 = vld [vmem:[%s602 + $0x8] sm:$0xff]
      %v614 = vld [vmem:[%s602 + $0x10] sm:$0xff]
      %v615 = vld [vmem:[%s602 + $0x18] sm:$0xf]
      %v616 = vld [vmem:[%s602 + $0x1c] sm:$0xff]
      %v617 = vld [vmem:[%s602 + $0x24] sm:$0xff]
      %v618 = vld [vmem:[%s602 + $0x2c] sm:$0xff]
      %v619 = vld [vmem:[%s602 + $0x34] sm:$0xf]
      %v620 = vld [vmem:[%s602 + $0x38] sm:$0xff]
      %v621 = vld [vmem:[%s602 + $0x40] sm:$0xff]
      %v622 = vld [vmem:[%s602 + $0x48] sm:$0xff]
      %v623 = vld [vmem:[%s602 + $0x50] sm:$0xf]
      %v624 = vld [vmem:[%s602 + $0x54] sm:$0xff]
      %v625 = vld [vmem:[%s602 + $0x5c] sm:$0xff]
      %v626 = vld [vmem:[%s602 + $0x64] sm:$0xff]
      %v627 = vld [vmem:[%s602 + $0x6c] sm:$0xf]
      %v628 = vld [vmem:[%s602 + $0x70] sm:$0xff]
      %v629 = vld [vmem:[%s602 + $0x78] sm:$0xff]
      %v630 = vld [vmem:[%s602 + $0x80] sm:$0xff]
      %v631 = vld [vmem:[%s602 + $0x88] sm:$0xf]
      %v632 = vld [vmem:[%s602 + $0x8c] sm:$0xff]
      %v633 = vld [vmem:[%s602 + $0x94] sm:$0xff]
      %v634 = vld [vmem:[%s602 + $0x9c] sm:$0xff]
      %v635 = vld [vmem:[%s602 + $0xa4] sm:$0xf]
      %v636 = vld [vmem:[%s602 + $0xa8] sm:$0xff]
      %v637 = vld [vmem:[%s602 + $0xb0] sm:$0xff]
      %v638 = vld [vmem:[%s602 + $0xb8] sm:$0xff]
      %v639 = vld [vmem:[%s602 + $0xc0] sm:$0xf]
      %v640 = vld [vmem:[%s602 + $0xc4] sm:$0xff]
      %v641 = vld [vmem:[%s602 + $0xcc] sm:$0xff]
      %v642 = vld [vmem:[%s602 + $0xd4] sm:$0xff]
      %v643 = vld [vmem:[%s602 + $0xdc] sm:$0xf]
      %v644 = vld [vmem:[%s602 + $0xe0] sm:$0xff]
      %v645 = vld [vmem:[%s602 + $0xe8] sm:$0xff]
      %v646 = vld [vmem:[%s602 + $0xf0] sm:$0xff]
      %v647 = vld [vmem:[%s602 + $0xf8] sm:$0xf]
      %v648 = vld [vmem:[%s602 + $0xfc] sm:$0xff]
      %v649 = vld [vmem:[%s602 + $0x104] sm:$0xff]
      %v650 = vld [vmem:[%s602 + $0x10c] sm:$0xff]
      %v651 = vld [vmem:[%s602 + $0x114] sm:$0xf]
      %v652 = vld [vmem:[%s602 + $0x118] sm:$0xff]
      %v653 = vld [vmem:[%s602 + $0x120] sm:$0xff]
      %v654 = vld [vmem:[%s602 + $0x128] sm:$0xff]
      %v655 = vld [vmem:[%s602 + $0x130] sm:$0xf]
      %v656 = vld [vmem:[%s602 + $0x134] sm:$0xff]
      %v657 = vld [vmem:[%s602 + $0x13c] sm:$0xff]
      %v658 = vld [vmem:[%s602 + $0x144] sm:$0xff]
      %v659 = vld [vmem:[%s602 + $0x14c] sm:$0xf]
      %v660 = vld [vmem:[%s602 + $0x150] sm:$0xff]
      %v661 = vld [vmem:[%s602 + $0x158] sm:$0xff]
      %v662 = vld [vmem:[%s602 + $0x160] sm:$0xff]
      %v663 = vld [vmem:[%s602 + $0x168] sm:$0xf]
      %v664 = vld [vmem:[%s602 + $0x16c] sm:$0xff]
      %v665 = vld [vmem:[%s602 + $0x174] sm:$0xff]
      %v666 = vld [vmem:[%s602 + $0x17c] sm:$0xff]
      %v667 = vld [vmem:[%s602 + $0x184] sm:$0xf]
      %v668 = vld [vmem:[%s602 + $0x188] sm:$0xff]
      %v669 = vld [vmem:[%s602 + $0x190] sm:$0xff]
      %v670 = vld [vmem:[%s602 + $0x198] sm:$0xff]
      %v671 = vld [vmem:[%s602 + $0x1a0] sm:$0xf]
      %v672 = vld [vmem:[%s602 + $0x1a4] sm:$0xff]
      %v673 = vld [vmem:[%s602 + $0x1ac] sm:$0xff]
      %v674 = vld [vmem:[%s602 + $0x1b4] sm:$0xff]
      %v675 = vld [vmem:[%s602 + $0x1bc] sm:$0xf]
      %v676 = vld [vmem:[%s602 + $0x1c0] sm:$0xff]
      %v677 = vld [vmem:[%s602 + $0x1c8] sm:$0xff]
      %v678 = vld [vmem:[%s602 + $0x1d0] sm:$0xff]
      %v679 = vld [vmem:[%s602 + $0x1d8] sm:$0xf]
      %v680 = vld [vmem:[%s602 + $0x1dc] sm:$0xff]
      %v681 = vld [vmem:[%s602 + $0x1e4] sm:$0xff]
      %v682 = vld [vmem:[%s602 + $0x1ec] sm:$0xff]
      %v683 = vld [vmem:[%s602 + $0x1f4] sm:$0xf]
      %v684 = vld [vmem:[%s602 + $0x1f8] sm:$0xff]
      %v685 = vld [vmem:[%s602 + $0x200] sm:$0xff]
      %v686 = vld [vmem:[%s602 + $0x208] sm:$0xff]
      %v687 = vld [vmem:[%s602 + $0x210] sm:$0xf]
      %v688 = vld [vmem:[%s602 + $0x214] sm:$0xff]
      %v689 = vld [vmem:[%s602 + $0x21c] sm:$0xff]
      %v690 = vld [vmem:[%s602 + $0x224] sm:$0xff]
      %v691 = vld [vmem:[%s602 + $0x22c] sm:$0xf]
      %v692 = vld [vmem:[%s602 + $0x230] sm:$0xff]
      %v693 = vld [vmem:[%s602 + $0x238] sm:$0xff]
      %v694 = vld [vmem:[%s602 + $0x240] sm:$0xff]
      %v695 = vld [vmem:[%s602 + $0x248] sm:$0xf]
      %v696 = vld [vmem:[%s602 + $0x24c] sm:$0xff]
      %v697 = vld [vmem:[%s602 + $0x254] sm:$0xff]
      %v698 = vld [vmem:[%s602 + $0x25c] sm:$0xff]
      %v699 = vld [vmem:[%s602 + $0x264] sm:$0xf]
      %v700 = vld [vmem:[%s602 + $0x268] sm:$0xff]
      %v701 = vld [vmem:[%s602 + $0x270] sm:$0xff]
      %v702 = vld [vmem:[%s602 + $0x278] sm:$0xff]
      %v703 = vld [vmem:[%s602 + $0x280] sm:$0xf]
      %v704 = vld [vmem:[%s602 + $0x284] sm:$0xff]
      %v705 = vld [vmem:[%s602 + $0x28c] sm:$0xff]
      %v706 = vld [vmem:[%s602 + $0x294] sm:$0xff]
      %v707 = vld [vmem:[%s602 + $0x29c] sm:$0xf]
      %v708 = vld [vmem:[%s602 + $0x2a0] sm:$0xff]
      %v709 = vld [vmem:[%s602 + $0x2a8] sm:$0xff]
      %v710 = vld [vmem:[%s602 + $0x2b0] sm:$0xff]
      %v711 = vld [vmem:[%s602 + $0x2b8] sm:$0xf]
      %v712 = vld [vmem:[%s602 + $0x2bc] sm:$0xff]
      %v713 = vld [vmem:[%s602 + $0x2c4] sm:$0xff]
      %v714 = vld [vmem:[%s602 + $0x2cc] sm:$0xff]
      %v715 = vld [vmem:[%s602 + $0x2d4] sm:$0xf]
      %v716 = vld [vmem:[%s602 + $0x2d8] sm:$0xff]
      %v717 = vld [vmem:[%s602 + $0x2e0] sm:$0xff]
      %v718 = vld [vmem:[%s602 + $0x2e8] sm:$0xff]
      %v719 = vld [vmem:[%s602 + $0x2f0] sm:$0xf]
      %v720 = vld [vmem:[%s602 + $0x2f4] sm:$0xff]
      %v721 = vld [vmem:[%s602 + $0x2fc] sm:$0xff]
      %v722 = vld [vmem:[%s602 + $0x304] sm:$0xff]
      %v723 = vld [vmem:[%s602 + $0x30c] sm:$0xf]
      %v724 = vld [vmem:[%s602 + $0x310] sm:$0xff]
      %v725 = vld [vmem:[%s602 + $0x318] sm:$0xff]
      %v726 = vld [vmem:[%s602 + $0x320] sm:$0xff]
      %v727 = vld [vmem:[%s602 + $0x328] sm:$0xf]
      %v728 = vld [vmem:[%s602 + $0x32c] sm:$0xff]
      %v729 = vld [vmem:[%s602 + $0x334] sm:$0xff]
      %v730 = vld [vmem:[%s602 + $0x33c] sm:$0xff]
      %v731 = vld [vmem:[%s602 + $0x344] sm:$0xf]
      %v732 = vld [vmem:[%s602 + $0x348] sm:$0xff]
      %v733 = vld [vmem:[%s602 + $0x350] sm:$0xff]
      %v734 = vld [vmem:[%s602 + $0x358] sm:$0xff]
      %v735 = vld [vmem:[%s602 + $0x360] sm:$0xf]
      %v736 = vld [vmem:[%s602 + $0x364] sm:$0xff]
      %v737 = vld [vmem:[%s602 + $0x36c] sm:$0xff]
      %v738 = vld [vmem:[%s602 + $0x374] sm:$0xff]
      %v739 = vld [vmem:[%s602 + $0x37c] sm:$0xf]
      %v740 = vld [vmem:[%s1] sm:$0xff]
      %v741 = vld [vmem:[%s1 + $0x8] sm:$0xff]
      %v742 = vld [vmem:[%s1 + $0x10] sm:$0xff]
      %v743 = vld [vmem:[%s1 + $0x18] sm:$0xff]
      %v744 = vld [vmem:[%s1 + $0x20] sm:$0xff]
      %v745 = vld [vmem:[%s1 + $0x28] sm:$0xff]
      %v746 = vld [vmem:[%s1 + $0x30] sm:$0xff]
      %v747 = vld [vmem:[%s1 + $0x38] sm:$0xff]
      %v748 = vld [vmem:[%s1 + $0x40] sm:$0xff]
      %v749 = vld [vmem:[%s1 + $0x48] sm:$0xff]
      %v750 = vld [vmem:[%s1 + $0x50] sm:$0xff]
      %v751 = vld [vmem:[%s1 + $0x58] sm:$0xff]
      %v752 = vld [vmem:[%s1 + $0x60] sm:$0xff]
      %v753 = vld [vmem:[%s1 + $0x68] sm:$0xff]
      %v754 = vld [vmem:[%s1 + $0x70] sm:$0xff]
      %v755 = vld [vmem:[%s1 + $0x78] sm:$0xff]
      %v756 = vld [vmem:[%s1 + $0x80] sm:$0xff]
      %v757 = vld [vmem:[%s1 + $0x88] sm:$0xff]
      %v758 = vld [vmem:[%s1 + $0x90] sm:$0xff]
      %v759 = vld [vmem:[%s1 + $0x98] sm:$0xff]
      %v760 = vld [vmem:[%s1 + $0xa0] sm:$0xff]
      %v761 = vld [vmem:[%s1 + $0xa8] sm:$0xff]
      %v762 = vld [vmem:[%s1 + $0xb0] sm:$0xff]
      %v763 = vld [vmem:[%s1 + $0xb8] sm:$0xff]
      %v764 = vld [vmem:[%s1 + $0xc0] sm:$0xff]
      %v765 = vld [vmem:[%s1 + $0xc8] sm:$0xff]
      %v766 = vld [vmem:[%s1 + $0xd0] sm:$0xff]
      %v767 = vld [vmem:[%s1 + $0xd8] sm:$0xff]
      %v768 = vld [vmem:[%s1 + $0xe0] sm:$0xff]
      %v769 = vld [vmem:[%s1 + $0xe8] sm:$0xff]
      %v770 = vld [vmem:[%s1 + $0xf0] sm:$0xff]
      %v771 = vld [vmem:[%s1 + $0xf8] sm:$0xff]
      %v772 = vld [vmem:[%s1 + $0x100] sm:$0xff]
      %v773 = vld [vmem:[%s1 + $0x108] sm:$0xff]
      %v774 = vld [vmem:[%s1 + $0x110] sm:$0xff]
      %v775 = vld [vmem:[%s1 + $0x118] sm:$0xff]
      %v776 = vld [vmem:[%s1 + $0x120] sm:$0xff]
      %v777 = vld [vmem:[%s1 + $0x128] sm:$0xff]
      %v778 = vld [vmem:[%s1 + $0x130] sm:$0xff]
      %v779 = vld [vmem:[%s1 + $0x138] sm:$0xff]
      %v780 = vld [vmem:[%s1 + $0x140] sm:$0xff]
      %v781 = vld [vmem:[%s1 + $0x148] sm:$0xff]
      %v782 = vld [vmem:[%s1 + $0x150] sm:$0xff]
      %v783 = vld [vmem:[%s1 + $0x158] sm:$0xff]
      %v784 = vld [vmem:[%s1 + $0x160] sm:$0xff]
      %v785 = vld [vmem:[%s1 + $0x168] sm:$0xff]
      %v786 = vld [vmem:[%s1 + $0x170] sm:$0xff]
      %v787 = vld [vmem:[%s1 + $0x178] sm:$0xff]
      %v788 = vld [vmem:[%s1 + $0x180] sm:$0xff]
      %v789 = vld [vmem:[%s1 + $0x188] sm:$0xff]
      %v790 = vld [vmem:[%s1 + $0x190] sm:$0xff]
      %v791 = vld [vmem:[%s1 + $0x198] sm:$0xff]
      %v792 = vld [vmem:[%s1 + $0x1a0] sm:$0xff]
      %v793 = vld [vmem:[%s1 + $0x1a8] sm:$0xff]
      %v794 = vld [vmem:[%s1 + $0x1b0] sm:$0xff]
      %v795 = vld [vmem:[%s1 + $0x1b8] sm:$0xff]
      %v796 = vld [vmem:[%s1 + $0x1c0] sm:$0xff]
      %v797 = vld [vmem:[%s1 + $0x1c8] sm:$0xff]
      %v798 = vld [vmem:[%s1 + $0x1d0] sm:$0xff]
      %v799 = vld [vmem:[%s1 + $0x1d8] sm:$0xff]
      %v800 = vld [vmem:[%s1 + $0x1e0] sm:$0xff]
      %v801 = vld [vmem:[%s1 + $0x1e8] sm:$0xff]
      %v802 = vld [vmem:[%s1 + $0x1f0] sm:$0xff]
      %v803 = vld [vmem:[%s1 + $0x1f8] sm:$0xff]
      %v804 = vld [vmem:[%s1 + $0x200] sm:$0xff]
      %v805 = vld [vmem:[%s1 + $0x208] sm:$0xff]
      %v806 = vld [vmem:[%s1 + $0x210] sm:$0xff]
      %v807 = vld [vmem:[%s1 + $0x218] sm:$0xff]
      %v808 = vld [vmem:[%s1 + $0x220] sm:$0xff]
      %v809 = vld [vmem:[%s1 + $0x228] sm:$0xff]
      %v810 = vld [vmem:[%s1 + $0x230] sm:$0xff]
      %v811 = vld [vmem:[%s1 + $0x238] sm:$0xff]
      %v812 = vld [vmem:[%s1 + $0x240] sm:$0xff]
      %v813 = vld [vmem:[%s1 + $0x248] sm:$0xff]
      %v814 = vld [vmem:[%s1 + $0x250] sm:$0xff]
      %v815 = vld [vmem:[%s1 + $0x258] sm:$0xff]
      %v816 = vld [vmem:[%s1 + $0x260] sm:$0xff]
      %v817 = vld [vmem:[%s1 + $0x268] sm:$0xff]
      %v818 = vld [vmem:[%s1 + $0x270] sm:$0xff]
      %v819 = vld [vmem:[%s1 + $0x278] sm:$0xff]
      %v820 = vld [vmem:[%s1 + $0x280] sm:$0xff]
      %v821 = vld [vmem:[%s1 + $0x288] sm:$0xff]
      %v822 = vld [vmem:[%s1 + $0x290] sm:$0xff]
      %v823 = vld [vmem:[%s1 + $0x298] sm:$0xff]
      %v824 = vld [vmem:[%s1 + $0x2a0] sm:$0xff]
      %v825 = vld [vmem:[%s1 + $0x2a8] sm:$0xff]
      %v826 = vld [vmem:[%s1 + $0x2b0] sm:$0xff]
      %v827 = vld [vmem:[%s1 + $0x2b8] sm:$0xff]
      %v828 = vld [vmem:[%s1 + $0x2c0] sm:$0xff]
      %v829 = vld [vmem:[%s1 + $0x2c8] sm:$0xff]
      %v830 = vld [vmem:[%s1 + $0x2d0] sm:$0xff]
      %v831 = vld [vmem:[%s1 + $0x2d8] sm:$0xff]
      %v832 = vld [vmem:[%s1 + $0x2e0] sm:$0xff]
      %v833 = vld [vmem:[%s1 + $0x2e8] sm:$0xff]
      %v834 = vld [vmem:[%s1 + $0x2f0] sm:$0xff]
      %v835 = vld [vmem:[%s1 + $0x2f8] sm:$0xff]
      %v836 = vld [vmem:[%s1 + $0x300] sm:$0xff]
      %v837 = vld [vmem:[%s1 + $0x308] sm:$0xff]
      %v838 = vld [vmem:[%s1 + $0x310] sm:$0xff]
      %v839 = vld [vmem:[%s1 + $0x318] sm:$0xff]
      %v840 = vld [vmem:[%s1 + $0x320] sm:$0xff]
      %v841 = vld [vmem:[%s1 + $0x328] sm:$0xff]
      %v842 = vld [vmem:[%s1 + $0x330] sm:$0xff]
      %v843 = vld [vmem:[%s1 + $0x338] sm:$0xff]
      %v844 = vld [vmem:[%s1 + $0x340] sm:$0xff]
      %v845 = vld [vmem:[%s1 + $0x348] sm:$0xff]
      %v846 = vld [vmem:[%s1 + $0x350] sm:$0xff]
      %v847 = vld [vmem:[%s1 + $0x358] sm:$0xff]
      %v848 = vld [vmem:[%s1 + $0x360] sm:$0xff]
      %v849 = vld [vmem:[%s1 + $0x368] sm:$0xff]
      %v850 = vld [vmem:[%s1 + $0x370] sm:$0xff]
      %v851 = vld [vmem:[%s1 + $0x378] sm:$0xff]
      %v852 = vld [vmem:[%s1 + $0x380] sm:$0xff]
      %v853 = vld [vmem:[%s1 + $0x388] sm:$0xff]
      %v854 = vld [vmem:[%s1 + $0x390] sm:$0xff]
      %v855 = vld [vmem:[%s1 + $0x398] sm:$0xff]
      %v856 = vld [vmem:[%s1 + $0x3a0] sm:$0xff]
      %v857 = vld [vmem:[%s1 + $0x3a8] sm:$0xff]
      %v858 = vld [vmem:[%s1 + $0x3b0] sm:$0xff]
      %v859 = vld [vmem:[%s1 + $0x3b8] sm:$0xff]
      %v860 = vld [vmem:[%s1 + $0x3c0] sm:$0xff]
      %v861 = vld [vmem:[%s1 + $0x3c8] sm:$0xff]
      %v862 = vld [vmem:[%s1 + $0x3d0] sm:$0xff]
      %v863 = vld [vmem:[%s1 + $0x3d8] sm:$0xff]
      %v864 = vld [vmem:[%s1 + $0x3e0] sm:$0xff]
      %v865 = vld [vmem:[%s1 + $0x3e8] sm:$0xff]
      %v866 = vld [vmem:[%s1 + $0x3f0] sm:$0xff]
      %v867 = vld [vmem:[%s1 + $0x3f8] sm:$0xff]
      %v868 = vld [vmem:[%s1 + $0x400] sm:$0xff]
      %v869 = vld [vmem:[%s1 + $0x408] sm:$0xff]
      %v870 = vld [vmem:[%s1 + $0x410] sm:$0xff]
      %v871 = vld [vmem:[%s1 + $0x418] sm:$0xff]
      %v872 = vld [vmem:[%s1 + $0x420] sm:$0xff]
      %v873 = vld [vmem:[%s1 + $0x428] sm:$0xff]
      %v874 = vld [vmem:[%s1 + $0x430] sm:$0xff]
      %v875 = vld [vmem:[%s1 + $0x438] sm:$0xff]
      %v876 = vld [vmem:[%s1 + $0x440] sm:$0xff]
      %v877 = vld [vmem:[%s1 + $0x448] sm:$0xff]
      %v878 = vld [vmem:[%s1 + $0x450] sm:$0xff]
      %v879 = vld [vmem:[%s1 + $0x458] sm:$0xff]
      %v880 = vld [vmem:[%s1 + $0x460] sm:$0xff]
      %v881 = vld [vmem:[%s1 + $0x468] sm:$0xff]
      %v882 = vld [vmem:[%s1 + $0x470] sm:$0xff]
      %v883 = vld [vmem:[%s1 + $0x478] sm:$0xff]
      %v884 = vld [vmem:[%s1 + $0x480] sm:$0xff]
      %v885 = vld [vmem:[%s1 + $0x488] sm:$0xff]
      %v886 = vld [vmem:[%s1 + $0x490] sm:$0xff]
      %v887 = vld [vmem:[%s1 + $0x498] sm:$0xff]
      %v888 = vld [vmem:[%s1 + $0x4a0] sm:$0xff]
      %v889 = vld [vmem:[%s1 + $0x4a8] sm:$0xff]
      %v890 = vld [vmem:[%s1 + $0x4b0] sm:$0xff]
      %v891 = vld [vmem:[%s1 + $0x4b8] sm:$0xff]
      %v892 = vld [vmem:[%s1 + $0x4c0] sm:$0xff]
      %v893 = vld [vmem:[%s1 + $0x4c8] sm:$0xff]
      %v894 = vld [vmem:[%s1 + $0x4d0] sm:$0xff]
      %v895 = vld [vmem:[%s1 + $0x4d8] sm:$0xff]
      %v896 = vld [vmem:[%s1 + $0x4e0] sm:$0xff]
      %v897 = vld [vmem:[%s1 + $0x4e8] sm:$0xff]
      %v898 = vld [vmem:[%s1 + $0x4f0] sm:$0xff]
      %v899 = vld [vmem:[%s1 + $0x4f8] sm:$0xff]
      %v900 = vld [vmem:[%s1 + $0x500] sm:$0xff]
      %v901 = vld [vmem:[%s1 + $0x508] sm:$0xff]
      %v902 = vld [vmem:[%s1 + $0x510] sm:$0xff]
      %v903 = vld [vmem:[%s1 + $0x518] sm:$0xff]
      %v904 = vld [vmem:[%s1 + $0x520] sm:$0xff]
      %v905 = vld [vmem:[%s1 + $0x528] sm:$0xff]
      %v906 = vld [vmem:[%s1 + $0x530] sm:$0xff]
      %v907 = vld [vmem:[%s1 + $0x538] sm:$0xff]
      %v908 = vld [vmem:[%s1 + $0x540] sm:$0xff]
      %v909 = vld [vmem:[%s1 + $0x548] sm:$0xff]
      %v910 = vld [vmem:[%s1 + $0x550] sm:$0xff]
      %v911 = vld [vmem:[%s1 + $0x558] sm:$0xff]
      %v912 = vld [vmem:[%s1 + $0x560] sm:$0xff]
      %v913 = vld [vmem:[%s1 + $0x568] sm:$0xff]
      %v914 = vld [vmem:[%s1 + $0x570] sm:$0xff]
      %v915 = vld [vmem:[%s1 + $0x578] sm:$0xff]
      %v916 = vld [vmem:[%s1 + $0x580] sm:$0xff]
      %v917 = vld [vmem:[%s1 + $0x588] sm:$0xff]
      %v918 = vld [vmem:[%s1 + $0x590] sm:$0xff]
      %v919 = vld [vmem:[%s1 + $0x598] sm:$0xff]
      %v920 = vld [vmem:[%s1 + $0x5a0] sm:$0xff]
      %v921 = vld [vmem:[%s1 + $0x5a8] sm:$0xff]
      %v922 = vld [vmem:[%s1 + $0x5b0] sm:$0xff]
      %v923 = vld [vmem:[%s1 + $0x5b8] sm:$0xff]
      %v924 = vld [vmem:[%s1 + $0x5c0] sm:$0xff]
      %v925 = vld [vmem:[%s1 + $0x5c8] sm:$0xff]
      %v926 = vld [vmem:[%s1 + $0x5d0] sm:$0xff]
      %v927 = vld [vmem:[%s1 + $0x5d8] sm:$0xff]
      %v928 = vld [vmem:[%s1 + $0x5e0] sm:$0xff]
      %v929 = vld [vmem:[%s1 + $0x5e8] sm:$0xff]
      %v930 = vld [vmem:[%s1 + $0x5f0] sm:$0xff]
      %v931 = vld [vmem:[%s1 + $0x5f8] sm:$0xff]
      %v932 = vld [vmem:[%s1 + $0x600] sm:$0xff]
      %v933 = vld [vmem:[%s1 + $0x608] sm:$0xff]
      %v934 = vld [vmem:[%s1 + $0x610] sm:$0xff]
      %v935 = vld [vmem:[%s1 + $0x618] sm:$0xff]
      %v936 = vld [vmem:[%s2] sm:$0xf]
      %v938 = vlaneseq
      %v939 = vshrl.u32 %v938, 7
      %v940 = vsub.s32 0, %v939
      %v941 = vrot.slane %v936, %v940
      %v942 = vlaneseq
      %v943 = vshrl.u32 %v942, 7
      %v944 = vsub.s32 1, %v943
      %v945 = vrot.slane %v936, %v944
      %v946 = vlaneseq
      %v947 = vshrl.u32 %v946, 7
      %v948 = vsub.s32 2, %v947
      %v949 = vrot.slane %v936, %v948
      %v950 = vlaneseq
      %v951 = vshrl.u32 %v950, 7
      %v952 = vsub.s32 3, %v951
      %v953 = vrot.slane %v936, %v952
      %v1086 = vunpack.c.l.b16 %v612
      %v1087 = vunpack.c.h.b16 %v612
      %v1088 = vunpack.c.l.b16 %v613
      %v1089 = vunpack.c.h.b16 %v613
      %v1090 = vunpack.c.l.b16 %v614
      %v1091 = vunpack.c.h.b16 %v614
      %v1092 = vunpack.c.l.b16 %v615
      %v1093 = vunpack.c.l.b16 %v616
      %v1094 = vunpack.c.h.b16 %v616
      %v1095 = vunpack.c.l.b16 %v617
      %v1096 = vunpack.c.h.b16 %v617
      %v1097 = vunpack.c.l.b16 %v618
      %v1098 = vunpack.c.h.b16 %v618
      %v1099 = vunpack.c.l.b16 %v619
      %v1100 = vunpack.c.l.b16 %v620
      %v1101 = vunpack.c.h.b16 %v620
      %v1102 = vunpack.c.l.b16 %v621
      %v1103 = vunpack.c.h.b16 %v621
      %v1104 = vunpack.c.l.b16 %v622
      %v1105 = vunpack.c.h.b16 %v622
      %v1106 = vunpack.c.l.b16 %v623
      %v1107 = vunpack.c.l.b16 %v624
      %v1108 = vunpack.c.h.b16 %v624
      %v1109 = vunpack.c.l.b16 %v625
      %v1110 = vunpack.c.h.b16 %v625
      %v1111 = vunpack.c.l.b16 %v626
      %v1112 = vunpack.c.h.b16 %v626
      %v1113 = vunpack.c.l.b16 %v627
      %v1114 = vunpack.c.l.b16 %v628
      %v1115 = vunpack.c.h.b16 %v628
      %v1116 = vunpack.c.l.b16 %v629
      %v1117 = vunpack.c.h.b16 %v629
      %v1118 = vunpack.c.l.b16 %v630
      %v1119 = vunpack.c.h.b16 %v630
      %v1120 = vunpack.c.l.b16 %v631
      %v1121 = vunpack.c.l.b16 %v632
      %v1122 = vunpack.c.h.b16 %v632
      %v1123 = vunpack.c.l.b16 %v633
      %v1124 = vunpack.c.h.b16 %v633
      %v1125 = vunpack.c.l.b16 %v634
      %v1126 = vunpack.c.h.b16 %v634
      %v1127 = vunpack.c.l.b16 %v635
      %v1128 = vunpack.c.l.b16 %v636
      %v1129 = vunpack.c.h.b16 %v636
      %v1130 = vunpack.c.l.b16 %v637
      %v1131 = vunpack.c.h.b16 %v637
      %v1132 = vunpack.c.l.b16 %v638
      %v1133 = vunpack.c.h.b16 %v638
      %v1134 = vunpack.c.l.b16 %v639
      %v1135 = vunpack.c.l.b16 %v640
      %v1136 = vunpack.c.h.b16 %v640
      %v1137 = vunpack.c.l.b16 %v641
      %v1138 = vunpack.c.h.b16 %v641
      %v1139 = vunpack.c.l.b16 %v642
      %v1140 = vunpack.c.h.b16 %v642
      %v1141 = vunpack.c.l.b16 %v643
      %v1142 = vunpack.c.l.b16 %v644
      %v1143 = vunpack.c.h.b16 %v644
      %v1144 = vunpack.c.l.b16 %v645
      %v1145 = vunpack.c.h.b16 %v645
      %v1146 = vunpack.c.l.b16 %v646
      %v1147 = vunpack.c.h.b16 %v646
      %v1148 = vunpack.c.l.b16 %v647
      %v1149 = vunpack.c.l.b16 %v648
      %v1150 = vunpack.c.h.b16 %v648
      %v1151 = vunpack.c.l.b16 %v649
      %v1152 = vunpack.c.h.b16 %v649
      %v1153 = vunpack.c.l.b16 %v650
      %v1154 = vunpack.c.h.b16 %v650
      %v1155 = vunpack.c.l.b16 %v651
      %v1156 = vunpack.c.l.b16 %v652
      %v1157 = vunpack.c.h.b16 %v652
      %v1158 = vunpack.c.l.b16 %v653
      %v1159 = vunpack.c.h.b16 %v653
      %v1160 = vunpack.c.l.b16 %v654
      %v1161 = vunpack.c.h.b16 %v654
      %v1162 = vunpack.c.l.b16 %v655
      %v1163 = vunpack.c.l.b16 %v656
      %v1164 = vunpack.c.h.b16 %v656
      %v1165 = vunpack.c.l.b16 %v657
      %v1166 = vunpack.c.h.b16 %v657
      %v1167 = vunpack.c.l.b16 %v658
      %v1168 = vunpack.c.h.b16 %v658
      %v1169 = vunpack.c.l.b16 %v659
      %v1170 = vunpack.c.l.b16 %v660
      %v1171 = vunpack.c.h.b16 %v660
      %v1172 = vunpack.c.l.b16 %v661
      %v1173 = vunpack.c.h.b16 %v661
      %v1174 = vunpack.c.l.b16 %v662
      %v1175 = vunpack.c.h.b16 %v662
      %v1176 = vunpack.c.l.b16 %v663
      %v1177 = vunpack.c.l.b16 %v664
      %v1178 = vunpack.c.h.b16 %v664
      %v1179 = vunpack.c.l.b16 %v665
      %v1180 = vunpack.c.h.b16 %v665
      %v1181 = vunpack.c.l.b16 %v666
      %v1182 = vunpack.c.h.b16 %v666
      %v1183 = vunpack.c.l.b16 %v667
      %v1184 = vunpack.c.l.b16 %v668
      %v1185 = vunpack.c.h.b16 %v668
      %v1186 = vunpack.c.l.b16 %v669
      %v1187 = vunpack.c.h.b16 %v669
      %v1188 = vunpack.c.l.b16 %v670
      %v1189 = vunpack.c.h.b16 %v670
      %v1190 = vunpack.c.l.b16 %v671
      %v1191 = vunpack.c.l.b16 %v672
      %v1192 = vunpack.c.h.b16 %v672
      %v1193 = vunpack.c.l.b16 %v673
      %v1194 = vunpack.c.h.b16 %v673
      %v1195 = vunpack.c.l.b16 %v674
      %v1196 = vunpack.c.h.b16 %v674
      %v1197 = vunpack.c.l.b16 %v675
      %v1198 = vunpack.c.l.b16 %v676
      %v1199 = vunpack.c.h.b16 %v676
      %v1200 = vunpack.c.l.b16 %v677
      %v1201 = vunpack.c.h.b16 %v677
      %v1202 = vunpack.c.l.b16 %v678
      %v1203 = vunpack.c.h.b16 %v678
      %v1204 = vunpack.c.l.b16 %v679
      %v1205 = vunpack.c.l.b16 %v680
      %v1206 = vunpack.c.h.b16 %v680
      %v1207 = vunpack.c.l.b16 %v681
      %v1208 = vunpack.c.h.b16 %v681
      %v1209 = vunpack.c.l.b16 %v682
      %v1210 = vunpack.c.h.b16 %v682
      %v1211 = vunpack.c.l.b16 %v683
      %v1212 = vunpack.c.l.b16 %v684
      %v1213 = vunpack.c.h.b16 %v684
      %v1214 = vunpack.c.l.b16 %v685
      %v1215 = vunpack.c.h.b16 %v685
      %v1216 = vunpack.c.l.b16 %v686
      %v1217 = vunpack.c.h.b16 %v686
      %v1218 = vunpack.c.l.b16 %v687
      %v1219 = vunpack.c.l.b16 %v688
      %v1220 = vunpack.c.h.b16 %v688
      %v1221 = vunpack.c.l.b16 %v689
      %v1222 = vunpack.c.h.b16 %v689
      %v1223 = vunpack.c.l.b16 %v690
      %v1224 = vunpack.c.h.b16 %v690
      %v1225 = vunpack.c.l.b16 %v691
      %v1226 = vunpack.c.l.b16 %v692
      %v1227 = vunpack.c.h.b16 %v692
      %v1228 = vunpack.c.l.b16 %v693
      %v1229 = vunpack.c.h.b16 %v693
      %v1230 = vunpack.c.l.b16 %v694
      %v1231 = vunpack.c.h.b16 %v694
      %v1232 = vunpack.c.l.b16 %v695
      %v1233 = vunpack.c.l.b16 %v696
      %v1234 = vunpack.c.h.b16 %v696
      %v1235 = vunpack.c.l.b16 %v697
      %v1236 = vunpack.c.h.b16 %v697
      %v1237 = vunpack.c.l.b16 %v698
      %v1238 = vunpack.c.h.b16 %v698
      %v1239 = vunpack.c.l.b16 %v699
      %v1240 = vunpack.c.l.b16 %v700
      %v1241 = vunpack.c.h.b16 %v700
      %v1242 = vunpack.c.l.b16 %v701
      %v1243 = vunpack.c.h.b16 %v701
      %v1244 = vunpack.c.l.b16 %v702
      %v1245 = vunpack.c.h.b16 %v702
      %v1246 = vunpack.c.l.b16 %v703
      %v1247 = vunpack.c.l.b16 %v704
      %v1248 = vunpack.c.h.b16 %v704
      %v1249 = vunpack.c.l.b16 %v705
      %v1250 = vunpack.c.h.b16 %v705
      %v1251 = vunpack.c.l.b16 %v706
      %v1252 = vunpack.c.h.b16 %v706
      %v1253 = vunpack.c.l.b16 %v707
      %v1254 = vunpack.c.l.b16 %v708
      %v1255 = vunpack.c.h.b16 %v708
      %v1256 = vunpack.c.l.b16 %v709
      %v1257 = vunpack.c.h.b16 %v709
      %v1258 = vunpack.c.l.b16 %v710
      %v1259 = vunpack.c.h.b16 %v710
      %v1260 = vunpack.c.l.b16 %v711
      %v1261 = vunpack.c.l.b16 %v712
      %v1262 = vunpack.c.h.b16 %v712
      %v1263 = vunpack.c.l.b16 %v713
      %v1264 = vunpack.c.h.b16 %v713
      %v1265 = vunpack.c.l.b16 %v714
      %v1266 = vunpack.c.h.b16 %v714
      %v1267 = vunpack.c.l.b16 %v715
      %v1268 = vunpack.c.l.b16 %v716
      %v1269 = vunpack.c.h.b16 %v716
      %v1270 = vunpack.c.l.b16 %v717
      %v1271 = vunpack.c.h.b16 %v717
      %v1272 = vunpack.c.l.b16 %v718
      %v1273 = vunpack.c.h.b16 %v718
      %v1274 = vunpack.c.l.b16 %v719
      %v1275 = vunpack.c.l.b16 %v720
      %v1276 = vunpack.c.h.b16 %v720
      %v1277 = vunpack.c.l.b16 %v721
      %v1278 = vunpack.c.h.b16 %v721
      %v1279 = vunpack.c.l.b16 %v722
      %v1280 = vunpack.c.h.b16 %v722
      %v1281 = vunpack.c.l.b16 %v723
      %v1282 = vunpack.c.l.b16 %v724
      %v1283 = vunpack.c.h.b16 %v724
      %v1284 = vunpack.c.l.b16 %v725
      %v1285 = vunpack.c.h.b16 %v725
      %v1286 = vunpack.c.l.b16 %v726
      %v1287 = vunpack.c.h.b16 %v726
      %v1288 = vunpack.c.l.b16 %v727
      %v1289 = vunpack.c.l.b16 %v728
      %v1290 = vunpack.c.h.b16 %v728
      %v1291 = vunpack.c.l.b16 %v729
      %v1292 = vunpack.c.h.b16 %v729
      %v1293 = vunpack.c.l.b16 %v730
      %v1294 = vunpack.c.h.b16 %v730
      %v1295 = vunpack.c.l.b16 %v731
      %v1296 = vunpack.c.l.b16 %v732
      %v1297 = vunpack.c.h.b16 %v732
      %v1298 = vunpack.c.l.b16 %v733
      %v1299 = vunpack.c.h.b16 %v733
      %v1300 = vunpack.c.l.b16 %v734
      %v1301 = vunpack.c.h.b16 %v734
      %v1302 = vunpack.c.l.b16 %v735
      %v1303 = vunpack.c.l.b16 %v736
      %v1304 = vunpack.c.h.b16 %v736
      %v1305 = vunpack.c.l.b16 %v737
      %v1306 = vunpack.c.h.b16 %v737
      %v1307 = vunpack.c.l.b16 %v738
      %v1308 = vunpack.c.h.b16 %v738
      %v1309 = vunpack.c.l.b16 %v739
      %v1310 = vpack.c.b16 %v1093, %v1086
      %v1311 = vpack.c.b16 %v1094, %v1087
      %v1312 = vpack.c.b16 %v1095, %v1088
      %v1313 = vpack.c.b16 %v1096, %v1089
      %v1314 = vpack.c.b16 %v1097, %v1090
      %v1315 = vpack.c.b16 %v1098, %v1091
      %v1316 = vpack.c.b16 %v1099, %v1092
      %v1317 = vpack.c.b16 %v1107, %v1100
      %v1318 = vpack.c.b16 %v1108, %v1101
      %v1319 = vpack.c.b16 %v1109, %v1102
      %v1320 = vpack.c.b16 %v1110, %v1103
      %v1321 = vpack.c.b16 %v1111, %v1104
      %v1322 = vpack.c.b16 %v1112, %v1105
      %v1323 = vpack.c.b16 %v1113, %v1106
      %v1324 = vpack.c.b16 %v1121, %v1114
      %v1325 = vpack.c.b16 %v1122, %v1115
      %v1326 = vpack.c.b16 %v1123, %v1116
      %v1327 = vpack.c.b16 %v1124, %v1117
      %v1328 = vpack.c.b16 %v1125, %v1118
      %v1329 = vpack.c.b16 %v1126, %v1119
      %v1330 = vpack.c.b16 %v1127, %v1120
      %v1331 = vpack.c.b16 %v1135, %v1128
      %v1332 = vpack.c.b16 %v1136, %v1129
      %v1333 = vpack.c.b16 %v1137, %v1130
      %v1334 = vpack.c.b16 %v1138, %v1131
      %v1335 = vpack.c.b16 %v1139, %v1132
      %v1336 = vpack.c.b16 %v1140, %v1133
      %v1337 = vpack.c.b16 %v1141, %v1134
      %v1338 = vpack.c.b16 %v1149, %v1142
      %v1339 = vpack.c.b16 %v1150, %v1143
      %v1340 = vpack.c.b16 %v1151, %v1144
      %v1341 = vpack.c.b16 %v1152, %v1145
      %v1342 = vpack.c.b16 %v1153, %v1146
      %v1343 = vpack.c.b16 %v1154, %v1147
      %v1344 = vpack.c.b16 %v1155, %v1148
      %v1345 = vpack.c.b16 %v1163, %v1156
      %v1346 = vpack.c.b16 %v1164, %v1157
      %v1347 = vpack.c.b16 %v1165, %v1158
      %v1348 = vpack.c.b16 %v1166, %v1159
      %v1349 = vpack.c.b16 %v1167, %v1160
      %v1350 = vpack.c.b16 %v1168, %v1161
      %v1351 = vpack.c.b16 %v1169, %v1162
      %v1352 = vpack.c.b16 %v1177, %v1170
      %v1353 = vpack.c.b16 %v1178, %v1171
      %v1354 = vpack.c.b16 %v1179, %v1172
      %v1355 = vpack.c.b16 %v1180, %v1173
      %v1356 = vpack.c.b16 %v1181, %v1174
      %v1357 = vpack.c.b16 %v1182, %v1175
      %v1358 = vpack.c.b16 %v1183, %v1176
      %v1359 = vpack.c.b16 %v1191, %v1184
      %v1360 = vpack.c.b16 %v1192, %v1185
      %v1361 = vpack.c.b16 %v1193, %v1186
      %v1362 = vpack.c.b16 %v1194, %v1187
      %v1363 = vpack.c.b16 %v1195, %v1188
      %v1364 = vpack.c.b16 %v1196, %v1189
      %v1365 = vpack.c.b16 %v1197, %v1190
      %v1366 = vpack.c.b16 %v1205, %v1198
      %v1367 = vpack.c.b16 %v1206, %v1199
      %v1368 = vpack.c.b16 %v1207, %v1200
      %v1369 = vpack.c.b16 %v1208, %v1201
      %v1370 = vpack.c.b16 %v1209, %v1202
      %v1371 = vpack.c.b16 %v1210, %v1203
      %v1372 = vpack.c.b16 %v1211, %v1204
      %v1373 = vpack.c.b16 %v1219, %v1212
      %v1374 = vpack.c.b16 %v1220, %v1213
      %v1375 = vpack.c.b16 %v1221, %v1214
      %v1376 = vpack.c.b16 %v1222, %v1215
      %v1377 = vpack.c.b16 %v1223, %v1216
      %v1378 = vpack.c.b16 %v1224, %v1217
      %v1379 = vpack.c.b16 %v1225, %v1218
      %v1380 = vpack.c.b16 %v1233, %v1226
      %v1381 = vpack.c.b16 %v1234, %v1227
      %v1382 = vpack.c.b16 %v1235, %v1228
      %v1383 = vpack.c.b16 %v1236, %v1229
      %v1384 = vpack.c.b16 %v1237, %v1230
      %v1385 = vpack.c.b16 %v1238, %v1231
      %v1386 = vpack.c.b16 %v1239, %v1232
      %v1387 = vpack.c.b16 %v1247, %v1240
      %v1388 = vpack.c.b16 %v1248, %v1241
      %v1389 = vpack.c.b16 %v1249, %v1242
      %v1390 = vpack.c.b16 %v1250, %v1243
      %v1391 = vpack.c.b16 %v1251, %v1244
      %v1392 = vpack.c.b16 %v1252, %v1245
      %v1393 = vpack.c.b16 %v1253, %v1246
      %v1394 = vpack.c.b16 %v1261, %v1254
      %v1395 = vpack.c.b16 %v1262, %v1255
      %v1396 = vpack.c.b16 %v1263, %v1256
      %v1397 = vpack.c.b16 %v1264, %v1257
      %v1398 = vpack.c.b16 %v1265, %v1258
      %v1399 = vpack.c.b16 %v1266, %v1259
      %v1400 = vpack.c.b16 %v1267, %v1260
      %v1401 = vpack.c.b16 %v1275, %v1268
      %v1402 = vpack.c.b16 %v1276, %v1269
      %v1403 = vpack.c.b16 %v1277, %v1270
      %v1404 = vpack.c.b16 %v1278, %v1271
      %v1405 = vpack.c.b16 %v1279, %v1272
      %v1406 = vpack.c.b16 %v1280, %v1273
      %v1407 = vpack.c.b16 %v1281, %v1274
      %v1408 = vpack.c.b16 %v1289, %v1282
      %v1409 = vpack.c.b16 %v1290, %v1283
      %v1410 = vpack.c.b16 %v1291, %v1284
      %v1411 = vpack.c.b16 %v1292, %v1285
      %v1412 = vpack.c.b16 %v1293, %v1286
      %v1413 = vpack.c.b16 %v1294, %v1287
      %v1414 = vpack.c.b16 %v1295, %v1288
      %v1415 = vpack.c.b16 %v1303, %v1296
      %v1416 = vpack.c.b16 %v1304, %v1297
      %v1417 = vpack.c.b16 %v1305, %v1298
      %v1418 = vpack.c.b16 %v1306, %v1299
      %v1419 = vpack.c.b16 %v1307, %v1300
      %v1420 = vpack.c.b16 %v1308, %v1301
      %v1421 = vpack.c.b16 %v1309, %v1302
      %v1714 = vunpack.c.l.b16 %v740
      %v1715 = vunpack.c.h.b16 %v740
      %v1716 = vunpack.c.l.b16 %v741
      %v1717 = vunpack.c.h.b16 %v741
      %v1718 = vunpack.c.l.b16 %v742
      %v1719 = vunpack.c.h.b16 %v742
      %v1720 = vunpack.c.l.b16 %v743
      %v1721 = vunpack.c.h.b16 %v743
      %v1722 = vunpack.c.l.b16 %v744
      %v1723 = vunpack.c.h.b16 %v744
      %v1724 = vunpack.c.l.b16 %v745
      %v1725 = vunpack.c.h.b16 %v745
      %v1726 = vunpack.c.l.b16 %v746
      %v1727 = vunpack.c.h.b16 %v746
      %v1728 = vunpack.c.l.b16 %v747
      %v1729 = vunpack.c.h.b16 %v747
      %v1730 = vunpack.c.l.b16 %v748
      %v1731 = vunpack.c.h.b16 %v748
      %v1732 = vunpack.c.l.b16 %v749
      %v1733 = vunpack.c.h.b16 %v749
      %v1734 = vunpack.c.l.b16 %v750
      %v1735 = vunpack.c.h.b16 %v750
      %v1736 = vunpack.c.l.b16 %v751
      %v1737 = vunpack.c.h.b16 %v751
      %v1738 = vunpack.c.l.b16 %v752
      %v1739 = vunpack.c.h.b16 %v752
      %v1740 = vunpack.c.l.b16 %v753
      %v1741 = vunpack.c.h.b16 %v753
      %v1742 = vunpack.c.l.b16 %v754
      %v1743 = vunpack.c.h.b16 %v754
      %v1744 = vunpack.c.l.b16 %v755
      %v1745 = vunpack.c.h.b16 %v755
      %v1746 = vunpack.c.l.b16 %v756
      %v1747 = vunpack.c.h.b16 %v756
      %v1748 = vunpack.c.l.b16 %v757
      %v1749 = vunpack.c.h.b16 %v757
      %v1750 = vunpack.c.l.b16 %v758
      %v1751 = vunpack.c.h.b16 %v758
      %v1752 = vunpack.c.l.b16 %v759
      %v1753 = vunpack.c.h.b16 %v759
      %v1754 = vunpack.c.l.b16 %v760
      %v1755 = vunpack.c.h.b16 %v760
      %v1756 = vunpack.c.l.b16 %v761
      %v1757 = vunpack.c.h.b16 %v761
      %v1758 = vunpack.c.l.b16 %v762
      %v1759 = vunpack.c.h.b16 %v762
      %v1760 = vunpack.c.l.b16 %v763
      %v1761 = vunpack.c.h.b16 %v763
      %v1762 = vunpack.c.l.b16 %v764
      %v1763 = vunpack.c.h.b16 %v764
      %v1764 = vunpack.c.l.b16 %v765
      %v1765 = vunpack.c.h.b16 %v765
      %v1766 = vunpack.c.l.b16 %v766
      %v1767 = vunpack.c.h.b16 %v766
      %v1768 = vunpack.c.l.b16 %v767
      %v1769 = vunpack.c.h.b16 %v767
      %v1770 = vunpack.c.l.b16 %v768
      %v1771 = vunpack.c.h.b16 %v768
      %v1772 = vunpack.c.l.b16 %v769
      %v1773 = vunpack.c.h.b16 %v769
      %v1774 = vunpack.c.l.b16 %v770
      %v1775 = vunpack.c.h.b16 %v770
      %v1776 = vunpack.c.l.b16 %v771
      %v1777 = vunpack.c.h.b16 %v771
      %v1778 = vunpack.c.l.b16 %v772
      %v1779 = vunpack.c.h.b16 %v772
      %v1780 = vunpack.c.l.b16 %v773
      %v1781 = vunpack.c.h.b16 %v773
      %v1782 = vunpack.c.l.b16 %v774
      %v1783 = vunpack.c.h.b16 %v774
      %v1784 = vunpack.c.l.b16 %v775
      %v1785 = vunpack.c.h.b16 %v775
      %v1786 = vunpack.c.l.b16 %v776
      %v1787 = vunpack.c.h.b16 %v776
      %v1788 = vunpack.c.l.b16 %v777
      %v1789 = vunpack.c.h.b16 %v777
      %v1790 = vunpack.c.l.b16 %v778
      %v1791 = vunpack.c.h.b16 %v778
      %v1792 = vunpack.c.l.b16 %v779
      %v1793 = vunpack.c.h.b16 %v779
      %v1794 = vunpack.c.l.b16 %v780
      %v1795 = vunpack.c.h.b16 %v780
      %v1796 = vunpack.c.l.b16 %v781
      %v1797 = vunpack.c.h.b16 %v781
      %v1798 = vunpack.c.l.b16 %v782
      %v1799 = vunpack.c.h.b16 %v782
      %v1800 = vunpack.c.l.b16 %v783
      %v1801 = vunpack.c.h.b16 %v783
      %v1802 = vunpack.c.l.b16 %v784
      %v1803 = vunpack.c.h.b16 %v784
      %v1804 = vunpack.c.l.b16 %v785
      %v1805 = vunpack.c.h.b16 %v785
      %v1806 = vunpack.c.l.b16 %v786
      %v1807 = vunpack.c.h.b16 %v786
      %v1808 = vunpack.c.l.b16 %v787
      %v1809 = vunpack.c.h.b16 %v787
      %v1810 = vunpack.c.l.b16 %v788
      %v1811 = vunpack.c.h.b16 %v788
      %v1812 = vunpack.c.l.b16 %v789
      %v1813 = vunpack.c.h.b16 %v789
      %v1814 = vunpack.c.l.b16 %v790
      %v1815 = vunpack.c.h.b16 %v790
      %v1816 = vunpack.c.l.b16 %v791
      %v1817 = vunpack.c.h.b16 %v791
      %v1818 = vunpack.c.l.b16 %v792
      %v1819 = vunpack.c.h.b16 %v792
      %v1820 = vunpack.c.l.b16 %v793
      %v1821 = vunpack.c.h.b16 %v793
      %v1822 = vunpack.c.l.b16 %v794
      %v1823 = vunpack.c.h.b16 %v794
      %v1824 = vunpack.c.l.b16 %v795
      %v1825 = vunpack.c.h.b16 %v795
      %v1826 = vunpack.c.l.b16 %v796
      %v1827 = vunpack.c.h.b16 %v796
      %v1828 = vunpack.c.l.b16 %v797
      %v1829 = vunpack.c.h.b16 %v797
      %v1830 = vunpack.c.l.b16 %v798
      %v1831 = vunpack.c.h.b16 %v798
      %v1832 = vunpack.c.l.b16 %v799
      %v1833 = vunpack.c.h.b16 %v799
      %v1834 = vunpack.c.l.b16 %v800
      %v1835 = vunpack.c.h.b16 %v800
      %v1836 = vunpack.c.l.b16 %v801
      %v1837 = vunpack.c.h.b16 %v801
      %v1838 = vunpack.c.l.b16 %v802
      %v1839 = vunpack.c.h.b16 %v802
      %v1840 = vunpack.c.l.b16 %v803
      %v1841 = vunpack.c.h.b16 %v803
      %v1842 = vunpack.c.l.b16 %v804
      %v1843 = vunpack.c.h.b16 %v804
      %v1844 = vunpack.c.l.b16 %v805
      %v1845 = vunpack.c.h.b16 %v805
      %v1846 = vunpack.c.l.b16 %v806
      %v1847 = vunpack.c.h.b16 %v806
      %v1848 = vunpack.c.l.b16 %v807
      %v1849 = vunpack.c.h.b16 %v807
      %v1850 = vunpack.c.l.b16 %v808
      %v1851 = vunpack.c.h.b16 %v808
      %v1852 = vunpack.c.l.b16 %v809
      %v1853 = vunpack.c.h.b16 %v809
      %v1854 = vunpack.c.l.b16 %v810
      %v1855 = vunpack.c.h.b16 %v810
      %v1856 = vunpack.c.l.b16 %v811
      %v1857 = vunpack.c.h.b16 %v811
      %v1858 = vunpack.c.l.b16 %v812
      %v1859 = vunpack.c.h.b16 %v812
      %v1860 = vunpack.c.l.b16 %v813
      %v1861 = vunpack.c.h.b16 %v813
      %v1862 = vunpack.c.l.b16 %v814
      %v1863 = vunpack.c.h.b16 %v814
      %v1864 = vunpack.c.l.b16 %v815
      %v1865 = vunpack.c.h.b16 %v815
      %v1866 = vunpack.c.l.b16 %v816
      %v1867 = vunpack.c.h.b16 %v816
      %v1868 = vunpack.c.l.b16 %v817
      %v1869 = vunpack.c.h.b16 %v817
      %v1870 = vunpack.c.l.b16 %v818
      %v1871 = vunpack.c.h.b16 %v818
      %v1872 = vunpack.c.l.b16 %v819
      %v1873 = vunpack.c.h.b16 %v819
      %v1874 = vunpack.c.l.b16 %v820
      %v1875 = vunpack.c.h.b16 %v820
      %v1876 = vunpack.c.l.b16 %v821
      %v1877 = vunpack.c.h.b16 %v821
      %v1878 = vunpack.c.l.b16 %v822
      %v1879 = vunpack.c.h.b16 %v822
      %v1880 = vunpack.c.l.b16 %v823
      %v1881 = vunpack.c.h.b16 %v823
      %v1882 = vunpack.c.l.b16 %v824
      %v1883 = vunpack.c.h.b16 %v824
      %v1884 = vunpack.c.l.b16 %v825
      %v1885 = vunpack.c.h.b16 %v825
      %v1886 = vunpack.c.l.b16 %v826
      %v1887 = vunpack.c.h.b16 %v826
      %v1888 = vunpack.c.l.b16 %v827
      %v1889 = vunpack.c.h.b16 %v827
      %v1890 = vunpack.c.l.b16 %v828
      %v1891 = vunpack.c.h.b16 %v828
      %v1892 = vunpack.c.l.b16 %v829
      %v1893 = vunpack.c.h.b16 %v829
      %v1894 = vunpack.c.l.b16 %v830
      %v1895 = vunpack.c.h.b16 %v830
      %v1896 = vunpack.c.l.b16 %v831
      %v1897 = vunpack.c.h.b16 %v831
      %v1898 = vunpack.c.l.b16 %v832
      %v1899 = vunpack.c.h.b16 %v832
      %v1900 = vunpack.c.l.b16 %v833
      %v1901 = vunpack.c.h.b16 %v833
      %v1902 = vunpack.c.l.b16 %v834
      %v1903 = vunpack.c.h.b16 %v834
      %v1904 = vunpack.c.l.b16 %v835
      %v1905 = vunpack.c.h.b16 %v835
      %v1906 = vunpack.c.l.b16 %v836
      %v1907 = vunpack.c.h.b16 %v836
      %v1908 = vunpack.c.l.b16 %v837
      %v1909 = vunpack.c.h.b16 %v837
      %v1910 = vunpack.c.l.b16 %v838
      %v1911 = vunpack.c.h.b16 %v838
      %v1912 = vunpack.c.l.b16 %v839
      %v1913 = vunpack.c.h.b16 %v839
      %v1914 = vunpack.c.l.b16 %v840
      %v1915 = vunpack.c.h.b16 %v840
      %v1916 = vunpack.c.l.b16 %v841
      %v1917 = vunpack.c.h.b16 %v841
      %v1918 = vunpack.c.l.b16 %v842
      %v1919 = vunpack.c.h.b16 %v842
      %v1920 = vunpack.c.l.b16 %v843
      %v1921 = vunpack.c.h.b16 %v843
      %v1922 = vunpack.c.l.b16 %v844
      %v1923 = vunpack.c.h.b16 %v844
      %v1924 = vunpack.c.l.b16 %v845
      %v1925 = vunpack.c.h.b16 %v845
      %v1926 = vunpack.c.l.b16 %v846
      %v1927 = vunpack.c.h.b16 %v846
      %v1928 = vunpack.c.l.b16 %v847
      %v1929 = vunpack.c.h.b16 %v847
      %v1930 = vunpack.c.l.b16 %v848
      %v1931 = vunpack.c.h.b16 %v848
      %v1932 = vunpack.c.l.b16 %v849
      %v1933 = vunpack.c.h.b16 %v849
      %v1934 = vunpack.c.l.b16 %v850
      %v1935 = vunpack.c.h.b16 %v850
      %v1936 = vunpack.c.l.b16 %v851
      %v1937 = vunpack.c.h.b16 %v851
      %v1938 = vunpack.c.l.b16 %v852
      %v1939 = vunpack.c.h.b16 %v852
      %v1940 = vunpack.c.l.b16 %v853
      %v1941 = vunpack.c.h.b16 %v853
      %v1942 = vunpack.c.l.b16 %v854
      %v1943 = vunpack.c.h.b16 %v854
      %v1944 = vunpack.c.l.b16 %v855
      %v1945 = vunpack.c.h.b16 %v855
      %v1946 = vunpack.c.l.b16 %v856
      %v1947 = vunpack.c.h.b16 %v856
      %v1948 = vunpack.c.l.b16 %v857
      %v1949 = vunpack.c.h.b16 %v857
      %v1950 = vunpack.c.l.b16 %v858
      %v1951 = vunpack.c.h.b16 %v858
      %v1952 = vunpack.c.l.b16 %v859
      %v1953 = vunpack.c.h.b16 %v859
      %v1954 = vunpack.c.l.b16 %v860
      %v1955 = vunpack.c.h.b16 %v860
      %v1956 = vunpack.c.l.b16 %v861
      %v1957 = vunpack.c.h.b16 %v861
      %v1958 = vunpack.c.l.b16 %v862
      %v1959 = vunpack.c.h.b16 %v862
      %v1960 = vunpack.c.l.b16 %v863
      %v1961 = vunpack.c.h.b16 %v863
      %v1962 = vunpack.c.l.b16 %v864
      %v1963 = vunpack.c.h.b16 %v864
      %v1964 = vunpack.c.l.b16 %v865
      %v1965 = vunpack.c.h.b16 %v865
      %v1966 = vunpack.c.l.b16 %v866
      %v1967 = vunpack.c.h.b16 %v866
      %v1968 = vunpack.c.l.b16 %v867
      %v1969 = vunpack.c.h.b16 %v867
      %v1970 = vunpack.c.l.b16 %v868
      %v1971 = vunpack.c.h.b16 %v868
      %v1972 = vunpack.c.l.b16 %v869
      %v1973 = vunpack.c.h.b16 %v869
      %v1974 = vunpack.c.l.b16 %v870
      %v1975 = vunpack.c.h.b16 %v870
      %v1976 = vunpack.c.l.b16 %v871
      %v1977 = vunpack.c.h.b16 %v871
      %v1978 = vunpack.c.l.b16 %v872
      %v1979 = vunpack.c.h.b16 %v872
      %v1980 = vunpack.c.l.b16 %v873
      %v1981 = vunpack.c.h.b16 %v873
      %v1982 = vunpack.c.l.b16 %v874
      %v1983 = vunpack.c.h.b16 %v874
      %v1984 = vunpack.c.l.b16 %v875
      %v1985 = vunpack.c.h.b16 %v875
      %v1986 = vunpack.c.l.b16 %v876
      %v1987 = vunpack.c.h.b16 %v876
      %v1988 = vunpack.c.l.b16 %v877
      %v1989 = vunpack.c.h.b16 %v877
      %v1990 = vunpack.c.l.b16 %v878
      %v1991 = vunpack.c.h.b16 %v878
      %v1992 = vunpack.c.l.b16 %v879
      %v1993 = vunpack.c.h.b16 %v879
      %v1994 = vunpack.c.l.b16 %v880
      %v1995 = vunpack.c.h.b16 %v880
      %v1996 = vunpack.c.l.b16 %v881
      %v1997 = vunpack.c.h.b16 %v881
      %v1998 = vunpack.c.l.b16 %v882
      %v1999 = vunpack.c.h.b16 %v882
      %v2000 = vunpack.c.l.b16 %v883
      %v2001 = vunpack.c.h.b16 %v883
      %v2002 = vunpack.c.l.b16 %v884
      %v2003 = vunpack.c.h.b16 %v884
      %v2004 = vunpack.c.l.b16 %v885
      %v2005 = vunpack.c.h.b16 %v885
      %v2006 = vunpack.c.l.b16 %v886
      %v2007 = vunpack.c.h.b16 %v886
      %v2008 = vunpack.c.l.b16 %v887
      %v2009 = vunpack.c.h.b16 %v887
      %v2010 = vunpack.c.l.b16 %v888
      %v2011 = vunpack.c.h.b16 %v888
      %v2012 = vunpack.c.l.b16 %v889
      %v2013 = vunpack.c.h.b16 %v889
      %v2014 = vunpack.c.l.b16 %v890
      %v2015 = vunpack.c.h.b16 %v890
      %v2016 = vunpack.c.l.b16 %v891
      %v2017 = vunpack.c.h.b16 %v891
      %v2018 = vunpack.c.l.b16 %v892
      %v2019 = vunpack.c.h.b16 %v892
      %v2020 = vunpack.c.l.b16 %v893
      %v2021 = vunpack.c.h.b16 %v893
      %v2022 = vunpack.c.l.b16 %v894
      %v2023 = vunpack.c.h.b16 %v894
      %v2024 = vunpack.c.l.b16 %v895
      %v2025 = vunpack.c.h.b16 %v895
      %v2026 = vunpack.c.l.b16 %v896
      %v2027 = vunpack.c.h.b16 %v896
      %v2028 = vunpack.c.l.b16 %v897
      %v2029 = vunpack.c.h.b16 %v897
      %v2030 = vunpack.c.l.b16 %v898
      %v2031 = vunpack.c.h.b16 %v898
      %v2032 = vunpack.c.l.b16 %v899
      %v2033 = vunpack.c.h.b16 %v899
      %v2034 = vunpack.c.l.b16 %v900
      %v2035 = vunpack.c.h.b16 %v900
      %v2036 = vunpack.c.l.b16 %v901
      %v2037 = vunpack.c.h.b16 %v901
      %v2038 = vunpack.c.l.b16 %v902
      %v2039 = vunpack.c.h.b16 %v902
      %v2040 = vunpack.c.l.b16 %v903
      %v2041 = vunpack.c.h.b16 %v903
      %v2042 = vunpack.c.l.b16 %v904
      %v2043 = vunpack.c.h.b16 %v904
      %v2044 = vunpack.c.l.b16 %v905
      %v2045 = vunpack.c.h.b16 %v905
      %v2046 = vunpack.c.l.b16 %v906
      %v2047 = vunpack.c.h.b16 %v906
      %v2048 = vunpack.c.l.b16 %v907
      %v2049 = vunpack.c.h.b16 %v907
      %v2050 = vunpack.c.l.b16 %v908
      %v2051 = vunpack.c.h.b16 %v908
      %v2052 = vunpack.c.l.b16 %v909
      %v2053 = vunpack.c.h.b16 %v909
      %v2054 = vunpack.c.l.b16 %v910
      %v2055 = vunpack.c.h.b16 %v910
      %v2056 = vunpack.c.l.b16 %v911
      %v2057 = vunpack.c.h.b16 %v911
      %v2058 = vunpack.c.l.b16 %v912
      %v2059 = vunpack.c.h.b16 %v912
      %v2060 = vunpack.c.l.b16 %v913
      %v2061 = vunpack.c.h.b16 %v913
      %v2062 = vunpack.c.l.b16 %v914
      %v2063 = vunpack.c.h.b16 %v914
      %v2064 = vunpack.c.l.b16 %v915
      %v2065 = vunpack.c.h.b16 %v915
      %v2066 = vunpack.c.l.b16 %v916
      %v2067 = vunpack.c.h.b16 %v916
      %v2068 = vunpack.c.l.b16 %v917
      %v2069 = vunpack.c.h.b16 %v917
      %v2070 = vunpack.c.l.b16 %v918
      %v2071 = vunpack.c.h.b16 %v918
      %v2072 = vunpack.c.l.b16 %v919
      %v2073 = vunpack.c.h.b16 %v919
      %v2074 = vunpack.c.l.b16 %v920
      %v2075 = vunpack.c.h.b16 %v920
      %v2076 = vunpack.c.l.b16 %v921
      %v2077 = vunpack.c.h.b16 %v921
      %v2078 = vunpack.c.l.b16 %v922
      %v2079 = vunpack.c.h.b16 %v922
      %v2080 = vunpack.c.l.b16 %v923
      %v2081 = vunpack.c.h.b16 %v923
      %v2082 = vunpack.c.l.b16 %v924
      %v2083 = vunpack.c.h.b16 %v924
      %v2084 = vunpack.c.l.b16 %v925
      %v2085 = vunpack.c.h.b16 %v925
      %v2086 = vunpack.c.l.b16 %v926
      %v2087 = vunpack.c.h.b16 %v926
      %v2088 = vunpack.c.l.b16 %v927
      %v2089 = vunpack.c.h.b16 %v927
      %v2090 = vunpack.c.l.b16 %v928
      %v2091 = vunpack.c.h.b16 %v928
      %v2092 = vunpack.c.l.b16 %v929
      %v2093 = vunpack.c.h.b16 %v929
      %v2094 = vunpack.c.l.b16 %v930
      %v2095 = vunpack.c.h.b16 %v930
      %v2096 = vunpack.c.l.b16 %v931
      %v2097 = vunpack.c.h.b16 %v931
      %v2098 = vunpack.c.l.b16 %v932
      %v2099 = vunpack.c.h.b16 %v932
      %v2100 = vunpack.c.l.b16 %v933
      %v2101 = vunpack.c.h.b16 %v933
      %v2102 = vunpack.c.l.b16 %v934
      %v2103 = vunpack.c.h.b16 %v934
      %v2104 = vunpack.c.l.b16 %v935
      %v2105 = vunpack.c.h.b16 %v935
      %v2106 = vpack.c.b16 %v1718, %v1714
      %v2107 = vpack.c.b16 %v1719, %v1715
      %v2108 = vpack.c.b16 %v1720, %v1716
      %v2109 = vpack.c.b16 %v1721, %v1717
      %v2110 = vpack.c.b16 %v1726, %v1722
      %v2111 = vpack.c.b16 %v1727, %v1723
      %v2112 = vpack.c.b16 %v1728, %v1724
      %v2113 = vpack.c.b16 %v1729, %v1725
      %v2114 = vpack.c.b16 %v1734, %v1730
      %v2115 = vpack.c.b16 %v1735, %v1731
      %v2116 = vpack.c.b16 %v1736, %v1732
      %v2117 = vpack.c.b16 %v1737, %v1733
      %v2118 = vpack.c.b16 %v1742, %v1738
      %v2119 = vpack.c.b16 %v1743, %v1739
      %v2120 = vpack.c.b16 %v1744, %v1740
      %v2121 = vpack.c.b16 %v1745, %v1741
      %v2122 = vpack.c.b16 %v1750, %v1746
      %v2123 = vpack.c.b16 %v1751, %v1747
      %v2124 = vpack.c.b16 %v1752, %v1748
      %v2125 = vpack.c.b16 %v1753, %v1749
      %v2126 = vpack.c.b16 %v1758, %v1754
      %v2127 = vpack.c.b16 %v1759, %v1755
      %v2128 = vpack.c.b16 %v1760, %v1756
      %v2129 = vpack.c.b16 %v1761, %v1757
      %v2130 = vpack.c.b16 %v1766, %v1762
      %v2131 = vpack.c.b16 %v1767, %v1763
      %v2132 = vpack.c.b16 %v1768, %v1764
      %v2133 = vpack.c.b16 %v1769, %v1765
      %v2134 = vpack.c.b16 %v1774, %v1770
      %v2135 = vpack.c.b16 %v1775, %v1771
      %v2136 = vpack.c.b16 %v1776, %v1772
      %v2137 = vpack.c.b16 %v1777, %v1773
      %v2138 = vpack.c.b16 %v1782, %v1778
      %v2139 = vpack.c.b16 %v1783, %v1779
      %v2140 = vpack.c.b16 %v1784, %v1780
      %v2141 = vpack.c.b16 %v1785, %v1781
      %v2142 = vpack.c.b16 %v1790, %v1786
      %v2143 = vpack.c.b16 %v1791, %v1787
      %v2144 = vpack.c.b16 %v1792, %v1788
      %v2145 = vpack.c.b16 %v1793, %v1789
      %v2146 = vpack.c.b16 %v1798, %v1794
      %v2147 = vpack.c.b16 %v1799, %v1795
      %v2148 = vpack.c.b16 %v1800, %v1796
      %v2149 = vpack.c.b16 %v1801, %v1797
      %v2150 = vpack.c.b16 %v1806, %v1802
      %v2151 = vpack.c.b16 %v1807, %v1803
      %v2152 = vpack.c.b16 %v1808, %v1804
      %v2153 = vpack.c.b16 %v1809, %v1805
      %v2154 = vpack.c.b16 %v1814, %v1810
      %v2155 = vpack.c.b16 %v1815, %v1811
      %v2156 = vpack.c.b16 %v1816, %v1812
      %v2157 = vpack.c.b16 %v1817, %v1813
      %v2158 = vpack.c.b16 %v1822, %v1818
      %v2159 = vpack.c.b16 %v1823, %v1819
      %v2160 = vpack.c.b16 %v1824, %v1820
      %v2161 = vpack.c.b16 %v1825, %v1821
      %v2162 = vpack.c.b16 %v1830, %v1826
      %v2163 = vpack.c.b16 %v1831, %v1827
      %v2164 = vpack.c.b16 %v1832, %v1828
      %v2165 = vpack.c.b16 %v1833, %v1829
      %v2166 = vpack.c.b16 %v1838, %v1834
      %v2167 = vpack.c.b16 %v1839, %v1835
      %v2168 = vpack.c.b16 %v1840, %v1836
      %v2169 = vpack.c.b16 %v1841, %v1837
      %v2170 = vpack.c.b16 %v1846, %v1842
      %v2171 = vpack.c.b16 %v1847, %v1843
      %v2172 = vpack.c.b16 %v1848, %v1844
      %v2173 = vpack.c.b16 %v1849, %v1845
      %v2174 = vpack.c.b16 %v1854, %v1850
      %v2175 = vpack.c.b16 %v1855, %v1851
      %v2176 = vpack.c.b16 %v1856, %v1852
      %v2177 = vpack.c.b16 %v1857, %v1853
      %v2178 = vpack.c.b16 %v1862, %v1858
      %v2179 = vpack.c.b16 %v1863, %v1859
      %v2180 = vpack.c.b16 %v1864, %v1860
      %v2181 = vpack.c.b16 %v1865, %v1861
      %v2182 = vpack.c.b16 %v1870, %v1866
      %v2183 = vpack.c.b16 %v1871, %v1867
      %v2184 = vpack.c.b16 %v1872, %v1868
      %v2185 = vpack.c.b16 %v1873, %v1869
      %v2186 = vpack.c.b16 %v1878, %v1874
      %v2187 = vpack.c.b16 %v1879, %v1875
      %v2188 = vpack.c.b16 %v1880, %v1876
      %v2189 = vpack.c.b16 %v1881, %v1877
      %v2190 = vpack.c.b16 %v1886, %v1882
      %v2191 = vpack.c.b16 %v1887, %v1883
      %v2192 = vpack.c.b16 %v1888, %v1884
      %v2193 = vpack.c.b16 %v1889, %v1885
      %v2194 = vpack.c.b16 %v1894, %v1890
      %v2195 = vpack.c.b16 %v1895, %v1891
      %v2196 = vpack.c.b16 %v1896, %v1892
      %v2197 = vpack.c.b16 %v1897, %v1893
      %v2198 = vpack.c.b16 %v1902, %v1898
      %v2199 = vpack.c.b16 %v1903, %v1899
      %v2200 = vpack.c.b16 %v1904, %v1900
      %v2201 = vpack.c.b16 %v1905, %v1901
      %v2202 = vpack.c.b16 %v1910, %v1906
      %v2203 = vpack.c.b16 %v1911, %v1907
      %v2204 = vpack.c.b16 %v1912, %v1908
      %v2205 = vpack.c.b16 %v1913, %v1909
      %v2206 = vpack.c.b16 %v1918, %v1914
      %v2207 = vpack.c.b16 %v1919, %v1915
      %v2208 = vpack.c.b16 %v1920, %v1916
      %v2209 = vpack.c.b16 %v1921, %v1917
      %v2210 = vpack.c.b16 %v1926, %v1922
      %v2211 = vpack.c.b16 %v1927, %v1923
      %v2212 = vpack.c.b16 %v1928, %v1924
      %v2213 = vpack.c.b16 %v1929, %v1925
      %v2214 = vpack.c.b16 %v1934, %v1930
      %v2215 = vpack.c.b16 %v1935, %v1931
      %v2216 = vpack.c.b16 %v1936, %v1932
      %v2217 = vpack.c.b16 %v1937, %v1933
      %v2218 = vpack.c.b16 %v1942, %v1938
      %v2219 = vpack.c.b16 %v1943, %v1939
      %v2220 = vpack.c.b16 %v1944, %v1940
      %v2221 = vpack.c.b16 %v1945, %v1941
      %v2222 = vpack.c.b16 %v1950, %v1946
      %v2223 = vpack.c.b16 %v1951, %v1947
      %v2224 = vpack.c.b16 %v1952, %v1948
      %v2225 = vpack.c.b16 %v1953, %v1949
      %v2226 = vpack.c.b16 %v1958, %v1954
      %v2227 = vpack.c.b16 %v1959, %v1955
      %v2228 = vpack.c.b16 %v1960, %v1956
      %v2229 = vpack.c.b16 %v1961, %v1957
      %v2230 = vpack.c.b16 %v1966, %v1962
      %v2231 = vpack.c.b16 %v1967, %v1963
      %v2232 = vpack.c.b16 %v1968, %v1964
      %v2233 = vpack.c.b16 %v1969, %v1965
      %v2234 = vpack.c.b16 %v1974, %v1970
      %v2235 = vpack.c.b16 %v1975, %v1971
      %v2236 = vpack.c.b16 %v1976, %v1972
      %v2237 = vpack.c.b16 %v1977, %v1973
      %v2238 = vpack.c.b16 %v1982, %v1978
      %v2239 = vpack.c.b16 %v1983, %v1979
      %v2240 = vpack.c.b16 %v1984, %v1980
      %v2241 = vpack.c.b16 %v1985, %v1981
      %v2242 = vpack.c.b16 %v1990, %v1986
      %v2243 = vpack.c.b16 %v1991, %v1987
      %v2244 = vpack.c.b16 %v1992, %v1988
      %v2245 = vpack.c.b16 %v1993, %v1989
      %v2246 = vpack.c.b16 %v1998, %v1994
      %v2247 = vpack.c.b16 %v1999, %v1995
      %v2248 = vpack.c.b16 %v2000, %v1996
      %v2249 = vpack.c.b16 %v2001, %v1997
      %v2250 = vpack.c.b16 %v2006, %v2002
      %v2251 = vpack.c.b16 %v2007, %v2003
      %v2252 = vpack.c.b16 %v2008, %v2004
      %v2253 = vpack.c.b16 %v2009, %v2005
      %v2254 = vpack.c.b16 %v2014, %v2010
      %v2255 = vpack.c.b16 %v2015, %v2011
      %v2256 = vpack.c.b16 %v2016, %v2012
      %v2257 = vpack.c.b16 %v2017, %v2013
      %v2258 = vpack.c.b16 %v2022, %v2018
      %v2259 = vpack.c.b16 %v2023, %v2019
      %v2260 = vpack.c.b16 %v2024, %v2020
      %v2261 = vpack.c.b16 %v2025, %v2021
      %v2262 = vpack.c.b16 %v2030, %v2026
      %v2263 = vpack.c.b16 %v2031, %v2027
      %v2264 = vpack.c.b16 %v2032, %v2028
      %v2265 = vpack.c.b16 %v2033, %v2029
      %v2266 = vpack.c.b16 %v2038, %v2034
      %v2267 = vpack.c.b16 %v2039, %v2035
      %v2268 = vpack.c.b16 %v2040, %v2036
      %v2269 = vpack.c.b16 %v2041, %v2037
      %v2270 = vpack.c.b16 %v2046, %v2042
      %v2271 = vpack.c.b16 %v2047, %v2043
      %v2272 = vpack.c.b16 %v2048, %v2044
      %v2273 = vpack.c.b16 %v2049, %v2045
      %v2274 = vpack.c.b16 %v2054, %v2050
      %v2275 = vpack.c.b16 %v2055, %v2051
      %v2276 = vpack.c.b16 %v2056, %v2052
      %v2277 = vpack.c.b16 %v2057, %v2053
      %v2278 = vpack.c.b16 %v2062, %v2058
      %v2279 = vpack.c.b16 %v2063, %v2059
      %v2280 = vpack.c.b16 %v2064, %v2060
      %v2281 = vpack.c.b16 %v2065, %v2061
      %v2282 = vpack.c.b16 %v2070, %v2066
      %v2283 = vpack.c.b16 %v2071, %v2067
      %v2284 = vpack.c.b16 %v2072, %v2068
      %v2285 = vpack.c.b16 %v2073, %v2069
      %v2286 = vpack.c.b16 %v2078, %v2074
      %v2287 = vpack.c.b16 %v2079, %v2075
      %v2288 = vpack.c.b16 %v2080, %v2076
      %v2289 = vpack.c.b16 %v2081, %v2077
      %v2290 = vpack.c.b16 %v2086, %v2082
      %v2291 = vpack.c.b16 %v2087, %v2083
      %v2292 = vpack.c.b16 %v2088, %v2084
      %v2293 = vpack.c.b16 %v2089, %v2085
      %v2294 = vpack.c.b16 %v2094, %v2090
      %v2295 = vpack.c.b16 %v2095, %v2091
      %v2296 = vpack.c.b16 %v2096, %v2092
      %v2297 = vpack.c.b16 %v2097, %v2093
      %v2298 = vpack.c.b16 %v2102, %v2098
      %v2299 = vpack.c.b16 %v2103, %v2099
      %v2300 = vpack.c.b16 %v2104, %v2100
      %v2301 = vpack.c.b16 %v2105, %v2101
      %vm2498 = vcmask 130048
      %v2500 = vsel %vm2498, %v1316, 0
      %v2503 = vsel %vm2498, %v1323, 0
      %v2506 = vsel %vm2498, %v1330, 0
      %v2509 = vsel %vm2498, %v1337, 0
      %v2512 = vsel %vm2498, %v1344, 0
      %v2515 = vsel %vm2498, %v1351, 0
      %v2518 = vsel %vm2498, %v1358, 0
      %v2521 = vsel %vm2498, %v1365, 0
      %v2524 = vsel %vm2498, %v1372, 0
      %v2527 = vsel %vm2498, %v1379, 0
      %v2530 = vsel %vm2498, %v1386, 0
      %v2533 = vsel %vm2498, %v1393, 0
      %v2536 = vsel %vm2498, %v1400, 0
      %v2539 = vsel %vm2498, %v1407, 0
      %v2542 = vsel %vm2498, %v1414, 0
      %v2545 = vsel %vm2498, %v1421, 0
      %2547 = vmatprep.subr.bf16.mxu0 %v2107
      %2548 = vmatpush1.bf16.msra.mxu0 %v2106
      %2549 = vmatprep.subr.bf16.mxu0 %v2111
      %2550 = vmatpush1.bf16.msra.mxu0 %v2110
      %2551 = vmatprep.subr.bf16.mxu0 %v2115
      %2552 = vmatpush1.bf16.msra.mxu0 %v2114
      %2553 = vmatprep.subr.bf16.mxu0 %v2119
      %2554 = vmatpush1.bf16.msra.mxu0 %v2118
      %2555 = vmatprep.subr.bf16.mxu0 %v2123
      %2556 = vmatpush1.bf16.msra.mxu0 %v2122
      %2557 = vmatprep.subr.bf16.mxu0 %v2127
      %2558 = vmatpush1.bf16.msra.mxu0 %v2126
      %2559 = vmatprep.subr.bf16.mxu0 %v2131
      %2560 = vmatpush1.bf16.msra.mxu0 %v2130
      %2561 = vmatprep.subr.bf16.mxu0 %v2135
      %2562 = vmatpush1.bf16.msra.mxu0 %v2134
      %2563 = vmatprep.subr.bf16.mxu0 %v2139
      %2564 = vmatpush1.bf16.msra.mxu0 %v2138
      %2565 = vmatprep.subr.bf16.mxu0 %v2143
      %2566 = vmatpush1.bf16.msra.mxu0 %v2142
      %2567 = vmatprep.subr.bf16.mxu0 %v2147
      %2568 = vmatpush1.bf16.msra.mxu0 %v2146
      %2569 = vmatprep.subr.bf16.mxu0 %v2151
      %2570 = vmatpush1.bf16.msra.mxu0 %v2150
      %2571 = vmatprep.subr.bf16.mxu0 %v2155
      %2572 = vmatpush1.bf16.msra.mxu0 %v2154
      %2573 = vmatprep.subr.bf16.mxu0 %v2159
      %2574 = vmatpush1.bf16.msra.mxu0 %v2158
      %2575 = vmatprep.subr.bf16.mxu0 %v2163
      %2576 = vmatpush1.bf16.msra.mxu0 %v2162
      %2577 = vmatprep.subr.bf16.mxu0 %v2167
      %2578 = vmatpush1.bf16.msra.mxu0 %v2166
      %2579 = vmatprep.mubr.bf16.mxu0 %v1311
      %2580 = vmatmul.mubr.bf16.gmra.mrb[0].mxu0 %v1310
      %v2581 = vpop.f32.mrb[0].mxu0
      %v2582 = vadd.f32 %v941, %v2581
      %v2583 = vpop.f32.mrb[0].mxu0
      %v2584 = vadd.f32 %v945, %v2583
      %v2585 = vpop.f32.mrb[0].mxu0
      %v2586 = vadd.f32 %v941, %v2585
      %v2587 = vpop.f32.mrb[0].mxu0
      %v2588 = vadd.f32 %v945, %v2587
      %2589 = vmatprep.mubr.bf16.mxu0 %v1318
      %2590 = vmatmul.mubr.bf16.gmra.mrb[0].mxu0 %v1317
      %v2591 = vpop.f32.mrb[0].mxu0
      %v2592 = vadd.f32 %v941, %v2591
      %v2593 = vpop.f32.mrb[0].mxu0
      %v2594 = vadd.f32 %v945, %v2593
      %v2595 = vpop.f32.mrb[0].mxu0
      %v2596 = vadd.f32 %v941, %v2595
      %v2597 = vpop.f32.mrb[0].mxu0
      %v2598 = vadd.f32 %v945, %v2597
      %2599 = vmatprep.mubr.bf16.mxu0 %v1325
      %2600 = vmatmul.mubr.bf16.gmra.mrb[0].mxu0 %v1324
      %v2601 = vpop.f32.mrb[0].mxu0
      %v2602 = vadd.f32 %v941, %v2601
      %v2603 = vpop.f32.mrb[0].mxu0
      %v2604 = vadd.f32 %v945, %v2603
      %v2605 = vpop.f32.mrb[0].mxu0
      %v2606 = vadd.f32 %v941, %v2605
      %v2607 = vpop.f32.mrb[0].mxu0
      %v2608 = vadd.f32 %v945, %v2607
      %2609 = vmatprep.mubr.bf16.mxu0 %v1332
      %2610 = vmatmul.mubr.bf16.gmra.mrb[0].mxu0 %v1331
      %v2611 = vpop.f32.mrb[0].mxu0
      %v2612 = vadd.f32 %v941, %v2611
      %v2613 = vpop.f32.mrb[0].mxu0
      %v2614 = vadd.f32 %v945, %v2613
      %v2615 = vpop.f32.mrb[0].mxu0
      %v2616 = vadd.f32 %v941, %v2615
      %v2617 = vpop.f32.mrb[0].mxu0
      %v2618 = vadd.f32 %v945, %v2617
      %2619 = vmatprep.mubr.bf16.mxu0 %v1339
      %2620 = vmatmul.mubr.bf16.gmra.mrb[0].mxu0 %v1338
      %v2621 = vpop.f32.mrb[0].mxu0
      %v2622 = vadd.f32 %v941, %v2621
      %v2623 = vpop.f32.mrb[0].mxu0
      %v2624 = vadd.f32 %v945, %v2623
      %v2625 = vpop.f32.mrb[0].mxu0
      %v2626 = vadd.f32 %v941, %v2625
      %v2627 = vpop.f32.mrb[0].mxu0
      %v2628 = vadd.f32 %v945, %v2627
      %2629 = vmatprep.mubr.bf16.mxu0 %v1346
      %2630 = vmatmul.mubr.bf16.gmra.mrb[0].mxu0 %v1345
      %v2631 = vpop.f32.mrb[0].mxu0
      %v2632 = vadd.f32 %v941, %v2631
      %v2633 = vpop.f32.mrb[0].mxu0
      %v2634 = vadd.f32 %v945, %v2633
      %v2635 = vpop.f32.mrb[0].mxu0
      %v2636 = vadd.f32 %v941, %v2635
      %v2637 = vpop.f32.mrb[0].mxu0
      %v2638 = vadd.f32 %v945, %v2637
      %2639 = vmatprep.mubr.bf16.mxu0 %v1353
      %2640 = vmatmul.mubr.bf16.gmra.mrb[0].mxu0 %v1352
      %v2641 = vpop.f32.mrb[0].mxu0
      %v2642 = vadd.f32 %v941, %v2641
      %v2643 = vpop.f32.mrb[0].mxu0
      %v2644 = vadd.f32 %v945, %v2643
      %v2645 = vpop.f32.mrb[0].mxu0
      %v2646 = vadd.f32 %v941, %v2645
      %v2647 = vpop.f32.mrb[0].mxu0
      %v2648 = vadd.f32 %v945, %v2647
      %2649 = vmatprep.mubr.bf16.mxu0 %v1360
      %2650 = vmatmul.mubr.bf16.gmra.mrb[0].mxu0 %v1359
      %v2651 = vpop.f32.mrb[0].mxu0
      %v2652 = vadd.f32 %v941, %v2651
      %v2653 = vpop.f32.mrb[0].mxu0
      %v2654 = vadd.f32 %v945, %v2653
      %v2655 = vpop.f32.mrb[0].mxu0
      %v2656 = vadd.f32 %v941, %v2655
      %v2657 = vpop.f32.mrb[0].mxu0
      %v2658 = vadd.f32 %v945, %v2657
      %2659 = vmatprep.mubr.bf16.mxu0 %v1367
      %2660 = vmatmul.mubr.bf16.gmra.mrb[0].mxu0 %v1366
      %v2661 = vpop.f32.mrb[0].mxu0
      %v2662 = vadd.f32 %v941, %v2661
      %v2663 = vpop.f32.mrb[0].mxu0
      %v2664 = vadd.f32 %v945, %v2663
      %v2665 = vpop.f32.mrb[0].mxu0
      %v2666 = vadd.f32 %v941, %v2665
      %v2667 = vpop.f32.mrb[0].mxu0
      %v2668 = vadd.f32 %v945, %v2667
      %2669 = vmatprep.mubr.bf16.mxu0 %v1374
      %2670 = vmatmul.mubr.bf16.gmra.mrb[0].mxu0 %v1373
      %v2671 = vpop.f32.mrb[0].mxu0
      %v2672 = vadd.f32 %v941, %v2671
      %v2673 = vpop.f32.mrb[0].mxu0
      %v2674 = vadd.f32 %v945, %v2673
      %v2675 = vpop.f32.mrb[0].mxu0
      %v2676 = vadd.f32 %v941, %v2675
      %v2677 = vpop.f32.mrb[0].mxu0
      %v2678 = vadd.f32 %v945, %v2677
      %2679 = vmatprep.mubr.bf16.mxu0 %v1381
      %2680 = vmatmul.mubr.bf16.gmra.mrb[0].mxu0 %v1380
      %v2681 = vpop.f32.mrb[0].mxu0
      %v2682 = vadd.f32 %v941, %v2681
      %v2683 = vpop.f32.mrb[0].mxu0
      %v2684 = vadd.f32 %v945, %v2683
      %v2685 = vpop.f32.mrb[0].mxu0
      %v2686 = vadd.f32 %v941, %v2685
      %v2687 = vpop.f32.mrb[0].mxu0
      %v2688 = vadd.f32 %v945, %v2687
      %2689 = vmatprep.mubr.bf16.mxu0 %v1388
      %2690 = vmatmul.mubr.bf16.gmra.mrb[0].mxu0 %v1387
      %v2691 = vpop.f32.mrb[0].mxu0
      %v2692 = vadd.f32 %v941, %v2691
      %v2693 = vpop.f32.mrb[0].mxu0
      %v2694 = vadd.f32 %v945, %v2693
      %v2695 = vpop.f32.mrb[0].mxu0
      %v2696 = vadd.f32 %v941, %v2695
      %v2697 = vpop.f32.mrb[0].mxu0
      %v2698 = vadd.f32 %v945, %v2697
      %2699 = vmatprep.mubr.bf16.mxu0 %v1395
      %2700 = vmatmul.mubr.bf16.gmra.mrb[0].mxu0 %v1394
      %v2701 = vpop.f32.mrb[0].mxu0
      %v2702 = vadd.f32 %v941, %v2701
      %v2703 = vpop.f32.mrb[0].mxu0
      %v2704 = vadd.f32 %v945, %v2703
      %v2705 = vpop.f32.mrb[0].mxu0
      %v2706 = vadd.f32 %v941, %v2705
      %v2707 = vpop.f32.mrb[0].mxu0
      %v2708 = vadd.f32 %v945, %v2707
      %2709 = vmatprep.mubr.bf16.mxu0 %v1402
      %2710 = vmatmul.mubr.bf16.gmra.mrb[0].mxu0 %v1401
      %v2711 = vpop.f32.mrb[0].mxu0
      %v2712 = vadd.f32 %v941, %v2711
      %v2713 = vpop.f32.mrb[0].mxu0
      %v2714 = vadd.f32 %v945, %v2713
      %v2715 = vpop.f32.mrb[0].mxu0
      %v2716 = vadd.f32 %v941, %v2715
      %v2717 = vpop.f32.mrb[0].mxu0
      %v2718 = vadd.f32 %v945, %v2717
      %2719 = vmatprep.mubr.bf16.mxu0 %v1409
      %2720 = vmatmul.mubr.bf16.gmra.mrb[0].mxu0 %v1408
      %v2721 = vpop.f32.mrb[0].mxu0
      %v2722 = vadd.f32 %v941, %v2721
      %v2723 = vpop.f32.mrb[0].mxu0
      %v2724 = vadd.f32 %v945, %v2723
      %v2725 = vpop.f32.mrb[0].mxu0
      %v2726 = vadd.f32 %v941, %v2725
      %v2727 = vpop.f32.mrb[0].mxu0
      %v2728 = vadd.f32 %v945, %v2727
      %2729 = vmatprep.mubr.bf16.mxu0 %v1416
      %2730 = vmatmul.mubr.bf16.gmra.mrb[0].mxu0 %v1415
      %v2731 = vpop.f32.mrb[0].mxu0
      %v2732 = vadd.f32 %v941, %v2731
      %v2733 = vpop.f32.mrb[0].mxu0
      %v2734 = vadd.f32 %v945, %v2733
      %v2735 = vpop.f32.mrb[0].mxu0
      %v2736 = vadd.f32 %v941, %v2735
      %v2737 = vpop.f32.mrb[0].mxu0
      %v2738 = vadd.f32 %v945, %v2737
      %2739 = vdwg.mxu0
      %2740 = vmatprep.subr.bf16.mxu0 %v2171
      %2741 = vmatpush1.bf16.msra.mxu0 %v2170
      %2742 = vmatprep.subr.bf16.mxu0 %v2175
      %2743 = vmatpush1.bf16.msra.mxu0 %v2174
      %2744 = vmatprep.subr.bf16.mxu0 %v2179
      %2745 = vmatpush1.bf16.msra.mxu0 %v2178
      %2746 = vmatprep.subr.bf16.mxu0 %v2183
      %2747 = vmatpush1.bf16.msra.mxu0 %v2182
      %2748 = vmatprep.subr.bf16.mxu0 %v2187
      %2749 = vmatpush1.bf16.msra.mxu0 %v2186
      %2750 = vmatprep.subr.bf16.mxu0 %v2191
      %2751 = vmatpush1.bf16.msra.mxu0 %v2190
      %2752 = vmatprep.subr.bf16.mxu0 %v2195
      %2753 = vmatpush1.bf16.msra.mxu0 %v2194
      %2754 = vmatprep.subr.bf16.mxu0 %v2199
      %2755 = vmatpush1.bf16.msra.mxu0 %v2198
      %2756 = vmatprep.subr.bf16.mxu0 %v2203
      %2757 = vmatpush1.bf16.msra.mxu0 %v2202
      %2758 = vmatprep.subr.bf16.mxu0 %v2207
      %2759 = vmatpush1.bf16.msra.mxu0 %v2206
      %2760 = vmatprep.subr.bf16.mxu0 %v2211
      %2761 = vmatpush1.bf16.msra.mxu0 %v2210
      %2762 = vmatprep.subr.bf16.mxu0 %v2215
      %2763 = vmatpush1.bf16.msra.mxu0 %v2214
      %2764 = vmatprep.subr.bf16.mxu0 %v2219
      %2765 = vmatpush1.bf16.msra.mxu0 %v2218
      %2766 = vmatprep.subr.bf16.mxu0 %v2223
      %2767 = vmatpush1.bf16.msra.mxu0 %v2222
      %2768 = vmatprep.subr.bf16.mxu0 %v2227
      %2769 = vmatpush1.bf16.msra.mxu0 %v2226
      %2770 = vmatprep.subr.bf16.mxu0 %v2231
      %2771 = vmatpush1.bf16.msra.mxu0 %v2230
      %2772 = vmatprep.mubr.bf16.mxu0 %v1313
      %2773 = vmatmul.mubr.bf16.gmra.mrb[0].mxu0 %v1312
      %v2774 = vpop.f32.mrb[0].mxu0
      %v2775 = vadd.f32 %v2582, %v2774
      %v2776 = vpop.f32.mrb[0].mxu0
      %v2777 = vadd.f32 %v2584, %v2776
      %v2778 = vpop.f32.mrb[0].mxu0
      %v2779 = vadd.f32 %v2586, %v2778
      %v2780 = vpop.f32.mrb[0].mxu0
      %v2781 = vadd.f32 %v2588, %v2780
      %2782 = vmatprep.mubr.bf16.mxu0 %v1320
      %2783 = vmatmul.mubr.bf16.gmra.mrb[0].mxu0 %v1319
      %v2784 = vpop.f32.mrb[0].mxu0
      %v2785 = vadd.f32 %v2592, %v2784
      %v2786 = vpop.f32.mrb[0].mxu0
      %v2787 = vadd.f32 %v2594, %v2786
      %v2788 = vpop.f32.mrb[0].mxu0
      %v2789 = vadd.f32 %v2596, %v2788
      %v2790 = vpop.f32.mrb[0].mxu0
      %v2791 = vadd.f32 %v2598, %v2790
      %2792 = vmatprep.mubr.bf16.mxu0 %v1327
      %2793 = vmatmul.mubr.bf16.gmra.mrb[0].mxu0 %v1326
      %v2794 = vpop.f32.mrb[0].mxu0
      %v2795 = vadd.f32 %v2602, %v2794
      %v2796 = vpop.f32.mrb[0].mxu0
      %v2797 = vadd.f32 %v2604, %v2796
      %v2798 = vpop.f32.mrb[0].mxu0
      %v2799 = vadd.f32 %v2606, %v2798
      %v2800 = vpop.f32.mrb[0].mxu0
      %v2801 = vadd.f32 %v2608, %v2800
      %2802 = vmatprep.mubr.bf16.mxu0 %v1334
      %2803 = vmatmul.mubr.bf16.gmra.mrb[0].mxu0 %v1333
      %v2804 = vpop.f32.mrb[0].mxu0
      %v2805 = vadd.f32 %v2612, %v2804
      %v2806 = vpop.f32.mrb[0].mxu0
      %v2807 = vadd.f32 %v2614, %v2806
      %v2808 = vpop.f32.mrb[0].mxu0
      %v2809 = vadd.f32 %v2616, %v2808
      %v2810 = vpop.f32.mrb[0].mxu0
      %v2811 = vadd.f32 %v2618, %v2810
      %2812 = vmatprep.mubr.bf16.mxu0 %v1341
      %2813 = vmatmul.mubr.bf16.gmra.mrb[0].mxu0 %v1340
      %v2814 = vpop.f32.mrb[0].mxu0
      %v2815 = vadd.f32 %v2622, %v2814
      %v2816 = vpop.f32.mrb[0].mxu0
      %v2817 = vadd.f32 %v2624, %v2816
      %v2818 = vpop.f32.mrb[0].mxu0
      %v2819 = vadd.f32 %v2626, %v2818
      %v2820 = vpop.f32.mrb[0].mxu0
      %v2821 = vadd.f32 %v2628, %v2820
      %2822 = vmatprep.mubr.bf16.mxu0 %v1348
      %2823 = vmatmul.mubr.bf16.gmra.mrb[0].mxu0 %v1347
      %v2824 = vpop.f32.mrb[0].mxu0
      %v2825 = vadd.f32 %v2632, %v2824
      %v2826 = vpop.f32.mrb[0].mxu0
      %v2827 = vadd.f32 %v2634, %v2826
      %v2828 = vpop.f32.mrb[0].mxu0
      %v2829 = vadd.f32 %v2636, %v2828
      %v2830 = vpop.f32.mrb[0].mxu0
      %v2831 = vadd.f32 %v2638, %v2830
      %2832 = vmatprep.mubr.bf16.mxu0 %v1355
      %2833 = vmatmul.mubr.bf16.gmra.mrb[0].mxu0 %v1354
      %v2834 = vpop.f32.mrb[0].mxu0
      %v2835 = vadd.f32 %v2642, %v2834
      %v2836 = vpop.f32.mrb[0].mxu0
      %v2837 = vadd.f32 %v2644, %v2836
      %v2838 = vpop.f32.mrb[0].mxu0
      %v2839 = vadd.f32 %v2646, %v2838
      %v2840 = vpop.f32.mrb[0].mxu0
      %v2841 = vadd.f32 %v2648, %v2840
      %2842 = vmatprep.mubr.bf16.mxu0 %v1362
      %2843 = vmatmul.mubr.bf16.gmra.mrb[0].mxu0 %v1361
      %v2844 = vpop.f32.mrb[0].mxu0
      %v2845 = vadd.f32 %v2652, %v2844
      %v2846 = vpop.f32.mrb[0].mxu0
      %v2847 = vadd.f32 %v2654, %v2846
      %v2848 = vpop.f32.mrb[0].mxu0
      %v2849 = vadd.f32 %v2656, %v2848
      %v2850 = vpop.f32.mrb[0].mxu0
      %v2851 = vadd.f32 %v2658, %v2850
      %2852 = vmatprep.mubr.bf16.mxu0 %v1369
      %2853 = vmatmul.mubr.bf16.gmra.mrb[0].mxu0 %v1368
      %v2854 = vpop.f32.mrb[0].mxu0
      %v2855 = vadd.f32 %v2662, %v2854
      %v2856 = vpop.f32.mrb[0].mxu0
      %v2857 = vadd.f32 %v2664, %v2856
      %v2858 = vpop.f32.mrb[0].mxu0
      %v2859 = vadd.f32 %v2666, %v2858
      %v2860 = vpop.f32.mrb[0].mxu0
      %v2861 = vadd.f32 %v2668, %v2860
      %2862 = vmatprep.mubr.bf16.mxu0 %v1376
      %2863 = vmatmul.mubr.bf16.gmra.mrb[0].mxu0 %v1375
      %v2864 = vpop.f32.mrb[0].mxu0
      %v2865 = vadd.f32 %v2672, %v2864
      %v2866 = vpop.f32.mrb[0].mxu0
      %v2867 = vadd.f32 %v2674, %v2866
      %v2868 = vpop.f32.mrb[0].mxu0
      %v2869 = vadd.f32 %v2676, %v2868
      %v2870 = vpop.f32.mrb[0].mxu0
      %v2871 = vadd.f32 %v2678, %v2870
      %2872 = vmatprep.mubr.bf16.mxu0 %v1383
      %2873 = vmatmul.mubr.bf16.gmra.mrb[0].mxu0 %v1382
      %v2874 = vpop.f32.mrb[0].mxu0
      %v2875 = vadd.f32 %v2682, %v2874
      %v2876 = vpop.f32.mrb[0].mxu0
      %v2877 = vadd.f32 %v2684, %v2876
      %v2878 = vpop.f32.mrb[0].mxu0
      %v2879 = vadd.f32 %v2686, %v2878
      %v2880 = vpop.f32.mrb[0].mxu0
      %v2881 = vadd.f32 %v2688, %v2880
      %2882 = vmatprep.mubr.bf16.mxu0 %v1390
      %2883 = vmatmul.mubr.bf16.gmra.mrb[0].mxu0 %v1389
      %v2884 = vpop.f32.mrb[0].mxu0
      %v2885 = vadd.f32 %v2692, %v2884
      %v2886 = vpop.f32.mrb[0].mxu0
      %v2887 = vadd.f32 %v2694, %v2886
      %v2888 = vpop.f32.mrb[0].mxu0
      %v2889 = vadd.f32 %v2696, %v2888
      %v2890 = vpop.f32.mrb[0].mxu0
      %v2891 = vadd.f32 %v2698, %v2890
      %2892 = vmatprep.mubr.bf16.mxu0 %v1397
      %2893 = vmatmul.mubr.bf16.gmra.mrb[0].mxu0 %v1396
      %v2894 = vpop.f32.mrb[0].mxu0
      %v2895 = vadd.f32 %v2702, %v2894
      %v2896 = vpop.f32.mrb[0].mxu0
      %v2897 = vadd.f32 %v2704, %v2896
      %v2898 = vpop.f32.mrb[0].mxu0
      %v2899 = vadd.f32 %v2706, %v2898
      %v2900 = vpop.f32.mrb[0].mxu0
      %v2901 = vadd.f32 %v2708, %v2900
      %2902 = vmatprep.mubr.bf16.mxu0 %v1404
      %2903 = vmatmul.mubr.bf16.gmra.mrb[0].mxu0 %v1403
      %v2904 = vpop.f32.mrb[0].mxu0
      %v2905 = vadd.f32 %v2712, %v2904
      %v2906 = vpop.f32.mrb[0].mxu0
      %v2907 = vadd.f32 %v2714, %v2906
      %v2908 = vpop.f32.mrb[0].mxu0
      %v2909 = vadd.f32 %v2716, %v2908
      %v2910 = vpop.f32.mrb[0].mxu0
      %v2911 = vadd.f32 %v2718, %v2910
      %2912 = vmatprep.mubr.bf16.mxu0 %v1411
      %2913 = vmatmul.mubr.bf16.gmra.mrb[0].mxu0 %v1410
      %v2914 = vpop.f32.mrb[0].mxu0
      %v2915 = vadd.f32 %v2722, %v2914
      %v2916 = vpop.f32.mrb[0].mxu0
      %v2917 = vadd.f32 %v2724, %v2916
      %v2918 = vpop.f32.mrb[0].mxu0
      %v2919 = vadd.f32 %v2726, %v2918
      %v2920 = vpop.f32.mrb[0].mxu0
      %v2921 = vadd.f32 %v2728, %v2920
      %2922 = vmatprep.mubr.bf16.mxu0 %v1418
      %2923 = vmatmul.mubr.bf16.gmra.mrb[0].mxu0 %v1417
      %v2924 = vpop.f32.mrb[0].mxu0
      %v2925 = vadd.f32 %v2732, %v2924
      %v2926 = vpop.f32.mrb[0].mxu0
      %v2927 = vadd.f32 %v2734, %v2926
      %v2928 = vpop.f32.mrb[0].mxu0
      %v2929 = vadd.f32 %v2736, %v2928
      %v2930 = vpop.f32.mrb[0].mxu0
      %v2931 = vadd.f32 %v2738, %v2930
      %2932 = vdwg.mxu0
      %2933 = vmatprep.subr.bf16.mxu0 %v2235
      %2934 = vmatpush1.bf16.msra.mxu0 %v2234
      %2935 = vmatprep.subr.bf16.mxu0 %v2239
      %2936 = vmatpush1.bf16.msra.mxu0 %v2238
      %2937 = vmatprep.subr.bf16.mxu0 %v2243
      %2938 = vmatpush1.bf16.msra.mxu0 %v2242
      %2939 = vmatprep.subr.bf16.mxu0 %v2247
      %2940 = vmatpush1.bf16.msra.mxu0 %v2246
      %2941 = vmatprep.subr.bf16.mxu0 %v2251
      %2942 = vmatpush1.bf16.msra.mxu0 %v2250
      %2943 = vmatprep.subr.bf16.mxu0 %v2255
      %2944 = vmatpush1.bf16.msra.mxu0 %v2254
      %2945 = vmatprep.subr.bf16.mxu0 %v2259
      %2946 = vmatpush1.bf16.msra.mxu0 %v2258
      %2947 = vmatprep.subr.bf16.mxu0 %v2263
      %2948 = vmatpush1.bf16.msra.mxu0 %v2262
      %2949 = vmatprep.subr.bf16.mxu0 %v2267
      %2950 = vmatpush1.bf16.msra.mxu0 %v2266
      %2951 = vmatprep.subr.bf16.mxu0 %v2271
      %2952 = vmatpush1.bf16.msra.mxu0 %v2270
      %2953 = vmatprep.subr.bf16.mxu0 %v2275
      %2954 = vmatpush1.bf16.msra.mxu0 %v2274
      %2955 = vmatprep.subr.bf16.mxu0 %v2279
      %2956 = vmatpush1.bf16.msra.mxu0 %v2278
      %2957 = vmatprep.subr.bf16.mxu0 %v2283
      %2958 = vmatpush1.bf16.msra.mxu0 %v2282
      %2959 = vmatprep.subr.bf16.mxu0 %v2287
      %2960 = vmatpush1.bf16.msra.mxu0 %v2286
      %2961 = vmatprep.subr.bf16.mxu0 %v2291
      %2962 = vmatpush1.bf16.msra.mxu0 %v2290
      %2963 = vmatprep.subr.bf16.mxu0 %v2295
      %2964 = vmatpush1.bf16.msra.mxu0 %v2294
      %2965 = vmatprep.mubr.bf16.mxu0 %v1315
      %2966 = vmatmul.mubr.bf16.gmra.mrb[0].mxu0 %v1314
      %v2967 = vpop.f32.mrb[0].mxu0
      %v2968 = vadd.f32 %v2775, %v2967
      %v2969 = vpop.f32.mrb[0].mxu0
      %v2970 = vadd.f32 %v2777, %v2969
      %v2971 = vpop.f32.mrb[0].mxu0
      %v2972 = vadd.f32 %v2779, %v2971
      %v2973 = vpop.f32.mrb[0].mxu0
      %v2974 = vadd.f32 %v2781, %v2973
      %2975 = vmatprep.mubr.bf16.mxu0 %v1322
      %2976 = vmatmul.mubr.bf16.gmra.mrb[0].mxu0 %v1321
      %v2977 = vpop.f32.mrb[0].mxu0
      %v2978 = vadd.f32 %v2785, %v2977
      %v2979 = vpop.f32.mrb[0].mxu0
      %v2980 = vadd.f32 %v2787, %v2979
      %v2981 = vpop.f32.mrb[0].mxu0
      %v2982 = vadd.f32 %v2789, %v2981
      %v2983 = vpop.f32.mrb[0].mxu0
      %v2984 = vadd.f32 %v2791, %v2983
      %2985 = vmatprep.mubr.bf16.mxu0 %v1329
      %2986 = vmatmul.mubr.bf16.gmra.mrb[0].mxu0 %v1328
      %v2987 = vpop.f32.mrb[0].mxu0
      %v2988 = vadd.f32 %v2795, %v2987
      %v2989 = vpop.f32.mrb[0].mxu0
      %v2990 = vadd.f32 %v2797, %v2989
      %v2991 = vpop.f32.mrb[0].mxu0
      %v2992 = vadd.f32 %v2799, %v2991
      %v2993 = vpop.f32.mrb[0].mxu0
      %v2994 = vadd.f32 %v2801, %v2993
      %2995 = vmatprep.mubr.bf16.mxu0 %v1336
      %2996 = vmatmul.mubr.bf16.gmra.mrb[0].mxu0 %v1335
      %v2997 = vpop.f32.mrb[0].mxu0
      %v2998 = vadd.f32 %v2805, %v2997
      %v2999 = vpop.f32.mrb[0].mxu0
      %v3000 = vadd.f32 %v2807, %v2999
      %v3001 = vpop.f32.mrb[0].mxu0
      %v3002 = vadd.f32 %v2809, %v3001
      %v3003 = vpop.f32.mrb[0].mxu0
      %v3004 = vadd.f32 %v2811, %v3003
      %3005 = vmatprep.mubr.bf16.mxu0 %v1343
      %3006 = vmatmul.mubr.bf16.gmra.mrb[0].mxu0 %v1342
      %v3007 = vpop.f32.mrb[0].mxu0
      %v3008 = vadd.f32 %v2815, %v3007
      %v3009 = vpop.f32.mrb[0].mxu0
      %v3010 = vadd.f32 %v2817, %v3009
      %v3011 = vpop.f32.mrb[0].mxu0
      %v3012 = vadd.f32 %v2819, %v3011
      %v3013 = vpop.f32.mrb[0].mxu0
      %v3014 = vadd.f32 %v2821, %v3013
      %3015 = vmatprep.mubr.bf16.mxu0 %v1350
      %3016 = vmatmul.mubr.bf16.gmra.mrb[0].mxu0 %v1349
      %v3017 = vpop.f32.mrb[0].mxu0
      %v3018 = vadd.f32 %v2825, %v3017
      %v3019 = vpop.f32.mrb[0].mxu0
      %v3020 = vadd.f32 %v2827, %v3019
      %v3021 = vpop.f32.mrb[0].mxu0
      %v3022 = vadd.f32 %v2829, %v3021
      %v3023 = vpop.f32.mrb[0].mxu0
      %v3024 = vadd.f32 %v2831, %v3023
      %3025 = vmatprep.mubr.bf16.mxu0 %v1357
      %3026 = vmatmul.mubr.bf16.gmra.mrb[0].mxu0 %v1356
      %v3027 = vpop.f32.mrb[0].mxu0
      %v3028 = vadd.f32 %v2835, %v3027
      %v3029 = vpop.f32.mrb[0].mxu0
      %v3030 = vadd.f32 %v2837, %v3029
      %v3031 = vpop.f32.mrb[0].mxu0
      %v3032 = vadd.f32 %v2839, %v3031
      %v3033 = vpop.f32.mrb[0].mxu0
      %v3034 = vadd.f32 %v2841, %v3033
      %3035 = vmatprep.mubr.bf16.mxu0 %v1364
      %3036 = vmatmul.mubr.bf16.gmra.mrb[0].mxu0 %v1363
      %v3037 = vpop.f32.mrb[0].mxu0
      %v3038 = vadd.f32 %v2845, %v3037
      %v3039 = vpop.f32.mrb[0].mxu0
      %v3040 = vadd.f32 %v2847, %v3039
      %v3041 = vpop.f32.mrb[0].mxu0
      %v3042 = vadd.f32 %v2849, %v3041
      %v3043 = vpop.f32.mrb[0].mxu0
      %v3044 = vadd.f32 %v2851, %v3043
      %3045 = vmatprep.mubr.bf16.mxu0 %v1371
      %3046 = vmatmul.mubr.bf16.gmra.mrb[0].mxu0 %v1370
      %v3047 = vpop.f32.mrb[0].mxu0
      %v3048 = vadd.f32 %v2855, %v3047
      %v3049 = vpop.f32.mrb[0].mxu0
      %v3050 = vadd.f32 %v2857, %v3049
      %v3051 = vpop.f32.mrb[0].mxu0
      %v3052 = vadd.f32 %v2859, %v3051
      %v3053 = vpop.f32.mrb[0].mxu0
      %v3054 = vadd.f32 %v2861, %v3053
      %3055 = vmatprep.mubr.bf16.mxu0 %v1378
      %3056 = vmatmul.mubr.bf16.gmra.mrb[0].mxu0 %v1377
      %v3057 = vpop.f32.mrb[0].mxu0
      %v3058 = vadd.f32 %v2865, %v3057
      %v3059 = vpop.f32.mrb[0].mxu0
      %v3060 = vadd.f32 %v2867, %v3059
      %v3061 = vpop.f32.mrb[0].mxu0
      %v3062 = vadd.f32 %v2869, %v3061
      %v3063 = vpop.f32.mrb[0].mxu0
      %v3064 = vadd.f32 %v2871, %v3063
      %3065 = vmatprep.mubr.bf16.mxu0 %v1385
      %3066 = vmatmul.mubr.bf16.gmra.mrb[0].mxu0 %v1384
      %v3067 = vpop.f32.mrb[0].mxu0
      %v3068 = vadd.f32 %v2875, %v3067
      %v3069 = vpop.f32.mrb[0].mxu0
      %v3070 = vadd.f32 %v2877, %v3069
      %v3071 = vpop.f32.mrb[0].mxu0
      %v3072 = vadd.f32 %v2879, %v3071
      %v3073 = vpop.f32.mrb[0].mxu0
      %v3074 = vadd.f32 %v2881, %v3073
      %3075 = vmatprep.mubr.bf16.mxu0 %v1392
      %3076 = vmatmul.mubr.bf16.gmra.mrb[0].mxu0 %v1391
      %v3077 = vpop.f32.mrb[0].mxu0
      %v3078 = vadd.f32 %v2885, %v3077
      %v3079 = vpop.f32.mrb[0].mxu0
      %v3080 = vadd.f32 %v2887, %v3079
      %v3081 = vpop.f32.mrb[0].mxu0
      %v3082 = vadd.f32 %v2889, %v3081
      %v3083 = vpop.f32.mrb[0].mxu0
      %v3084 = vadd.f32 %v2891, %v3083
      %3085 = vmatprep.mubr.bf16.mxu0 %v1399
      %3086 = vmatmul.mubr.bf16.gmra.mrb[0].mxu0 %v1398
      %v3087 = vpop.f32.mrb[0].mxu0
      %v3088 = vadd.f32 %v2895, %v3087
      %v3089 = vpop.f32.mrb[0].mxu0
      %v3090 = vadd.f32 %v2897, %v3089
      %v3091 = vpop.f32.mrb[0].mxu0
      %v3092 = vadd.f32 %v2899, %v3091
      %v3093 = vpop.f32.mrb[0].mxu0
      %v3094 = vadd.f32 %v2901, %v3093
      %3095 = vmatprep.mubr.bf16.mxu0 %v1406
      %3096 = vmatmul.mubr.bf16.gmra.mrb[0].mxu0 %v1405
      %v3097 = vpop.f32.mrb[0].mxu0
      %v3098 = vadd.f32 %v2905, %v3097
      %v3099 = vpop.f32.mrb[0].mxu0
      %v3100 = vadd.f32 %v2907, %v3099
      %v3101 = vpop.f32.mrb[0].mxu0
      %v3102 = vadd.f32 %v2909, %v3101
      %v3103 = vpop.f32.mrb[0].mxu0
      %v3104 = vadd.f32 %v2911, %v3103
      %3105 = vmatprep.mubr.bf16.mxu0 %v1413
      %3106 = vmatmul.mubr.bf16.gmra.mrb[0].mxu0 %v1412
      %v3107 = vpop.f32.mrb[0].mxu0
      %v3108 = vadd.f32 %v2915, %v3107
      %v3109 = vpop.f32.mrb[0].mxu0
      %v3110 = vadd.f32 %v2917, %v3109
      %v3111 = vpop.f32.mrb[0].mxu0
      %v3112 = vadd.f32 %v2919, %v3111
      %v3113 = vpop.f32.mrb[0].mxu0
      %v3114 = vadd.f32 %v2921, %v3113
      %3115 = vmatprep.mubr.bf16.mxu0 %v1420
      %3116 = vmatmul.mubr.bf16.gmra.mrb[0].mxu0 %v1419
      %v3117 = vpop.f32.mrb[0].mxu0
      %v3118 = vadd.f32 %v2925, %v3117
      %v3119 = vpop.f32.mrb[0].mxu0
      %v3120 = vadd.f32 %v2927, %v3119
      %v3121 = vpop.f32.mrb[0].mxu0
      %v3122 = vadd.f32 %v2929, %v3121
      %v3123 = vpop.f32.mrb[0].mxu0
      %v3124 = vadd.f32 %v2931, %v3123
      %3125 = vdwg.mxu0
      %3126 = vmatprep.subr.bf16.mxu0 %v2299
      %3127 = vmatpush1.bf16.msra.mxu0 %v2298
      %3128 = vmatprep.subr.bf16.mxu0 0
      %3129 = vmatpush1.bf16.msra.mxu0 0
      %3130 = vmatprep.subr.bf16.mxu0 0
      %3131 = vmatpush1.bf16.msra.mxu0 0
      %3132 = vmatprep.subr.bf16.mxu0 0
      %3133 = vmatpush1.bf16.msra.mxu0 0
      %3134 = vmatprep.subr.bf16.mxu0 0
      %3135 = vmatpush1.bf16.msra.mxu0 0
      %3136 = vmatprep.subr.bf16.mxu0 0
      %3137 = vmatpush1.bf16.msra.mxu0 0
      %3138 = vmatprep.subr.bf16.mxu0 0
      %3139 = vmatpush1.bf16.msra.mxu0 0
      %3140 = vmatprep.subr.bf16.mxu0 0
      %3141 = vmatpush1.bf16.msra.mxu0 0
      %3142 = vmatprep.subr.bf16.mxu0 0
      %3143 = vmatpush1.bf16.msra.mxu0 0
      %3144 = vmatprep.subr.bf16.mxu0 0
      %3145 = vmatpush1.bf16.msra.mxu0 0
      %3146 = vmatprep.subr.bf16.mxu0 0
      %3147 = vmatpush1.bf16.msra.mxu0 0
      %3148 = vmatprep.subr.bf16.mxu0 0
      %3149 = vmatpush1.bf16.msra.mxu0 0
      %3150 = vmatprep.subr.bf16.mxu0 0
      %3151 = vmatpush1.bf16.msra.mxu0 0
      %3152 = vmatprep.subr.bf16.mxu0 0
      %3153 = vmatpush1.bf16.msra.mxu0 0
      %3154 = vmatprep.subr.bf16.mxu0 0
      %3155 = vmatpush1.bf16.msra.mxu0 0
      %3156 = vmatprep.subr.bf16.mxu0 0
      %3157 = vmatpush1.bf16.msra.mxu0 0
      %3158 = vmatprep.mubr.bf16.mxu0 0
      %3159 = vmatmul.mubr.bf16.gmra.mrb[0].mxu0 %v2500
      %v3160 = vpop.f32.mrb[0].mxu0
      %v3161 = vadd.f32 %v2968, %v3160
      %v3162 = vpop.f32.mrb[0].mxu0
      %v3163 = vadd.f32 %v2970, %v3162
      %v3164 = vpop.f32.mrb[0].mxu0
      %v3165 = vadd.f32 %v2972, %v3164
      %v3166 = vpop.f32.mrb[0].mxu0
      %v3167 = vadd.f32 %v2974, %v3166
      %3168 = vmatprep.mubr.bf16.mxu0 0
      %3169 = vmatmul.mubr.bf16.gmra.mrb[0].mxu0 %v2503
      %v3170 = vpop.f32.mrb[0].mxu0
      %v3171 = vadd.f32 %v2978, %v3170
      %v3172 = vpop.f32.mrb[0].mxu0
      %v3173 = vadd.f32 %v2980, %v3172
      %v3174 = vpop.f32.mrb[0].mxu0
      %v3175 = vadd.f32 %v2982, %v3174
      %v3176 = vpop.f32.mrb[0].mxu0
      %v3177 = vadd.f32 %v2984, %v3176
      %3178 = vmatprep.mubr.bf16.mxu0 0
      %3179 = vmatmul.mubr.bf16.gmra.mrb[0].mxu0 %v2506
      %v3180 = vpop.f32.mrb[0].mxu0
      %v3181 = vadd.f32 %v2988, %v3180
      %v3182 = vpop.f32.mrb[0].mxu0
      %v3183 = vadd.f32 %v2990, %v3182
      %v3184 = vpop.f32.mrb[0].mxu0
      %v3185 = vadd.f32 %v2992, %v3184
      %v3186 = vpop.f32.mrb[0].mxu0
      %v3187 = vadd.f32 %v2994, %v3186
      %3188 = vmatprep.mubr.bf16.mxu0 0
      %3189 = vmatmul.mubr.bf16.gmra.mrb[0].mxu0 %v2509
      %v3190 = vpop.f32.mrb[0].mxu0
      %v3191 = vadd.f32 %v2998, %v3190
      %v3192 = vpop.f32.mrb[0].mxu0
      %v3193 = vadd.f32 %v3000, %v3192
      %v3194 = vpop.f32.mrb[0].mxu0
      %v3195 = vadd.f32 %v3002, %v3194
      %v3196 = vpop.f32.mrb[0].mxu0
      %v3197 = vadd.f32 %v3004, %v3196
      %3198 = vmatprep.mubr.bf16.mxu0 0
      %3199 = vmatmul.mubr.bf16.gmra.mrb[0].mxu0 %v2512
      %v3200 = vpop.f32.mrb[0].mxu0
      %v3201 = vadd.f32 %v3008, %v3200
      %v3202 = vpop.f32.mrb[0].mxu0
      %v3203 = vadd.f32 %v3010, %v3202
      %v3204 = vpop.f32.mrb[0].mxu0
      %v3205 = vadd.f32 %v3012, %v3204
      %v3206 = vpop.f32.mrb[0].mxu0
      %v3207 = vadd.f32 %v3014, %v3206
      %3208 = vmatprep.mubr.bf16.mxu0 0
      %3209 = vmatmul.mubr.bf16.gmra.mrb[0].mxu0 %v2515
      %v3210 = vpop.f32.mrb[0].mxu0
      %v3211 = vadd.f32 %v3018, %v3210
      %v3212 = vpop.f32.mrb[0].mxu0
      %v3213 = vadd.f32 %v3020, %v3212
      %v3214 = vpop.f32.mrb[0].mxu0
      %v3215 = vadd.f32 %v3022, %v3214
      %v3216 = vpop.f32.mrb[0].mxu0
      %v3217 = vadd.f32 %v3024, %v3216
      %3218 = vmatprep.mubr.bf16.mxu0 0
      %3219 = vmatmul.mubr.bf16.gmra.mrb[0].mxu0 %v2518
      %v3220 = vpop.f32.mrb[0].mxu0
      %v3221 = vadd.f32 %v3028, %v3220
      %v3222 = vpop.f32.mrb[0].mxu0
      %v3223 = vadd.f32 %v3030, %v3222
      %v3224 = vpop.f32.mrb[0].mxu0
      %v3225 = vadd.f32 %v3032, %v3224
      %v3226 = vpop.f32.mrb[0].mxu0
      %v3227 = vadd.f32 %v3034, %v3226
      %3228 = vmatprep.mubr.bf16.mxu0 0
      %3229 = vmatmul.mubr.bf16.gmra.mrb[0].mxu0 %v2521
      %v3230 = vpop.f32.mrb[0].mxu0
      %v3231 = vadd.f32 %v3038, %v3230
      %v3232 = vpop.f32.mrb[0].mxu0
      %v3233 = vadd.f32 %v3040, %v3232
      %v3234 = vpop.f32.mrb[0].mxu0
      %v3235 = vadd.f32 %v3042, %v3234
      %v3236 = vpop.f32.mrb[0].mxu0
      %v3237 = vadd.f32 %v3044, %v3236
      %3238 = vmatprep.mubr.bf16.mxu0 0
      %3239 = vmatmul.mubr.bf16.gmra.mrb[0].mxu0 %v2524
      %v3240 = vpop.f32.mrb[0].mxu0
      %v3241 = vadd.f32 %v3048, %v3240
      %v3242 = vpop.f32.mrb[0].mxu0
      %v3243 = vadd.f32 %v3050, %v3242
      %v3244 = vpop.f32.mrb[0].mxu0
      %v3245 = vadd.f32 %v3052, %v3244
      %v3246 = vpop.f32.mrb[0].mxu0
      %v3247 = vadd.f32 %v3054, %v3246
      %3248 = vmatprep.mubr.bf16.mxu0 0
      %3249 = vmatmul.mubr.bf16.gmra.mrb[0].mxu0 %v2527
      %v3250 = vpop.f32.mrb[0].mxu0
      %v3251 = vadd.f32 %v3058, %v3250
      %v3252 = vpop.f32.mrb[0].mxu0
      %v3253 = vadd.f32 %v3060, %v3252
      %v3254 = vpop.f32.mrb[0].mxu0
      %v3255 = vadd.f32 %v3062, %v3254
      %v3256 = vpop.f32.mrb[0].mxu0
      %v3257 = vadd.f32 %v3064, %v3256
      %3258 = vmatprep.mubr.bf16.mxu0 0
      %3259 = vmatmul.mubr.bf16.gmra.mrb[0].mxu0 %v2530
      %v3260 = vpop.f32.mrb[0].mxu0
      %v3261 = vadd.f32 %v3068, %v3260
      %v3262 = vpop.f32.mrb[0].mxu0
      %v3263 = vadd.f32 %v3070, %v3262
      %v3264 = vpop.f32.mrb[0].mxu0
      %v3265 = vadd.f32 %v3072, %v3264
      %v3266 = vpop.f32.mrb[0].mxu0
      %v3267 = vadd.f32 %v3074, %v3266
      %3268 = vmatprep.mubr.bf16.mxu0 0
      %3269 = vmatmul.mubr.bf16.gmra.mrb[0].mxu0 %v2533
      %v3270 = vpop.f32.mrb[0].mxu0
      %v3271 = vadd.f32 %v3078, %v3270
      %v3272 = vpop.f32.mrb[0].mxu0
      %v3273 = vadd.f32 %v3080, %v3272
      %v3274 = vpop.f32.mrb[0].mxu0
      %v3275 = vadd.f32 %v3082, %v3274
      %v3276 = vpop.f32.mrb[0].mxu0
      %v3277 = vadd.f32 %v3084, %v3276
      %3278 = vmatprep.mubr.bf16.mxu0 0
      %3279 = vmatmul.mubr.bf16.gmra.mrb[0].mxu0 %v2536
      %v3280 = vpop.f32.mrb[0].mxu0
      %v3281 = vadd.f32 %v3088, %v3280
      %v3282 = vpop.f32.mrb[0].mxu0
      %v3283 = vadd.f32 %v3090, %v3282
      %v3284 = vpop.f32.mrb[0].mxu0
      %v3285 = vadd.f32 %v3092, %v3284
      %v3286 = vpop.f32.mrb[0].mxu0
      %v3287 = vadd.f32 %v3094, %v3286
      %3288 = vmatprep.mubr.bf16.mxu0 0
      %3289 = vmatmul.mubr.bf16.gmra.mrb[0].mxu0 %v2539
      %v3290 = vpop.f32.mrb[0].mxu0
      %v3291 = vadd.f32 %v3098, %v3290
      %v3292 = vpop.f32.mrb[0].mxu0
      %v3293 = vadd.f32 %v3100, %v3292
      %v3294 = vpop.f32.mrb[0].mxu0
      %v3295 = vadd.f32 %v3102, %v3294
      %v3296 = vpop.f32.mrb[0].mxu0
      %v3297 = vadd.f32 %v3104, %v3296
      %3298 = vmatprep.mubr.bf16.mxu0 0
      %3299 = vmatmul.mubr.bf16.gmra.mrb[0].mxu0 %v2542
      %v3300 = vpop.f32.mrb[0].mxu0
      %v3301 = vadd.f32 %v3108, %v3300
      %v3302 = vpop.f32.mrb[0].mxu0
      %v3303 = vadd.f32 %v3110, %v3302
      %v3304 = vpop.f32.mrb[0].mxu0
      %v3305 = vadd.f32 %v3112, %v3304
      %v3306 = vpop.f32.mrb[0].mxu0
      %v3307 = vadd.f32 %v3114, %v3306
      %3308 = vmatprep.mubr.bf16.mxu0 0
      %3309 = vmatmul.mubr.bf16.gmra.mrb[0].mxu0 %v2545
      %v3310 = vpop.f32.mrb[0].mxu0
      %v3311 = vadd.f32 %v3118, %v3310
      %v3312 = vpop.f32.mrb[0].mxu0
      %v3313 = vadd.f32 %v3120, %v3312
      %v3314 = vpop.f32.mrb[0].mxu0
      %v3315 = vadd.f32 %v3122, %v3314
      %v3316 = vpop.f32.mrb[0].mxu0
      %v3317 = vadd.f32 %v3124, %v3316
      %3318 = vdwg.mxu0
      %3319 = vmatprep.subr.bf16.mxu0 %v2109
      %3320 = vmatpush1.bf16.msra.mxu0 %v2108
      %3321 = vmatprep.subr.bf16.mxu0 %v2113
      %3322 = vmatpush1.bf16.msra.mxu0 %v2112
      %3323 = vmatprep.subr.bf16.mxu0 %v2117
      %3324 = vmatpush1.bf16.msra.mxu0 %v2116
      %3325 = vmatprep.subr.bf16.mxu0 %v2121
      %3326 = vmatpush1.bf16.msra.mxu0 %v2120
      %3327 = vmatprep.subr.bf16.mxu0 %v2125
      %3328 = vmatpush1.bf16.msra.mxu0 %v2124
      %3329 = vmatprep.subr.bf16.mxu0 %v2129
      %3330 = vmatpush1.bf16.msra.mxu0 %v2128
      %3331 = vmatprep.subr.bf16.mxu0 %v2133
      %3332 = vmatpush1.bf16.msra.mxu0 %v2132
      %3333 = vmatprep.subr.bf16.mxu0 %v2137
      %3334 = vmatpush1.bf16.msra.mxu0 %v2136
      %3335 = vmatprep.subr.bf16.mxu0 %v2141
      %3336 = vmatpush1.bf16.msra.mxu0 %v2140
      %3337 = vmatprep.subr.bf16.mxu0 %v2145
      %3338 = vmatpush1.bf16.msra.mxu0 %v2144
      %3339 = vmatprep.subr.bf16.mxu0 %v2149
      %3340 = vmatpush1.bf16.msra.mxu0 %v2148
      %3341 = vmatprep.subr.bf16.mxu0 %v2153
      %3342 = vmatpush1.bf16.msra.mxu0 %v2152
      %3343 = vmatprep.subr.bf16.mxu0 %v2157
      %3344 = vmatpush1.bf16.msra.mxu0 %v2156
      %3345 = vmatprep.subr.bf16.mxu0 %v2161
      %3346 = vmatpush1.bf16.msra.mxu0 %v2160
      %3347 = vmatprep.subr.bf16.mxu0 %v2165
      %3348 = vmatpush1.bf16.msra.mxu0 %v2164
      %3349 = vmatprep.subr.bf16.mxu0 %v2169
      %3350 = vmatpush1.bf16.msra.mxu0 %v2168
      %3351 = vmatprep.mubr.bf16.mxu0 %v1311
      %3352 = vmatmul.mubr.bf16.gmra.mrb[0].mxu0 %v1310
      %v3353 = vpop.f32.mrb[0].mxu0
      %v3354 = vadd.f32 %v949, %v3353
      %v3355 = vpop.f32.mrb[0].mxu0
      %v3356 = vadd.f32 %v953, %v3355
      %v3357 = vpop.f32.mrb[0].mxu0
      %v3358 = vadd.f32 %v949, %v3357
      %v3359 = vpop.f32.mrb[0].mxu0
      %v3360 = vadd.f32 %v953, %v3359
      %3361 = vmatprep.mubr.bf16.mxu0 %v1318
      %3362 = vmatmul.mubr.bf16.gmra.mrb[0].mxu0 %v1317
      %v3363 = vpop.f32.mrb[0].mxu0
      %v3364 = vadd.f32 %v949, %v3363
      %v3365 = vpop.f32.mrb[0].mxu0
      %v3366 = vadd.f32 %v953, %v3365
      %v3367 = vpop.f32.mrb[0].mxu0
      %v3368 = vadd.f32 %v949, %v3367
      %v3369 = vpop.f32.mrb[0].mxu0
      %v3370 = vadd.f32 %v953, %v3369
      %3371 = vmatprep.mubr.bf16.mxu0 %v1325
      %3372 = vmatmul.mubr.bf16.gmra.mrb[0].mxu0 %v1324
      %v3373 = vpop.f32.mrb[0].mxu0
      %v3374 = vadd.f32 %v949, %v3373
      %v3375 = vpop.f32.mrb[0].mxu0
      %v3376 = vadd.f32 %v953, %v3375
      %v3377 = vpop.f32.mrb[0].mxu0
      %v3378 = vadd.f32 %v949, %v3377
      %v3379 = vpop.f32.mrb[0].mxu0
      %v3380 = vadd.f32 %v953, %v3379
      %3381 = vmatprep.mubr.bf16.mxu0 %v1332
      %3382 = vmatmul.mubr.bf16.gmra.mrb[0].mxu0 %v1331
      %v3383 = vpop.f32.mrb[0].mxu0
      %v3384 = vadd.f32 %v949, %v3383
      %v3385 = vpop.f32.mrb[0].mxu0
      %v3386 = vadd.f32 %v953, %v3385
      %v3387 = vpop.f32.mrb[0].mxu0
      %v3388 = vadd.f32 %v949, %v3387
      %v3389 = vpop.f32.mrb[0].mxu0
      %v3390 = vadd.f32 %v953, %v3389
      %3391 = vmatprep.mubr.bf16.mxu0 %v1339
      %3392 = vmatmul.mubr.bf16.gmra.mrb[0].mxu0 %v1338
      %v3393 = vpop.f32.mrb[0].mxu0
      %v3394 = vadd.f32 %v949, %v3393
      %v3395 = vpop.f32.mrb[0].mxu0
      %v3396 = vadd.f32 %v953, %v3395
      %v3397 = vpop.f32.mrb[0].mxu0
      %v3398 = vadd.f32 %v949, %v3397
      %v3399 = vpop.f32.mrb[0].mxu0
      %v3400 = vadd.f32 %v953, %v3399
      %3401 = vmatprep.mubr.bf16.mxu0 %v1346
      %3402 = vmatmul.mubr.bf16.gmra.mrb[0].mxu0 %v1345
      %v3403 = vpop.f32.mrb[0].mxu0
      %v3404 = vadd.f32 %v949, %v3403
      %v3405 = vpop.f32.mrb[0].mxu0
      %v3406 = vadd.f32 %v953, %v3405
      %v3407 = vpop.f32.mrb[0].mxu0
      %v3408 = vadd.f32 %v949, %v3407
      %v3409 = vpop.f32.mrb[0].mxu0
      %v3410 = vadd.f32 %v953, %v3409
      %3411 = vmatprep.mubr.bf16.mxu0 %v1353
      %3412 = vmatmul.mubr.bf16.gmra.mrb[0].mxu0 %v1352
      %v3413 = vpop.f32.mrb[0].mxu0
      %v3414 = vadd.f32 %v949, %v3413
      %v3415 = vpop.f32.mrb[0].mxu0
      %v3416 = vadd.f32 %v953, %v3415
      %v3417 = vpop.f32.mrb[0].mxu0
      %v3418 = vadd.f32 %v949, %v3417
      %v3419 = vpop.f32.mrb[0].mxu0
      %v3420 = vadd.f32 %v953, %v3419
      %3421 = vmatprep.mubr.bf16.mxu0 %v1360
      %3422 = vmatmul.mubr.bf16.gmra.mrb[0].mxu0 %v1359
      %v3423 = vpop.f32.mrb[0].mxu0
      %v3424 = vadd.f32 %v949, %v3423
      %v3425 = vpop.f32.mrb[0].mxu0
      %v3426 = vadd.f32 %v953, %v3425
      %v3427 = vpop.f32.mrb[0].mxu0
      %v3428 = vadd.f32 %v949, %v3427
      %v3429 = vpop.f32.mrb[0].mxu0
      %v3430 = vadd.f32 %v953, %v3429
      %3431 = vmatprep.mubr.bf16.mxu0 %v1367
      %3432 = vmatmul.mubr.bf16.gmra.mrb[0].mxu0 %v1366
      %v3433 = vpop.f32.mrb[0].mxu0
      %v3434 = vadd.f32 %v949, %v3433
      %v3435 = vpop.f32.mrb[0].mxu0
      %v3436 = vadd.f32 %v953, %v3435
      %v3437 = vpop.f32.mrb[0].mxu0
      %v3438 = vadd.f32 %v949, %v3437
      %v3439 = vpop.f32.mrb[0].mxu0
      %v3440 = vadd.f32 %v953, %v3439
      %3441 = vmatprep.mubr.bf16.mxu0 %v1374
      %3442 = vmatmul.mubr.bf16.gmra.mrb[0].mxu0 %v1373
      %v3443 = vpop.f32.mrb[0].mxu0
      %v3444 = vadd.f32 %v949, %v3443
      %v3445 = vpop.f32.mrb[0].mxu0
      %v3446 = vadd.f32 %v953, %v3445
      %v3447 = vpop.f32.mrb[0].mxu0
      %v3448 = vadd.f32 %v949, %v3447
      %v3449 = vpop.f32.mrb[0].mxu0
      %v3450 = vadd.f32 %v953, %v3449
      %3451 = vmatprep.mubr.bf16.mxu0 %v1381
      %3452 = vmatmul.mubr.bf16.gmra.mrb[0].mxu0 %v1380
      %v3453 = vpop.f32.mrb[0].mxu0
      %v3454 = vadd.f32 %v949, %v3453
      %v3455 = vpop.f32.mrb[0].mxu0
      %v3456 = vadd.f32 %v953, %v3455
      %v3457 = vpop.f32.mrb[0].mxu0
      %v3458 = vadd.f32 %v949, %v3457
      %v3459 = vpop.f32.mrb[0].mxu0
      %v3460 = vadd.f32 %v953, %v3459
      %3461 = vmatprep.mubr.bf16.mxu0 %v1388
      %3462 = vmatmul.mubr.bf16.gmra.mrb[0].mxu0 %v1387
      %v3463 = vpop.f32.mrb[0].mxu0
      %v3464 = vadd.f32 %v949, %v3463
      %v3465 = vpop.f32.mrb[0].mxu0
      %v3466 = vadd.f32 %v953, %v3465
      %v3467 = vpop.f32.mrb[0].mxu0
      %v3468 = vadd.f32 %v949, %v3467
      %v3469 = vpop.f32.mrb[0].mxu0
      %v3470 = vadd.f32 %v953, %v3469
      %3471 = vmatprep.mubr.bf16.mxu0 %v1395
      %3472 = vmatmul.mubr.bf16.gmra.mrb[0].mxu0 %v1394
      %v3473 = vpop.f32.mrb[0].mxu0
      %v3474 = vadd.f32 %v949, %v3473
      %v3475 = vpop.f32.mrb[0].mxu0
      %v3476 = vadd.f32 %v953, %v3475
      %v3477 = vpop.f32.mrb[0].mxu0
      %v3478 = vadd.f32 %v949, %v3477
      %v3479 = vpop.f32.mrb[0].mxu0
      %v3480 = vadd.f32 %v953, %v3479
      %3481 = vmatprep.mubr.bf16.mxu0 %v1402
      %3482 = vmatmul.mubr.bf16.gmra.mrb[0].mxu0 %v1401
      %v3483 = vpop.f32.mrb[0].mxu0
      %v3484 = vadd.f32 %v949, %v3483
      %v3485 = vpop.f32.mrb[0].mxu0
      %v3486 = vadd.f32 %v953, %v3485
      %v3487 = vpop.f32.mrb[0].mxu0
      %v3488 = vadd.f32 %v949, %v3487
      %v3489 = vpop.f32.mrb[0].mxu0
      %v3490 = vadd.f32 %v953, %v3489
      %3491 = vmatprep.mubr.bf16.mxu0 %v1409
      %3492 = vmatmul.mubr.bf16.gmra.mrb[0].mxu0 %v1408
      %v3493 = vpop.f32.mrb[0].mxu0
      %v3494 = vadd.f32 %v949, %v3493
      %v3495 = vpop.f32.mrb[0].mxu0
      %v3496 = vadd.f32 %v953, %v3495
      %v3497 = vpop.f32.mrb[0].mxu0
      %v3498 = vadd.f32 %v949, %v3497
      %v3499 = vpop.f32.mrb[0].mxu0
      %v3500 = vadd.f32 %v953, %v3499
      %3501 = vmatprep.mubr.bf16.mxu0 %v1416
      %3502 = vmatmul.mubr.bf16.gmra.mrb[0].mxu0 %v1415
      %v3503 = vpop.f32.mrb[0].mxu0
      %v3504 = vadd.f32 %v949, %v3503
      %v3505 = vpop.f32.mrb[0].mxu0
      %v3506 = vadd.f32 %v953, %v3505
      %v3507 = vpop.f32.mrb[0].mxu0
      %v3508 = vadd.f32 %v949, %v3507
      %v3509 = vpop.f32.mrb[0].mxu0
      %v3510 = vadd.f32 %v953, %v3509
      %3511 = vdwg.mxu0
      %3512 = vmatprep.subr.bf16.mxu0 %v2173
      %3513 = vmatpush1.bf16.msra.mxu0 %v2172
      %3514 = vmatprep.subr.bf16.mxu0 %v2177
      %3515 = vmatpush1.bf16.msra.mxu0 %v2176
      %3516 = vmatprep.subr.bf16.mxu0 %v2181
      %3517 = vmatpush1.bf16.msra.mxu0 %v2180
      %3518 = vmatprep.subr.bf16.mxu0 %v2185
      %3519 = vmatpush1.bf16.msra.mxu0 %v2184
      %3520 = vmatprep.subr.bf16.mxu0 %v2189
      %3521 = vmatpush1.bf16.msra.mxu0 %v2188
      %3522 = vmatprep.subr.bf16.mxu0 %v2193
      %3523 = vmatpush1.bf16.msra.mxu0 %v2192
      %3524 = vmatprep.subr.bf16.mxu0 %v2197
      %3525 = vmatpush1.bf16.msra.mxu0 %v2196
      %3526 = vmatprep.subr.bf16.mxu0 %v2201
      %3527 = vmatpush1.bf16.msra.mxu0 %v2200
      %3528 = vmatprep.subr.bf16.mxu0 %v2205
      %3529 = vmatpush1.bf16.msra.mxu0 %v2204
      %3530 = vmatprep.subr.bf16.mxu0 %v2209
      %3531 = vmatpush1.bf16.msra.mxu0 %v2208
      %3532 = vmatprep.subr.bf16.mxu0 %v2213
      %3533 = vmatpush1.bf16.msra.mxu0 %v2212
      %3534 = vmatprep.subr.bf16.mxu0 %v2217
      %3535 = vmatpush1.bf16.msra.mxu0 %v2216
      %3536 = vmatprep.subr.bf16.mxu0 %v2221
      %3537 = vmatpush1.bf16.msra.mxu0 %v2220
      %3538 = vmatprep.subr.bf16.mxu0 %v2225
      %3539 = vmatpush1.bf16.msra.mxu0 %v2224
      %3540 = vmatprep.subr.bf16.mxu0 %v2229
      %3541 = vmatpush1.bf16.msra.mxu0 %v2228
      %3542 = vmatprep.subr.bf16.mxu0 %v2233
      %3543 = vmatpush1.bf16.msra.mxu0 %v2232
      %3544 = vmatprep.mubr.bf16.mxu0 %v1313
      %3545 = vmatmul.mubr.bf16.gmra.mrb[0].mxu0 %v1312
      %v3546 = vpop.f32.mrb[0].mxu0
      %v3547 = vadd.f32 %v3354, %v3546
      %v3548 = vpop.f32.mrb[0].mxu0
      %v3549 = vadd.f32 %v3356, %v3548
      %v3550 = vpop.f32.mrb[0].mxu0
      %v3551 = vadd.f32 %v3358, %v3550
      %v3552 = vpop.f32.mrb[0].mxu0
      %v3553 = vadd.f32 %v3360, %v3552
      %3554 = vmatprep.mubr.bf16.mxu0 %v1320
      %3555 = vmatmul.mubr.bf16.gmra.mrb[0].mxu0 %v1319
      %v3556 = vpop.f32.mrb[0].mxu0
      %v3557 = vadd.f32 %v3364, %v3556
      %v3558 = vpop.f32.mrb[0].mxu0
      %v3559 = vadd.f32 %v3366, %v3558
      %v3560 = vpop.f32.mrb[0].mxu0
      %v3561 = vadd.f32 %v3368, %v3560
      %v3562 = vpop.f32.mrb[0].mxu0
      %v3563 = vadd.f32 %v3370, %v3562
      %3564 = vmatprep.mubr.bf16.mxu0 %v1327
      %3565 = vmatmul.mubr.bf16.gmra.mrb[0].mxu0 %v1326
      %v3566 = vpop.f32.mrb[0].mxu0
      %v3567 = vadd.f32 %v3374, %v3566
      %v3568 = vpop.f32.mrb[0].mxu0
      %v3569 = vadd.f32 %v3376, %v3568
      %v3570 = vpop.f32.mrb[0].mxu0
      %v3571 = vadd.f32 %v3378, %v3570
      %v3572 = vpop.f32.mrb[0].mxu0
      %v3573 = vadd.f32 %v3380, %v3572
      %3574 = vmatprep.mubr.bf16.mxu0 %v1334
      %3575 = vmatmul.mubr.bf16.gmra.mrb[0].mxu0 %v1333
      %v3576 = vpop.f32.mrb[0].mxu0
      %v3577 = vadd.f32 %v3384, %v3576
      %v3578 = vpop.f32.mrb[0].mxu0
      %v3579 = vadd.f32 %v3386, %v3578
      %v3580 = vpop.f32.mrb[0].mxu0
      %v3581 = vadd.f32 %v3388, %v3580
      %v3582 = vpop.f32.mrb[0].mxu0
      %v3583 = vadd.f32 %v3390, %v3582
      %3584 = vmatprep.mubr.bf16.mxu0 %v1341
      %3585 = vmatmul.mubr.bf16.gmra.mrb[0].mxu0 %v1340
      %v3586 = vpop.f32.mrb[0].mxu0
      %v3587 = vadd.f32 %v3394, %v3586
      %v3588 = vpop.f32.mrb[0].mxu0
      %v3589 = vadd.f32 %v3396, %v3588
      %v3590 = vpop.f32.mrb[0].mxu0
      %v3591 = vadd.f32 %v3398, %v3590
      %v3592 = vpop.f32.mrb[0].mxu0
      %v3593 = vadd.f32 %v3400, %v3592
      %3594 = vmatprep.mubr.bf16.mxu0 %v1348
      %3595 = vmatmul.mubr.bf16.gmra.mrb[0].mxu0 %v1347
      %v3596 = vpop.f32.mrb[0].mxu0
      %v3597 = vadd.f32 %v3404, %v3596
      %v3598 = vpop.f32.mrb[0].mxu0
      %v3599 = vadd.f32 %v3406, %v3598
      %v3600 = vpop.f32.mrb[0].mxu0
      %v3601 = vadd.f32 %v3408, %v3600
      %v3602 = vpop.f32.mrb[0].mxu0
      %v3603 = vadd.f32 %v3410, %v3602
      %3604 = vmatprep.mubr.bf16.mxu0 %v1355
      %3605 = vmatmul.mubr.bf16.gmra.mrb[0].mxu0 %v1354
      %v3606 = vpop.f32.mrb[0].mxu0
      %v3607 = vadd.f32 %v3414, %v3606
      %v3608 = vpop.f32.mrb[0].mxu0
      %v3609 = vadd.f32 %v3416, %v3608
      %v3610 = vpop.f32.mrb[0].mxu0
      %v3611 = vadd.f32 %v3418, %v3610
      %v3612 = vpop.f32.mrb[0].mxu0
      %v3613 = vadd.f32 %v3420, %v3612
      %3614 = vmatprep.mubr.bf16.mxu0 %v1362
      %3615 = vmatmul.mubr.bf16.gmra.mrb[0].mxu0 %v1361
      %v3616 = vpop.f32.mrb[0].mxu0
      %v3617 = vadd.f32 %v3424, %v3616
      %v3618 = vpop.f32.mrb[0].mxu0
      %v3619 = vadd.f32 %v3426, %v3618
      %v3620 = vpop.f32.mrb[0].mxu0
      %v3621 = vadd.f32 %v3428, %v3620
      %v3622 = vpop.f32.mrb[0].mxu0
      %v3623 = vadd.f32 %v3430, %v3622
      %3624 = vmatprep.mubr.bf16.mxu0 %v1369
      %3625 = vmatmul.mubr.bf16.gmra.mrb[0].mxu0 %v1368
      %v3626 = vpop.f32.mrb[0].mxu0
      %v3627 = vadd.f32 %v3434, %v3626
      %v3628 = vpop.f32.mrb[0].mxu0
      %v3629 = vadd.f32 %v3436, %v3628
      %v3630 = vpop.f32.mrb[0].mxu0
      %v3631 = vadd.f32 %v3438, %v3630
      %v3632 = vpop.f32.mrb[0].mxu0
      %v3633 = vadd.f32 %v3440, %v3632
      %3634 = vmatprep.mubr.bf16.mxu0 %v1376
      %3635 = vmatmul.mubr.bf16.gmra.mrb[0].mxu0 %v1375
      %v3636 = vpop.f32.mrb[0].mxu0
      %v3637 = vadd.f32 %v3444, %v3636
      %v3638 = vpop.f32.mrb[0].mxu0
      %v3639 = vadd.f32 %v3446, %v3638
      %v3640 = vpop.f32.mrb[0].mxu0
      %v3641 = vadd.f32 %v3448, %v3640
      %v3642 = vpop.f32.mrb[0].mxu0
      %v3643 = vadd.f32 %v3450, %v3642
      %3644 = vmatprep.mubr.bf16.mxu0 %v1383
      %3645 = vmatmul.mubr.bf16.gmra.mrb[0].mxu0 %v1382
      %v3646 = vpop.f32.mrb[0].mxu0
      %v3647 = vadd.f32 %v3454, %v3646
      %v3648 = vpop.f32.mrb[0].mxu0
      %v3649 = vadd.f32 %v3456, %v3648
      %v3650 = vpop.f32.mrb[0].mxu0
      %v3651 = vadd.f32 %v3458, %v3650
      %v3652 = vpop.f32.mrb[0].mxu0
      %v3653 = vadd.f32 %v3460, %v3652
      %3654 = vmatprep.mubr.bf16.mxu0 %v1390
      %3655 = vmatmul.mubr.bf16.gmra.mrb[0].mxu0 %v1389
      %v3656 = vpop.f32.mrb[0].mxu0
      %v3657 = vadd.f32 %v3464, %v3656
      %v3658 = vpop.f32.mrb[0].mxu0
      %v3659 = vadd.f32 %v3466, %v3658
      %v3660 = vpop.f32.mrb[0].mxu0
      %v3661 = vadd.f32 %v3468, %v3660
      %v3662 = vpop.f32.mrb[0].mxu0
      %v3663 = vadd.f32 %v3470, %v3662
      %3664 = vmatprep.mubr.bf16.mxu0 %v1397
      %3665 = vmatmul.mubr.bf16.gmra.mrb[0].mxu0 %v1396
      %v3666 = vpop.f32.mrb[0].mxu0
      %v3667 = vadd.f32 %v3474, %v3666
      %v3668 = vpop.f32.mrb[0].mxu0
      %v3669 = vadd.f32 %v3476, %v3668
      %v3670 = vpop.f32.mrb[0].mxu0
      %v3671 = vadd.f32 %v3478, %v3670
      %v3672 = vpop.f32.mrb[0].mxu0
      %v3673 = vadd.f32 %v3480, %v3672
      %3674 = vmatprep.mubr.bf16.mxu0 %v1404
      %3675 = vmatmul.mubr.bf16.gmra.mrb[0].mxu0 %v1403
      %v3676 = vpop.f32.mrb[0].mxu0
      %v3677 = vadd.f32 %v3484, %v3676
      %v3678 = vpop.f32.mrb[0].mxu0
      %v3679 = vadd.f32 %v3486, %v3678
      %v3680 = vpop.f32.mrb[0].mxu0
      %v3681 = vadd.f32 %v3488, %v3680
      %v3682 = vpop.f32.mrb[0].mxu0
      %v3683 = vadd.f32 %v3490, %v3682
      %3684 = vmatprep.mubr.bf16.mxu0 %v1411
      %3685 = vmatmul.mubr.bf16.gmra.mrb[0].mxu0 %v1410
      %v3686 = vpop.f32.mrb[0].mxu0
      %v3687 = vadd.f32 %v3494, %v3686
      %v3688 = vpop.f32.mrb[0].mxu0
      %v3689 = vadd.f32 %v3496, %v3688
      %v3690 = vpop.f32.mrb[0].mxu0
      %v3691 = vadd.f32 %v3498, %v3690
      %v3692 = vpop.f32.mrb[0].mxu0
      %v3693 = vadd.f32 %v3500, %v3692
      %3694 = vmatprep.mubr.bf16.mxu0 %v1418
      %3695 = vmatmul.mubr.bf16.gmra.mrb[0].mxu0 %v1417
      %v3696 = vpop.f32.mrb[0].mxu0
      %v3697 = vadd.f32 %v3504, %v3696
      %v3698 = vpop.f32.mrb[0].mxu0
      %v3699 = vadd.f32 %v3506, %v3698
      %v3700 = vpop.f32.mrb[0].mxu0
      %v3701 = vadd.f32 %v3508, %v3700
      %v3702 = vpop.f32.mrb[0].mxu0
      %v3703 = vadd.f32 %v3510, %v3702
      %3704 = vdwg.mxu0
      %3705 = vmatprep.subr.bf16.mxu0 %v2237
      %3706 = vmatpush1.bf16.msra.mxu0 %v2236
      %3707 = vmatprep.subr.bf16.mxu0 %v2241
      %3708 = vmatpush1.bf16.msra.mxu0 %v2240
      %3709 = vmatprep.subr.bf16.mxu0 %v2245
      %3710 = vmatpush1.bf16.msra.mxu0 %v2244
      %3711 = vmatprep.subr.bf16.mxu0 %v2249
      %3712 = vmatpush1.bf16.msra.mxu0 %v2248
      %3713 = vmatprep.subr.bf16.mxu0 %v2253
      %3714 = vmatpush1.bf16.msra.mxu0 %v2252
      %3715 = vmatprep.subr.bf16.mxu0 %v2257
      %3716 = vmatpush1.bf16.msra.mxu0 %v2256
      %3717 = vmatprep.subr.bf16.mxu0 %v2261
      %3718 = vmatpush1.bf16.msra.mxu0 %v2260
      %3719 = vmatprep.subr.bf16.mxu0 %v2265
      %3720 = vmatpush1.bf16.msra.mxu0 %v2264
      %3721 = vmatprep.subr.bf16.mxu0 %v2269
      %3722 = vmatpush1.bf16.msra.mxu0 %v2268
      %3723 = vmatprep.subr.bf16.mxu0 %v2273
      %3724 = vmatpush1.bf16.msra.mxu0 %v2272
      %3725 = vmatprep.subr.bf16.mxu0 %v2277
      %3726 = vmatpush1.bf16.msra.mxu0 %v2276
      %3727 = vmatprep.subr.bf16.mxu0 %v2281
      %3728 = vmatpush1.bf16.msra.mxu0 %v2280
      %3729 = vmatprep.subr.bf16.mxu0 %v2285
      %3730 = vmatpush1.bf16.msra.mxu0 %v2284
      %3731 = vmatprep.subr.bf16.mxu0 %v2289
      %3732 = vmatpush1.bf16.msra.mxu0 %v2288
      %3733 = vmatprep.subr.bf16.mxu0 %v2293
      %3734 = vmatpush1.bf16.msra.mxu0 %v2292
      %3735 = vmatprep.subr.bf16.mxu0 %v2297
      %3736 = vmatpush1.bf16.msra.mxu0 %v2296
      %3737 = vmatprep.mubr.bf16.mxu0 %v1315
      %3738 = vmatmul.mubr.bf16.gmra.mrb[0].mxu0 %v1314
      %v3739 = vpop.f32.mrb[0].mxu0
      %v3740 = vadd.f32 %v3547, %v3739
      %v3741 = vpop.f32.mrb[0].mxu0
      %v3742 = vadd.f32 %v3549, %v3741
      %v3743 = vpop.f32.mrb[0].mxu0
      %v3744 = vadd.f32 %v3551, %v3743
      %v3745 = vpop.f32.mrb[0].mxu0
      %v3746 = vadd.f32 %v3553, %v3745
      %3747 = vmatprep.mubr.bf16.mxu0 %v1322
      %3748 = vmatmul.mubr.bf16.gmra.mrb[0].mxu0 %v1321
      %v3749 = vpop.f32.mrb[0].mxu0
      %v3750 = vadd.f32 %v3557, %v3749
      %v3751 = vpop.f32.mrb[0].mxu0
      %v3752 = vadd.f32 %v3559, %v3751
      %v3753 = vpop.f32.mrb[0].mxu0
      %v3754 = vadd.f32 %v3561, %v3753
      %v3755 = vpop.f32.mrb[0].mxu0
      %v3756 = vadd.f32 %v3563, %v3755
      %3757 = vmatprep.mubr.bf16.mxu0 %v1329
      %3758 = vmatmul.mubr.bf16.gmra.mrb[0].mxu0 %v1328
      %v3759 = vpop.f32.mrb[0].mxu0
      %v3760 = vadd.f32 %v3567, %v3759
      %v3761 = vpop.f32.mrb[0].mxu0
      %v3762 = vadd.f32 %v3569, %v3761
      %v3763 = vpop.f32.mrb[0].mxu0
      %v3764 = vadd.f32 %v3571, %v3763
      %v3765 = vpop.f32.mrb[0].mxu0
      %v3766 = vadd.f32 %v3573, %v3765
      %3767 = vmatprep.mubr.bf16.mxu0 %v1336
      %3768 = vmatmul.mubr.bf16.gmra.mrb[0].mxu0 %v1335
      %v3769 = vpop.f32.mrb[0].mxu0
      %v3770 = vadd.f32 %v3577, %v3769
      %v3771 = vpop.f32.mrb[0].mxu0
      %v3772 = vadd.f32 %v3579, %v3771
      %v3773 = vpop.f32.mrb[0].mxu0
      %v3774 = vadd.f32 %v3581, %v3773
      %v3775 = vpop.f32.mrb[0].mxu0
      %v3776 = vadd.f32 %v3583, %v3775
      %3777 = vmatprep.mubr.bf16.mxu0 %v1343
      %3778 = vmatmul.mubr.bf16.gmra.mrb[0].mxu0 %v1342
      %v3779 = vpop.f32.mrb[0].mxu0
      %v3780 = vadd.f32 %v3587, %v3779
      %v3781 = vpop.f32.mrb[0].mxu0
      %v3782 = vadd.f32 %v3589, %v3781
      %v3783 = vpop.f32.mrb[0].mxu0
      %v3784 = vadd.f32 %v3591, %v3783
      %v3785 = vpop.f32.mrb[0].mxu0
      %v3786 = vadd.f32 %v3593, %v3785
      %3787 = vmatprep.mubr.bf16.mxu0 %v1350
      %3788 = vmatmul.mubr.bf16.gmra.mrb[0].mxu0 %v1349
      %v3789 = vpop.f32.mrb[0].mxu0
      %v3790 = vadd.f32 %v3597, %v3789
      %v3791 = vpop.f32.mrb[0].mxu0
      %v3792 = vadd.f32 %v3599, %v3791
      %v3793 = vpop.f32.mrb[0].mxu0
      %v3794 = vadd.f32 %v3601, %v3793
      %v3795 = vpop.f32.mrb[0].mxu0
      %v3796 = vadd.f32 %v3603, %v3795
      %3797 = vmatprep.mubr.bf16.mxu0 %v1357
      %3798 = vmatmul.mubr.bf16.gmra.mrb[0].mxu0 %v1356
      %v3799 = vpop.f32.mrb[0].mxu0
      %v3800 = vadd.f32 %v3607, %v3799
      %v3801 = vpop.f32.mrb[0].mxu0
      %v3802 = vadd.f32 %v3609, %v3801
      %v3803 = vpop.f32.mrb[0].mxu0
      %v3804 = vadd.f32 %v3611, %v3803
      %v3805 = vpop.f32.mrb[0].mxu0
      %v3806 = vadd.f32 %v3613, %v3805
      %3807 = vmatprep.mubr.bf16.mxu0 %v1364
      %3808 = vmatmul.mubr.bf16.gmra.mrb[0].mxu0 %v1363
      %v3809 = vpop.f32.mrb[0].mxu0
      %v3810 = vadd.f32 %v3617, %v3809
      %v3811 = vpop.f32.mrb[0].mxu0
      %v3812 = vadd.f32 %v3619, %v3811
      %v3813 = vpop.f32.mrb[0].mxu0
      %v3814 = vadd.f32 %v3621, %v3813
      %v3815 = vpop.f32.mrb[0].mxu0
      %v3816 = vadd.f32 %v3623, %v3815
      %3817 = vmatprep.mubr.bf16.mxu0 %v1371
      %3818 = vmatmul.mubr.bf16.gmra.mrb[0].mxu0 %v1370
      %v3819 = vpop.f32.mrb[0].mxu0
      %v3820 = vadd.f32 %v3627, %v3819
      %v3821 = vpop.f32.mrb[0].mxu0
      %v3822 = vadd.f32 %v3629, %v3821
      %v3823 = vpop.f32.mrb[0].mxu0
      %v3824 = vadd.f32 %v3631, %v3823
      %v3825 = vpop.f32.mrb[0].mxu0
      %v3826 = vadd.f32 %v3633, %v3825
      %3827 = vmatprep.mubr.bf16.mxu0 %v1378
      %3828 = vmatmul.mubr.bf16.gmra.mrb[0].mxu0 %v1377
      %v3829 = vpop.f32.mrb[0].mxu0
      %v3830 = vadd.f32 %v3637, %v3829
      %v3831 = vpop.f32.mrb[0].mxu0
      %v3832 = vadd.f32 %v3639, %v3831
      %v3833 = vpop.f32.mrb[0].mxu0
      %v3834 = vadd.f32 %v3641, %v3833
      %v3835 = vpop.f32.mrb[0].mxu0
      %v3836 = vadd.f32 %v3643, %v3835
      %3837 = vmatprep.mubr.bf16.mxu0 %v1385
      %3838 = vmatmul.mubr.bf16.gmra.mrb[0].mxu0 %v1384
      %v3839 = vpop.f32.mrb[0].mxu0
      %v3840 = vadd.f32 %v3647, %v3839
      %v3841 = vpop.f32.mrb[0].mxu0
      %v3842 = vadd.f32 %v3649, %v3841
      %v3843 = vpop.f32.mrb[0].mxu0
      %v3844 = vadd.f32 %v3651, %v3843
      %v3845 = vpop.f32.mrb[0].mxu0
      %v3846 = vadd.f32 %v3653, %v3845
      %3847 = vmatprep.mubr.bf16.mxu0 %v1392
      %3848 = vmatmul.mubr.bf16.gmra.mrb[0].mxu0 %v1391
      %v3849 = vpop.f32.mrb[0].mxu0
      %v3850 = vadd.f32 %v3657, %v3849
      %v3851 = vpop.f32.mrb[0].mxu0
      %v3852 = vadd.f32 %v3659, %v3851
      %v3853 = vpop.f32.mrb[0].mxu0
      %v3854 = vadd.f32 %v3661, %v3853
      %v3855 = vpop.f32.mrb[0].mxu0
      %v3856 = vadd.f32 %v3663, %v3855
      %3857 = vmatprep.mubr.bf16.mxu0 %v1399
      %3858 = vmatmul.mubr.bf16.gmra.mrb[0].mxu0 %v1398
      %v3859 = vpop.f32.mrb[0].mxu0
      %v3860 = vadd.f32 %v3667, %v3859
      %v3861 = vpop.f32.mrb[0].mxu0
      %v3862 = vadd.f32 %v3669, %v3861
      %v3863 = vpop.f32.mrb[0].mxu0
      %v3864 = vadd.f32 %v3671, %v3863
      %v3865 = vpop.f32.mrb[0].mxu0
      %v3866 = vadd.f32 %v3673, %v3865
      %3867 = vmatprep.mubr.bf16.mxu0 %v1406
      %3868 = vmatmul.mubr.bf16.gmra.mrb[0].mxu0 %v1405
      %v3869 = vpop.f32.mrb[0].mxu0
      %v3870 = vadd.f32 %v3677, %v3869
      %v3871 = vpop.f32.mrb[0].mxu0
      %v3872 = vadd.f32 %v3679, %v3871
      %v3873 = vpop.f32.mrb[0].mxu0
      %v3874 = vadd.f32 %v3681, %v3873
      %v3875 = vpop.f32.mrb[0].mxu0
      %v3876 = vadd.f32 %v3683, %v3875
      %3877 = vmatprep.mubr.bf16.mxu0 %v1413
      %3878 = vmatmul.mubr.bf16.gmra.mrb[0].mxu0 %v1412
      %v3879 = vpop.f32.mrb[0].mxu0
      %v3880 = vadd.f32 %v3687, %v3879
      %v3881 = vpop.f32.mrb[0].mxu0
      %v3882 = vadd.f32 %v3689, %v3881
      %v3883 = vpop.f32.mrb[0].mxu0
      %v3884 = vadd.f32 %v3691, %v3883
      %v3885 = vpop.f32.mrb[0].mxu0
      %v3886 = vadd.f32 %v3693, %v3885
      %3887 = vmatprep.mubr.bf16.mxu0 %v1420
      %3888 = vmatmul.mubr.bf16.gmra.mrb[0].mxu0 %v1419
      %v3889 = vpop.f32.mrb[0].mxu0
      %v3890 = vadd.f32 %v3697, %v3889
      %v3891 = vpop.f32.mrb[0].mxu0
      %v3892 = vadd.f32 %v3699, %v3891
      %v3893 = vpop.f32.mrb[0].mxu0
      %v3894 = vadd.f32 %v3701, %v3893
      %v3895 = vpop.f32.mrb[0].mxu0
      %v3896 = vadd.f32 %v3703, %v3895
      %3897 = vdwg.mxu0
      %3898 = vmatprep.subr.bf16.mxu0 %v2301
      %3899 = vmatpush1.bf16.msra.mxu0 %v2300
      %3900 = vmatprep.subr.bf16.mxu0 0
      %3901 = vmatpush1.bf16.msra.mxu0 0
      %3902 = vmatprep.subr.bf16.mxu0 0
      %3903 = vmatpush1.bf16.msra.mxu0 0
      %3904 = vmatprep.subr.bf16.mxu0 0
      %3905 = vmatpush1.bf16.msra.mxu0 0
      %3906 = vmatprep.subr.bf16.mxu0 0
      %3907 = vmatpush1.bf16.msra.mxu0 0
      %3908 = vmatprep.subr.bf16.mxu0 0
      %3909 = vmatpush1.bf16.msra.mxu0 0
      %3910 = vmatprep.subr.bf16.mxu0 0
      %3911 = vmatpush1.bf16.msra.mxu0 0
      %3912 = vmatprep.subr.bf16.mxu0 0
      %3913 = vmatpush1.bf16.msra.mxu0 0
      %3914 = vmatprep.subr.bf16.mxu0 0
      %3915 = vmatpush1.bf16.msra.mxu0 0
      %3916 = vmatprep.subr.bf16.mxu0 0
      %3917 = vmatpush1.bf16.msra.mxu0 0
      %3918 = vmatprep.subr.bf16.mxu0 0
      %3919 = vmatpush1.bf16.msra.mxu0 0
      %3920 = vmatprep.subr.bf16.mxu0 0
      %3921 = vmatpush1.bf16.msra.mxu0 0
      %3922 = vmatprep.subr.bf16.mxu0 0
      %3923 = vmatpush1.bf16.msra.mxu0 0
      %3924 = vmatprep.subr.bf16.mxu0 0
      %3925 = vmatpush1.bf16.msra.mxu0 0
      %3926 = vmatprep.subr.bf16.mxu0 0
      %3927 = vmatpush1.bf16.msra.mxu0 0
      %3928 = vmatprep.subr.bf16.mxu0 0
      %3929 = vmatpush1.bf16.msra.mxu0 0
      %3930 = vmatprep.mubr.bf16.mxu0 0
      %3931 = vmatmul.mubr.bf16.gmra.mrb[0].mxu0 %v2500
      %v3932 = vpop.f32.mrb[0].mxu0
      %v3933 = vadd.f32 %v3740, %v3932
      %v3934 = vpop.f32.mrb[0].mxu0
      %v3935 = vadd.f32 %v3742, %v3934
      %v3936 = vpop.f32.mrb[0].mxu0
      %v3937 = vadd.f32 %v3744, %v3936
      %v3938 = vpop.f32.mrb[0].mxu0
      %v3939 = vadd.f32 %v3746, %v3938
      %3940 = vmatprep.mubr.bf16.mxu0 0
      %3941 = vmatmul.mubr.bf16.gmra.mrb[0].mxu0 %v2503
      %v3942 = vpop.f32.mrb[0].mxu0
      %v3943 = vadd.f32 %v3750, %v3942
      %v3944 = vpop.f32.mrb[0].mxu0
      %v3945 = vadd.f32 %v3752, %v3944
      %v3946 = vpop.f32.mrb[0].mxu0
      %v3947 = vadd.f32 %v3754, %v3946
      %v3948 = vpop.f32.mrb[0].mxu0
      %v3949 = vadd.f32 %v3756, %v3948
      %3950 = vmatprep.mubr.bf16.mxu0 0
      %3951 = vmatmul.mubr.bf16.gmra.mrb[0].mxu0 %v2506
      %v3952 = vpop.f32.mrb[0].mxu0
      %v3953 = vadd.f32 %v3760, %v3952
      %v3954 = vpop.f32.mrb[0].mxu0
      %v3955 = vadd.f32 %v3762, %v3954
      %v3956 = vpop.f32.mrb[0].mxu0
      %v3957 = vadd.f32 %v3764, %v3956
      %v3958 = vpop.f32.mrb[0].mxu0
      %v3959 = vadd.f32 %v3766, %v3958
      %3960 = vmatprep.mubr.bf16.mxu0 0
      %3961 = vmatmul.mubr.bf16.gmra.mrb[0].mxu0 %v2509
      %v3962 = vpop.f32.mrb[0].mxu0
      %v3963 = vadd.f32 %v3770, %v3962
      %v3964 = vpop.f32.mrb[0].mxu0
      %v3965 = vadd.f32 %v3772, %v3964
      %v3966 = vpop.f32.mrb[0].mxu0
      %v3967 = vadd.f32 %v3774, %v3966
      %v3968 = vpop.f32.mrb[0].mxu0
      %v3969 = vadd.f32 %v3776, %v3968
      %3970 = vmatprep.mubr.bf16.mxu0 0
      %3971 = vmatmul.mubr.bf16.gmra.mrb[0].mxu0 %v2512
      %v3972 = vpop.f32.mrb[0].mxu0
      %v3973 = vadd.f32 %v3780, %v3972
      %v3974 = vpop.f32.mrb[0].mxu0
      %v3975 = vadd.f32 %v3782, %v3974
      %v3976 = vpop.f32.mrb[0].mxu0
      %v3977 = vadd.f32 %v3784, %v3976
      %v3978 = vpop.f32.mrb[0].mxu0
      %v3979 = vadd.f32 %v3786, %v3978
      %3980 = vmatprep.mubr.bf16.mxu0 0
      %3981 = vmatmul.mubr.bf16.gmra.mrb[0].mxu0 %v2515
      %v3982 = vpop.f32.mrb[0].mxu0
      %v3983 = vadd.f32 %v3790, %v3982
      %v3984 = vpop.f32.mrb[0].mxu0
      %v3985 = vadd.f32 %v3792, %v3984
      %v3986 = vpop.f32.mrb[0].mxu0
      %v3987 = vadd.f32 %v3794, %v3986
      %v3988 = vpop.f32.mrb[0].mxu0
      %v3989 = vadd.f32 %v3796, %v3988
      %3990 = vmatprep.mubr.bf16.mxu0 0
      %3991 = vmatmul.mubr.bf16.gmra.mrb[0].mxu0 %v2518
      %v3992 = vpop.f32.mrb[0].mxu0
      %v3993 = vadd.f32 %v3800, %v3992
      %v3994 = vpop.f32.mrb[0].mxu0
      %v3995 = vadd.f32 %v3802, %v3994
      %v3996 = vpop.f32.mrb[0].mxu0
      %v3997 = vadd.f32 %v3804, %v3996
      %v3998 = vpop.f32.mrb[0].mxu0
      %v3999 = vadd.f32 %v3806, %v3998
      %4000 = vmatprep.mubr.bf16.mxu0 0
      %4001 = vmatmul.mubr.bf16.gmra.mrb[0].mxu0 %v2521
      %v4002 = vpop.f32.mrb[0].mxu0
      %v4003 = vadd.f32 %v3810, %v4002
      %v4004 = vpop.f32.mrb[0].mxu0
      %v4005 = vadd.f32 %v3812, %v4004
      %v4006 = vpop.f32.mrb[0].mxu0
      %v4007 = vadd.f32 %v3814, %v4006
      %v4008 = vpop.f32.mrb[0].mxu0
      %v4009 = vadd.f32 %v3816, %v4008
      %4010 = vmatprep.mubr.bf16.mxu0 0
      %4011 = vmatmul.mubr.bf16.gmra.mrb[0].mxu0 %v2524
      %v4012 = vpop.f32.mrb[0].mxu0
      %v4013 = vadd.f32 %v3820, %v4012
      %v4014 = vpop.f32.mrb[0].mxu0
      %v4015 = vadd.f32 %v3822, %v4014
      %v4016 = vpop.f32.mrb[0].mxu0
      %v4017 = vadd.f32 %v3824, %v4016
      %v4018 = vpop.f32.mrb[0].mxu0
      %v4019 = vadd.f32 %v3826, %v4018
      %4020 = vmatprep.mubr.bf16.mxu0 0
      %4021 = vmatmul.mubr.bf16.gmra.mrb[0].mxu0 %v2527
      %v4022 = vpop.f32.mrb[0].mxu0
      %v4023 = vadd.f32 %v3830, %v4022
      %v4024 = vpop.f32.mrb[0].mxu0
      %v4025 = vadd.f32 %v3832, %v4024
      %v4026 = vpop.f32.mrb[0].mxu0
      %v4027 = vadd.f32 %v3834, %v4026
      %v4028 = vpop.f32.mrb[0].mxu0
      %v4029 = vadd.f32 %v3836, %v4028
      %4030 = vmatprep.mubr.bf16.mxu0 0
      %4031 = vmatmul.mubr.bf16.gmra.mrb[0].mxu0 %v2530
      %v4032 = vpop.f32.mrb[0].mxu0
      %v4033 = vadd.f32 %v3840, %v4032
      %v4034 = vpop.f32.mrb[0].mxu0
      %v4035 = vadd.f32 %v3842, %v4034
      %v4036 = vpop.f32.mrb[0].mxu0
      %v4037 = vadd.f32 %v3844, %v4036
      %v4038 = vpop.f32.mrb[0].mxu0
      %v4039 = vadd.f32 %v3846, %v4038
      %4040 = vmatprep.mubr.bf16.mxu0 0
      %4041 = vmatmul.mubr.bf16.gmra.mrb[0].mxu0 %v2533
      %v4042 = vpop.f32.mrb[0].mxu0
      %v4043 = vadd.f32 %v3850, %v4042
      %v4044 = vpop.f32.mrb[0].mxu0
      %v4045 = vadd.f32 %v3852, %v4044
      %v4046 = vpop.f32.mrb[0].mxu0
      %v4047 = vadd.f32 %v3854, %v4046
      %v4048 = vpop.f32.mrb[0].mxu0
      %v4049 = vadd.f32 %v3856, %v4048
      %4050 = vmatprep.mubr.bf16.mxu0 0
      %4051 = vmatmul.mubr.bf16.gmra.mrb[0].mxu0 %v2536
      %v4052 = vpop.f32.mrb[0].mxu0
      %v4053 = vadd.f32 %v3860, %v4052
      %v4054 = vpop.f32.mrb[0].mxu0
      %v4055 = vadd.f32 %v3862, %v4054
      %v4056 = vpop.f32.mrb[0].mxu0
      %v4057 = vadd.f32 %v3864, %v4056
      %v4058 = vpop.f32.mrb[0].mxu0
      %v4059 = vadd.f32 %v3866, %v4058
      %4060 = vmatprep.mubr.bf16.mxu0 0
      %4061 = vmatmul.mubr.bf16.gmra.mrb[0].mxu0 %v2539
      %v4062 = vpop.f32.mrb[0].mxu0
      %v4063 = vadd.f32 %v3870, %v4062
      %v4064 = vpop.f32.mrb[0].mxu0
      %v4065 = vadd.f32 %v3872, %v4064
      %v4066 = vpop.f32.mrb[0].mxu0
      %v4067 = vadd.f32 %v3874, %v4066
      %v4068 = vpop.f32.mrb[0].mxu0
      %v4069 = vadd.f32 %v3876, %v4068
      %4070 = vmatprep.mubr.bf16.mxu0 0
      %4071 = vmatmul.mubr.bf16.gmra.mrb[0].mxu0 %v2542
      %v4072 = vpop.f32.mrb[0].mxu0
      %v4073 = vadd.f32 %v3880, %v4072
      %v4074 = vpop.f32.mrb[0].mxu0
      %v4075 = vadd.f32 %v3882, %v4074
      %v4076 = vpop.f32.mrb[0].mxu0
      %v4077 = vadd.f32 %v3884, %v4076
      %v4078 = vpop.f32.mrb[0].mxu0
      %v4079 = vadd.f32 %v3886, %v4078
      %4080 = vmatprep.mubr.bf16.mxu0 0
      %4081 = vmatmul.mubr.bf16.gmra.mrb[0].mxu0 %v2545
      %v4082 = vpop.f32.mrb[0].mxu0
      %v4083 = vadd.f32 %v3890, %v4082
      %v4084 = vpop.f32.mrb[0].mxu0
      %v4085 = vadd.f32 %v3892, %v4084
      %v4086 = vpop.f32.mrb[0].mxu0
      %v4087 = vadd.f32 %v3894, %v4086
      %v4088 = vpop.f32.mrb[0].mxu0
      %v4089 = vadd.f32 %v3896, %v4088
      %4090 = vdwg.mxu0
      %v4091 = vmax.f32 %v3161, 0.0
      %v4092 = vmax.f32 %v3163, 0.0
      %v4093 = vmax.f32 %v3933, 0.0
      %v4094 = vmax.f32 %v3935, 0.0
      %v4095 = vmax.f32 %v3165, 0.0
      %v4096 = vmax.f32 %v3167, 0.0
      %v4097 = vmax.f32 %v3937, 0.0
      %v4098 = vmax.f32 %v3939, 0.0
      %v4099 = vmax.f32 %v3171, 0.0
      %v4100 = vmax.f32 %v3173, 0.0
      %v4101 = vmax.f32 %v3943, 0.0
      %v4102 = vmax.f32 %v3945, 0.0
      %v4103 = vmax.f32 %v3175, 0.0
      %v4104 = vmax.f32 %v3177, 0.0
      %v4105 = vmax.f32 %v3947, 0.0
      %v4106 = vmax.f32 %v3949, 0.0
      %v4107 = vmax.f32 %v3181, 0.0
      %v4108 = vmax.f32 %v3183, 0.0
      %v4109 = vmax.f32 %v3953, 0.0
      %v4110 = vmax.f32 %v3955, 0.0
      %v4111 = vmax.f32 %v3185, 0.0
      %v4112 = vmax.f32 %v3187, 0.0
      %v4113 = vmax.f32 %v3957, 0.0
      %v4114 = vmax.f32 %v3959, 0.0
      %v4115 = vmax.f32 %v3191, 0.0
      %v4116 = vmax.f32 %v3193, 0.0
      %v4117 = vmax.f32 %v3963, 0.0
      %v4118 = vmax.f32 %v3965, 0.0
      %v4119 = vmax.f32 %v3195, 0.0
      %v4120 = vmax.f32 %v3197, 0.0
      %v4121 = vmax.f32 %v3967, 0.0
      %v4122 = vmax.f32 %v3969, 0.0
      %v4123 = vmax.f32 %v3201, 0.0
      %v4124 = vmax.f32 %v3203, 0.0
      %v4125 = vmax.f32 %v3973, 0.0
      %v4126 = vmax.f32 %v3975, 0.0
      %v4127 = vmax.f32 %v3205, 0.0
      %v4128 = vmax.f32 %v3207, 0.0
      %v4129 = vmax.f32 %v3977, 0.0
      %v4130 = vmax.f32 %v3979, 0.0
      %v4131 = vmax.f32 %v3211, 0.0
      %v4132 = vmax.f32 %v3213, 0.0
      %v4133 = vmax.f32 %v3983, 0.0
      %v4134 = vmax.f32 %v3985, 0.0
      %v4135 = vmax.f32 %v3215, 0.0
      %v4136 = vmax.f32 %v3217, 0.0
      %v4137 = vmax.f32 %v3987, 0.0
      %v4138 = vmax.f32 %v3989, 0.0
      %v4139 = vmax.f32 %v3221, 0.0
      %v4140 = vmax.f32 %v3223, 0.0
      %v4141 = vmax.f32 %v3993, 0.0
      %v4142 = vmax.f32 %v3995, 0.0
      %v4143 = vmax.f32 %v3225, 0.0
      %v4144 = vmax.f32 %v3227, 0.0
      %v4145 = vmax.f32 %v3997, 0.0
      %v4146 = vmax.f32 %v3999, 0.0
      %v4147 = vmax.f32 %v3231, 0.0
      %v4148 = vmax.f32 %v3233, 0.0
      %v4149 = vmax.f32 %v4003, 0.0
      %v4150 = vmax.f32 %v4005, 0.0
      %v4151 = vmax.f32 %v3235, 0.0
      %v4152 = vmax.f32 %v3237, 0.0
      %v4153 = vmax.f32 %v4007, 0.0
      %v4154 = vmax.f32 %v4009, 0.0
      %v4155 = vmax.f32 %v3241, 0.0
      %v4156 = vmax.f32 %v3243, 0.0
      %v4157 = vmax.f32 %v4013, 0.0
      %v4158 = vmax.f32 %v4015, 0.0
      %v4159 = vmax.f32 %v3245, 0.0
      %v4160 = vmax.f32 %v3247, 0.0
      %v4161 = vmax.f32 %v4017, 0.0
      %v4162 = vmax.f32 %v4019, 0.0
      %v4163 = vmax.f32 %v3251, 0.0
      %v4164 = vmax.f32 %v3253, 0.0
      %v4165 = vmax.f32 %v4023, 0.0
      %v4166 = vmax.f32 %v4025, 0.0
      %v4167 = vmax.f32 %v3255, 0.0
      %v4168 = vmax.f32 %v3257, 0.0
      %v4169 = vmax.f32 %v4027, 0.0
      %v4170 = vmax.f32 %v4029, 0.0
      %v4171 = vmax.f32 %v3261, 0.0
      %v4172 = vmax.f32 %v3263, 0.0
      %v4173 = vmax.f32 %v4033, 0.0
      %v4174 = vmax.f32 %v4035, 0.0
      %v4175 = vmax.f32 %v3265, 0.0
      %v4176 = vmax.f32 %v3267, 0.0
      %v4177 = vmax.f32 %v4037, 0.0
      %v4178 = vmax.f32 %v4039, 0.0
      %v4179 = vmax.f32 %v3271, 0.0
      %v4180 = vmax.f32 %v3273, 0.0
      %v4181 = vmax.f32 %v4043, 0.0
      %v4182 = vmax.f32 %v4045, 0.0
      %v4183 = vmax.f32 %v3275, 0.0
      %v4184 = vmax.f32 %v3277, 0.0
      %v4185 = vmax.f32 %v4047, 0.0
      %v4186 = vmax.f32 %v4049, 0.0
      %v4187 = vmax.f32 %v3281, 0.0
      %v4188 = vmax.f32 %v3283, 0.0
      %v4189 = vmax.f32 %v4053, 0.0
      %v4190 = vmax.f32 %v4055, 0.0
      %v4191 = vmax.f32 %v3285, 0.0
      %v4192 = vmax.f32 %v3287, 0.0
      %v4193 = vmax.f32 %v4057, 0.0
      %v4194 = vmax.f32 %v4059, 0.0
      %v4195 = vmax.f32 %v3291, 0.0
      %v4196 = vmax.f32 %v3293, 0.0
      %v4197 = vmax.f32 %v4063, 0.0
      %v4198 = vmax.f32 %v4065, 0.0
      %v4199 = vmax.f32 %v3295, 0.0
      %v4200 = vmax.f32 %v3297, 0.0
      %v4201 = vmax.f32 %v4067, 0.0
      %v4202 = vmax.f32 %v4069, 0.0
      %v4203 = vmax.f32 %v3301, 0.0
      %v4204 = vmax.f32 %v3303, 0.0
      %v4205 = vmax.f32 %v4073, 0.0
      %v4206 = vmax.f32 %v4075, 0.0
      %v4207 = vmax.f32 %v3305, 0.0
      %v4208 = vmax.f32 %v3307, 0.0
      %v4209 = vmax.f32 %v4077, 0.0
      %v4210 = vmax.f32 %v4079, 0.0
      %v4211 = vmax.f32 %v3311, 0.0
      %v4212 = vmax.f32 %v3313, 0.0
      %v4213 = vmax.f32 %v4083, 0.0
      %v4214 = vmax.f32 %v4085, 0.0
      %v4215 = vmax.f32 %v3315, 0.0
      %v4216 = vmax.f32 %v3317, 0.0
      %v4217 = vmax.f32 %v4087, 0.0
      %v4218 = vmax.f32 %v4089, 0.0
      %v4219 = vld [vmem:[%s3] sm:$0xff]
      %v4220 = vld [vmem:[%s3 + $0x8] sm:$0xff]
      %v4221 = vld [vmem:[%s3 + $0x10] sm:$0xff]
      %v4222 = vld [vmem:[%s3 + $0x18] sm:$0xff]
      %v4223 = vld [vmem:[%s3 + $0x20] sm:$0xff]
      %v4224 = vld [vmem:[%s3 + $0x28] sm:$0xff]
      %v4225 = vld [vmem:[%s3 + $0x30] sm:$0xff]
      %v4226 = vld [vmem:[%s3 + $0x38] sm:$0xff]
      %v4227 = vld [vmem:[%s3 + $0x40] sm:$0xff]
      %v4228 = vld [vmem:[%s3 + $0x48] sm:$0xff]
      %v4229 = vld [vmem:[%s3 + $0x50] sm:$0xff]
      %v4230 = vld [vmem:[%s3 + $0x58] sm:$0xff]
      %v4231 = vld [vmem:[%s3 + $0x60] sm:$0xff]
      %v4232 = vld [vmem:[%s3 + $0x68] sm:$0xff]
      %v4233 = vld [vmem:[%s3 + $0x70] sm:$0xff]
      %v4234 = vld [vmem:[%s3 + $0x78] sm:$0xff]
      %v4235 = vld [vmem:[%s3 + $0x80] sm:$0xff]
      %v4236 = vld [vmem:[%s3 + $0x88] sm:$0xff]
      %v4237 = vld [vmem:[%s3 + $0x90] sm:$0xff]
      %v4238 = vld [vmem:[%s3 + $0x98] sm:$0xff]
      %v4239 = vld [vmem:[%s3 + $0xa0] sm:$0xff]
      %v4240 = vld [vmem:[%s3 + $0xa8] sm:$0xff]
      %v4241 = vld [vmem:[%s3 + $0xb0] sm:$0xff]
      %v4242 = vld [vmem:[%s3 + $0xb8] sm:$0xff]
      %v4243 = vld [vmem:[%s3 + $0xc0] sm:$0xff]
      %v4244 = vld [vmem:[%s3 + $0xc8] sm:$0xff]
      %v4245 = vld [vmem:[%s3 + $0xd0] sm:$0xff]
      %v4246 = vld [vmem:[%s3 + $0xd8] sm:$0xff]
      %v4247 = vld [vmem:[%s3 + $0xe0] sm:$0xff]
      %v4248 = vld [vmem:[%s3 + $0xe8] sm:$0xff]
      %v4249 = vld [vmem:[%s3 + $0xf0] sm:$0xff]
      %v4250 = vld [vmem:[%s3 + $0xf8] sm:$0xff]
      %v4251 = vld [vmem:[%s3 + $0x100] sm:$0xff]
      %v4252 = vld [vmem:[%s3 + $0x108] sm:$0xff]
      %v4253 = vld [vmem:[%s3 + $0x110] sm:$0xff]
      %v4254 = vld [vmem:[%s3 + $0x118] sm:$0xff]
      %v4255 = vld [vmem:[%s3 + $0x120] sm:$0xff]
      %v4256 = vld [vmem:[%s3 + $0x128] sm:$0xff]
      %v4257 = vld [vmem:[%s3 + $0x130] sm:$0xff]
      %v4258 = vld [vmem:[%s3 + $0x138] sm:$0xff]
      %v4259 = vld [vmem:[%s3 + $0x140] sm:$0xff]
      %v4260 = vld [vmem:[%s3 + $0x148] sm:$0xff]
      %v4261 = vld [vmem:[%s3 + $0x150] sm:$0xff]
      %v4262 = vld [vmem:[%s3 + $0x158] sm:$0xff]
      %v4263 = vld [vmem:[%s3 + $0x160] sm:$0xff]
      %v4264 = vld [vmem:[%s3 + $0x168] sm:$0xff]
      %v4265 = vld [vmem:[%s3 + $0x170] sm:$0xff]
      %v4266 = vld [vmem:[%s3 + $0x178] sm:$0xff]
      %v4267 = vld [vmem:[%s3 + $0x180] sm:$0xff]
      %v4268 = vld [vmem:[%s4] sm:$0x3]
      %v4269 = vpack.c.bf16 %v4095, %v4091
      %v4270 = vpack.c.bf16 %v4096, %v4092
      %v4271 = vpack.c.bf16 %v4097, %v4093
      %v4272 = vpack.c.bf16 %v4098, %v4094
      %v4273 = vpack.c.bf16 %v4103, %v4099
      %v4274 = vpack.c.bf16 %v4104, %v4100
      %v4275 = vpack.c.bf16 %v4105, %v4101
      %v4276 = vpack.c.bf16 %v4106, %v4102
      %v4277 = vpack.c.bf16 %v4111, %v4107
      %v4278 = vpack.c.bf16 %v4112, %v4108
      %v4279 = vpack.c.bf16 %v4113, %v4109
      %v4280 = vpack.c.bf16 %v4114, %v4110
      %v4281 = vpack.c.bf16 %v4119, %v4115
      %v4282 = vpack.c.bf16 %v4120, %v4116
      %v4283 = vpack.c.bf16 %v4121, %v4117
      %v4284 = vpack.c.bf16 %v4122, %v4118
      %v4285 = vpack.c.bf16 %v4127, %v4123
      %v4286 = vpack.c.bf16 %v4128, %v4124
      %v4287 = vpack.c.bf16 %v4129, %v4125
      %v4288 = vpack.c.bf16 %v4130, %v4126
      %v4289 = vpack.c.bf16 %v4135, %v4131
      %v4290 = vpack.c.bf16 %v4136, %v4132
      %v4291 = vpack.c.bf16 %v4137, %v4133
      %v4292 = vpack.c.bf16 %v4138, %v4134
      %v4293 = vpack.c.bf16 %v4143, %v4139
      %v4294 = vpack.c.bf16 %v4144, %v4140
      %v4295 = vpack.c.bf16 %v4145, %v4141
      %v4296 = vpack.c.bf16 %v4146, %v4142
      %v4297 = vpack.c.bf16 %v4151, %v4147
      %v4298 = vpack.c.bf16 %v4152, %v4148
      %v4299 = vpack.c.bf16 %v4153, %v4149
      %v4300 = vpack.c.bf16 %v4154, %v4150
      %v4301 = vpack.c.bf16 %v4159, %v4155
      %v4302 = vpack.c.bf16 %v4160, %v4156
      %v4303 = vpack.c.bf16 %v4161, %v4157
      %v4304 = vpack.c.bf16 %v4162, %v4158
      %v4305 = vpack.c.bf16 %v4167, %v4163
      %v4306 = vpack.c.bf16 %v4168, %v4164
      %v4307 = vpack.c.bf16 %v4169, %v4165
      %v4308 = vpack.c.bf16 %v4170, %v4166
      %v4309 = vpack.c.bf16 %v4175, %v4171
      %v4310 = vpack.c.bf16 %v4176, %v4172
      %v4311 = vpack.c.bf16 %v4177, %v4173
      %v4312 = vpack.c.bf16 %v4178, %v4174
      %v4313 = vpack.c.bf16 %v4183, %v4179
      %v4314 = vpack.c.bf16 %v4184, %v4180
      %v4315 = vpack.c.bf16 %v4185, %v4181
      %v4316 = vpack.c.bf16 %v4186, %v4182
      %v4317 = vpack.c.bf16 %v4191, %v4187
      %v4318 = vpack.c.bf16 %v4192, %v4188
      %v4319 = vpack.c.bf16 %v4193, %v4189
      %v4320 = vpack.c.bf16 %v4194, %v4190
      %v4321 = vpack.c.bf16 %v4199, %v4195
      %v4322 = vpack.c.bf16 %v4200, %v4196
      %v4323 = vpack.c.bf16 %v4201, %v4197
      %v4324 = vpack.c.bf16 %v4202, %v4198
      %v4325 = vpack.c.bf16 %v4207, %v4203
      %v4326 = vpack.c.bf16 %v4208, %v4204
      %v4327 = vpack.c.bf16 %v4209, %v4205
      %v4328 = vpack.c.bf16 %v4210, %v4206
      %v4329 = vpack.c.bf16 %v4215, %v4211
      %v4330 = vpack.c.bf16 %v4216, %v4212
      %v4331 = vpack.c.bf16 %v4217, %v4213
      %v4332 = vpack.c.bf16 %v4218, %v4214
      %v4334 = vlaneseq
      %v4335 = vshrl.u32 %v4334, 7
      %v4336 = vsub.s32 0, %v4335
      %v4337 = vrot.slane %v4268, %v4336
      %v4338 = vlaneseq
      %v4339 = vshrl.u32 %v4338, 7
      %v4340 = vsub.s32 1, %v4339
      %v4341 = vrot.slane %v4268, %v4340
      %v4393 = vunpack.c.l.b16 %v4219
      %v4394 = vunpack.c.h.b16 %v4219
      %v4395 = vunpack.c.l.b16 %v4220
      %v4396 = vunpack.c.h.b16 %v4220
      %v4397 = vunpack.c.l.b16 %v4221
      %v4398 = vunpack.c.h.b16 %v4221
      %v4399 = vunpack.c.l.b16 %v4222
      %v4400 = vunpack.c.h.b16 %v4222
      %v4401 = vunpack.c.l.b16 %v4223
      %v4402 = vunpack.c.h.b16 %v4223
      %v4403 = vunpack.c.l.b16 %v4224
      %v4404 = vunpack.c.h.b16 %v4224
      %v4405 = vunpack.c.l.b16 %v4225
      %v4406 = vunpack.c.h.b16 %v4225
      %v4407 = vunpack.c.l.b16 %v4226
      %v4408 = vunpack.c.h.b16 %v4226
      %v4409 = vunpack.c.l.b16 %v4227
      %v4410 = vunpack.c.h.b16 %v4227
      %v4411 = vunpack.c.l.b16 %v4228
      %v4412 = vunpack.c.h.b16 %v4228
      %v4413 = vunpack.c.l.b16 %v4229
      %v4414 = vunpack.c.h.b16 %v4229
      %v4415 = vunpack.c.l.b16 %v4230
      %v4416 = vunpack.c.h.b16 %v4230
      %v4417 = vunpack.c.l.b16 %v4231
      %v4418 = vunpack.c.h.b16 %v4231
      %v4419 = vunpack.c.l.b16 %v4232
      %v4420 = vunpack.c.h.b16 %v4232
      %v4421 = vunpack.c.l.b16 %v4233
      %v4422 = vunpack.c.h.b16 %v4233
      %v4423 = vunpack.c.l.b16 %v4234
      %v4424 = vunpack.c.h.b16 %v4234
      %v4425 = vunpack.c.l.b16 %v4235
      %v4426 = vunpack.c.h.b16 %v4235
      %v4427 = vunpack.c.l.b16 %v4236
      %v4428 = vunpack.c.h.b16 %v4236
      %v4429 = vunpack.c.l.b16 %v4237
      %v4430 = vunpack.c.h.b16 %v4237
      %v4431 = vunpack.c.l.b16 %v4238
      %v4432 = vunpack.c.h.b16 %v4238
      %v4433 = vunpack.c.l.b16 %v4239
      %v4434 = vunpack.c.h.b16 %v4239
      %v4435 = vunpack.c.l.b16 %v4240
      %v4436 = vunpack.c.h.b16 %v4240
      %v4437 = vunpack.c.l.b16 %v4241
      %v4438 = vunpack.c.h.b16 %v4241
      %v4439 = vunpack.c.l.b16 %v4242
      %v4440 = vunpack.c.h.b16 %v4242
      %v4441 = vunpack.c.l.b16 %v4243
      %v4442 = vunpack.c.h.b16 %v4243
      %v4443 = vunpack.c.l.b16 %v4244
      %v4444 = vunpack.c.h.b16 %v4244
      %v4445 = vunpack.c.l.b16 %v4245
      %v4446 = vunpack.c.h.b16 %v4245
      %v4447 = vunpack.c.l.b16 %v4246
      %v4448 = vunpack.c.h.b16 %v4246
      %v4449 = vunpack.c.l.b16 %v4247
      %v4450 = vunpack.c.h.b16 %v4247
      %v4451 = vunpack.c.l.b16 %v4248
      %v4452 = vunpack.c.h.b16 %v4248
      %v4453 = vunpack.c.l.b16 %v4249
      %v4454 = vunpack.c.h.b16 %v4249
      %v4455 = vunpack.c.l.b16 %v4250
      %v4456 = vunpack.c.h.b16 %v4250
      %v4457 = vunpack.c.l.b16 %v4251
      %v4458 = vunpack.c.h.b16 %v4251
      %v4459 = vunpack.c.l.b16 %v4252
      %v4460 = vunpack.c.h.b16 %v4252
      %v4461 = vunpack.c.l.b16 %v4253
      %v4462 = vunpack.c.h.b16 %v4253
      %v4463 = vunpack.c.l.b16 %v4254
      %v4464 = vunpack.c.h.b16 %v4254
      %v4465 = vunpack.c.l.b16 %v4255
      %v4466 = vunpack.c.h.b16 %v4255
      %v4467 = vunpack.c.l.b16 %v4256
      %v4468 = vunpack.c.h.b16 %v4256
      %v4469 = vunpack.c.l.b16 %v4257
      %v4470 = vunpack.c.h.b16 %v4257
      %v4471 = vunpack.c.l.b16 %v4258
      %v4472 = vunpack.c.h.b16 %v4258
      %v4473 = vunpack.c.l.b16 %v4259
      %v4474 = vunpack.c.h.b16 %v4259
      %v4475 = vunpack.c.l.b16 %v4260
      %v4476 = vunpack.c.h.b16 %v4260
      %v4477 = vunpack.c.l.b16 %v4261
      %v4478 = vunpack.c.h.b16 %v4261
      %v4479 = vunpack.c.l.b16 %v4262
      %v4480 = vunpack.c.h.b16 %v4262
      %v4481 = vunpack.c.l.b16 %v4263
      %v4482 = vunpack.c.h.b16 %v4263
      %v4483 = vunpack.c.l.b16 %v4264
      %v4484 = vunpack.c.h.b16 %v4264
      %v4485 = vunpack.c.l.b16 %v4265
      %v4486 = vunpack.c.h.b16 %v4265
      %v4487 = vunpack.c.l.b16 %v4266
      %v4488 = vunpack.c.h.b16 %v4266
      %v4489 = vunpack.c.l.b16 %v4267
      %v4490 = vunpack.c.h.b16 %v4267
      %v4491 = vpack.c.b16 %v4395, %v4393
      %v4492 = vpack.c.b16 %v4396, %v4394
      %v4493 = vpack.c.b16 %v4399, %v4397
      %v4494 = vpack.c.b16 %v4400, %v4398
      %v4495 = vpack.c.b16 %v4403, %v4401
      %v4496 = vpack.c.b16 %v4404, %v4402
      %v4497 = vpack.c.b16 %v4407, %v4405
      %v4498 = vpack.c.b16 %v4408, %v4406
      %v4499 = vpack.c.b16 %v4411, %v4409
      %v4500 = vpack.c.b16 %v4412, %v4410
      %v4501 = vpack.c.b16 %v4415, %v4413
      %v4502 = vpack.c.b16 %v4416, %v4414
      %v4503 = vpack.c.b16 %v4419, %v4417
      %v4504 = vpack.c.b16 %v4420, %v4418
      %v4505 = vpack.c.b16 %v4423, %v4421
      %v4506 = vpack.c.b16 %v4424, %v4422
      %v4507 = vpack.c.b16 %v4427, %v4425
      %v4508 = vpack.c.b16 %v4428, %v4426
      %v4509 = vpack.c.b16 %v4431, %v4429
      %v4510 = vpack.c.b16 %v4432, %v4430
      %v4511 = vpack.c.b16 %v4435, %v4433
      %v4512 = vpack.c.b16 %v4436, %v4434
      %v4513 = vpack.c.b16 %v4439, %v4437
      %v4514 = vpack.c.b16 %v4440, %v4438
      %v4515 = vpack.c.b16 %v4443, %v4441
      %v4516 = vpack.c.b16 %v4444, %v4442
      %v4517 = vpack.c.b16 %v4447, %v4445
      %v4518 = vpack.c.b16 %v4448, %v4446
      %v4519 = vpack.c.b16 %v4451, %v4449
      %v4520 = vpack.c.b16 %v4452, %v4450
      %v4521 = vpack.c.b16 %v4455, %v4453
      %v4522 = vpack.c.b16 %v4456, %v4454
      %v4523 = vpack.c.b16 %v4459, %v4457
      %v4524 = vpack.c.b16 %v4460, %v4458
      %v4525 = vpack.c.b16 %v4463, %v4461
      %v4526 = vpack.c.b16 %v4464, %v4462
      %v4527 = vpack.c.b16 %v4467, %v4465
      %v4528 = vpack.c.b16 %v4468, %v4466
      %v4529 = vpack.c.b16 %v4471, %v4469
      %v4530 = vpack.c.b16 %v4472, %v4470
      %v4531 = vpack.c.b16 %v4475, %v4473
      %v4532 = vpack.c.b16 %v4476, %v4474
      %v4533 = vpack.c.b16 %v4479, %v4477
      %v4534 = vpack.c.b16 %v4480, %v4478
      %v4535 = vpack.c.b16 %v4483, %v4481
      %v4536 = vpack.c.b16 %v4484, %v4482
      %v4537 = vpack.c.b16 %v4487, %v4485
      %v4538 = vpack.c.b16 %v4488, %v4486
      %v4539 = vpack.c.b16 %v4489, %v4489
      %v4540 = vpack.c.b16 %v4490, %v4490
      %vm4589 = vcmask 64512
      %v4591 = vsel %vm4589, %v4272, 0
      %v4594 = vsel %vm4589, %v4276, 0
      %v4597 = vsel %vm4589, %v4280, 0
      %v4600 = vsel %vm4589, %v4284, 0
      %v4603 = vsel %vm4589, %v4288, 0
      %v4606 = vsel %vm4589, %v4292, 0
      %v4609 = vsel %vm4589, %v4296, 0
      %v4612 = vsel %vm4589, %v4300, 0
      %v4615 = vsel %vm4589, %v4304, 0
      %v4618 = vsel %vm4589, %v4308, 0
      %v4621 = vsel %vm4589, %v4312, 0
      %v4624 = vsel %vm4589, %v4316, 0
      %v4627 = vsel %vm4589, %v4320, 0
      %v4630 = vsel %vm4589, %v4324, 0
      %v4633 = vsel %vm4589, %v4328, 0
      %v4636 = vsel %vm4589, %v4332, 0
      %vm4638 = vcmask 1043456
      %v4640 = vsel %vm4638, %v4539, 0
      %v4643 = vsel %vm4638, %v4540, 0
      %4645 = vmatprep.subr.bf16.mxu0 %v4492
      %4646 = vmatpush1.bf16.msra.mxu0 %v4491
      %4647 = vmatprep.subr.bf16.mxu0 %v4494
      %4648 = vmatpush1.bf16.msra.mxu0 %v4493
      %4649 = vmatprep.subr.bf16.mxu0 %v4496
      %4650 = vmatpush1.bf16.msra.mxu0 %v4495
      %4651 = vmatprep.subr.bf16.mxu0 %v4498
      %4652 = vmatpush1.bf16.msra.mxu0 %v4497
      %4653 = vmatprep.subr.bf16.mxu0 %v4500
      %4654 = vmatpush1.bf16.msra.mxu0 %v4499
      %4655 = vmatprep.subr.bf16.mxu0 %v4502
      %4656 = vmatpush1.bf16.msra.mxu0 %v4501
      %4657 = vmatprep.subr.bf16.mxu0 %v4504
      %4658 = vmatpush1.bf16.msra.mxu0 %v4503
      %4659 = vmatprep.subr.bf16.mxu0 %v4506
      %4660 = vmatpush1.bf16.msra.mxu0 %v4505
      %4661 = vmatprep.subr.bf16.mxu0 %v4508
      %4662 = vmatpush1.bf16.msra.mxu0 %v4507
      %4663 = vmatprep.subr.bf16.mxu0 %v4510
      %4664 = vmatpush1.bf16.msra.mxu0 %v4509
      %4665 = vmatprep.subr.bf16.mxu0 %v4512
      %4666 = vmatpush1.bf16.msra.mxu0 %v4511
      %4667 = vmatprep.subr.bf16.mxu0 %v4514
      %4668 = vmatpush1.bf16.msra.mxu0 %v4513
      %4669 = vmatprep.subr.bf16.mxu0 %v4516
      %4670 = vmatpush1.bf16.msra.mxu0 %v4515
      %4671 = vmatprep.subr.bf16.mxu0 %v4518
      %4672 = vmatpush1.bf16.msra.mxu0 %v4517
      %4673 = vmatprep.subr.bf16.mxu0 %v4520
      %4674 = vmatpush1.bf16.msra.mxu0 %v4519
      %4675 = vmatprep.subr.bf16.mxu0 %v4522
      %4676 = vmatpush1.bf16.msra.mxu0 %v4521
      %4677 = vmatprep.mubr.bf16.mxu0 %v4270
      %4678 = vmatmul.mubr.bf16.gmra.mrb[0].mxu0 %v4269
      %v4679 = vpop.f32.mrb[0].mxu0
      %v4680 = vadd.f32 %v4337, %v4679
      %v4681 = vpop.f32.mrb[0].mxu0
      %v4682 = vadd.f32 %v4341, %v4681
      %v4683 = vpop.f32.mrb[0].mxu0
      %v4684 = vadd.f32 %v4337, %v4683
      %v4685 = vpop.f32.mrb[0].mxu0
      %v4686 = vadd.f32 %v4341, %v4685
      %4687 = vmatprep.mubr.bf16.mxu0 %v4274
      %4688 = vmatmul.mubr.bf16.gmra.mrb[0].mxu0 %v4273
      %v4689 = vpop.f32.mrb[0].mxu0
      %v4690 = vadd.f32 %v4337, %v4689
      %v4691 = vpop.f32.mrb[0].mxu0
      %v4692 = vadd.f32 %v4341, %v4691
      %v4693 = vpop.f32.mrb[0].mxu0
      %v4694 = vadd.f32 %v4337, %v4693
      %v4695 = vpop.f32.mrb[0].mxu0
      %v4696 = vadd.f32 %v4341, %v4695
      %4697 = vmatprep.mubr.bf16.mxu0 %v4278
      %4698 = vmatmul.mubr.bf16.gmra.mrb[0].mxu0 %v4277
      %v4699 = vpop.f32.mrb[0].mxu0
      %v4700 = vadd.f32 %v4337, %v4699
      %v4701 = vpop.f32.mrb[0].mxu0
      %v4702 = vadd.f32 %v4341, %v4701
      %v4703 = vpop.f32.mrb[0].mxu0
      %v4704 = vadd.f32 %v4337, %v4703
      %v4705 = vpop.f32.mrb[0].mxu0
      %v4706 = vadd.f32 %v4341, %v4705
      %4707 = vmatprep.mubr.bf16.mxu0 %v4282
      %4708 = vmatmul.mubr.bf16.gmra.mrb[0].mxu0 %v4281
      %v4709 = vpop.f32.mrb[0].mxu0
      %v4710 = vadd.f32 %v4337, %v4709
      %v4711 = vpop.f32.mrb[0].mxu0
      %v4712 = vadd.f32 %v4341, %v4711
      %v4713 = vpop.f32.mrb[0].mxu0
      %v4714 = vadd.f32 %v4337, %v4713
      %v4715 = vpop.f32.mrb[0].mxu0
      %v4716 = vadd.f32 %v4341, %v4715
      %4717 = vmatprep.mubr.bf16.mxu0 %v4286
      %4718 = vmatmul.mubr.bf16.gmra.mrb[0].mxu0 %v4285
      %v4719 = vpop.f32.mrb[0].mxu0
      %v4720 = vadd.f32 %v4337, %v4719
      %v4721 = vpop.f32.mrb[0].mxu0
      %v4722 = vadd.f32 %v4341, %v4721
      %v4723 = vpop.f32.mrb[0].mxu0
      %v4724 = vadd.f32 %v4337, %v4723
      %v4725 = vpop.f32.mrb[0].mxu0
      %v4726 = vadd.f32 %v4341, %v4725
      %4727 = vmatprep.mubr.bf16.mxu0 %v4290
      %4728 = vmatmul.mubr.bf16.gmra.mrb[0].mxu0 %v4289
      %v4729 = vpop.f32.mrb[0].mxu0
      %v4730 = vadd.f32 %v4337, %v4729
      %v4731 = vpop.f32.mrb[0].mxu0
      %v4732 = vadd.f32 %v4341, %v4731
      %v4733 = vpop.f32.mrb[0].mxu0
      %v4734 = vadd.f32 %v4337, %v4733
      %v4735 = vpop.f32.mrb[0].mxu0
      %v4736 = vadd.f32 %v4341, %v4735
      %4737 = vmatprep.mubr.bf16.mxu0 %v4294
      %4738 = vmatmul.mubr.bf16.gmra.mrb[0].mxu0 %v4293
      %v4739 = vpop.f32.mrb[0].mxu0
      %v4740 = vadd.f32 %v4337, %v4739
      %v4741 = vpop.f32.mrb[0].mxu0
      %v4742 = vadd.f32 %v4341, %v4741
      %v4743 = vpop.f32.mrb[0].mxu0
      %v4744 = vadd.f32 %v4337, %v4743
      %v4745 = vpop.f32.mrb[0].mxu0
      %v4746 = vadd.f32 %v4341, %v4745
      %4747 = vmatprep.mubr.bf16.mxu0 %v4298
      %4748 = vmatmul.mubr.bf16.gmra.mrb[0].mxu0 %v4297
      %v4749 = vpop.f32.mrb[0].mxu0
      %v4750 = vadd.f32 %v4337, %v4749
      %v4751 = vpop.f32.mrb[0].mxu0
      %v4752 = vadd.f32 %v4341, %v4751
      %v4753 = vpop.f32.mrb[0].mxu0
      %v4754 = vadd.f32 %v4337, %v4753
      %v4755 = vpop.f32.mrb[0].mxu0
      %v4756 = vadd.f32 %v4341, %v4755
      %4757 = vmatprep.mubr.bf16.mxu0 %v4302
      %4758 = vmatmul.mubr.bf16.gmra.mrb[0].mxu0 %v4301
      %v4759 = vpop.f32.mrb[0].mxu0
      %v4760 = vadd.f32 %v4337, %v4759
      %v4761 = vpop.f32.mrb[0].mxu0
      %v4762 = vadd.f32 %v4341, %v4761
      %v4763 = vpop.f32.mrb[0].mxu0
      %v4764 = vadd.f32 %v4337, %v4763
      %v4765 = vpop.f32.mrb[0].mxu0
      %v4766 = vadd.f32 %v4341, %v4765
      %4767 = vmatprep.mubr.bf16.mxu0 %v4306
      %4768 = vmatmul.mubr.bf16.gmra.mrb[0].mxu0 %v4305
      %v4769 = vpop.f32.mrb[0].mxu0
      %v4770 = vadd.f32 %v4337, %v4769
      %v4771 = vpop.f32.mrb[0].mxu0
      %v4772 = vadd.f32 %v4341, %v4771
      %v4773 = vpop.f32.mrb[0].mxu0
      %v4774 = vadd.f32 %v4337, %v4773
      %v4775 = vpop.f32.mrb[0].mxu0
      %v4776 = vadd.f32 %v4341, %v4775
      %4777 = vmatprep.mubr.bf16.mxu0 %v4310
      %4778 = vmatmul.mubr.bf16.gmra.mrb[0].mxu0 %v4309
      %v4779 = vpop.f32.mrb[0].mxu0
      %v4780 = vadd.f32 %v4337, %v4779
      %v4781 = vpop.f32.mrb[0].mxu0
      %v4782 = vadd.f32 %v4341, %v4781
      %v4783 = vpop.f32.mrb[0].mxu0
      %v4784 = vadd.f32 %v4337, %v4783
      %v4785 = vpop.f32.mrb[0].mxu0
      %v4786 = vadd.f32 %v4341, %v4785
      %4787 = vmatprep.mubr.bf16.mxu0 %v4314
      %4788 = vmatmul.mubr.bf16.gmra.mrb[0].mxu0 %v4313
      %v4789 = vpop.f32.mrb[0].mxu0
      %v4790 = vadd.f32 %v4337, %v4789
      %v4791 = vpop.f32.mrb[0].mxu0
      %v4792 = vadd.f32 %v4341, %v4791
      %v4793 = vpop.f32.mrb[0].mxu0
      %v4794 = vadd.f32 %v4337, %v4793
      %v4795 = vpop.f32.mrb[0].mxu0
      %v4796 = vadd.f32 %v4341, %v4795
      %4797 = vmatprep.mubr.bf16.mxu0 %v4318
      %4798 = vmatmul.mubr.bf16.gmra.mrb[0].mxu0 %v4317
      %v4799 = vpop.f32.mrb[0].mxu0
      %v4800 = vadd.f32 %v4337, %v4799
      %v4801 = vpop.f32.mrb[0].mxu0
      %v4802 = vadd.f32 %v4341, %v4801
      %v4803 = vpop.f32.mrb[0].mxu0
      %v4804 = vadd.f32 %v4337, %v4803
      %v4805 = vpop.f32.mrb[0].mxu0
      %v4806 = vadd.f32 %v4341, %v4805
      %4807 = vmatprep.mubr.bf16.mxu0 %v4322
      %4808 = vmatmul.mubr.bf16.gmra.mrb[0].mxu0 %v4321
      %v4809 = vpop.f32.mrb[0].mxu0
      %v4810 = vadd.f32 %v4337, %v4809
      %v4811 = vpop.f32.mrb[0].mxu0
      %v4812 = vadd.f32 %v4341, %v4811
      %v4813 = vpop.f32.mrb[0].mxu0
      %v4814 = vadd.f32 %v4337, %v4813
      %v4815 = vpop.f32.mrb[0].mxu0
      %v4816 = vadd.f32 %v4341, %v4815
      %4817 = vmatprep.mubr.bf16.mxu0 %v4326
      %4818 = vmatmul.mubr.bf16.gmra.mrb[0].mxu0 %v4325
      %v4819 = vpop.f32.mrb[0].mxu0
      %v4820 = vadd.f32 %v4337, %v4819
      %v4821 = vpop.f32.mrb[0].mxu0
      %v4822 = vadd.f32 %v4341, %v4821
      %v4823 = vpop.f32.mrb[0].mxu0
      %v4824 = vadd.f32 %v4337, %v4823
      %v4825 = vpop.f32.mrb[0].mxu0
      %v4826 = vadd.f32 %v4341, %v4825
      %4827 = vmatprep.mubr.bf16.mxu0 %v4330
      %4828 = vmatmul.mubr.bf16.gmra.mrb[0].mxu0 %v4329
      %v4829 = vpop.f32.mrb[0].mxu0
      %v4830 = vadd.f32 %v4337, %v4829
      %v4831 = vpop.f32.mrb[0].mxu0
      %v4832 = vadd.f32 %v4341, %v4831
      %v4833 = vpop.f32.mrb[0].mxu0
      %v4834 = vadd.f32 %v4337, %v4833
      %v4835 = vpop.f32.mrb[0].mxu0
      %v4836 = vadd.f32 %v4341, %v4835
      %4837 = vdwg.mxu0
      %4838 = vmatprep.subr.bf16.mxu0 %v4524
      %4839 = vmatpush1.bf16.msra.mxu0 %v4523
      %4840 = vmatprep.subr.bf16.mxu0 %v4526
      %4841 = vmatpush1.bf16.msra.mxu0 %v4525
      %4842 = vmatprep.subr.bf16.mxu0 %v4528
      %4843 = vmatpush1.bf16.msra.mxu0 %v4527
      %4844 = vmatprep.subr.bf16.mxu0 %v4530
      %4845 = vmatpush1.bf16.msra.mxu0 %v4529
      %4846 = vmatprep.subr.bf16.mxu0 %v4532
      %4847 = vmatpush1.bf16.msra.mxu0 %v4531
      %4848 = vmatprep.subr.bf16.mxu0 %v4534
      %4849 = vmatpush1.bf16.msra.mxu0 %v4533
      %4850 = vmatprep.subr.bf16.mxu0 %v4536
      %4851 = vmatpush1.bf16.msra.mxu0 %v4535
      %4852 = vmatprep.subr.bf16.mxu0 %v4538
      %4853 = vmatpush1.bf16.msra.mxu0 %v4537
      %4854 = vmatprep.subr.bf16.mxu0 %v4643
      %4855 = vmatpush1.bf16.msra.mxu0 %v4640
      %4856 = vmatprep.subr.bf16.mxu0 0
      %4857 = vmatpush1.bf16.msra.mxu0 0
      %4858 = vmatprep.subr.bf16.mxu0 0
      %4859 = vmatpush1.bf16.msra.mxu0 0
      %4860 = vmatprep.subr.bf16.mxu0 0
      %4861 = vmatpush1.bf16.msra.mxu0 0
      %4862 = vmatprep.subr.bf16.mxu0 0
      %4863 = vmatpush1.bf16.msra.mxu0 0
      %4864 = vmatprep.subr.bf16.mxu0 0
      %4865 = vmatpush1.bf16.msra.mxu0 0
      %4866 = vmatprep.subr.bf16.mxu0 0
      %4867 = vmatpush1.bf16.msra.mxu0 0
      %4868 = vmatprep.subr.bf16.mxu0 0
      %4869 = vmatpush1.bf16.msra.mxu0 0
      %4870 = vmatprep.mubr.bf16.mxu0 %v4591
      %4871 = vmatmul.mubr.bf16.gmra.mrb[0].mxu0 %v4271
      %v4872 = vpop.f32.mrb[0].mxu0
      %v4873 = vadd.f32 %v4680, %v4872
      %v4874 = vpop.f32.mrb[0].mxu0
      %v4875 = vadd.f32 %v4682, %v4874
      %v4876 = vpop.f32.mrb[0].mxu0
      %v4877 = vadd.f32 %v4684, %v4876
      %v4878 = vpop.f32.mrb[0].mxu0
      %v4879 = vadd.f32 %v4686, %v4878
      %4880 = vmatprep.mubr.bf16.mxu0 %v4594
      %4881 = vmatmul.mubr.bf16.gmra.mrb[0].mxu0 %v4275
      %v4882 = vpop.f32.mrb[0].mxu0
      %v4883 = vadd.f32 %v4690, %v4882
      %v4884 = vpop.f32.mrb[0].mxu0
      %v4885 = vadd.f32 %v4692, %v4884
      %v4886 = vpop.f32.mrb[0].mxu0
      %v4887 = vadd.f32 %v4694, %v4886
      %v4888 = vpop.f32.mrb[0].mxu0
      %v4889 = vadd.f32 %v4696, %v4888
      %4890 = vmatprep.mubr.bf16.mxu0 %v4597
      %4891 = vmatmul.mubr.bf16.gmra.mrb[0].mxu0 %v4279
      %v4892 = vpop.f32.mrb[0].mxu0
      %v4893 = vadd.f32 %v4700, %v4892
      %v4894 = vpop.f32.mrb[0].mxu0
      %v4895 = vadd.f32 %v4702, %v4894
      %v4896 = vpop.f32.mrb[0].mxu0
      %v4897 = vadd.f32 %v4704, %v4896
      %v4898 = vpop.f32.mrb[0].mxu0
      %v4899 = vadd.f32 %v4706, %v4898
      %4900 = vmatprep.mubr.bf16.mxu0 %v4600
      %4901 = vmatmul.mubr.bf16.gmra.mrb[0].mxu0 %v4283
      %v4902 = vpop.f32.mrb[0].mxu0
      %v4903 = vadd.f32 %v4710, %v4902
      %v4904 = vpop.f32.mrb[0].mxu0
      %v4905 = vadd.f32 %v4712, %v4904
      %v4906 = vpop.f32.mrb[0].mxu0
      %v4907 = vadd.f32 %v4714, %v4906
      %v4908 = vpop.f32.mrb[0].mxu0
      %v4909 = vadd.f32 %v4716, %v4908
      %4910 = vmatprep.mubr.bf16.mxu0 %v4603
      %4911 = vmatmul.mubr.bf16.gmra.mrb[0].mxu0 %v4287
      %v4912 = vpop.f32.mrb[0].mxu0
      %v4913 = vadd.f32 %v4720, %v4912
      %v4914 = vpop.f32.mrb[0].mxu0
      %v4915 = vadd.f32 %v4722, %v4914
      %v4916 = vpop.f32.mrb[0].mxu0
      %v4917 = vadd.f32 %v4724, %v4916
      %v4918 = vpop.f32.mrb[0].mxu0
      %v4919 = vadd.f32 %v4726, %v4918
      %4920 = vmatprep.mubr.bf16.mxu0 %v4606
      %4921 = vmatmul.mubr.bf16.gmra.mrb[0].mxu0 %v4291
      %v4922 = vpop.f32.mrb[0].mxu0
      %v4923 = vadd.f32 %v4730, %v4922
      %v4924 = vpop.f32.mrb[0].mxu0
      %v4925 = vadd.f32 %v4732, %v4924
      %v4926 = vpop.f32.mrb[0].mxu0
      %v4927 = vadd.f32 %v4734, %v4926
      %v4928 = vpop.f32.mrb[0].mxu0
      %v4929 = vadd.f32 %v4736, %v4928
      %4930 = vmatprep.mubr.bf16.mxu0 %v4609
      %4931 = vmatmul.mubr.bf16.gmra.mrb[0].mxu0 %v4295
      %v4932 = vpop.f32.mrb[0].mxu0
      %v4933 = vadd.f32 %v4740, %v4932
      %v4934 = vpop.f32.mrb[0].mxu0
      %v4935 = vadd.f32 %v4742, %v4934
      %v4936 = vpop.f32.mrb[0].mxu0
      %v4937 = vadd.f32 %v4744, %v4936
      %v4938 = vpop.f32.mrb[0].mxu0
      %v4939 = vadd.f32 %v4746, %v4938
      %4940 = vmatprep.mubr.bf16.mxu0 %v4612
      %4941 = vmatmul.mubr.bf16.gmra.mrb[0].mxu0 %v4299
      %v4942 = vpop.f32.mrb[0].mxu0
      %v4943 = vadd.f32 %v4750, %v4942
      %v4944 = vpop.f32.mrb[0].mxu0
      %v4945 = vadd.f32 %v4752, %v4944
      %v4946 = vpop.f32.mrb[0].mxu0
      %v4947 = vadd.f32 %v4754, %v4946
      %v4948 = vpop.f32.mrb[0].mxu0
      %v4949 = vadd.f32 %v4756, %v4948
      %4950 = vmatprep.mubr.bf16.mxu0 %v4615
      %4951 = vmatmul.mubr.bf16.gmra.mrb[0].mxu0 %v4303
      %v4952 = vpop.f32.mrb[0].mxu0
      %v4953 = vadd.f32 %v4760, %v4952
      %v4954 = vpop.f32.mrb[0].mxu0
      %v4955 = vadd.f32 %v4762, %v4954
      %v4956 = vpop.f32.mrb[0].mxu0
      %v4957 = vadd.f32 %v4764, %v4956
      %v4958 = vpop.f32.mrb[0].mxu0
      %v4959 = vadd.f32 %v4766, %v4958
      %4960 = vmatprep.mubr.bf16.mxu0 %v4618
      %4961 = vmatmul.mubr.bf16.gmra.mrb[0].mxu0 %v4307
      %v4962 = vpop.f32.mrb[0].mxu0
      %v4963 = vadd.f32 %v4770, %v4962
      %v4964 = vpop.f32.mrb[0].mxu0
      %v4965 = vadd.f32 %v4772, %v4964
      %v4966 = vpop.f32.mrb[0].mxu0
      %v4967 = vadd.f32 %v4774, %v4966
      %v4968 = vpop.f32.mrb[0].mxu0
      %v4969 = vadd.f32 %v4776, %v4968
      %4970 = vmatprep.mubr.bf16.mxu0 %v4621
      %4971 = vmatmul.mubr.bf16.gmra.mrb[0].mxu0 %v4311
      %v4972 = vpop.f32.mrb[0].mxu0
      %v4973 = vadd.f32 %v4780, %v4972
      %v4974 = vpop.f32.mrb[0].mxu0
      %v4975 = vadd.f32 %v4782, %v4974
      %v4976 = vpop.f32.mrb[0].mxu0
      %v4977 = vadd.f32 %v4784, %v4976
      %v4978 = vpop.f32.mrb[0].mxu0
      %v4979 = vadd.f32 %v4786, %v4978
      %4980 = vmatprep.mubr.bf16.mxu0 %v4624
      %4981 = vmatmul.mubr.bf16.gmra.mrb[0].mxu0 %v4315
      %v4982 = vpop.f32.mrb[0].mxu0
      %v4983 = vadd.f32 %v4790, %v4982
      %v4984 = vpop.f32.mrb[0].mxu0
      %v4985 = vadd.f32 %v4792, %v4984
      %v4986 = vpop.f32.mrb[0].mxu0
      %v4987 = vadd.f32 %v4794, %v4986
      %v4988 = vpop.f32.mrb[0].mxu0
      %v4989 = vadd.f32 %v4796, %v4988
      %4990 = vmatprep.mubr.bf16.mxu0 %v4627
      %4991 = vmatmul.mubr.bf16.gmra.mrb[0].mxu0 %v4319
      %v4992 = vpop.f32.mrb[0].mxu0
      %v4993 = vadd.f32 %v4800, %v4992
      %v4994 = vpop.f32.mrb[0].mxu0
      %v4995 = vadd.f32 %v4802, %v4994
      %v4996 = vpop.f32.mrb[0].mxu0
      %v4997 = vadd.f32 %v4804, %v4996
      %v4998 = vpop.f32.mrb[0].mxu0
      %v4999 = vadd.f32 %v4806, %v4998
      %5000 = vmatprep.mubr.bf16.mxu0 %v4630
      %5001 = vmatmul.mubr.bf16.gmra.mrb[0].mxu0 %v4323
      %v5002 = vpop.f32.mrb[0].mxu0
      %v5003 = vadd.f32 %v4810, %v5002
      %v5004 = vpop.f32.mrb[0].mxu0
      %v5005 = vadd.f32 %v4812, %v5004
      %v5006 = vpop.f32.mrb[0].mxu0
      %v5007 = vadd.f32 %v4814, %v5006
      %v5008 = vpop.f32.mrb[0].mxu0
      %v5009 = vadd.f32 %v4816, %v5008
      %5010 = vmatprep.mubr.bf16.mxu0 %v4633
      %5011 = vmatmul.mubr.bf16.gmra.mrb[0].mxu0 %v4327
      %v5012 = vpop.f32.mrb[0].mxu0
      %v5013 = vadd.f32 %v4820, %v5012
      %v5014 = vpop.f32.mrb[0].mxu0
      %v5015 = vadd.f32 %v4822, %v5014
      %v5016 = vpop.f32.mrb[0].mxu0
      %v5017 = vadd.f32 %v4824, %v5016
      %v5018 = vpop.f32.mrb[0].mxu0
      %v5019 = vadd.f32 %v4826, %v5018
      %5020 = vmatprep.mubr.bf16.mxu0 %v4636
      %5021 = vmatmul.mubr.bf16.gmra.mrb[0].mxu0 %v4331
      %v5022 = vpop.f32.mrb[0].mxu0
      %v5023 = vadd.f32 %v4830, %v5022
      %v5024 = vpop.f32.mrb[0].mxu0
      %v5025 = vadd.f32 %v4832, %v5024
      %v5026 = vpop.f32.mrb[0].mxu0
      %v5027 = vadd.f32 %v4834, %v5026
      %v5028 = vpop.f32.mrb[0].mxu0
      %v5029 = vadd.f32 %v4836, %v5028
      %5030 = vdwg.mxu0
      %v5031 = vmax.f32 %v4873, 0.0
      %v5032 = vmax.f32 %v4875, 0.0
      %v5033 = vmax.f32 %v4877, 0.0
      %v5034 = vmax.f32 %v4879, 0.0
      %v5035 = vmax.f32 %v4883, 0.0
      %v5036 = vmax.f32 %v4885, 0.0
      %v5037 = vmax.f32 %v4887, 0.0
      %v5038 = vmax.f32 %v4889, 0.0
      %v5039 = vmax.f32 %v4893, 0.0
      %v5040 = vmax.f32 %v4895, 0.0
      %v5041 = vmax.f32 %v4897, 0.0
      %v5042 = vmax.f32 %v4899, 0.0
      %v5043 = vmax.f32 %v4903, 0.0
      %v5044 = vmax.f32 %v4905, 0.0
      %v5045 = vmax.f32 %v4907, 0.0
      %v5046 = vmax.f32 %v4909, 0.0
      %v5047 = vmax.f32 %v4913, 0.0
      %v5048 = vmax.f32 %v4915, 0.0
      %v5049 = vmax.f32 %v4917, 0.0
      %v5050 = vmax.f32 %v4919, 0.0
      %v5051 = vmax.f32 %v4923, 0.0
      %v5052 = vmax.f32 %v4925, 0.0
      %v5053 = vmax.f32 %v4927, 0.0
      %v5054 = vmax.f32 %v4929, 0.0
      %v5055 = vmax.f32 %v4933, 0.0
      %v5056 = vmax.f32 %v4935, 0.0
      %v5057 = vmax.f32 %v4937, 0.0
      %v5058 = vmax.f32 %v4939, 0.0
      %v5059 = vmax.f32 %v4943, 0.0
      %v5060 = vmax.f32 %v4945, 0.0
      %v5061 = vmax.f32 %v4947, 0.0
      %v5062 = vmax.f32 %v4949, 0.0
      %v5063 = vmax.f32 %v4953, 0.0
      %v5064 = vmax.f32 %v4955, 0.0
      %v5065 = vmax.f32 %v4957, 0.0
      %v5066 = vmax.f32 %v4959, 0.0
      %v5067 = vmax.f32 %v4963, 0.0
      %v5068 = vmax.f32 %v4965, 0.0
      %v5069 = vmax.f32 %v4967, 0.0
      %v5070 = vmax.f32 %v4969, 0.0
      %v5071 = vmax.f32 %v4973, 0.0
      %v5072 = vmax.f32 %v4975, 0.0
      %v5073 = vmax.f32 %v4977, 0.0
      %v5074 = vmax.f32 %v4979, 0.0
      %v5075 = vmax.f32 %v4983, 0.0
      %v5076 = vmax.f32 %v4985, 0.0
      %v5077 = vmax.f32 %v4987, 0.0
      %v5078 = vmax.f32 %v4989, 0.0
      %v5079 = vmax.f32 %v4993, 0.0
      %v5080 = vmax.f32 %v4995, 0.0
      %v5081 = vmax.f32 %v4997, 0.0
      %v5082 = vmax.f32 %v4999, 0.0
      %v5083 = vmax.f32 %v5003, 0.0
      %v5084 = vmax.f32 %v5005, 0.0
      %v5085 = vmax.f32 %v5007, 0.0
      %v5086 = vmax.f32 %v5009, 0.0
      %v5087 = vmax.f32 %v5013, 0.0
      %v5088 = vmax.f32 %v5015, 0.0
      %v5089 = vmax.f32 %v5017, 0.0
      %v5090 = vmax.f32 %v5019, 0.0
      %v5091 = vmax.f32 %v5023, 0.0
      %v5092 = vmax.f32 %v5025, 0.0
      %v5093 = vmax.f32 %v5027, 0.0
      %v5094 = vmax.f32 %v5029, 0.0
      %v5095 = vld [vmem:[%s5] sm:$0xf]
      %v5096 = vld [vmem:[%s5 + $0x4] sm:$0xf]
      %v5097 = vld [vmem:[%s5 + $0x8] sm:$0xf]
      %v5098 = vld [vmem:[%s5 + $0xc] sm:$0xf]
      %v5099 = vld [vmem:[%s5 + $0x10] sm:$0xf]
      %v5100 = vld [vmem:[%s5 + $0x14] sm:$0xf]
      %v5101 = vld [vmem:[%s5 + $0x18] sm:$0xf]
      %v5102 = vld [vmem:[%s5 + $0x1c] sm:$0xf]
      %v5103 = vld [vmem:[%s5 + $0x20] sm:$0xf]
      %v5104 = vld [vmem:[%s5 + $0x24] sm:$0xf]
      %v5105 = vld [vmem:[%s5 + $0x28] sm:$0xf]
      %v5106 = vld [vmem:[%s5 + $0x2c] sm:$0xf]
      %v5107 = vld [vmem:[%s5 + $0x30] sm:$0xf]
      %v5108 = vld [vmem:[%s5 + $0x34] sm:$0xf]
      %v5109 = vld [vmem:[%s5 + $0x38] sm:$0xf]
      %v5110 = vld [vmem:[%s5 + $0x3c] sm:$0xf]
      %v5111 = vld [vmem:[%s5 + $0x40] sm:$0xf]
      %v5112 = vld [vmem:[%s5 + $0x44] sm:$0xf]
      %v5113 = vld [vmem:[%s5 + $0x48] sm:$0xf]
      %v5114 = vld [vmem:[%s5 + $0x4c] sm:$0xf]
      %v5115 = vld [vmem:[%s5 + $0x50] sm:$0xf]
      %v5116 = vld [vmem:[%s5 + $0x54] sm:$0xf]
      %v5117 = vld [vmem:[%s5 + $0x58] sm:$0xf]
      %v5118 = vld [vmem:[%s5 + $0x5c] sm:$0xf]
      %v5119 = vld [vmem:[%s5 + $0x60] sm:$0x3]
      %v5120 = vld [vmem:[%s6] sm:$0x1]
      %v5121 = vpack.c.bf16 %v5033, %v5031
      %v5122 = vpack.c.bf16 %v5034, %v5032
      %v5123 = vpack.c.bf16 %v5037, %v5035
      %v5124 = vpack.c.bf16 %v5038, %v5036
      %v5125 = vpack.c.bf16 %v5041, %v5039
      %v5126 = vpack.c.bf16 %v5042, %v5040
      %v5127 = vpack.c.bf16 %v5045, %v5043
      %v5128 = vpack.c.bf16 %v5046, %v5044
      %v5129 = vpack.c.bf16 %v5049, %v5047
      %v5130 = vpack.c.bf16 %v5050, %v5048
      %v5131 = vpack.c.bf16 %v5053, %v5051
      %v5132 = vpack.c.bf16 %v5054, %v5052
      %v5133 = vpack.c.bf16 %v5057, %v5055
      %v5134 = vpack.c.bf16 %v5058, %v5056
      %v5135 = vpack.c.bf16 %v5061, %v5059
      %v5136 = vpack.c.bf16 %v5062, %v5060
      %v5137 = vpack.c.bf16 %v5065, %v5063
      %v5138 = vpack.c.bf16 %v5066, %v5064
      %v5139 = vpack.c.bf16 %v5069, %v5067
      %v5140 = vpack.c.bf16 %v5070, %v5068
      %v5141 = vpack.c.bf16 %v5073, %v5071
      %v5142 = vpack.c.bf16 %v5074, %v5072
      %v5143 = vpack.c.bf16 %v5077, %v5075
      %v5144 = vpack.c.bf16 %v5078, %v5076
      %v5145 = vpack.c.bf16 %v5081, %v5079
      %v5146 = vpack.c.bf16 %v5082, %v5080
      %v5147 = vpack.c.bf16 %v5085, %v5083
      %v5148 = vpack.c.bf16 %v5086, %v5084
      %v5149 = vpack.c.bf16 %v5089, %v5087
      %v5150 = vpack.c.bf16 %v5090, %v5088
      %v5151 = vpack.c.bf16 %v5093, %v5091
      %v5152 = vpack.c.bf16 %v5094, %v5092
      %v5154 = vlaneseq
      %v5155 = vshrl.u32 %v5154, 7
      %v5156 = vsub.s32 0, %v5155
      %v5157 = vrot.slane %v5120, %v5156
      %v5184 = vunpack.c.l.b16 %v5095
      %v5185 = vunpack.c.l.b16 %v5096
      %v5186 = vunpack.c.l.b16 %v5097
      %v5187 = vunpack.c.l.b16 %v5098
      %v5188 = vunpack.c.l.b16 %v5099
      %v5189 = vunpack.c.l.b16 %v5100
      %v5190 = vunpack.c.l.b16 %v5101
      %v5191 = vunpack.c.l.b16 %v5102
      %v5192 = vunpack.c.l.b16 %v5103
      %v5193 = vunpack.c.l.b16 %v5104
      %v5194 = vunpack.c.l.b16 %v5105
      %v5195 = vunpack.c.l.b16 %v5106
      %v5196 = vunpack.c.l.b16 %v5107
      %v5197 = vunpack.c.l.b16 %v5108
      %v5198 = vunpack.c.l.b16 %v5109
      %v5199 = vunpack.c.l.b16 %v5110
      %v5200 = vunpack.c.l.b16 %v5111
      %v5201 = vunpack.c.l.b16 %v5112
      %v5202 = vunpack.c.l.b16 %v5113
      %v5203 = vunpack.c.l.b16 %v5114
      %v5204 = vunpack.c.l.b16 %v5115
      %v5205 = vunpack.c.l.b16 %v5116
      %v5206 = vunpack.c.l.b16 %v5117
      %v5207 = vunpack.c.l.b16 %v5118
      %v5208 = vunpack.c.l.b16 %v5119
      %v5209 = vpack.c.b16 %v5185, %v5184
      %v5210 = vpack.c.b16 %v5187, %v5186
      %v5211 = vpack.c.b16 %v5189, %v5188
      %v5212 = vpack.c.b16 %v5191, %v5190
      %v5213 = vpack.c.b16 %v5193, %v5192
      %v5214 = vpack.c.b16 %v5195, %v5194
      %v5215 = vpack.c.b16 %v5197, %v5196
      %v5216 = vpack.c.b16 %v5199, %v5198
      %v5217 = vpack.c.b16 %v5201, %v5200
      %v5218 = vpack.c.b16 %v5203, %v5202
      %v5219 = vpack.c.b16 %v5205, %v5204
      %v5220 = vpack.c.b16 %v5207, %v5206
      %v5221 = vpack.c.b16 %v5208, %v5208
      %vm5234 = vcmask 556032
      %v5236 = vsel %vm5234, %v5122, 0
      %v5239 = vsel %vm5234, %v5124, 0
      %v5242 = vsel %vm5234, %v5126, 0
      %v5245 = vsel %vm5234, %v5128, 0
      %v5248 = vsel %vm5234, %v5130, 0
      %v5251 = vsel %vm5234, %v5132, 0
      %v5254 = vsel %vm5234, %v5134, 0
      %v5257 = vsel %vm5234, %v5136, 0
      %v5260 = vsel %vm5234, %v5138, 0
      %v5263 = vsel %vm5234, %v5140, 0
      %v5266 = vsel %vm5234, %v5142, 0
      %v5269 = vsel %vm5234, %v5144, 0
      %v5272 = vsel %vm5234, %v5146, 0
      %v5275 = vsel %vm5234, %v5148, 0
      %v5278 = vsel %vm5234, %v5150, 0
      %v5281 = vsel %vm5234, %v5152, 0
      %vm5283 = vcmask 1041408
      %v5285 = vsel %vm5283, %v5221, 0
      %5287 = vmatprep.subr.bf16.mxu0 0
      %5288 = vmatpush1.bf16.msra.mxu0 %v5209
      %5289 = vmatprep.subr.bf16.mxu0 0
      %5290 = vmatpush1.bf16.msra.mxu0 %v5210
      %5291 = vmatprep.subr.bf16.mxu0 0
      %5292 = vmatpush1.bf16.msra.mxu0 %v5211
      %5293 = vmatprep.subr.bf16.mxu0 0
      %5294 = vmatpush1.bf16.msra.mxu0 %v5212
      %5295 = vmatprep.subr.bf16.mxu0 0
      %5296 = vmatpush1.bf16.msra.mxu0 %v5213
      %5297 = vmatprep.subr.bf16.mxu0 0
      %5298 = vmatpush1.bf16.msra.mxu0 %v5214
      %5299 = vmatprep.subr.bf16.mxu0 0
      %5300 = vmatpush1.bf16.msra.mxu0 %v5215
      %5301 = vmatprep.subr.bf16.mxu0 0
      %5302 = vmatpush1.bf16.msra.mxu0 %v5216
      %5303 = vmatprep.subr.bf16.mxu0 0
      %5304 = vmatpush1.bf16.msra.mxu0 %v5217
      %5305 = vmatprep.subr.bf16.mxu0 0
      %5306 = vmatpush1.bf16.msra.mxu0 %v5218
      %5307 = vmatprep.subr.bf16.mxu0 0
      %5308 = vmatpush1.bf16.msra.mxu0 %v5219
      %5309 = vmatprep.subr.bf16.mxu0 0
      %5310 = vmatpush1.bf16.msra.mxu0 %v5220
      %5311 = vmatprep.subr.bf16.mxu0 0
      %5312 = vmatpush1.bf16.msra.mxu0 %v5285
      %5313 = vmatprep.subr.bf16.mxu0 0
      %5314 = vmatpush1.bf16.msra.mxu0 0
      %5315 = vmatprep.subr.bf16.mxu0 0
      %5316 = vmatpush1.bf16.msra.mxu0 0
      %5317 = vmatprep.subr.bf16.mxu0 0
      %5318 = vmatpush1.bf16.msra.mxu0 0
      %5319 = vmatprep.mubr.bf16.mxu0 %v5236
      %5320 = vmatmul.mubr.bf16.gmra.mrb[0].mxu0 %v5121
      %v5321 = vpop.f32.mrb[0].mxu0
      %v5322 = vadd.f32 %v5157, %v5321
      %v5323 = vpop.f32.mrb[0].mxu0
      %v5324 = vpop.f32.mrb[0].mxu0
      %v5325 = vadd.f32 %v5157, %v5324
      %v5326 = vpop.f32.mrb[0].mxu0
      %5327 = vmatprep.mubr.bf16.mxu0 %v5239
      %5328 = vmatmul.mubr.bf16.gmra.mrb[0].mxu0 %v5123
      %v5329 = vpop.f32.mrb[0].mxu0
      %v5330 = vadd.f32 %v5157, %v5329
      %v5331 = vpop.f32.mrb[0].mxu0
      %v5332 = vpop.f32.mrb[0].mxu0
      %v5333 = vadd.f32 %v5157, %v5332
      %v5334 = vpop.f32.mrb[0].mxu0
      %5335 = vmatprep.mubr.bf16.mxu0 %v5242
      %5336 = vmatmul.mubr.bf16.gmra.mrb[0].mxu0 %v5125
      %v5337 = vpop.f32.mrb[0].mxu0
      %v5338 = vadd.f32 %v5157, %v5337
      %v5339 = vpop.f32.mrb[0].mxu0
      %v5340 = vpop.f32.mrb[0].mxu0
      %v5341 = vadd.f32 %v5157, %v5340
      %v5342 = vpop.f32.mrb[0].mxu0
      %5343 = vmatprep.mubr.bf16.mxu0 %v5245
      %5344 = vmatmul.mubr.bf16.gmra.mrb[0].mxu0 %v5127
      %v5345 = vpop.f32.mrb[0].mxu0
      %v5346 = vadd.f32 %v5157, %v5345
      %v5347 = vpop.f32.mrb[0].mxu0
      %v5348 = vpop.f32.mrb[0].mxu0
      %v5349 = vadd.f32 %v5157, %v5348
      %v5350 = vpop.f32.mrb[0].mxu0
      %5351 = vmatprep.mubr.bf16.mxu0 %v5248
      %5352 = vmatmul.mubr.bf16.gmra.mrb[0].mxu0 %v5129
      %v5353 = vpop.f32.mrb[0].mxu0
      %v5354 = vadd.f32 %v5157, %v5353
      %v5355 = vpop.f32.mrb[0].mxu0
      %v5356 = vpop.f32.mrb[0].mxu0
      %v5357 = vadd.f32 %v5157, %v5356
      %v5358 = vpop.f32.mrb[0].mxu0
      %5359 = vmatprep.mubr.bf16.mxu0 %v5251
      %5360 = vmatmul.mubr.bf16.gmra.mrb[0].mxu0 %v5131
      %v5361 = vpop.f32.mrb[0].mxu0
      %v5362 = vadd.f32 %v5157, %v5361
      %v5363 = vpop.f32.mrb[0].mxu0
      %v5364 = vpop.f32.mrb[0].mxu0
      %v5365 = vadd.f32 %v5157, %v5364
      %v5366 = vpop.f32.mrb[0].mxu0
      %5367 = vmatprep.mubr.bf16.mxu0 %v5254
      %5368 = vmatmul.mubr.bf16.gmra.mrb[0].mxu0 %v5133
      %v5369 = vpop.f32.mrb[0].mxu0
      %v5370 = vadd.f32 %v5157, %v5369
      %v5371 = vpop.f32.mrb[0].mxu0
      %v5372 = vpop.f32.mrb[0].mxu0
      %v5373 = vadd.f32 %v5157, %v5372
      %v5374 = vpop.f32.mrb[0].mxu0
      %5375 = vmatprep.mubr.bf16.mxu0 %v5257
      %5376 = vmatmul.mubr.bf16.gmra.mrb[0].mxu0 %v5135
      %v5377 = vpop.f32.mrb[0].mxu0
      %v5378 = vadd.f32 %v5157, %v5377
      %v5379 = vpop.f32.mrb[0].mxu0
      %v5380 = vpop.f32.mrb[0].mxu0
      %v5381 = vadd.f32 %v5157, %v5380
      %v5382 = vpop.f32.mrb[0].mxu0
      %5383 = vmatprep.mubr.bf16.mxu0 %v5260
      %5384 = vmatmul.mubr.bf16.gmra.mrb[0].mxu0 %v5137
      %v5385 = vpop.f32.mrb[0].mxu0
      %v5386 = vadd.f32 %v5157, %v5385
      %v5387 = vpop.f32.mrb[0].mxu0
      %v5388 = vpop.f32.mrb[0].mxu0
      %v5389 = vadd.f32 %v5157, %v5388
      %v5390 = vpop.f32.mrb[0].mxu0
      %5391 = vmatprep.mubr.bf16.mxu0 %v5263
      %5392 = vmatmul.mubr.bf16.gmra.mrb[0].mxu0 %v5139
      %v5393 = vpop.f32.mrb[0].mxu0
      %v5394 = vadd.f32 %v5157, %v5393
      %v5395 = vpop.f32.mrb[0].mxu0
      %v5396 = vpop.f32.mrb[0].mxu0
      %v5397 = vadd.f32 %v5157, %v5396
      %v5398 = vpop.f32.mrb[0].mxu0
      %5399 = vmatprep.mubr.bf16.mxu0 %v5266
      %5400 = vmatmul.mubr.bf16.gmra.mrb[0].mxu0 %v5141
      %v5401 = vpop.f32.mrb[0].mxu0
      %v5402 = vadd.f32 %v5157, %v5401
      %v5403 = vpop.f32.mrb[0].mxu0
      %v5404 = vpop.f32.mrb[0].mxu0
      %v5405 = vadd.f32 %v5157, %v5404
      %v5406 = vpop.f32.mrb[0].mxu0
      %5407 = vmatprep.mubr.bf16.mxu0 %v5269
      %5408 = vmatmul.mubr.bf16.gmra.mrb[0].mxu0 %v5143
      %v5409 = vpop.f32.mrb[0].mxu0
      %v5410 = vadd.f32 %v5157, %v5409
      %v5411 = vpop.f32.mrb[0].mxu0
      %v5412 = vpop.f32.mrb[0].mxu0
      %v5413 = vadd.f32 %v5157, %v5412
      %v5414 = vpop.f32.mrb[0].mxu0
      %5415 = vmatprep.mubr.bf16.mxu0 %v5272
      %5416 = vmatmul.mubr.bf16.gmra.mrb[0].mxu0 %v5145
      %v5417 = vpop.f32.mrb[0].mxu0
      %v5418 = vadd.f32 %v5157, %v5417
      %v5419 = vpop.f32.mrb[0].mxu0
      %v5420 = vpop.f32.mrb[0].mxu0
      %v5421 = vadd.f32 %v5157, %v5420
      %v5422 = vpop.f32.mrb[0].mxu0
      %5423 = vmatprep.mubr.bf16.mxu0 %v5275
      %5424 = vmatmul.mubr.bf16.gmra.mrb[0].mxu0 %v5147
      %v5425 = vpop.f32.mrb[0].mxu0
      %v5426 = vadd.f32 %v5157, %v5425
      %v5427 = vpop.f32.mrb[0].mxu0
      %v5428 = vpop.f32.mrb[0].mxu0
      %v5429 = vadd.f32 %v5157, %v5428
      %v5430 = vpop.f32.mrb[0].mxu0
      %5431 = vmatprep.mubr.bf16.mxu0 %v5278
      %5432 = vmatmul.mubr.bf16.gmra.mrb[0].mxu0 %v5149
      %v5433 = vpop.f32.mrb[0].mxu0
      %v5434 = vadd.f32 %v5157, %v5433
      %v5435 = vpop.f32.mrb[0].mxu0
      %v5436 = vpop.f32.mrb[0].mxu0
      %v5437 = vadd.f32 %v5157, %v5436
      %v5438 = vpop.f32.mrb[0].mxu0
      %5439 = vmatprep.mubr.bf16.mxu0 %v5281
      %5440 = vmatmul.mubr.bf16.gmra.mrb[0].mxu0 %v5151
      %v5441 = vpop.f32.mrb[0].mxu0
      %v5442 = vadd.f32 %v5157, %v5441
      %v5443 = vpop.f32.mrb[0].mxu0
      %v5444 = vpop.f32.mrb[0].mxu0
      %v5445 = vadd.f32 %v5157, %v5444
      %v5446 = vpop.f32.mrb[0].mxu0
      %5447 = vdwg.mxu0
      %v5448 = vmax.f32 %v5322, 0.0
      %v5449 = vmax.f32 %v5325, 0.0
      %v5450 = vmax.f32 %v5330, 0.0
      %v5451 = vmax.f32 %v5333, 0.0
      %v5452 = vmax.f32 %v5338, 0.0
      %v5453 = vmax.f32 %v5341, 0.0
      %v5454 = vmax.f32 %v5346, 0.0
      %v5455 = vmax.f32 %v5349, 0.0
      %v5456 = vmax.f32 %v5354, 0.0
      %v5457 = vmax.f32 %v5357, 0.0
      %v5458 = vmax.f32 %v5362, 0.0
      %v5459 = vmax.f32 %v5365, 0.0
      %v5460 = vmax.f32 %v5370, 0.0
      %v5461 = vmax.f32 %v5373, 0.0
      %v5462 = vmax.f32 %v5378, 0.0
      %v5463 = vmax.f32 %v5381, 0.0
      %v5464 = vmax.f32 %v5386, 0.0
      %v5465 = vmax.f32 %v5389, 0.0
      %v5466 = vmax.f32 %v5394, 0.0
      %v5467 = vmax.f32 %v5397, 0.0
      %v5468 = vmax.f32 %v5402, 0.0
      %v5469 = vmax.f32 %v5405, 0.0
      %v5470 = vmax.f32 %v5410, 0.0
      %v5471 = vmax.f32 %v5413, 0.0
      %v5472 = vmax.f32 %v5418, 0.0
      %v5473 = vmax.f32 %v5421, 0.0
      %v5474 = vmax.f32 %v5426, 0.0
      %v5475 = vmax.f32 %v5429, 0.0
      %v5476 = vmax.f32 %v5434, 0.0
      %v5477 = vmax.f32 %v5437, 0.0
      %v5478 = vmax.f32 %v5442, 0.0
      %v5479 = vmax.f32 %v5445, 0.0
      %v5480 = vld [vmem:[%s7] sm:$0xf]
      %v5481 = vld [vmem:[%s7 + $0x4] sm:$0xf]
      %v5482 = vld [vmem:[%s7 + $0x8] sm:$0xf]
      %v5483 = vld [vmem:[%s7 + $0xc] sm:$0xf]
      %v5484 = vld [vmem:[%s7 + $0x10] sm:$0xf]
      %v5485 = vld [vmem:[%s7 + $0x14] sm:$0xf]
      %v5486 = vld [vmem:[%s7 + $0x18] sm:$0xf]
      %v5487 = vld [vmem:[%s7 + $0x1c] sm:$0xf]
      %v5488 = vld [vmem:[%s7 + $0x20] sm:$0xf]
      %v5489 = vld [vmem:[%s7 + $0x24] sm:$0xf]
      %v5490 = vld [vmem:[%s7 + $0x28] sm:$0xf]
      %v5491 = vld [vmem:[%s7 + $0x2c] sm:$0xf]
      %v5492 = vld [vmem:[%s7 + $0x30] sm:$0x1]
      %v5493 = vld [vmem:[%s8] sm:$0x1]
      %v5494 = vpack.c.bf16 %v5449, %v5448
      %v5495 = vpack.c.bf16 %v5451, %v5450
      %v5496 = vpack.c.bf16 %v5453, %v5452
      %v5497 = vpack.c.bf16 %v5455, %v5454
      %v5498 = vpack.c.bf16 %v5457, %v5456
      %v5499 = vpack.c.bf16 %v5459, %v5458
      %v5500 = vpack.c.bf16 %v5461, %v5460
      %v5501 = vpack.c.bf16 %v5463, %v5462
      %v5502 = vpack.c.bf16 %v5465, %v5464
      %v5503 = vpack.c.bf16 %v5467, %v5466
      %v5504 = vpack.c.bf16 %v5469, %v5468
      %v5505 = vpack.c.bf16 %v5471, %v5470
      %v5506 = vpack.c.bf16 %v5473, %v5472
      %v5507 = vpack.c.bf16 %v5475, %v5474
      %v5508 = vpack.c.bf16 %v5477, %v5476
      %v5509 = vpack.c.bf16 %v5479, %v5478
      %v5511 = vlaneseq
      %v5512 = vshrl.u32 %v5511, 7
      %v5513 = vsub.s32 0, %v5512
      %v5514 = vrot.slane %v5493, %v5513
      %v5529 = vunpack.c.l.b16 %v5480
      %v5530 = vunpack.c.l.b16 %v5481
      %v5531 = vunpack.c.l.b16 %v5482
      %v5532 = vunpack.c.l.b16 %v5483
      %v5533 = vunpack.c.l.b16 %v5484
      %v5534 = vunpack.c.l.b16 %v5485
      %v5535 = vunpack.c.l.b16 %v5486
      %v5536 = vunpack.c.l.b16 %v5487
      %v5537 = vunpack.c.l.b16 %v5488
      %v5538 = vunpack.c.l.b16 %v5489
      %v5539 = vunpack.c.l.b16 %v5490
      %v5540 = vunpack.c.l.b16 %v5491
      %v5541 = vunpack.c.l.b16 %v5492
      %v5542 = vpack.c.b16 %v5530, %v5529
      %v5543 = vpack.c.b16 %v5532, %v5531
      %v5544 = vpack.c.b16 %v5534, %v5533
      %v5545 = vpack.c.b16 %v5536, %v5535
      %v5546 = vpack.c.b16 %v5538, %v5537
      %v5547 = vpack.c.b16 %v5540, %v5539
      %v5548 = vpack.c.b16 %v5541, %v5541
      %vm5555 = vcmask 801792
      %v5557 = vsel %vm5555, %v5494, 0
      %v5560 = vsel %vm5555, %v5495, 0
      %v5563 = vsel %vm5555, %v5496, 0
      %v5566 = vsel %vm5555, %v5497, 0
      %v5569 = vsel %vm5555, %v5498, 0
      %v5572 = vsel %vm5555, %v5499, 0
      %v5575 = vsel %vm5555, %v5500, 0
      %v5578 = vsel %vm5555, %v5501, 0
      %v5581 = vsel %vm5555, %v5502, 0
      %v5584 = vsel %vm5555, %v5503, 0
      %v5587 = vsel %vm5555, %v5504, 0
      %v5590 = vsel %vm5555, %v5505, 0
      %v5593 = vsel %vm5555, %v5506, 0
      %v5596 = vsel %vm5555, %v5507, 0
      %v5599 = vsel %vm5555, %v5508, 0
      %v5602 = vsel %vm5555, %v5509, 0
      %vm5604 = vcmask 1040384
      %v5606 = vsel %vm5604, %v5548, 0
      %5608 = vmatprep.subr.bf16.mxu0 0
      %5609 = vmatpush1.bf16.msra.mxu0 %v5542
      %5610 = vmatprep.subr.bf16.mxu0 0
      %5611 = vmatpush1.bf16.msra.mxu0 %v5543
      %5612 = vmatprep.subr.bf16.mxu0 0
      %5613 = vmatpush1.bf16.msra.mxu0 %v5544
      %5614 = vmatprep.subr.bf16.mxu0 0
      %5615 = vmatpush1.bf16.msra.mxu0 %v5545
      %5616 = vmatprep.subr.bf16.mxu0 0
      %5617 = vmatpush1.bf16.msra.mxu0 %v5546
      %5618 = vmatprep.subr.bf16.mxu0 0
      %5619 = vmatpush1.bf16.msra.mxu0 %v5547
      %5620 = vmatprep.subr.bf16.mxu0 0
      %5621 = vmatpush1.bf16.msra.mxu0 %v5606
      %5622 = vmatprep.subr.bf16.mxu0 0
      %5623 = vmatpush1.bf16.msra.mxu0 0
      %5624 = vmatprep.subr.bf16.mxu0 0
      %5625 = vmatpush1.bf16.msra.mxu0 0
      %5626 = vmatprep.subr.bf16.mxu0 0
      %5627 = vmatpush1.bf16.msra.mxu0 0
      %5628 = vmatprep.subr.bf16.mxu0 0
      %5629 = vmatpush1.bf16.msra.mxu0 0
      %5630 = vmatprep.subr.bf16.mxu0 0
      %5631 = vmatpush1.bf16.msra.mxu0 0
      %5632 = vmatprep.subr.bf16.mxu0 0
      %5633 = vmatpush1.bf16.msra.mxu0 0
      %5634 = vmatprep.subr.bf16.mxu0 0
      %5635 = vmatpush1.bf16.msra.mxu0 0
      %5636 = vmatprep.subr.bf16.mxu0 0
      %5637 = vmatpush1.bf16.msra.mxu0 0
      %5638 = vmatprep.subr.bf16.mxu0 0
      %5639 = vmatpush1.bf16.msra.mxu0 0
      %5640 = vmatprep.mubr.bf16.mxu0 0
      %5641 = vmatmul.mubr.bf16.gmra.mrb[0].mxu0 %v5557
      %v5642 = vpop.f32.mrb[0].mxu0
      %v5643 = vadd.f32 %v5514, %v5642
      %v5644 = vpop.f32.mrb[0].mxu0
      %v5645 = vpop.f32.mrb[0].mxu0
      %v5646 = vadd.f32 %v5514, %v5645
      %v5647 = vpop.f32.mrb[0].mxu0
      %5648 = vmatprep.mubr.bf16.mxu0 0
      %5649 = vmatmul.mubr.bf16.gmra.mrb[0].mxu0 %v5560
      %v5650 = vpop.f32.mrb[0].mxu0
      %v5651 = vadd.f32 %v5514, %v5650
      %v5652 = vpop.f32.mrb[0].mxu0
      %v5653 = vpop.f32.mrb[0].mxu0
      %v5654 = vadd.f32 %v5514, %v5653
      %v5655 = vpop.f32.mrb[0].mxu0
      %5656 = vmatprep.mubr.bf16.mxu0 0
      %5657 = vmatmul.mubr.bf16.gmra.mrb[0].mxu0 %v5563
      %v5658 = vpop.f32.mrb[0].mxu0
      %v5659 = vadd.f32 %v5514, %v5658
      %v5660 = vpop.f32.mrb[0].mxu0
      %v5661 = vpop.f32.mrb[0].mxu0
      %v5662 = vadd.f32 %v5514, %v5661
      %v5663 = vpop.f32.mrb[0].mxu0
      %5664 = vmatprep.mubr.bf16.mxu0 0
      %5665 = vmatmul.mubr.bf16.gmra.mrb[0].mxu0 %v5566
      %v5666 = vpop.f32.mrb[0].mxu0
      %v5667 = vadd.f32 %v5514, %v5666
      %v5668 = vpop.f32.mrb[0].mxu0
      %v5669 = vpop.f32.mrb[0].mxu0
      %v5670 = vadd.f32 %v5514, %v5669
      %v5671 = vpop.f32.mrb[0].mxu0
      %5672 = vmatprep.mubr.bf16.mxu0 0
      %5673 = vmatmul.mubr.bf16.gmra.mrb[0].mxu0 %v5569
      %v5674 = vpop.f32.mrb[0].mxu0
      %v5675 = vadd.f32 %v5514, %v5674
      %v5676 = vpop.f32.mrb[0].mxu0
      %v5677 = vpop.f32.mrb[0].mxu0
      %v5678 = vadd.f32 %v5514, %v5677
      %v5679 = vpop.f32.mrb[0].mxu0
      %5680 = vmatprep.mubr.bf16.mxu0 0
      %5681 = vmatmul.mubr.bf16.gmra.mrb[0].mxu0 %v5572
      %v5682 = vpop.f32.mrb[0].mxu0
      %v5683 = vadd.f32 %v5514, %v5682
      %v5684 = vpop.f32.mrb[0].mxu0
      %v5685 = vpop.f32.mrb[0].mxu0
      %v5686 = vadd.f32 %v5514, %v5685
      %v5687 = vpop.f32.mrb[0].mxu0
      %5688 = vmatprep.mubr.bf16.mxu0 0
      %5689 = vmatmul.mubr.bf16.gmra.mrb[0].mxu0 %v5575
      %v5690 = vpop.f32.mrb[0].mxu0
      %v5691 = vadd.f32 %v5514, %v5690
      %v5692 = vpop.f32.mrb[0].mxu0
      %v5693 = vpop.f32.mrb[0].mxu0
      %v5694 = vadd.f32 %v5514, %v5693
      %v5695 = vpop.f32.mrb[0].mxu0
      %5696 = vmatprep.mubr.bf16.mxu0 0
      %5697 = vmatmul.mubr.bf16.gmra.mrb[0].mxu0 %v5578
      %v5698 = vpop.f32.mrb[0].mxu0
      %v5699 = vadd.f32 %v5514, %v5698
      %v5700 = vpop.f32.mrb[0].mxu0
      %v5701 = vpop.f32.mrb[0].mxu0
      %v5702 = vadd.f32 %v5514, %v5701
      %v5703 = vpop.f32.mrb[0].mxu0
      %5704 = vmatprep.mubr.bf16.mxu0 0
      %5705 = vmatmul.mubr.bf16.gmra.mrb[0].mxu0 %v5581
      %v5706 = vpop.f32.mrb[0].mxu0
      %v5707 = vadd.f32 %v5514, %v5706
      %v5708 = vpop.f32.mrb[0].mxu0
      %v5709 = vpop.f32.mrb[0].mxu0
      %v5710 = vadd.f32 %v5514, %v5709
      %v5711 = vpop.f32.mrb[0].mxu0
      %5712 = vmatprep.mubr.bf16.mxu0 0
      %5713 = vmatmul.mubr.bf16.gmra.mrb[0].mxu0 %v5584
      %v5714 = vpop.f32.mrb[0].mxu0
      %v5715 = vadd.f32 %v5514, %v5714
      %v5716 = vpop.f32.mrb[0].mxu0
      %v5717 = vpop.f32.mrb[0].mxu0
      %v5718 = vadd.f32 %v5514, %v5717
      %v5719 = vpop.f32.mrb[0].mxu0
      %5720 = vmatprep.mubr.bf16.mxu0 0
      %5721 = vmatmul.mubr.bf16.gmra.mrb[0].mxu0 %v5587
      %v5722 = vpop.f32.mrb[0].mxu0
      %v5723 = vadd.f32 %v5514, %v5722
      %v5724 = vpop.f32.mrb[0].mxu0
      %v5725 = vpop.f32.mrb[0].mxu0
      %v5726 = vadd.f32 %v5514, %v5725
      %v5727 = vpop.f32.mrb[0].mxu0
      %5728 = vmatprep.mubr.bf16.mxu0 0
      %5729 = vmatmul.mubr.bf16.gmra.mrb[0].mxu0 %v5590
      %v5730 = vpop.f32.mrb[0].mxu0
      %v5731 = vadd.f32 %v5514, %v5730
      %v5732 = vpop.f32.mrb[0].mxu0
      %v5733 = vpop.f32.mrb[0].mxu0
      %v5734 = vadd.f32 %v5514, %v5733
      %v5735 = vpop.f32.mrb[0].mxu0
      %5736 = vmatprep.mubr.bf16.mxu0 0
      %5737 = vmatmul.mubr.bf16.gmra.mrb[0].mxu0 %v5593
      %v5738 = vpop.f32.mrb[0].mxu0
      %v5739 = vadd.f32 %v5514, %v5738
      %v5740 = vpop.f32.mrb[0].mxu0
      %v5741 = vpop.f32.mrb[0].mxu0
      %v5742 = vadd.f32 %v5514, %v5741
      %v5743 = vpop.f32.mrb[0].mxu0
      %5744 = vmatprep.mubr.bf16.mxu0 0
      %5745 = vmatmul.mubr.bf16.gmra.mrb[0].mxu0 %v5596
      %v5746 = vpop.f32.mrb[0].mxu0
      %v5747 = vadd.f32 %v5514, %v5746
      %v5748 = vpop.f32.mrb[0].mxu0
      %v5749 = vpop.f32.mrb[0].mxu0
      %v5750 = vadd.f32 %v5514, %v5749
      %v5751 = vpop.f32.mrb[0].mxu0
      %5752 = vmatprep.mubr.bf16.mxu0 0
      %5753 = vmatmul.mubr.bf16.gmra.mrb[0].mxu0 %v5599
      %v5754 = vpop.f32.mrb[0].mxu0
      %v5755 = vadd.f32 %v5514, %v5754
      %v5756 = vpop.f32.mrb[0].mxu0
      %v5757 = vpop.f32.mrb[0].mxu0
      %v5758 = vadd.f32 %v5514, %v5757
      %v5759 = vpop.f32.mrb[0].mxu0
      %5760 = vmatprep.mubr.bf16.mxu0 0
      %5761 = vmatmul.mubr.bf16.gmra.mrb[0].mxu0 %v5602
      %v5762 = vpop.f32.mrb[0].mxu0
      %v5763 = vadd.f32 %v5514, %v5762
      %v5764 = vpop.f32.mrb[0].mxu0
      %v5765 = vpop.f32.mrb[0].mxu0
      %v5766 = vadd.f32 %v5514, %v5765
      %v5767 = vpop.f32.mrb[0].mxu0
      %5768 = vdwg.mxu0
      %v5769 = vmax.f32 %v5643, 0.0
      %v5770 = vmax.f32 %v5646, 0.0
      %v5771 = vmax.f32 %v5651, 0.0
      %v5772 = vmax.f32 %v5654, 0.0
      %v5773 = vmax.f32 %v5659, 0.0
      %v5774 = vmax.f32 %v5662, 0.0
      %v5775 = vmax.f32 %v5667, 0.0
      %v5776 = vmax.f32 %v5670, 0.0
      %v5777 = vmax.f32 %v5675, 0.0
      %v5778 = vmax.f32 %v5678, 0.0
      %v5779 = vmax.f32 %v5683, 0.0
      %v5780 = vmax.f32 %v5686, 0.0
      %v5781 = vmax.f32 %v5691, 0.0
      %v5782 = vmax.f32 %v5694, 0.0
      %v5783 = vmax.f32 %v5699, 0.0
      %v5784 = vmax.f32 %v5702, 0.0
      %v5785 = vmax.f32 %v5707, 0.0
      %v5786 = vmax.f32 %v5710, 0.0
      %v5787 = vmax.f32 %v5715, 0.0
      %v5788 = vmax.f32 %v5718, 0.0
      %v5789 = vmax.f32 %v5723, 0.0
      %v5790 = vmax.f32 %v5726, 0.0
      %v5791 = vmax.f32 %v5731, 0.0
      %v5792 = vmax.f32 %v5734, 0.0
      %v5793 = vmax.f32 %v5739, 0.0
      %v5794 = vmax.f32 %v5742, 0.0
      %v5795 = vmax.f32 %v5747, 0.0
      %v5796 = vmax.f32 %v5750, 0.0
      %v5797 = vmax.f32 %v5755, 0.0
      %v5798 = vmax.f32 %v5758, 0.0
      %v5799 = vmax.f32 %v5763, 0.0
      %v5800 = vmax.f32 %v5766, 0.0
      %v5801 = vld [vmem:[%s9] sm:$0xf]
      %v5802 = vld [vmem:[%s9 + $0x4] sm:$0xf]
      %v5803 = vld [vmem:[%s9 + $0x8] sm:$0xf]
      %v5804 = vld [vmem:[%s9 + $0xc] sm:$0xf]
      %v5805 = vld [vmem:[%s9 + $0x10] sm:$0xf]
      %v5806 = vld [vmem:[%s9 + $0x14] sm:$0xf]
      %v5807 = vld [vmem:[%s9 + $0x18] sm:$0x1]
      %v5808 = vld [vmem:[%s10] sm:$0x1]
      %v5809 = vpack.c.bf16 %v5770, %v5769
      %v5810 = vpack.c.bf16 %v5772, %v5771
      %v5811 = vpack.c.bf16 %v5774, %v5773
      %v5812 = vpack.c.bf16 %v5776, %v5775
      %v5813 = vpack.c.bf16 %v5778, %v5777
      %v5814 = vpack.c.bf16 %v5780, %v5779
      %v5815 = vpack.c.bf16 %v5782, %v5781
      %v5816 = vpack.c.bf16 %v5784, %v5783
      %v5817 = vpack.c.bf16 %v5786, %v5785
      %v5818 = vpack.c.bf16 %v5788, %v5787
      %v5819 = vpack.c.bf16 %v5790, %v5789
      %v5820 = vpack.c.bf16 %v5792, %v5791
      %v5821 = vpack.c.bf16 %v5794, %v5793
      %v5822 = vpack.c.bf16 %v5796, %v5795
      %v5823 = vpack.c.bf16 %v5798, %v5797
      %v5824 = vpack.c.bf16 %v5800, %v5799
      %v5826 = vlaneseq
      %v5827 = vshrl.u32 %v5826, 7
      %v5828 = vsub.s32 0, %v5827
      %v5829 = vrot.slane %v5808, %v5828
      %v5838 = vunpack.c.l.b16 %v5801
      %v5839 = vunpack.c.l.b16 %v5802
      %v5840 = vunpack.c.l.b16 %v5803
      %v5841 = vunpack.c.l.b16 %v5804
      %v5842 = vunpack.c.l.b16 %v5805
      %v5843 = vunpack.c.l.b16 %v5806
      %v5844 = vunpack.c.l.b16 %v5807
      %v5845 = vpack.c.b16 %v5839, %v5838
      %v5846 = vpack.c.b16 %v5841, %v5840
      %v5847 = vpack.c.b16 %v5843, %v5842
      %v5848 = vpack.c.b16 %v5844, %v5844
      %vm5852 = vcmask 400384
      %v5854 = vsel %vm5852, %v5809, 0
      %v5857 = vsel %vm5852, %v5810, 0
      %v5860 = vsel %vm5852, %v5811, 0
      %v5863 = vsel %vm5852, %v5812, 0
      %v5866 = vsel %vm5852, %v5813, 0
      %v5869 = vsel %vm5852, %v5814, 0
      %v5872 = vsel %vm5852, %v5815, 0
      %v5875 = vsel %vm5852, %v5816, 0
      %v5878 = vsel %vm5852, %v5817, 0
      %v5881 = vsel %vm5852, %v5818, 0
      %v5884 = vsel %vm5852, %v5819, 0
      %v5887 = vsel %vm5852, %v5820, 0
      %v5890 = vsel %vm5852, %v5821, 0
      %v5893 = vsel %vm5852, %v5822, 0
      %v5896 = vsel %vm5852, %v5823, 0
      %v5899 = vsel %vm5852, %v5824, 0
      %v5901 = vsel 0, 4294967295, 65535
      %v5902 = vsel %vm5604, %v5901, 0
      %v5904 = vand.u32 %v5848, %v5902
      %5906 = vmatprep.subr.bf16.mxu0 0
      %5907 = vmatpush1.bf16.msra.mxu0 %v5845
      %5908 = vmatprep.subr.bf16.mxu0 0
      %5909 = vmatpush1.bf16.msra.mxu0 %v5846
      %5910 = vmatprep.subr.bf16.mxu0 0
      %5911 = vmatpush1.bf16.msra.mxu0 %v5847
      %5912 = vmatprep.subr.bf16.mxu0 0
      %5913 = vmatpush1.bf16.msra.mxu0 %v5904
      %5914 = vmatprep.subr.bf16.mxu0 0
      %5915 = vmatpush1.bf16.msra.mxu0 0
      %5916 = vmatprep.subr.bf16.mxu0 0
      %5917 = vmatpush1.bf16.msra.mxu0 0
      %5918 = vmatprep.subr.bf16.mxu0 0
      %5919 = vmatpush1.bf16.msra.mxu0 0
      %5920 = vmatprep.subr.bf16.mxu0 0
      %5921 = vmatpush1.bf16.msra.mxu0 0
      %5922 = vmatprep.subr.bf16.mxu0 0
      %5923 = vmatpush1.bf16.msra.mxu0 0
      %5924 = vmatprep.subr.bf16.mxu0 0
      %5925 = vmatpush1.bf16.msra.mxu0 0
      %5926 = vmatprep.subr.bf16.mxu0 0
      %5927 = vmatpush1.bf16.msra.mxu0 0
      %5928 = vmatprep.subr.bf16.mxu0 0
      %5929 = vmatpush1.bf16.msra.mxu0 0
      %5930 = vmatprep.subr.bf16.mxu0 0
      %5931 = vmatpush1.bf16.msra.mxu0 0
      %5932 = vmatprep.subr.bf16.mxu0 0
      %5933 = vmatpush1.bf16.msra.mxu0 0
      %5934 = vmatprep.subr.bf16.mxu0 0
      %5935 = vmatpush1.bf16.msra.mxu0 0
      %5936 = vmatprep.subr.bf16.mxu0 0
      %5937 = vmatpush1.bf16.msra.mxu0 0
      %5938 = vmatprep.mubr.bf16.mxu0 0
      %5939 = vmatmul.mubr.bf16.gmra.mrb[0].mxu0 %v5854
      %v5940 = vpop.f32.mrb[0].mxu0
      %v5941 = vadd.f32 %v5829, %v5940
      %v5942 = vpop.f32.mrb[0].mxu0
      %v5943 = vpop.f32.mrb[0].mxu0
      %v5944 = vadd.f32 %v5829, %v5943
      %v5945 = vpop.f32.mrb[0].mxu0
      %5946 = vmatprep.mubr.bf16.mxu0 0
      %5947 = vmatmul.mubr.bf16.gmra.mrb[0].mxu0 %v5857
      %v5948 = vpop.f32.mrb[0].mxu0
      %v5949 = vadd.f32 %v5829, %v5948
      %v5950 = vpop.f32.mrb[0].mxu0
      %v5951 = vpop.f32.mrb[0].mxu0
      %v5952 = vadd.f32 %v5829, %v5951
      %v5953 = vpop.f32.mrb[0].mxu0
      %5954 = vmatprep.mubr.bf16.mxu0 0
      %5955 = vmatmul.mubr.bf16.gmra.mrb[0].mxu0 %v5860
      %v5956 = vpop.f32.mrb[0].mxu0
      %v5957 = vadd.f32 %v5829, %v5956
      %v5958 = vpop.f32.mrb[0].mxu0
      %v5959 = vpop.f32.mrb[0].mxu0
      %v5960 = vadd.f32 %v5829, %v5959
      %v5961 = vpop.f32.mrb[0].mxu0
      %5962 = vmatprep.mubr.bf16.mxu0 0
      %5963 = vmatmul.mubr.bf16.gmra.mrb[0].mxu0 %v5863
      %v5964 = vpop.f32.mrb[0].mxu0
      %v5965 = vadd.f32 %v5829, %v5964
      %v5966 = vpop.f32.mrb[0].mxu0
      %v5967 = vpop.f32.mrb[0].mxu0
      %v5968 = vadd.f32 %v5829, %v5967
      %v5969 = vpop.f32.mrb[0].mxu0
      %5970 = vmatprep.mubr.bf16.mxu0 0
      %5971 = vmatmul.mubr.bf16.gmra.mrb[0].mxu0 %v5866
      %v5972 = vpop.f32.mrb[0].mxu0
      %v5973 = vadd.f32 %v5829, %v5972
      %v5974 = vpop.f32.mrb[0].mxu0
      %v5975 = vpop.f32.mrb[0].mxu0
      %v5976 = vadd.f32 %v5829, %v5975
      %v5977 = vpop.f32.mrb[0].mxu0
      %5978 = vmatprep.mubr.bf16.mxu0 0
      %5979 = vmatmul.mubr.bf16.gmra.mrb[0].mxu0 %v5869
      %v5980 = vpop.f32.mrb[0].mxu0
      %v5981 = vadd.f32 %v5829, %v5980
      %v5982 = vpop.f32.mrb[0].mxu0
      %v5983 = vpop.f32.mrb[0].mxu0
      %v5984 = vadd.f32 %v5829, %v5983
      %v5985 = vpop.f32.mrb[0].mxu0
      %5986 = vmatprep.mubr.bf16.mxu0 0
      %5987 = vmatmul.mubr.bf16.gmra.mrb[0].mxu0 %v5872
      %v5988 = vpop.f32.mrb[0].mxu0
      %v5989 = vadd.f32 %v5829, %v5988
      %v5990 = vpop.f32.mrb[0].mxu0
      %v5991 = vpop.f32.mrb[0].mxu0
      %v5992 = vadd.f32 %v5829, %v5991
      %v5993 = vpop.f32.mrb[0].mxu0
      %5994 = vmatprep.mubr.bf16.mxu0 0
      %5995 = vmatmul.mubr.bf16.gmra.mrb[0].mxu0 %v5875
      %v5996 = vpop.f32.mrb[0].mxu0
      %v5997 = vadd.f32 %v5829, %v5996
      %v5998 = vpop.f32.mrb[0].mxu0
      %v5999 = vpop.f32.mrb[0].mxu0
      %v6000 = vadd.f32 %v5829, %v5999
      %v6001 = vpop.f32.mrb[0].mxu0
      %6002 = vmatprep.mubr.bf16.mxu0 0
      %6003 = vmatmul.mubr.bf16.gmra.mrb[0].mxu0 %v5878
      %v6004 = vpop.f32.mrb[0].mxu0
      %v6005 = vadd.f32 %v5829, %v6004
      %v6006 = vpop.f32.mrb[0].mxu0
      %v6007 = vpop.f32.mrb[0].mxu0
      %v6008 = vadd.f32 %v5829, %v6007
      %v6009 = vpop.f32.mrb[0].mxu0
      %6010 = vmatprep.mubr.bf16.mxu0 0
      %6011 = vmatmul.mubr.bf16.gmra.mrb[0].mxu0 %v5881
      %v6012 = vpop.f32.mrb[0].mxu0
      %v6013 = vadd.f32 %v5829, %v6012
      %v6014 = vpop.f32.mrb[0].mxu0
      %v6015 = vpop.f32.mrb[0].mxu0
      %v6016 = vadd.f32 %v5829, %v6015
      %v6017 = vpop.f32.mrb[0].mxu0
      %6018 = vmatprep.mubr.bf16.mxu0 0
      %6019 = vmatmul.mubr.bf16.gmra.mrb[0].mxu0 %v5884
      %v6020 = vpop.f32.mrb[0].mxu0
      %v6021 = vadd.f32 %v5829, %v6020
      %v6022 = vpop.f32.mrb[0].mxu0
      %v6023 = vpop.f32.mrb[0].mxu0
      %v6024 = vadd.f32 %v5829, %v6023
      %v6025 = vpop.f32.mrb[0].mxu0
      %6026 = vmatprep.mubr.bf16.mxu0 0
      %6027 = vmatmul.mubr.bf16.gmra.mrb[0].mxu0 %v5887
      %v6028 = vpop.f32.mrb[0].mxu0
      %v6029 = vadd.f32 %v5829, %v6028
      %v6030 = vpop.f32.mrb[0].mxu0
      %v6031 = vpop.f32.mrb[0].mxu0
      %v6032 = vadd.f32 %v5829, %v6031
      %v6033 = vpop.f32.mrb[0].mxu0
      %6034 = vmatprep.mubr.bf16.mxu0 0
      %6035 = vmatmul.mubr.bf16.gmra.mrb[0].mxu0 %v5890
      %v6036 = vpop.f32.mrb[0].mxu0
      %v6037 = vadd.f32 %v5829, %v6036
      %v6038 = vpop.f32.mrb[0].mxu0
      %v6039 = vpop.f32.mrb[0].mxu0
      %v6040 = vadd.f32 %v5829, %v6039
      %v6041 = vpop.f32.mrb[0].mxu0
      %6042 = vmatprep.mubr.bf16.mxu0 0
      %6043 = vmatmul.mubr.bf16.gmra.mrb[0].mxu0 %v5893
      %v6044 = vpop.f32.mrb[0].mxu0
      %v6045 = vadd.f32 %v5829, %v6044
      %v6046 = vpop.f32.mrb[0].mxu0
      %v6047 = vpop.f32.mrb[0].mxu0
      %v6048 = vadd.f32 %v5829, %v6047
      %v6049 = vpop.f32.mrb[0].mxu0
      %6050 = vmatprep.mubr.bf16.mxu0 0
      %6051 = vmatmul.mubr.bf16.gmra.mrb[0].mxu0 %v5896
      %v6052 = vpop.f32.mrb[0].mxu0
      %v6053 = vadd.f32 %v5829, %v6052
      %v6054 = vpop.f32.mrb[0].mxu0
      %v6055 = vpop.f32.mrb[0].mxu0
      %v6056 = vadd.f32 %v5829, %v6055
      %v6057 = vpop.f32.mrb[0].mxu0
      %6058 = vmatprep.mubr.bf16.mxu0 0
      %6059 = vmatmul.mubr.bf16.gmra.mrb[0].mxu0 %v5899
      %v6060 = vpop.f32.mrb[0].mxu0
      %v6061 = vadd.f32 %v5829, %v6060
      %v6062 = vpop.f32.mrb[0].mxu0
      %v6063 = vpop.f32.mrb[0].mxu0
      %v6064 = vadd.f32 %v5829, %v6063
      %v6065 = vpop.f32.mrb[0].mxu0
      %6066 = vdwg.mxu0
      %v6067 = vmax.f32 %v5941, 0.0
      %v6068 = vmax.f32 %v5944, 0.0
      %v6069 = vmax.f32 %v5949, 0.0
      %v6070 = vmax.f32 %v5952, 0.0
      %v6071 = vmax.f32 %v5957, 0.0
      %v6072 = vmax.f32 %v5960, 0.0
      %v6073 = vmax.f32 %v5965, 0.0
      %v6074 = vmax.f32 %v5968, 0.0
      %v6075 = vmax.f32 %v5973, 0.0
      %v6076 = vmax.f32 %v5976, 0.0
      %v6077 = vmax.f32 %v5981, 0.0
      %v6078 = vmax.f32 %v5984, 0.0
      %v6079 = vmax.f32 %v5989, 0.0
      %v6080 = vmax.f32 %v5992, 0.0
      %v6081 = vmax.f32 %v5997, 0.0
      %v6082 = vmax.f32 %v6000, 0.0
      %v6083 = vmax.f32 %v6005, 0.0
      %v6084 = vmax.f32 %v6008, 0.0
      %v6085 = vmax.f32 %v6013, 0.0
      %v6086 = vmax.f32 %v6016, 0.0
      %v6087 = vmax.f32 %v6021, 0.0
      %v6088 = vmax.f32 %v6024, 0.0
      %v6089 = vmax.f32 %v6029, 0.0
      %v6090 = vmax.f32 %v6032, 0.0
      %v6091 = vmax.f32 %v6037, 0.0
      %v6092 = vmax.f32 %v6040, 0.0
      %v6093 = vmax.f32 %v6045, 0.0
      %v6094 = vmax.f32 %v6048, 0.0
      %v6095 = vmax.f32 %v6053, 0.0
      %v6096 = vmax.f32 %v6056, 0.0
      %v6097 = vmax.f32 %v6061, 0.0
      %v6098 = vmax.f32 %v6064, 0.0
      %v6099 = vld [vmem:[%s11] sm:$0xf]
      %v6100 = vld [vmem:[%s11 + $0x4] sm:$0xf]
      %v6101 = vld [vmem:[%s11 + $0x8] sm:$0xf]
      %v6102 = vld [vmem:[%s11 + $0xc] sm:$0xf]
      %v6103 = vld [vmem:[%s11 + $0x10] sm:$0xf]
      %v6104 = vld [vmem:[%s11 + $0x14] sm:$0xf]
      %v6105 = vld [vmem:[%s11 + $0x18] sm:$0x1]
      %v6106 = vld [vmem:[%s12] sm:$0x1]
      %v6107 = vpack.c.bf16 %v6068, %v6067
      %v6108 = vpack.c.bf16 %v6070, %v6069
      %v6109 = vpack.c.bf16 %v6072, %v6071
      %v6110 = vpack.c.bf16 %v6074, %v6073
      %v6111 = vpack.c.bf16 %v6076, %v6075
      %v6112 = vpack.c.bf16 %v6078, %v6077
      %v6113 = vpack.c.bf16 %v6080, %v6079
      %v6114 = vpack.c.bf16 %v6082, %v6081
      %v6115 = vpack.c.bf16 %v6084, %v6083
      %v6116 = vpack.c.bf16 %v6086, %v6085
      %v6117 = vpack.c.bf16 %v6088, %v6087
      %v6118 = vpack.c.bf16 %v6090, %v6089
      %v6119 = vpack.c.bf16 %v6092, %v6091
      %v6120 = vpack.c.bf16 %v6094, %v6093
      %v6121 = vpack.c.bf16 %v6096, %v6095
      %v6122 = vpack.c.bf16 %v6098, %v6097
      %v6124 = vlaneseq
      %v6125 = vshrl.u32 %v6124, 7
      %v6126 = vsub.s32 0, %v6125
      %v6127 = vrot.slane %v6106, %v6126
      %v6136 = vunpack.c.l.b16 %v6099
      %v6137 = vunpack.c.l.b16 %v6100
      %v6138 = vunpack.c.l.b16 %v6101
      %v6139 = vunpack.c.l.b16 %v6102
      %v6140 = vunpack.c.l.b16 %v6103
      %v6141 = vunpack.c.l.b16 %v6104
      %v6142 = vunpack.c.l.b16 %v6105
      %v6143 = vpack.c.b16 %v6137, %v6136
      %v6144 = vpack.c.b16 %v6139, %v6138
      %v6145 = vpack.c.b16 %v6141, %v6140
      %v6146 = vpack.c.b16 %v6142, %v6142
      %v6151 = vsel %vm5852, %v6107, 0
      %v6154 = vsel %vm5852, %v6108, 0
      %v6157 = vsel %vm5852, %v6109, 0
      %v6160 = vsel %vm5852, %v6110, 0
      %v6163 = vsel %vm5852, %v6111, 0
      %v6166 = vsel %vm5852, %v6112, 0
      %v6169 = vsel %vm5852, %v6113, 0
      %v6172 = vsel %vm5852, %v6114, 0
      %v6175 = vsel %vm5852, %v6115, 0
      %v6178 = vsel %vm5852, %v6116, 0
      %v6181 = vsel %vm5852, %v6117, 0
      %v6184 = vsel %vm5852, %v6118, 0
      %v6187 = vsel %vm5852, %v6119, 0
      %v6190 = vsel %vm5852, %v6120, 0
      %v6193 = vsel %vm5852, %v6121, 0
      %v6196 = vsel %vm5852, %v6122, 0
      %v6199 = vand.u32 %v6146, %v5902
      %6201 = vmatprep.subr.bf16.mxu0 0
      %6202 = vmatpush1.bf16.msra.mxu0 %v6143
      %6203 = vmatprep.subr.bf16.mxu0 0
      %6204 = vmatpush1.bf16.msra.mxu0 %v6144
      %6205 = vmatprep.subr.bf16.mxu0 0
      %6206 = vmatpush1.bf16.msra.mxu0 %v6145
      %6207 = vmatprep.subr.bf16.mxu0 0
      %6208 = vmatpush1.bf16.msra.mxu0 %v6199
      %6209 = vmatprep.subr.bf16.mxu0 0
      %6210 = vmatpush1.bf16.msra.mxu0 0
      %6211 = vmatprep.subr.bf16.mxu0 0
      %6212 = vmatpush1.bf16.msra.mxu0 0
      %6213 = vmatprep.subr.bf16.mxu0 0
      %6214 = vmatpush1.bf16.msra.mxu0 0
      %6215 = vmatprep.subr.bf16.mxu0 0
      %6216 = vmatpush1.bf16.msra.mxu0 0
      %6217 = vmatprep.subr.bf16.mxu0 0
      %6218 = vmatpush1.bf16.msra.mxu0 0
      %6219 = vmatprep.subr.bf16.mxu0 0
      %6220 = vmatpush1.bf16.msra.mxu0 0
      %6221 = vmatprep.subr.bf16.mxu0 0
      %6222 = vmatpush1.bf16.msra.mxu0 0
      %6223 = vmatprep.subr.bf16.mxu0 0
      %6224 = vmatpush1.bf16.msra.mxu0 0
      %6225 = vmatprep.subr.bf16.mxu0 0
      %6226 = vmatpush1.bf16.msra.mxu0 0
      %6227 = vmatprep.subr.bf16.mxu0 0
      %6228 = vmatpush1.bf16.msra.mxu0 0
      %6229 = vmatprep.subr.bf16.mxu0 0
      %6230 = vmatpush1.bf16.msra.mxu0 0
      %6231 = vmatprep.subr.bf16.mxu0 0
      %6232 = vmatpush1.bf16.msra.mxu0 0
      %6233 = vmatprep.mubr.bf16.mxu0 0
      %6234 = vmatmul.mubr.bf16.gmra.mrb[0].mxu0 %v6151
      %v6235 = vpop.f32.mrb[0].mxu0
      %v6236 = vadd.f32 %v6127, %v6235
      %v6237 = vpop.f32.mrb[0].mxu0
      %v6238 = vpop.f32.mrb[0].mxu0
      %v6239 = vadd.f32 %v6127, %v6238
      %v6240 = vpop.f32.mrb[0].mxu0
      %6241 = vmatprep.mubr.bf16.mxu0 0
      %6242 = vmatmul.mubr.bf16.gmra.mrb[0].mxu0 %v6154
      %v6243 = vpop.f32.mrb[0].mxu0
      %v6244 = vadd.f32 %v6127, %v6243
      %v6245 = vpop.f32.mrb[0].mxu0
      %v6246 = vpop.f32.mrb[0].mxu0
      %v6247 = vadd.f32 %v6127, %v6246
      %v6248 = vpop.f32.mrb[0].mxu0
      %6249 = vmatprep.mubr.bf16.mxu0 0
      %6250 = vmatmul.mubr.bf16.gmra.mrb[0].mxu0 %v6157
      %v6251 = vpop.f32.mrb[0].mxu0
      %v6252 = vadd.f32 %v6127, %v6251
      %v6253 = vpop.f32.mrb[0].mxu0
      %v6254 = vpop.f32.mrb[0].mxu0
      %v6255 = vadd.f32 %v6127, %v6254
      %v6256 = vpop.f32.mrb[0].mxu0
      %6257 = vmatprep.mubr.bf16.mxu0 0
      %6258 = vmatmul.mubr.bf16.gmra.mrb[0].mxu0 %v6160
      %v6259 = vpop.f32.mrb[0].mxu0
      %v6260 = vadd.f32 %v6127, %v6259
      %v6261 = vpop.f32.mrb[0].mxu0
      %v6262 = vpop.f32.mrb[0].mxu0
      %v6263 = vadd.f32 %v6127, %v6262
      %v6264 = vpop.f32.mrb[0].mxu0
      %6265 = vmatprep.mubr.bf16.mxu0 0
      %6266 = vmatmul.mubr.bf16.gmra.mrb[0].mxu0 %v6163
      %v6267 = vpop.f32.mrb[0].mxu0
      %v6268 = vadd.f32 %v6127, %v6267
      %v6269 = vpop.f32.mrb[0].mxu0
      %v6270 = vpop.f32.mrb[0].mxu0
      %v6271 = vadd.f32 %v6127, %v6270
      %v6272 = vpop.f32.mrb[0].mxu0
      %6273 = vmatprep.mubr.bf16.mxu0 0
      %6274 = vmatmul.mubr.bf16.gmra.mrb[0].mxu0 %v6166
      %v6275 = vpop.f32.mrb[0].mxu0
      %v6276 = vadd.f32 %v6127, %v6275
      %v6277 = vpop.f32.mrb[0].mxu0
      %v6278 = vpop.f32.mrb[0].mxu0
      %v6279 = vadd.f32 %v6127, %v6278
      %v6280 = vpop.f32.mrb[0].mxu0
      %6281 = vmatprep.mubr.bf16.mxu0 0
      %6282 = vmatmul.mubr.bf16.gmra.mrb[0].mxu0 %v6169
      %v6283 = vpop.f32.mrb[0].mxu0
      %v6284 = vadd.f32 %v6127, %v6283
      %v6285 = vpop.f32.mrb[0].mxu0
      %v6286 = vpop.f32.mrb[0].mxu0
      %v6287 = vadd.f32 %v6127, %v6286
      %v6288 = vpop.f32.mrb[0].mxu0
      %6289 = vmatprep.mubr.bf16.mxu0 0
      %6290 = vmatmul.mubr.bf16.gmra.mrb[0].mxu0 %v6172
      %v6291 = vpop.f32.mrb[0].mxu0
      %v6292 = vadd.f32 %v6127, %v6291
      %v6293 = vpop.f32.mrb[0].mxu0
      %v6294 = vpop.f32.mrb[0].mxu0
      %v6295 = vadd.f32 %v6127, %v6294
      %v6296 = vpop.f32.mrb[0].mxu0
      %6297 = vmatprep.mubr.bf16.mxu0 0
      %6298 = vmatmul.mubr.bf16.gmra.mrb[0].mxu0 %v6175
      %v6299 = vpop.f32.mrb[0].mxu0
      %v6300 = vadd.f32 %v6127, %v6299
      %v6301 = vpop.f32.mrb[0].mxu0
      %v6302 = vpop.f32.mrb[0].mxu0
      %v6303 = vadd.f32 %v6127, %v6302
      %v6304 = vpop.f32.mrb[0].mxu0
      %6305 = vmatprep.mubr.bf16.mxu0 0
      %6306 = vmatmul.mubr.bf16.gmra.mrb[0].mxu0 %v6178
      %v6307 = vpop.f32.mrb[0].mxu0
      %v6308 = vadd.f32 %v6127, %v6307
      %v6309 = vpop.f32.mrb[0].mxu0
      %v6310 = vpop.f32.mrb[0].mxu0
      %v6311 = vadd.f32 %v6127, %v6310
      %v6312 = vpop.f32.mrb[0].mxu0
      %6313 = vmatprep.mubr.bf16.mxu0 0
      %6314 = vmatmul.mubr.bf16.gmra.mrb[0].mxu0 %v6181
      %v6315 = vpop.f32.mrb[0].mxu0
      %v6316 = vadd.f32 %v6127, %v6315
      %v6317 = vpop.f32.mrb[0].mxu0
      %v6318 = vpop.f32.mrb[0].mxu0
      %v6319 = vadd.f32 %v6127, %v6318
      %v6320 = vpop.f32.mrb[0].mxu0
      %6321 = vmatprep.mubr.bf16.mxu0 0
      %6322 = vmatmul.mubr.bf16.gmra.mrb[0].mxu0 %v6184
      %v6323 = vpop.f32.mrb[0].mxu0
      %v6324 = vadd.f32 %v6127, %v6323
      %v6325 = vpop.f32.mrb[0].mxu0
      %v6326 = vpop.f32.mrb[0].mxu0
      %v6327 = vadd.f32 %v6127, %v6326
      %v6328 = vpop.f32.mrb[0].mxu0
      %6329 = vmatprep.mubr.bf16.mxu0 0
      %6330 = vmatmul.mubr.bf16.gmra.mrb[0].mxu0 %v6187
      %v6331 = vpop.f32.mrb[0].mxu0
      %v6332 = vadd.f32 %v6127, %v6331
      %v6333 = vpop.f32.mrb[0].mxu0
      %v6334 = vpop.f32.mrb[0].mxu0
      %v6335 = vadd.f32 %v6127, %v6334
      %v6336 = vpop.f32.mrb[0].mxu0
      %6337 = vmatprep.mubr.bf16.mxu0 0
      %6338 = vmatmul.mubr.bf16.gmra.mrb[0].mxu0 %v6190
      %v6339 = vpop.f32.mrb[0].mxu0
      %v6340 = vadd.f32 %v6127, %v6339
      %v6341 = vpop.f32.mrb[0].mxu0
      %v6342 = vpop.f32.mrb[0].mxu0
      %v6343 = vadd.f32 %v6127, %v6342
      %v6344 = vpop.f32.mrb[0].mxu0
      %6345 = vmatprep.mubr.bf16.mxu0 0
      %6346 = vmatmul.mubr.bf16.gmra.mrb[0].mxu0 %v6193
      %v6347 = vpop.f32.mrb[0].mxu0
      %v6348 = vadd.f32 %v6127, %v6347
      %v6349 = vpop.f32.mrb[0].mxu0
      %v6350 = vpop.f32.mrb[0].mxu0
      %v6351 = vadd.f32 %v6127, %v6350
      %v6352 = vpop.f32.mrb[0].mxu0
      %6353 = vmatprep.mubr.bf16.mxu0 0
      %6354 = vmatmul.mubr.bf16.gmra.mrb[0].mxu0 %v6196
      %v6355 = vpop.f32.mrb[0].mxu0
      %v6356 = vadd.f32 %v6127, %v6355
      %v6357 = vpop.f32.mrb[0].mxu0
      %v6358 = vpop.f32.mrb[0].mxu0
      %v6359 = vadd.f32 %v6127, %v6358
      %v6360 = vpop.f32.mrb[0].mxu0
      %6361 = vdwg.mxu0
      %v6362 = vmax.f32 %v6236, 0.0
      %v6363 = vmax.f32 %v6239, 0.0
      %v6364 = vmax.f32 %v6244, 0.0
      %v6365 = vmax.f32 %v6247, 0.0
      %v6366 = vmax.f32 %v6252, 0.0
      %v6367 = vmax.f32 %v6255, 0.0
      %v6368 = vmax.f32 %v6260, 0.0
      %v6369 = vmax.f32 %v6263, 0.0
      %v6370 = vmax.f32 %v6268, 0.0
      %v6371 = vmax.f32 %v6271, 0.0
      %v6372 = vmax.f32 %v6276, 0.0
      %v6373 = vmax.f32 %v6279, 0.0
      %v6374 = vmax.f32 %v6284, 0.0
      %v6375 = vmax.f32 %v6287, 0.0
      %v6376 = vmax.f32 %v6292, 0.0
      %v6377 = vmax.f32 %v6295, 0.0
      %v6378 = vmax.f32 %v6300, 0.0
      %v6379 = vmax.f32 %v6303, 0.0
      %v6380 = vmax.f32 %v6308, 0.0
      %v6381 = vmax.f32 %v6311, 0.0
      %v6382 = vmax.f32 %v6316, 0.0
      %v6383 = vmax.f32 %v6319, 0.0
      %v6384 = vmax.f32 %v6324, 0.0
      %v6385 = vmax.f32 %v6327, 0.0
      %v6386 = vmax.f32 %v6332, 0.0
      %v6387 = vmax.f32 %v6335, 0.0
      %v6388 = vmax.f32 %v6340, 0.0
      %v6389 = vmax.f32 %v6343, 0.0
      %v6390 = vmax.f32 %v6348, 0.0
      %v6391 = vmax.f32 %v6351, 0.0
      %v6392 = vmax.f32 %v6356, 0.0
      %v6393 = vmax.f32 %v6359, 0.0
      %v6394 = vld [vmem:[%s13] sm:$0xff]
      %v6395 = vld [vmem:[%s13 + $0x8] sm:$0xff]
      %v6396 = vld [vmem:[%s13 + $0x10] sm:$0xff]
      %v6397 = vld [vmem:[%s13 + $0x18] sm:$0xff]
      %v6398 = vld [vmem:[%s13 + $0x20] sm:$0xff]
      %v6399 = vld [vmem:[%s13 + $0x28] sm:$0xff]
      %v6400 = vld [vmem:[%s13 + $0x30] sm:$0xff]
      %v6401 = vld [vmem:[%s13 + $0x38] sm:$0xff]
      %v6402 = vld [vmem:[%s13 + $0x40] sm:$0xff]
      %v6403 = vld [vmem:[%s13 + $0x48] sm:$0xff]
      %v6404 = vld [vmem:[%s13 + $0x50] sm:$0xff]
      %v6405 = vld [vmem:[%s13 + $0x58] sm:$0xff]
      %v6406 = vld [vmem:[%s13 + $0x60] sm:$0x11]
      %v6407 = vld [vmem:[%s14] sm:$0x3]
      %v6408 = vpack.c.bf16 %v6363, %v6362
      %v6409 = vpack.c.bf16 %v6365, %v6364
      %v6410 = vpack.c.bf16 %v6367, %v6366
      %v6411 = vpack.c.bf16 %v6369, %v6368
      %v6412 = vpack.c.bf16 %v6371, %v6370
      %v6413 = vpack.c.bf16 %v6373, %v6372
      %v6414 = vpack.c.bf16 %v6375, %v6374
      %v6415 = vpack.c.bf16 %v6377, %v6376
      %v6416 = vpack.c.bf16 %v6379, %v6378
      %v6417 = vpack.c.bf16 %v6381, %v6380
      %v6418 = vpack.c.bf16 %v6383, %v6382
      %v6419 = vpack.c.bf16 %v6385, %v6384
      %v6420 = vpack.c.bf16 %v6387, %v6386
      %v6421 = vpack.c.bf16 %v6389, %v6388
      %v6422 = vpack.c.bf16 %v6391, %v6390
      %v6423 = vpack.c.bf16 %v6393, %v6392
      %v6425 = vlaneseq
      %v6426 = vshrl.u32 %v6425, 7
      %v6427 = vsub.s32 0, %v6426
      %v6428 = vrot.slane %v6407, %v6427
      %v6429 = vlaneseq
      %v6430 = vshrl.u32 %v6429, 7
      %v6431 = vsub.s32 1, %v6430
      %v6432 = vrot.slane %v6407, %v6431
      %v6448 = vunpack.c.l.b16 %v6394
      %v6449 = vunpack.c.h.b16 %v6394
      %v6450 = vunpack.c.l.b16 %v6395
      %v6451 = vunpack.c.h.b16 %v6395
      %v6452 = vunpack.c.l.b16 %v6396
      %v6453 = vunpack.c.h.b16 %v6396
      %v6454 = vunpack.c.l.b16 %v6397
      %v6455 = vunpack.c.h.b16 %v6397
      %v6456 = vunpack.c.l.b16 %v6398
      %v6457 = vunpack.c.h.b16 %v6398
      %v6458 = vunpack.c.l.b16 %v6399
      %v6459 = vunpack.c.h.b16 %v6399
      %v6460 = vunpack.c.l.b16 %v6400
      %v6461 = vunpack.c.h.b16 %v6400
      %v6462 = vunpack.c.l.b16 %v6401
      %v6463 = vunpack.c.h.b16 %v6401
      %v6464 = vunpack.c.l.b16 %v6402
      %v6465 = vunpack.c.h.b16 %v6402
      %v6466 = vunpack.c.l.b16 %v6403
      %v6467 = vunpack.c.h.b16 %v6403
      %v6468 = vunpack.c.l.b16 %v6404
      %v6469 = vunpack.c.h.b16 %v6404
      %v6470 = vunpack.c.l.b16 %v6405
      %v6471 = vunpack.c.h.b16 %v6405
      %v6472 = vunpack.c.l.b16 %v6406
      %v6473 = vunpack.c.h.b16 %v6406
      %v6474 = vpack.c.b16 %v6450, %v6448
      %v6475 = vpack.c.b16 %v6451, %v6449
      %v6476 = vpack.c.b16 %v6454, %v6452
      %v6477 = vpack.c.b16 %v6455, %v6453
      %v6478 = vpack.c.b16 %v6458, %v6456
      %v6479 = vpack.c.b16 %v6459, %v6457
      %v6480 = vpack.c.b16 %v6462, %v6460
      %v6481 = vpack.c.b16 %v6463, %v6461
      %v6482 = vpack.c.b16 %v6466, %v6464
      %v6483 = vpack.c.b16 %v6467, %v6465
      %v6484 = vpack.c.b16 %v6470, %v6468
      %v6485 = vpack.c.b16 %v6471, %v6469
      %v6486 = vpack.c.b16 %v6472, %v6472
      %v6487 = vpack.c.b16 %v6473, %v6473
      %v6501 = vsel %vm5555, %v6408, 0
      %v6504 = vsel %vm5555, %v6409, 0
      %v6507 = vsel %vm5555, %v6410, 0
      %v6510 = vsel %vm5555, %v6411, 0
      %v6513 = vsel %vm5555, %v6412, 0
      %v6516 = vsel %vm5555, %v6413, 0
      %v6519 = vsel %vm5555, %v6414, 0
      %v6522 = vsel %vm5555, %v6415, 0
      %v6525 = vsel %vm5555, %v6416, 0
      %v6528 = vsel %vm5555, %v6417, 0
      %v6531 = vsel %vm5555, %v6418, 0
      %v6534 = vsel %vm5555, %v6419, 0
      %v6537 = vsel %vm5555, %v6420, 0
      %v6540 = vsel %vm5555, %v6421, 0
      %v6543 = vsel %vm5555, %v6422, 0
      %v6546 = vsel %vm5555, %v6423, 0
      %v6549 = vsel %vm5604, %v6486, 0
      %v6552 = vsel %vm5604, %v6487, 0
      %6554 = vmatprep.subr.bf16.mxu0 %v6475
      %6555 = vmatpush1.bf16.msra.mxu0 %v6474
      %6556 = vmatprep.subr.bf16.mxu0 %v6477
      %6557 = vmatpush1.bf16.msra.mxu0 %v6476
      %6558 = vmatprep.subr.bf16.mxu0 %v6479
      %6559 = vmatpush1.bf16.msra.mxu0 %v6478
      %6560 = vmatprep.subr.bf16.mxu0 %v6481
      %6561 = vmatpush1.bf16.msra.mxu0 %v6480
      %6562 = vmatprep.subr.bf16.mxu0 %v6483
      %6563 = vmatpush1.bf16.msra.mxu0 %v6482
      %6564 = vmatprep.subr.bf16.mxu0 %v6485
      %6565 = vmatpush1.bf16.msra.mxu0 %v6484
      %6566 = vmatprep.subr.bf16.mxu0 %v6552
      %6567 = vmatpush1.bf16.msra.mxu0 %v6549
      %6568 = vmatprep.subr.bf16.mxu0 0
      %6569 = vmatpush1.bf16.msra.mxu0 0
      %6570 = vmatprep.subr.bf16.mxu0 0
      %6571 = vmatpush1.bf16.msra.mxu0 0
      %6572 = vmatprep.subr.bf16.mxu0 0
      %6573 = vmatpush1.bf16.msra.mxu0 0
      %6574 = vmatprep.subr.bf16.mxu0 0
      %6575 = vmatpush1.bf16.msra.mxu0 0
      %6576 = vmatprep.subr.bf16.mxu0 0
      %6577 = vmatpush1.bf16.msra.mxu0 0
      %6578 = vmatprep.subr.bf16.mxu0 0
      %6579 = vmatpush1.bf16.msra.mxu0 0
      %6580 = vmatprep.subr.bf16.mxu0 0
      %6581 = vmatpush1.bf16.msra.mxu0 0
      %6582 = vmatprep.subr.bf16.mxu0 0
      %6583 = vmatpush1.bf16.msra.mxu0 0
      %6584 = vmatprep.subr.bf16.mxu0 0
      %6585 = vmatpush1.bf16.msra.mxu0 0
      %6586 = vmatprep.mubr.bf16.mxu0 0
      %6587 = vmatmul.mubr.bf16.gmra.mrb[0].mxu0 %v6501
      %v6588 = vpop.f32.mrb[0].mxu0
      %v6589 = vadd.f32 %v6428, %v6588
      %v6590 = vpop.f32.mrb[0].mxu0
      %v6591 = vadd.f32 %v6432, %v6590
      %v6592 = vpop.f32.mrb[0].mxu0
      %v6593 = vadd.f32 %v6428, %v6592
      %v6594 = vpop.f32.mrb[0].mxu0
      %v6595 = vadd.f32 %v6432, %v6594
      %6596 = vmatprep.mubr.bf16.mxu0 0
      %6597 = vmatmul.mubr.bf16.gmra.mrb[0].mxu0 %v6504
      %v6598 = vpop.f32.mrb[0].mxu0
      %v6599 = vadd.f32 %v6428, %v6598
      %v6600 = vpop.f32.mrb[0].mxu0
      %v6601 = vadd.f32 %v6432, %v6600
      %v6602 = vpop.f32.mrb[0].mxu0
      %v6603 = vadd.f32 %v6428, %v6602
      %v6604 = vpop.f32.mrb[0].mxu0
      %v6605 = vadd.f32 %v6432, %v6604
      %6606 = vmatprep.mubr.bf16.mxu0 0
      %6607 = vmatmul.mubr.bf16.gmra.mrb[0].mxu0 %v6507
      %v6608 = vpop.f32.mrb[0].mxu0
      %v6609 = vadd.f32 %v6428, %v6608
      %v6610 = vpop.f32.mrb[0].mxu0
      %v6611 = vadd.f32 %v6432, %v6610
      %v6612 = vpop.f32.mrb[0].mxu0
      %v6613 = vadd.f32 %v6428, %v6612
      %v6614 = vpop.f32.mrb[0].mxu0
      %v6615 = vadd.f32 %v6432, %v6614
      %6616 = vmatprep.mubr.bf16.mxu0 0
      %6617 = vmatmul.mubr.bf16.gmra.mrb[0].mxu0 %v6510
      %v6618 = vpop.f32.mrb[0].mxu0
      %v6619 = vadd.f32 %v6428, %v6618
      %v6620 = vpop.f32.mrb[0].mxu0
      %v6621 = vadd.f32 %v6432, %v6620
      %v6622 = vpop.f32.mrb[0].mxu0
      %v6623 = vadd.f32 %v6428, %v6622
      %v6624 = vpop.f32.mrb[0].mxu0
      %v6625 = vadd.f32 %v6432, %v6624
      %6626 = vmatprep.mubr.bf16.mxu0 0
      %6627 = vmatmul.mubr.bf16.gmra.mrb[0].mxu0 %v6513
      %v6628 = vpop.f32.mrb[0].mxu0
      %v6629 = vadd.f32 %v6428, %v6628
      %v6630 = vpop.f32.mrb[0].mxu0
      %v6631 = vadd.f32 %v6432, %v6630
      %v6632 = vpop.f32.mrb[0].mxu0
      %v6633 = vadd.f32 %v6428, %v6632
      %v6634 = vpop.f32.mrb[0].mxu0
      %v6635 = vadd.f32 %v6432, %v6634
      %6636 = vmatprep.mubr.bf16.mxu0 0
      %6637 = vmatmul.mubr.bf16.gmra.mrb[0].mxu0 %v6516
      %v6638 = vpop.f32.mrb[0].mxu0
      %v6639 = vadd.f32 %v6428, %v6638
      %v6640 = vpop.f32.mrb[0].mxu0
      %v6641 = vadd.f32 %v6432, %v6640
      %v6642 = vpop.f32.mrb[0].mxu0
      %v6643 = vadd.f32 %v6428, %v6642
      %v6644 = vpop.f32.mrb[0].mxu0
      %v6645 = vadd.f32 %v6432, %v6644
      %6646 = vmatprep.mubr.bf16.mxu0 0
      %6647 = vmatmul.mubr.bf16.gmra.mrb[0].mxu0 %v6519
      %v6648 = vpop.f32.mrb[0].mxu0
      %v6649 = vadd.f32 %v6428, %v6648
      %v6650 = vpop.f32.mrb[0].mxu0
      %v6651 = vadd.f32 %v6432, %v6650
      %v6652 = vpop.f32.mrb[0].mxu0
      %v6653 = vadd.f32 %v6428, %v6652
      %v6654 = vpop.f32.mrb[0].mxu0
      %v6655 = vadd.f32 %v6432, %v6654
      %6656 = vmatprep.mubr.bf16.mxu0 0
      %6657 = vmatmul.mubr.bf16.gmra.mrb[0].mxu0 %v6522
      %v6658 = vpop.f32.mrb[0].mxu0
      %v6659 = vadd.f32 %v6428, %v6658
      %v6660 = vpop.f32.mrb[0].mxu0
      %v6661 = vadd.f32 %v6432, %v6660
      %v6662 = vpop.f32.mrb[0].mxu0
      %v6663 = vadd.f32 %v6428, %v6662
      %v6664 = vpop.f32.mrb[0].mxu0
      %v6665 = vadd.f32 %v6432, %v6664
      %6666 = vmatprep.mubr.bf16.mxu0 0
      %6667 = vmatmul.mubr.bf16.gmra.mrb[0].mxu0 %v6525
      %v6668 = vpop.f32.mrb[0].mxu0
      %v6669 = vadd.f32 %v6428, %v6668
      %v6670 = vpop.f32.mrb[0].mxu0
      %v6671 = vadd.f32 %v6432, %v6670
      %v6672 = vpop.f32.mrb[0].mxu0
      %v6673 = vadd.f32 %v6428, %v6672
      %v6674 = vpop.f32.mrb[0].mxu0
      %v6675 = vadd.f32 %v6432, %v6674
      %6676 = vmatprep.mubr.bf16.mxu0 0
      %6677 = vmatmul.mubr.bf16.gmra.mrb[0].mxu0 %v6528
      %v6678 = vpop.f32.mrb[0].mxu0
      %v6679 = vadd.f32 %v6428, %v6678
      %v6680 = vpop.f32.mrb[0].mxu0
      %v6681 = vadd.f32 %v6432, %v6680
      %v6682 = vpop.f32.mrb[0].mxu0
      %v6683 = vadd.f32 %v6428, %v6682
      %v6684 = vpop.f32.mrb[0].mxu0
      %v6685 = vadd.f32 %v6432, %v6684
      %6686 = vmatprep.mubr.bf16.mxu0 0
      %6687 = vmatmul.mubr.bf16.gmra.mrb[0].mxu0 %v6531
      %v6688 = vpop.f32.mrb[0].mxu0
      %v6689 = vadd.f32 %v6428, %v6688
      %v6690 = vpop.f32.mrb[0].mxu0
      %v6691 = vadd.f32 %v6432, %v6690
      %v6692 = vpop.f32.mrb[0].mxu0
      %v6693 = vadd.f32 %v6428, %v6692
      %v6694 = vpop.f32.mrb[0].mxu0
      %v6695 = vadd.f32 %v6432, %v6694
      %6696 = vmatprep.mubr.bf16.mxu0 0
      %6697 = vmatmul.mubr.bf16.gmra.mrb[0].mxu0 %v6534
      %v6698 = vpop.f32.mrb[0].mxu0
      %v6699 = vadd.f32 %v6428, %v6698
      %v6700 = vpop.f32.mrb[0].mxu0
      %v6701 = vadd.f32 %v6432, %v6700
      %v6702 = vpop.f32.mrb[0].mxu0
      %v6703 = vadd.f32 %v6428, %v6702
      %v6704 = vpop.f32.mrb[0].mxu0
      %v6705 = vadd.f32 %v6432, %v6704
      %6706 = vmatprep.mubr.bf16.mxu0 0
      %6707 = vmatmul.mubr.bf16.gmra.mrb[0].mxu0 %v6537
      %v6708 = vpop.f32.mrb[0].mxu0
      %v6709 = vadd.f32 %v6428, %v6708
      %v6710 = vpop.f32.mrb[0].mxu0
      %v6711 = vadd.f32 %v6432, %v6710
      %v6712 = vpop.f32.mrb[0].mxu0
      %v6713 = vadd.f32 %v6428, %v6712
      %v6714 = vpop.f32.mrb[0].mxu0
      %v6715 = vadd.f32 %v6432, %v6714
      %6716 = vmatprep.mubr.bf16.mxu0 0
      %6717 = vmatmul.mubr.bf16.gmra.mrb[0].mxu0 %v6540
      %v6718 = vpop.f32.mrb[0].mxu0
      %v6719 = vadd.f32 %v6428, %v6718
      %v6720 = vpop.f32.mrb[0].mxu0
      %v6721 = vadd.f32 %v6432, %v6720
      %v6722 = vpop.f32.mrb[0].mxu0
      %v6723 = vadd.f32 %v6428, %v6722
      %v6724 = vpop.f32.mrb[0].mxu0
      %v6725 = vadd.f32 %v6432, %v6724
      %6726 = vmatprep.mubr.bf16.mxu0 0
      %6727 = vmatmul.mubr.bf16.gmra.mrb[0].mxu0 %v6543
      %v6728 = vpop.f32.mrb[0].mxu0
      %v6729 = vadd.f32 %v6428, %v6728
      %v6730 = vpop.f32.mrb[0].mxu0
      %v6731 = vadd.f32 %v6432, %v6730
      %v6732 = vpop.f32.mrb[0].mxu0
      %v6733 = vadd.f32 %v6428, %v6732
      %v6734 = vpop.f32.mrb[0].mxu0
      %v6735 = vadd.f32 %v6432, %v6734
      %6736 = vmatprep.mubr.bf16.mxu0 0
      %6737 = vmatmul.mubr.bf16.gmra.mrb[0].mxu0 %v6546
      %v6738 = vpop.f32.mrb[0].mxu0
      %v6739 = vadd.f32 %v6428, %v6738
      %v6740 = vpop.f32.mrb[0].mxu0
      %v6741 = vadd.f32 %v6432, %v6740
      %v6742 = vpop.f32.mrb[0].mxu0
      %v6743 = vadd.f32 %v6428, %v6742
      %v6744 = vpop.f32.mrb[0].mxu0
      %v6745 = vadd.f32 %v6432, %v6744
      %6746 = vdwg.mxu0
      %v6747 = vmax.f32 %v6589, 0.0
      %v6748 = vmax.f32 %v6591, 0.0
      %v6749 = vmax.f32 %v6593, 0.0
      %v6750 = vmax.f32 %v6595, 0.0
      %v6751 = vmax.f32 %v6599, 0.0
      %v6752 = vmax.f32 %v6601, 0.0
      %v6753 = vmax.f32 %v6603, 0.0
      %v6754 = vmax.f32 %v6605, 0.0
      %v6755 = vmax.f32 %v6609, 0.0
      %v6756 = vmax.f32 %v6611, 0.0
      %v6757 = vmax.f32 %v6613, 0.0
      %v6758 = vmax.f32 %v6615, 0.0
      %v6759 = vmax.f32 %v6619, 0.0
      %v6760 = vmax.f32 %v6621, 0.0
      %v6761 = vmax.f32 %v6623, 0.0
      %v6762 = vmax.f32 %v6625, 0.0
      %v6763 = vmax.f32 %v6629, 0.0
      %v6764 = vmax.f32 %v6631, 0.0
      %v6765 = vmax.f32 %v6633, 0.0
      %v6766 = vmax.f32 %v6635, 0.0
      %v6767 = vmax.f32 %v6639, 0.0
      %v6768 = vmax.f32 %v6641, 0.0
      %v6769 = vmax.f32 %v6643, 0.0
      %v6770 = vmax.f32 %v6645, 0.0
      %v6771 = vmax.f32 %v6649, 0.0
      %v6772 = vmax.f32 %v6651, 0.0
      %v6773 = vmax.f32 %v6653, 0.0
      %v6774 = vmax.f32 %v6655, 0.0
      %v6775 = vmax.f32 %v6659, 0.0
      %v6776 = vmax.f32 %v6661, 0.0
      %v6777 = vmax.f32 %v6663, 0.0
      %v6778 = vmax.f32 %v6665, 0.0
      %v6779 = vmax.f32 %v6669, 0.0
      %v6780 = vmax.f32 %v6671, 0.0
      %v6781 = vmax.f32 %v6673, 0.0
      %v6782 = vmax.f32 %v6675, 0.0
      %v6783 = vmax.f32 %v6679, 0.0
      %v6784 = vmax.f32 %v6681, 0.0
      %v6785 = vmax.f32 %v6683, 0.0
      %v6786 = vmax.f32 %v6685, 0.0
      %v6787 = vmax.f32 %v6689, 0.0
      %v6788 = vmax.f32 %v6691, 0.0
      %v6789 = vmax.f32 %v6693, 0.0
      %v6790 = vmax.f32 %v6695, 0.0
      %v6791 = vmax.f32 %v6699, 0.0
      %v6792 = vmax.f32 %v6701, 0.0
      %v6793 = vmax.f32 %v6703, 0.0
      %v6794 = vmax.f32 %v6705, 0.0
      %v6795 = vmax.f32 %v6709, 0.0
      %v6796 = vmax.f32 %v6711, 0.0
      %v6797 = vmax.f32 %v6713, 0.0
      %v6798 = vmax.f32 %v6715, 0.0
      %v6799 = vmax.f32 %v6719, 0.0
      %v6800 = vmax.f32 %v6721, 0.0
      %v6801 = vmax.f32 %v6723, 0.0
      %v6802 = vmax.f32 %v6725, 0.0
      %v6803 = vmax.f32 %v6729, 0.0
      %v6804 = vmax.f32 %v6731, 0.0
      %v6805 = vmax.f32 %v6733, 0.0
      %v6806 = vmax.f32 %v6735, 0.0
      %v6807 = vmax.f32 %v6739, 0.0
      %v6808 = vmax.f32 %v6741, 0.0
      %v6809 = vmax.f32 %v6743, 0.0
      %v6810 = vmax.f32 %v6745, 0.0
      %v6811 = vld [vmem:[%s15] sm:$0xff]
      %v6812 = vld [vmem:[%s15 + $0x8] sm:$0xff]
      %v6813 = vld [vmem:[%s15 + $0x10] sm:$0xff]
      %v6814 = vld [vmem:[%s15 + $0x18] sm:$0xff]
      %v6815 = vld [vmem:[%s15 + $0x20] sm:$0xff]
      %v6816 = vld [vmem:[%s15 + $0x28] sm:$0xff]
      %v6817 = vld [vmem:[%s15 + $0x30] sm:$0xff]
      %v6818 = vld [vmem:[%s15 + $0x38] sm:$0xff]
      %v6819 = vld [vmem:[%s15 + $0x40] sm:$0xff]
      %v6820 = vld [vmem:[%s15 + $0x48] sm:$0xff]
      %v6821 = vld [vmem:[%s15 + $0x50] sm:$0xff]
      %v6822 = vld [vmem:[%s15 + $0x58] sm:$0xff]
      %v6823 = vld [vmem:[%s15 + $0x60] sm:$0xff]
      %v6824 = vld [vmem:[%s15 + $0x68] sm:$0xff]
      %v6825 = vld [vmem:[%s15 + $0x70] sm:$0xff]
      %v6826 = vld [vmem:[%s15 + $0x78] sm:$0xff]
      %v6827 = vld [vmem:[%s15 + $0x80] sm:$0xff]
      %v6828 = vld [vmem:[%s15 + $0x88] sm:$0xff]
      %v6829 = vld [vmem:[%s15 + $0x90] sm:$0xff]
      %v6830 = vld [vmem:[%s15 + $0x98] sm:$0xff]
      %v6831 = vld [vmem:[%s15 + $0xa0] sm:$0xff]
      %v6832 = vld [vmem:[%s15 + $0xa8] sm:$0xff]
      %v6833 = vld [vmem:[%s15 + $0xb0] sm:$0xff]
      %v6834 = vld [vmem:[%s15 + $0xb8] sm:$0xff]
      %v6835 = vld [vmem:[%s15 + $0xc0] sm:$0xff]
      %v6836 = vld [vmem:[%s15 + $0xc8] sm:$0xff]
      %v6837 = vld [vmem:[%s15 + $0xd0] sm:$0xff]
      %v6838 = vld [vmem:[%s15 + $0xd8] sm:$0xff]
      %v6839 = vld [vmem:[%s15 + $0xe0] sm:$0xff]
      %v6840 = vld [vmem:[%s15 + $0xe8] sm:$0xff]
      %v6841 = vld [vmem:[%s15 + $0xf0] sm:$0xff]
      %v6842 = vld [vmem:[%s15 + $0xf8] sm:$0xff]
      %v6843 = vld [vmem:[%s15 + $0x100] sm:$0xff]
      %v6844 = vld [vmem:[%s15 + $0x108] sm:$0xff]
      %v6845 = vld [vmem:[%s15 + $0x110] sm:$0xff]
      %v6846 = vld [vmem:[%s15 + $0x118] sm:$0xff]
      %v6847 = vld [vmem:[%s15 + $0x120] sm:$0xff]
      %v6848 = vld [vmem:[%s15 + $0x128] sm:$0xff]
      %v6849 = vld [vmem:[%s15 + $0x130] sm:$0xff]
      %v6850 = vld [vmem:[%s15 + $0x138] sm:$0xff]
      %v6851 = vld [vmem:[%s15 + $0x140] sm:$0xff]
      %v6852 = vld [vmem:[%s15 + $0x148] sm:$0xff]
      %v6853 = vld [vmem:[%s15 + $0x150] sm:$0xff]
      %v6854 = vld [vmem:[%s15 + $0x158] sm:$0xff]
      %v6855 = vld [vmem:[%s15 + $0x160] sm:$0xff]
      %v6856 = vld [vmem:[%s15 + $0x168] sm:$0xff]
      %v6857 = vld [vmem:[%s15 + $0x170] sm:$0xff]
      %v6858 = vld [vmem:[%s15 + $0x178] sm:$0xff]
      %v6859 = vld [vmem:[%s15 + $0x180] sm:$0x33]
      %v6860 = vld [vmem:[%s15 + $0x188] sm:$0x33]
      %v6861 = vld [vmem:[%s16] sm:$0xf]
      %v6862 = vpack.c.bf16 %v6749, %v6747
      %v6863 = vpack.c.bf16 %v6750, %v6748
      %v6864 = vpack.c.bf16 %v6753, %v6751
      %v6865 = vpack.c.bf16 %v6754, %v6752
      %v6866 = vpack.c.bf16 %v6757, %v6755
      %v6867 = vpack.c.bf16 %v6758, %v6756
      %v6868 = vpack.c.bf16 %v6761, %v6759
      %v6869 = vpack.c.bf16 %v6762, %v6760
      %v6870 = vpack.c.bf16 %v6765, %v6763
      %v6871 = vpack.c.bf16 %v6766, %v6764
      %v6872 = vpack.c.bf16 %v6769, %v6767
      %v6873 = vpack.c.bf16 %v6770, %v6768
      %v6874 = vpack.c.bf16 %v6773, %v6771
      %v6875 = vpack.c.bf16 %v6774, %v6772
      %v6876 = vpack.c.bf16 %v6777, %v6775
      %v6877 = vpack.c.bf16 %v6778, %v6776
      %v6878 = vpack.c.bf16 %v6781, %v6779
      %v6879 = vpack.c.bf16 %v6782, %v6780
      %v6880 = vpack.c.bf16 %v6785, %v6783
      %v6881 = vpack.c.bf16 %v6786, %v6784
      %v6882 = vpack.c.bf16 %v6789, %v6787
      %v6883 = vpack.c.bf16 %v6790, %v6788
      %v6884 = vpack.c.bf16 %v6793, %v6791
      %v6885 = vpack.c.bf16 %v6794, %v6792
      %v6886 = vpack.c.bf16 %v6797, %v6795
      %v6887 = vpack.c.bf16 %v6798, %v6796
      %v6888 = vpack.c.bf16 %v6801, %v6799
      %v6889 = vpack.c.bf16 %v6802, %v6800
      %v6890 = vpack.c.bf16 %v6805, %v6803
      %v6891 = vpack.c.bf16 %v6806, %v6804
      %v6892 = vpack.c.bf16 %v6809, %v6807
      %v6893 = vpack.c.bf16 %v6810, %v6808
      %v6895 = vlaneseq
      %v6896 = vshrl.u32 %v6895, 7
      %v6897 = vsub.s32 0, %v6896
      %v6898 = vrot.slane %v6861, %v6897
      %v6899 = vlaneseq
      %v6900 = vshrl.u32 %v6899, 7
      %v6901 = vsub.s32 1, %v6900
      %v6902 = vrot.slane %v6861, %v6901
      %v6903 = vlaneseq
      %v6904 = vshrl.u32 %v6903, 7
      %v6905 = vsub.s32 2, %v6904
      %v6906 = vrot.slane %v6861, %v6905
      %v6907 = vlaneseq
      %v6908 = vshrl.u32 %v6907, 7
      %v6909 = vsub.s32 3, %v6908
      %v6910 = vrot.slane %v6861, %v6909
      %v6965 = vunpack.c.l.b16 %v6811
      %v6966 = vunpack.c.h.b16 %v6811
      %v6967 = vunpack.c.l.b16 %v6812
      %v6968 = vunpack.c.h.b16 %v6812
      %v6969 = vunpack.c.l.b16 %v6813
      %v6970 = vunpack.c.h.b16 %v6813
      %v6971 = vunpack.c.l.b16 %v6814
      %v6972 = vunpack.c.h.b16 %v6814
      %v6973 = vunpack.c.l.b16 %v6815
      %v6974 = vunpack.c.h.b16 %v6815
      %v6975 = vunpack.c.l.b16 %v6816
      %v6976 = vunpack.c.h.b16 %v6816
      %v6977 = vunpack.c.l.b16 %v6817
      %v6978 = vunpack.c.h.b16 %v6817
      %v6979 = vunpack.c.l.b16 %v6818
      %v6980 = vunpack.c.h.b16 %v6818
      %v6981 = vunpack.c.l.b16 %v6819
      %v6982 = vunpack.c.h.b16 %v6819
      %v6983 = vunpack.c.l.b16 %v6820
      %v6984 = vunpack.c.h.b16 %v6820
      %v6985 = vunpack.c.l.b16 %v6821
      %v6986 = vunpack.c.h.b16 %v6821
      %v6987 = vunpack.c.l.b16 %v6822
      %v6988 = vunpack.c.h.b16 %v6822
      %v6989 = vunpack.c.l.b16 %v6823
      %v6990 = vunpack.c.h.b16 %v6823
      %v6991 = vunpack.c.l.b16 %v6824
      %v6992 = vunpack.c.h.b16 %v6824
      %v6993 = vunpack.c.l.b16 %v6825
      %v6994 = vunpack.c.h.b16 %v6825
      %v6995 = vunpack.c.l.b16 %v6826
      %v6996 = vunpack.c.h.b16 %v6826
      %v6997 = vunpack.c.l.b16 %v6827
      %v6998 = vunpack.c.h.b16 %v6827
      %v6999 = vunpack.c.l.b16 %v6828
      %v7000 = vunpack.c.h.b16 %v6828
      %v7001 = vunpack.c.l.b16 %v6829
      %v7002 = vunpack.c.h.b16 %v6829
      %v7003 = vunpack.c.l.b16 %v6830
      %v7004 = vunpack.c.h.b16 %v6830
      %v7005 = vunpack.c.l.b16 %v6831
      %v7006 = vunpack.c.h.b16 %v6831
      %v7007 = vunpack.c.l.b16 %v6832
      %v7008 = vunpack.c.h.b16 %v6832
      %v7009 = vunpack.c.l.b16 %v6833
      %v7010 = vunpack.c.h.b16 %v6833
      %v7011 = vunpack.c.l.b16 %v6834
      %v7012 = vunpack.c.h.b16 %v6834
      %v7013 = vunpack.c.l.b16 %v6835
      %v7014 = vunpack.c.h.b16 %v6835
      %v7015 = vunpack.c.l.b16 %v6836
      %v7016 = vunpack.c.h.b16 %v6836
      %v7017 = vunpack.c.l.b16 %v6837
      %v7018 = vunpack.c.h.b16 %v6837
      %v7019 = vunpack.c.l.b16 %v6838
      %v7020 = vunpack.c.h.b16 %v6838
      %v7021 = vunpack.c.l.b16 %v6839
      %v7022 = vunpack.c.h.b16 %v6839
      %v7023 = vunpack.c.l.b16 %v6840
      %v7024 = vunpack.c.h.b16 %v6840
      %v7025 = vunpack.c.l.b16 %v6841
      %v7026 = vunpack.c.h.b16 %v6841
      %v7027 = vunpack.c.l.b16 %v6842
      %v7028 = vunpack.c.h.b16 %v6842
      %v7029 = vunpack.c.l.b16 %v6843
      %v7030 = vunpack.c.h.b16 %v6843
      %v7031 = vunpack.c.l.b16 %v6844
      %v7032 = vunpack.c.h.b16 %v6844
      %v7033 = vunpack.c.l.b16 %v6845
      %v7034 = vunpack.c.h.b16 %v6845
      %v7035 = vunpack.c.l.b16 %v6846
      %v7036 = vunpack.c.h.b16 %v6846
      %v7037 = vunpack.c.l.b16 %v6847
      %v7038 = vunpack.c.h.b16 %v6847
      %v7039 = vunpack.c.l.b16 %v6848
      %v7040 = vunpack.c.h.b16 %v6848
      %v7041 = vunpack.c.l.b16 %v6849
      %v7042 = vunpack.c.h.b16 %v6849
      %v7043 = vunpack.c.l.b16 %v6850
      %v7044 = vunpack.c.h.b16 %v6850
      %v7045 = vunpack.c.l.b16 %v6851
      %v7046 = vunpack.c.h.b16 %v6851
      %v7047 = vunpack.c.l.b16 %v6852
      %v7048 = vunpack.c.h.b16 %v6852
      %v7049 = vunpack.c.l.b16 %v6853
      %v7050 = vunpack.c.h.b16 %v6853
      %v7051 = vunpack.c.l.b16 %v6854
      %v7052 = vunpack.c.h.b16 %v6854
      %v7053 = vunpack.c.l.b16 %v6855
      %v7054 = vunpack.c.h.b16 %v6855
      %v7055 = vunpack.c.l.b16 %v6856
      %v7056 = vunpack.c.h.b16 %v6856
      %v7057 = vunpack.c.l.b16 %v6857
      %v7058 = vunpack.c.h.b16 %v6857
      %v7059 = vunpack.c.l.b16 %v6858
      %v7060 = vunpack.c.h.b16 %v6858
      %v7061 = vunpack.c.l.b16 %v6859
      %v7062 = vunpack.c.h.b16 %v6859
      %v7063 = vunpack.c.l.b16 %v6860
      %v7064 = vunpack.c.h.b16 %v6860
      %v7065 = vpack.c.b16 %v6969, %v6965
      %v7066 = vpack.c.b16 %v6970, %v6966
      %v7067 = vpack.c.b16 %v6971, %v6967
      %v7068 = vpack.c.b16 %v6972, %v6968
      %v7069 = vpack.c.b16 %v6977, %v6973
      %v7070 = vpack.c.b16 %v6978, %v6974
      %v7071 = vpack.c.b16 %v6979, %v6975
      %v7072 = vpack.c.b16 %v6980, %v6976
      %v7073 = vpack.c.b16 %v6985, %v6981
      %v7074 = vpack.c.b16 %v6986, %v6982
      %v7075 = vpack.c.b16 %v6987, %v6983
      %v7076 = vpack.c.b16 %v6988, %v6984
      %v7077 = vpack.c.b16 %v6993, %v6989
      %v7078 = vpack.c.b16 %v6994, %v6990
      %v7079 = vpack.c.b16 %v6995, %v6991
      %v7080 = vpack.c.b16 %v6996, %v6992
      %v7081 = vpack.c.b16 %v7001, %v6997
      %v7082 = vpack.c.b16 %v7002, %v6998
      %v7083 = vpack.c.b16 %v7003, %v6999
      %v7084 = vpack.c.b16 %v7004, %v7000
      %v7085 = vpack.c.b16 %v7009, %v7005
      %v7086 = vpack.c.b16 %v7010, %v7006
      %v7087 = vpack.c.b16 %v7011, %v7007
      %v7088 = vpack.c.b16 %v7012, %v7008
      %v7089 = vpack.c.b16 %v7017, %v7013
      %v7090 = vpack.c.b16 %v7018, %v7014
      %v7091 = vpack.c.b16 %v7019, %v7015
      %v7092 = vpack.c.b16 %v7020, %v7016
      %v7093 = vpack.c.b16 %v7025, %v7021
      %v7094 = vpack.c.b16 %v7026, %v7022
      %v7095 = vpack.c.b16 %v7027, %v7023
      %v7096 = vpack.c.b16 %v7028, %v7024
      %v7097 = vpack.c.b16 %v7033, %v7029
      %v7098 = vpack.c.b16 %v7034, %v7030
      %v7099 = vpack.c.b16 %v7035, %v7031
      %v7100 = vpack.c.b16 %v7036, %v7032
      %v7101 = vpack.c.b16 %v7041, %v7037
      %v7102 = vpack.c.b16 %v7042, %v7038
      %v7103 = vpack.c.b16 %v7043, %v7039
      %v7104 = vpack.c.b16 %v7044, %v7040
      %v7105 = vpack.c.b16 %v7049, %v7045
      %v7106 = vpack.c.b16 %v7050, %v7046
      %v7107 = vpack.c.b16 %v7051, %v7047
      %v7108 = vpack.c.b16 %v7052, %v7048
      %v7109 = vpack.c.b16 %v7057, %v7053
      %v7110 = vpack.c.b16 %v7058, %v7054
      %v7111 = vpack.c.b16 %v7059, %v7055
      %v7112 = vpack.c.b16 %v7060, %v7056
      %v7113 = vpack.c.b16 %v7061, %v7061
      %v7114 = vpack.c.b16 %v7062, %v7062
      %v7115 = vpack.c.b16 %v7063, %v7063
      %v7116 = vpack.c.b16 %v7064, %v7064
      %v7166 = vsel %vm5234, %v6863, 0
      %v7169 = vsel %vm5234, %v6865, 0
      %v7172 = vsel %vm5234, %v6867, 0
      %v7175 = vsel %vm5234, %v6869, 0
      %v7178 = vsel %vm5234, %v6871, 0
      %v7181 = vsel %vm5234, %v6873, 0
      %v7184 = vsel %vm5234, %v6875, 0
      %v7187 = vsel %vm5234, %v6877, 0
      %v7190 = vsel %vm5234, %v6879, 0
      %v7193 = vsel %vm5234, %v6881, 0
      %v7196 = vsel %vm5234, %v6883, 0
      %v7199 = vsel %vm5234, %v6885, 0
      %v7202 = vsel %vm5234, %v6887, 0
      %v7205 = vsel %vm5234, %v6889, 0
      %v7208 = vsel %vm5234, %v6891, 0
      %v7211 = vsel %vm5234, %v6893, 0
      %v7214 = vsel %vm5283, %v7113, 0
      %v7217 = vsel %vm5283, %v7114, 0
      %v7220 = vsel %vm5283, %v7115, 0
      %v7223 = vsel %vm5283, %v7116, 0
      %7225 = vmatprep.subr.bf16.mxu0 %v7066
      %7226 = vmatpush1.bf16.msra.mxu0 %v7065
      %7227 = vmatprep.subr.bf16.mxu0 %v7070
      %7228 = vmatpush1.bf16.msra.mxu0 %v7069
      %7229 = vmatprep.subr.bf16.mxu0 %v7074
      %7230 = vmatpush1.bf16.msra.mxu0 %v7073
      %7231 = vmatprep.subr.bf16.mxu0 %v7078
      %7232 = vmatpush1.bf16.msra.mxu0 %v7077
      %7233 = vmatprep.subr.bf16.mxu0 %v7082
      %7234 = vmatpush1.bf16.msra.mxu0 %v7081
      %7235 = vmatprep.subr.bf16.mxu0 %v7086
      %7236 = vmatpush1.bf16.msra.mxu0 %v7085
      %7237 = vmatprep.subr.bf16.mxu0 %v7090
      %7238 = vmatpush1.bf16.msra.mxu0 %v7089
      %7239 = vmatprep.subr.bf16.mxu0 %v7094
      %7240 = vmatpush1.bf16.msra.mxu0 %v7093
      %7241 = vmatprep.subr.bf16.mxu0 %v7098
      %7242 = vmatpush1.bf16.msra.mxu0 %v7097
      %7243 = vmatprep.subr.bf16.mxu0 %v7102
      %7244 = vmatpush1.bf16.msra.mxu0 %v7101
      %7245 = vmatprep.subr.bf16.mxu0 %v7106
      %7246 = vmatpush1.bf16.msra.mxu0 %v7105
      %7247 = vmatprep.subr.bf16.mxu0 %v7110
      %7248 = vmatpush1.bf16.msra.mxu0 %v7109
      %7249 = vmatprep.subr.bf16.mxu0 %v7217
      %7250 = vmatpush1.bf16.msra.mxu0 %v7214
      %7251 = vmatprep.subr.bf16.mxu0 0
      %7252 = vmatpush1.bf16.msra.mxu0 0
      %7253 = vmatprep.subr.bf16.mxu0 0
      %7254 = vmatpush1.bf16.msra.mxu0 0
      %7255 = vmatprep.subr.bf16.mxu0 0
      %7256 = vmatpush1.bf16.msra.mxu0 0
      %7257 = vmatprep.mubr.bf16.mxu0 %v7166
      %7258 = vmatmul.mubr.bf16.gmra.mrb[0].mxu0 %v6862
      %v7259 = vpop.f32.mrb[0].mxu0
      %v7260 = vadd.f32 %v6898, %v7259
      %v7261 = vpop.f32.mrb[0].mxu0
      %v7262 = vadd.f32 %v6902, %v7261
      %v7263 = vpop.f32.mrb[0].mxu0
      %v7264 = vadd.f32 %v6898, %v7263
      %v7265 = vpop.f32.mrb[0].mxu0
      %v7266 = vadd.f32 %v6902, %v7265
      %7267 = vmatprep.mubr.bf16.mxu0 %v7169
      %7268 = vmatmul.mubr.bf16.gmra.mrb[0].mxu0 %v6864
      %v7269 = vpop.f32.mrb[0].mxu0
      %v7270 = vadd.f32 %v6898, %v7269
      %v7271 = vpop.f32.mrb[0].mxu0
      %v7272 = vadd.f32 %v6902, %v7271
      %v7273 = vpop.f32.mrb[0].mxu0
      %v7274 = vadd.f32 %v6898, %v7273
      %v7275 = vpop.f32.mrb[0].mxu0
      %v7276 = vadd.f32 %v6902, %v7275
      %7277 = vmatprep.mubr.bf16.mxu0 %v7172
      %7278 = vmatmul.mubr.bf16.gmra.mrb[0].mxu0 %v6866
      %v7279 = vpop.f32.mrb[0].mxu0
      %v7280 = vadd.f32 %v6898, %v7279
      %v7281 = vpop.f32.mrb[0].mxu0
      %v7282 = vadd.f32 %v6902, %v7281
      %v7283 = vpop.f32.mrb[0].mxu0
      %v7284 = vadd.f32 %v6898, %v7283
      %v7285 = vpop.f32.mrb[0].mxu0
      %v7286 = vadd.f32 %v6902, %v7285
      %7287 = vmatprep.mubr.bf16.mxu0 %v7175
      %7288 = vmatmul.mubr.bf16.gmra.mrb[0].mxu0 %v6868
      %v7289 = vpop.f32.mrb[0].mxu0
      %v7290 = vadd.f32 %v6898, %v7289
      %v7291 = vpop.f32.mrb[0].mxu0
      %v7292 = vadd.f32 %v6902, %v7291
      %v7293 = vpop.f32.mrb[0].mxu0
      %v7294 = vadd.f32 %v6898, %v7293
      %v7295 = vpop.f32.mrb[0].mxu0
      %v7296 = vadd.f32 %v6902, %v7295
      %7297 = vmatprep.mubr.bf16.mxu0 %v7178
      %7298 = vmatmul.mubr.bf16.gmra.mrb[0].mxu0 %v6870
      %v7299 = vpop.f32.mrb[0].mxu0
      %v7300 = vadd.f32 %v6898, %v7299
      %v7301 = vpop.f32.mrb[0].mxu0
      %v7302 = vadd.f32 %v6902, %v7301
      %v7303 = vpop.f32.mrb[0].mxu0
      %v7304 = vadd.f32 %v6898, %v7303
      %v7305 = vpop.f32.mrb[0].mxu0
      %v7306 = vadd.f32 %v6902, %v7305
      %7307 = vmatprep.mubr.bf16.mxu0 %v7181
      %7308 = vmatmul.mubr.bf16.gmra.mrb[0].mxu0 %v6872
      %v7309 = vpop.f32.mrb[0].mxu0
      %v7310 = vadd.f32 %v6898, %v7309
      %v7311 = vpop.f32.mrb[0].mxu0
      %v7312 = vadd.f32 %v6902, %v7311
      %v7313 = vpop.f32.mrb[0].mxu0
      %v7314 = vadd.f32 %v6898, %v7313
      %v7315 = vpop.f32.mrb[0].mxu0
      %v7316 = vadd.f32 %v6902, %v7315
      %7317 = vmatprep.mubr.bf16.mxu0 %v7184
      %7318 = vmatmul.mubr.bf16.gmra.mrb[0].mxu0 %v6874
      %v7319 = vpop.f32.mrb[0].mxu0
      %v7320 = vadd.f32 %v6898, %v7319
      %v7321 = vpop.f32.mrb[0].mxu0
      %v7322 = vadd.f32 %v6902, %v7321
      %v7323 = vpop.f32.mrb[0].mxu0
      %v7324 = vadd.f32 %v6898, %v7323
      %v7325 = vpop.f32.mrb[0].mxu0
      %v7326 = vadd.f32 %v6902, %v7325
      %7327 = vmatprep.mubr.bf16.mxu0 %v7187
      %7328 = vmatmul.mubr.bf16.gmra.mrb[0].mxu0 %v6876
      %v7329 = vpop.f32.mrb[0].mxu0
      %v7330 = vadd.f32 %v6898, %v7329
      %v7331 = vpop.f32.mrb[0].mxu0
      %v7332 = vadd.f32 %v6902, %v7331
      %v7333 = vpop.f32.mrb[0].mxu0
      %v7334 = vadd.f32 %v6898, %v7333
      %v7335 = vpop.f32.mrb[0].mxu0
      %v7336 = vadd.f32 %v6902, %v7335
      %7337 = vmatprep.mubr.bf16.mxu0 %v7190
      %7338 = vmatmul.mubr.bf16.gmra.mrb[0].mxu0 %v6878
      %v7339 = vpop.f32.mrb[0].mxu0
      %v7340 = vadd.f32 %v6898, %v7339
      %v7341 = vpop.f32.mrb[0].mxu0
      %v7342 = vadd.f32 %v6902, %v7341
      %v7343 = vpop.f32.mrb[0].mxu0
      %v7344 = vadd.f32 %v6898, %v7343
      %v7345 = vpop.f32.mrb[0].mxu0
      %v7346 = vadd.f32 %v6902, %v7345
      %7347 = vmatprep.mubr.bf16.mxu0 %v7193
      %7348 = vmatmul.mubr.bf16.gmra.mrb[0].mxu0 %v6880
      %v7349 = vpop.f32.mrb[0].mxu0
      %v7350 = vadd.f32 %v6898, %v7349
      %v7351 = vpop.f32.mrb[0].mxu0
      %v7352 = vadd.f32 %v6902, %v7351
      %v7353 = vpop.f32.mrb[0].mxu0
      %v7354 = vadd.f32 %v6898, %v7353
      %v7355 = vpop.f32.mrb[0].mxu0
      %v7356 = vadd.f32 %v6902, %v7355
      %7357 = vmatprep.mubr.bf16.mxu0 %v7196
      %7358 = vmatmul.mubr.bf16.gmra.mrb[0].mxu0 %v6882
      %v7359 = vpop.f32.mrb[0].mxu0
      %v7360 = vadd.f32 %v6898, %v7359
      %v7361 = vpop.f32.mrb[0].mxu0
      %v7362 = vadd.f32 %v6902, %v7361
      %v7363 = vpop.f32.mrb[0].mxu0
      %v7364 = vadd.f32 %v6898, %v7363
      %v7365 = vpop.f32.mrb[0].mxu0
      %v7366 = vadd.f32 %v6902, %v7365
      %7367 = vmatprep.mubr.bf16.mxu0 %v7199
      %7368 = vmatmul.mubr.bf16.gmra.mrb[0].mxu0 %v6884
      %v7369 = vpop.f32.mrb[0].mxu0
      %v7370 = vadd.f32 %v6898, %v7369
      %v7371 = vpop.f32.mrb[0].mxu0
      %v7372 = vadd.f32 %v6902, %v7371
      %v7373 = vpop.f32.mrb[0].mxu0
      %v7374 = vadd.f32 %v6898, %v7373
      %v7375 = vpop.f32.mrb[0].mxu0
      %v7376 = vadd.f32 %v6902, %v7375
      %7377 = vmatprep.mubr.bf16.mxu0 %v7202
      %7378 = vmatmul.mubr.bf16.gmra.mrb[0].mxu0 %v6886
      %v7379 = vpop.f32.mrb[0].mxu0
      %v7380 = vadd.f32 %v6898, %v7379
      %v7381 = vpop.f32.mrb[0].mxu0
      %v7382 = vadd.f32 %v6902, %v7381
      %v7383 = vpop.f32.mrb[0].mxu0
      %v7384 = vadd.f32 %v6898, %v7383
      %v7385 = vpop.f32.mrb[0].mxu0
      %v7386 = vadd.f32 %v6902, %v7385
      %7387 = vmatprep.mubr.bf16.mxu0 %v7205
      %7388 = vmatmul.mubr.bf16.gmra.mrb[0].mxu0 %v6888
      %v7389 = vpop.f32.mrb[0].mxu0
      %v7390 = vadd.f32 %v6898, %v7389
      %v7391 = vpop.f32.mrb[0].mxu0
      %v7392 = vadd.f32 %v6902, %v7391
      %v7393 = vpop.f32.mrb[0].mxu0
      %v7394 = vadd.f32 %v6898, %v7393
      %v7395 = vpop.f32.mrb[0].mxu0
      %v7396 = vadd.f32 %v6902, %v7395
      %7397 = vmatprep.mubr.bf16.mxu0 %v7208
      %7398 = vmatmul.mubr.bf16.gmra.mrb[0].mxu0 %v6890
      %v7399 = vpop.f32.mrb[0].mxu0
      %v7400 = vadd.f32 %v6898, %v7399
      %v7401 = vpop.f32.mrb[0].mxu0
      %v7402 = vadd.f32 %v6902, %v7401
      %v7403 = vpop.f32.mrb[0].mxu0
      %v7404 = vadd.f32 %v6898, %v7403
      %v7405 = vpop.f32.mrb[0].mxu0
      %v7406 = vadd.f32 %v6902, %v7405
      %7407 = vmatprep.mubr.bf16.mxu0 %v7211
      %7408 = vmatmul.mubr.bf16.gmra.mrb[0].mxu0 %v6892
      %v7409 = vpop.f32.mrb[0].mxu0
      %v7410 = vadd.f32 %v6898, %v7409
      %v7411 = vpop.f32.mrb[0].mxu0
      %v7412 = vadd.f32 %v6902, %v7411
      %v7413 = vpop.f32.mrb[0].mxu0
      %v7414 = vadd.f32 %v6898, %v7413
      %v7415 = vpop.f32.mrb[0].mxu0
      %v7416 = vadd.f32 %v6902, %v7415
      %7417 = vdwg.mxu0
      %7418 = vmatprep.subr.bf16.mxu0 %v7068
      %7419 = vmatpush1.bf16.msra.mxu0 %v7067
      %7420 = vmatprep.subr.bf16.mxu0 %v7072
      %7421 = vmatpush1.bf16.msra.mxu0 %v7071
      %7422 = vmatprep.subr.bf16.mxu0 %v7076
      %7423 = vmatpush1.bf16.msra.mxu0 %v7075
      %7424 = vmatprep.subr.bf16.mxu0 %v7080
      %7425 = vmatpush1.bf16.msra.mxu0 %v7079
      %7426 = vmatprep.subr.bf16.mxu0 %v7084
      %7427 = vmatpush1.bf16.msra.mxu0 %v7083
      %7428 = vmatprep.subr.bf16.mxu0 %v7088
      %7429 = vmatpush1.bf16.msra.mxu0 %v7087
      %7430 = vmatprep.subr.bf16.mxu0 %v7092
      %7431 = vmatpush1.bf16.msra.mxu0 %v7091
      %7432 = vmatprep.subr.bf16.mxu0 %v7096
      %7433 = vmatpush1.bf16.msra.mxu0 %v7095
      %7434 = vmatprep.subr.bf16.mxu0 %v7100
      %7435 = vmatpush1.bf16.msra.mxu0 %v7099
      %7436 = vmatprep.subr.bf16.mxu0 %v7104
      %7437 = vmatpush1.bf16.msra.mxu0 %v7103
      %7438 = vmatprep.subr.bf16.mxu0 %v7108
      %7439 = vmatpush1.bf16.msra.mxu0 %v7107
      %7440 = vmatprep.subr.bf16.mxu0 %v7112
      %7441 = vmatpush1.bf16.msra.mxu0 %v7111
      %7442 = vmatprep.subr.bf16.mxu0 %v7223
      %7443 = vmatpush1.bf16.msra.mxu0 %v7220
      %7444 = vmatprep.subr.bf16.mxu0 0
      %7445 = vmatpush1.bf16.msra.mxu0 0
      %7446 = vmatprep.subr.bf16.mxu0 0
      %7447 = vmatpush1.bf16.msra.mxu0 0
      %7448 = vmatprep.subr.bf16.mxu0 0
      %7449 = vmatpush1.bf16.msra.mxu0 0
      %7450 = vmatprep.mubr.bf16.mxu0 %v7166
      %7451 = vmatmul.mubr.bf16.gmra.mrb[0].mxu0 %v6862
      %v7452 = vpop.f32.mrb[0].mxu0
      %v7453 = vadd.f32 %v6906, %v7452
      %v7454 = vpop.f32.mrb[0].mxu0
      %v7455 = vadd.f32 %v6910, %v7454
      %v7456 = vpop.f32.mrb[0].mxu0
      %v7457 = vadd.f32 %v6906, %v7456
      %v7458 = vpop.f32.mrb[0].mxu0
      %v7459 = vadd.f32 %v6910, %v7458
      %7460 = vmatprep.mubr.bf16.mxu0 %v7169
      %7461 = vmatmul.mubr.bf16.gmra.mrb[0].mxu0 %v6864
      %v7462 = vpop.f32.mrb[0].mxu0
      %v7463 = vadd.f32 %v6906, %v7462
      %v7464 = vpop.f32.mrb[0].mxu0
      %v7465 = vadd.f32 %v6910, %v7464
      %v7466 = vpop.f32.mrb[0].mxu0
      %v7467 = vadd.f32 %v6906, %v7466
      %v7468 = vpop.f32.mrb[0].mxu0
      %v7469 = vadd.f32 %v6910, %v7468
      %7470 = vmatprep.mubr.bf16.mxu0 %v7172
      %7471 = vmatmul.mubr.bf16.gmra.mrb[0].mxu0 %v6866
      %v7472 = vpop.f32.mrb[0].mxu0
      %v7473 = vadd.f32 %v6906, %v7472
      %v7474 = vpop.f32.mrb[0].mxu0
      %v7475 = vadd.f32 %v6910, %v7474
      %v7476 = vpop.f32.mrb[0].mxu0
      %v7477 = vadd.f32 %v6906, %v7476
      %v7478 = vpop.f32.mrb[0].mxu0
      %v7479 = vadd.f32 %v6910, %v7478
      %7480 = vmatprep.mubr.bf16.mxu0 %v7175
      %7481 = vmatmul.mubr.bf16.gmra.mrb[0].mxu0 %v6868
      %v7482 = vpop.f32.mrb[0].mxu0
      %v7483 = vadd.f32 %v6906, %v7482
      %v7484 = vpop.f32.mrb[0].mxu0
      %v7485 = vadd.f32 %v6910, %v7484
      %v7486 = vpop.f32.mrb[0].mxu0
      %v7487 = vadd.f32 %v6906, %v7486
      %v7488 = vpop.f32.mrb[0].mxu0
      %v7489 = vadd.f32 %v6910, %v7488
      %7490 = vmatprep.mubr.bf16.mxu0 %v7178
      %7491 = vmatmul.mubr.bf16.gmra.mrb[0].mxu0 %v6870
      %v7492 = vpop.f32.mrb[0].mxu0
      %v7493 = vadd.f32 %v6906, %v7492
      %v7494 = vpop.f32.mrb[0].mxu0
      %v7495 = vadd.f32 %v6910, %v7494
      %v7496 = vpop.f32.mrb[0].mxu0
      %v7497 = vadd.f32 %v6906, %v7496
      %v7498 = vpop.f32.mrb[0].mxu0
      %v7499 = vadd.f32 %v6910, %v7498
      %7500 = vmatprep.mubr.bf16.mxu0 %v7181
      %7501 = vmatmul.mubr.bf16.gmra.mrb[0].mxu0 %v6872
      %v7502 = vpop.f32.mrb[0].mxu0
      %v7503 = vadd.f32 %v6906, %v7502
      %v7504 = vpop.f32.mrb[0].mxu0
      %v7505 = vadd.f32 %v6910, %v7504
      %v7506 = vpop.f32.mrb[0].mxu0
      %v7507 = vadd.f32 %v6906, %v7506
      %v7508 = vpop.f32.mrb[0].mxu0
      %v7509 = vadd.f32 %v6910, %v7508
      %7510 = vmatprep.mubr.bf16.mxu0 %v7184
      %7511 = vmatmul.mubr.bf16.gmra.mrb[0].mxu0 %v6874
      %v7512 = vpop.f32.mrb[0].mxu0
      %v7513 = vadd.f32 %v6906, %v7512
      %v7514 = vpop.f32.mrb[0].mxu0
      %v7515 = vadd.f32 %v6910, %v7514
      %v7516 = vpop.f32.mrb[0].mxu0
      %v7517 = vadd.f32 %v6906, %v7516
      %v7518 = vpop.f32.mrb[0].mxu0
      %v7519 = vadd.f32 %v6910, %v7518
      %7520 = vmatprep.mubr.bf16.mxu0 %v7187
      %7521 = vmatmul.mubr.bf16.gmra.mrb[0].mxu0 %v6876
      %v7522 = vpop.f32.mrb[0].mxu0
      %v7523 = vadd.f32 %v6906, %v7522
      %v7524 = vpop.f32.mrb[0].mxu0
      %v7525 = vadd.f32 %v6910, %v7524
      %v7526 = vpop.f32.mrb[0].mxu0
      %v7527 = vadd.f32 %v6906, %v7526
      %v7528 = vpop.f32.mrb[0].mxu0
      %v7529 = vadd.f32 %v6910, %v7528
      %7530 = vmatprep.mubr.bf16.mxu0 %v7190
      %7531 = vmatmul.mubr.bf16.gmra.mrb[0].mxu0 %v6878
      %v7532 = vpop.f32.mrb[0].mxu0
      %v7533 = vadd.f32 %v6906, %v7532
      %v7534 = vpop.f32.mrb[0].mxu0
      %v7535 = vadd.f32 %v6910, %v7534
      %v7536 = vpop.f32.mrb[0].mxu0
      %v7537 = vadd.f32 %v6906, %v7536
      %v7538 = vpop.f32.mrb[0].mxu0
      %v7539 = vadd.f32 %v6910, %v7538
      %7540 = vmatprep.mubr.bf16.mxu0 %v7193
      %7541 = vmatmul.mubr.bf16.gmra.mrb[0].mxu0 %v6880
      %v7542 = vpop.f32.mrb[0].mxu0
      %v7543 = vadd.f32 %v6906, %v7542
      %v7544 = vpop.f32.mrb[0].mxu0
      %v7545 = vadd.f32 %v6910, %v7544
      %v7546 = vpop.f32.mrb[0].mxu0
      %v7547 = vadd.f32 %v6906, %v7546
      %v7548 = vpop.f32.mrb[0].mxu0
      %v7549 = vadd.f32 %v6910, %v7548
      %7550 = vmatprep.mubr.bf16.mxu0 %v7196
      %7551 = vmatmul.mubr.bf16.gmra.mrb[0].mxu0 %v6882
      %v7552 = vpop.f32.mrb[0].mxu0
      %v7553 = vadd.f32 %v6906, %v7552
      %v7554 = vpop.f32.mrb[0].mxu0
      %v7555 = vadd.f32 %v6910, %v7554
      %v7556 = vpop.f32.mrb[0].mxu0
      %v7557 = vadd.f32 %v6906, %v7556
      %v7558 = vpop.f32.mrb[0].mxu0
      %v7559 = vadd.f32 %v6910, %v7558
      %7560 = vmatprep.mubr.bf16.mxu0 %v7199
      %7561 = vmatmul.mubr.bf16.gmra.mrb[0].mxu0 %v6884
      %v7562 = vpop.f32.mrb[0].mxu0
      %v7563 = vadd.f32 %v6906, %v7562
      %v7564 = vpop.f32.mrb[0].mxu0
      %v7565 = vadd.f32 %v6910, %v7564
      %v7566 = vpop.f32.mrb[0].mxu0
      %v7567 = vadd.f32 %v6906, %v7566
      %v7568 = vpop.f32.mrb[0].mxu0
      %v7569 = vadd.f32 %v6910, %v7568
      %7570 = vmatprep.mubr.bf16.mxu0 %v7202
      %7571 = vmatmul.mubr.bf16.gmra.mrb[0].mxu0 %v6886
      %v7572 = vpop.f32.mrb[0].mxu0
      %v7573 = vadd.f32 %v6906, %v7572
      %v7574 = vpop.f32.mrb[0].mxu0
      %v7575 = vadd.f32 %v6910, %v7574
      %v7576 = vpop.f32.mrb[0].mxu0
      %v7577 = vadd.f32 %v6906, %v7576
      %v7578 = vpop.f32.mrb[0].mxu0
      %v7579 = vadd.f32 %v6910, %v7578
      %7580 = vmatprep.mubr.bf16.mxu0 %v7205
      %7581 = vmatmul.mubr.bf16.gmra.mrb[0].mxu0 %v6888
      %v7582 = vpop.f32.mrb[0].mxu0
      %v7583 = vadd.f32 %v6906, %v7582
      %v7584 = vpop.f32.mrb[0].mxu0
      %v7585 = vadd.f32 %v6910, %v7584
      %v7586 = vpop.f32.mrb[0].mxu0
      %v7587 = vadd.f32 %v6906, %v7586
      %v7588 = vpop.f32.mrb[0].mxu0
      %v7589 = vadd.f32 %v6910, %v7588
      %7590 = vmatprep.mubr.bf16.mxu0 %v7208
      %7591 = vmatmul.mubr.bf16.gmra.mrb[0].mxu0 %v6890
      %v7592 = vpop.f32.mrb[0].mxu0
      %v7593 = vadd.f32 %v6906, %v7592
      %v7594 = vpop.f32.mrb[0].mxu0
      %v7595 = vadd.f32 %v6910, %v7594
      %v7596 = vpop.f32.mrb[0].mxu0
      %v7597 = vadd.f32 %v6906, %v7596
      %v7598 = vpop.f32.mrb[0].mxu0
      %v7599 = vadd.f32 %v6910, %v7598
      %7600 = vmatprep.mubr.bf16.mxu0 %v7211
      %7601 = vmatmul.mubr.bf16.gmra.mrb[0].mxu0 %v6892
      %v7602 = vpop.f32.mrb[0].mxu0
      %v7603 = vadd.f32 %v6906, %v7602
      %v7604 = vpop.f32.mrb[0].mxu0
      %v7605 = vadd.f32 %v6910, %v7604
      %v7606 = vpop.f32.mrb[0].mxu0
      %v7607 = vadd.f32 %v6906, %v7606
      %v7608 = vpop.f32.mrb[0].mxu0
      %v7609 = vadd.f32 %v6910, %v7608
      %7610 = vdwg.mxu0
      %v7611 = vmax.f32 %v7260, 0.0
      %v7612 = vmax.f32 %v7262, 0.0
      %v7613 = vmax.f32 %v7453, 0.0
      %v7614 = vmax.f32 %v7455, 0.0
      %v7615 = vmax.f32 %v7264, 0.0
      %v7616 = vmax.f32 %v7266, 0.0
      %v7617 = vmax.f32 %v7457, 0.0
      %v7618 = vmax.f32 %v7459, 0.0
      %v7619 = vmax.f32 %v7270, 0.0
      %v7620 = vmax.f32 %v7272, 0.0
      %v7621 = vmax.f32 %v7463, 0.0
      %v7622 = vmax.f32 %v7465, 0.0
      %v7623 = vmax.f32 %v7274, 0.0
      %v7624 = vmax.f32 %v7276, 0.0
      %v7625 = vmax.f32 %v7467, 0.0
      %v7626 = vmax.f32 %v7469, 0.0
      %v7627 = vmax.f32 %v7280, 0.0
      %v7628 = vmax.f32 %v7282, 0.0
      %v7629 = vmax.f32 %v7473, 0.0
      %v7630 = vmax.f32 %v7475, 0.0
      %v7631 = vmax.f32 %v7284, 0.0
      %v7632 = vmax.f32 %v7286, 0.0
      %v7633 = vmax.f32 %v7477, 0.0
      %v7634 = vmax.f32 %v7479, 0.0
      %v7635 = vmax.f32 %v7290, 0.0
      %v7636 = vmax.f32 %v7292, 0.0
      %v7637 = vmax.f32 %v7483, 0.0
      %v7638 = vmax.f32 %v7485, 0.0
      %v7639 = vmax.f32 %v7294, 0.0
      %v7640 = vmax.f32 %v7296, 0.0
      %v7641 = vmax.f32 %v7487, 0.0
      %v7642 = vmax.f32 %v7489, 0.0
      %v7643 = vmax.f32 %v7300, 0.0
      %v7644 = vmax.f32 %v7302, 0.0
      %v7645 = vmax.f32 %v7493, 0.0
      %v7646 = vmax.f32 %v7495, 0.0
      %v7647 = vmax.f32 %v7304, 0.0
      %v7648 = vmax.f32 %v7306, 0.0
      %v7649 = vmax.f32 %v7497, 0.0
      %v7650 = vmax.f32 %v7499, 0.0
      %v7651 = vmax.f32 %v7310, 0.0
      %v7652 = vmax.f32 %v7312, 0.0
      %v7653 = vmax.f32 %v7503, 0.0
      %v7654 = vmax.f32 %v7505, 0.0
      %v7655 = vmax.f32 %v7314, 0.0
      %v7656 = vmax.f32 %v7316, 0.0
      %v7657 = vmax.f32 %v7507, 0.0
      %v7658 = vmax.f32 %v7509, 0.0
      %v7659 = vmax.f32 %v7320, 0.0
      %v7660 = vmax.f32 %v7322, 0.0
      %v7661 = vmax.f32 %v7513, 0.0
      %v7662 = vmax.f32 %v7515, 0.0
      %v7663 = vmax.f32 %v7324, 0.0
      %v7664 = vmax.f32 %v7326, 0.0
      %v7665 = vmax.f32 %v7517, 0.0
      %v7666 = vmax.f32 %v7519, 0.0
      %v7667 = vmax.f32 %v7330, 0.0
      %v7668 = vmax.f32 %v7332, 0.0
      %v7669 = vmax.f32 %v7523, 0.0
      %v7670 = vmax.f32 %v7525, 0.0
      %v7671 = vmax.f32 %v7334, 0.0
      %v7672 = vmax.f32 %v7336, 0.0
      %v7673 = vmax.f32 %v7527, 0.0
      %v7674 = vmax.f32 %v7529, 0.0
      %v7675 = vmax.f32 %v7340, 0.0
      %v7676 = vmax.f32 %v7342, 0.0
      %v7677 = vmax.f32 %v7533, 0.0
      %v7678 = vmax.f32 %v7535, 0.0
      %v7679 = vmax.f32 %v7344, 0.0
      %v7680 = vmax.f32 %v7346, 0.0
      %v7681 = vmax.f32 %v7537, 0.0
      %v7682 = vmax.f32 %v7539, 0.0
      %v7683 = vmax.f32 %v7350, 0.0
      %v7684 = vmax.f32 %v7352, 0.0
      %v7685 = vmax.f32 %v7543, 0.0
      %v7686 = vmax.f32 %v7545, 0.0
      %v7687 = vmax.f32 %v7354, 0.0
      %v7688 = vmax.f32 %v7356, 0.0
      %v7689 = vmax.f32 %v7547, 0.0
      %v7690 = vmax.f32 %v7549, 0.0
      %v7691 = vmax.f32 %v7360, 0.0
      %v7692 = vmax.f32 %v7362, 0.0
      %v7693 = vmax.f32 %v7553, 0.0
      %v7694 = vmax.f32 %v7555, 0.0
      %v7695 = vmax.f32 %v7364, 0.0
      %v7696 = vmax.f32 %v7366, 0.0
      %v7697 = vmax.f32 %v7557, 0.0
      %v7698 = vmax.f32 %v7559, 0.0
      %v7699 = vmax.f32 %v7370, 0.0
      %v7700 = vmax.f32 %v7372, 0.0
      %v7701 = vmax.f32 %v7563, 0.0
      %v7702 = vmax.f32 %v7565, 0.0
      %v7703 = vmax.f32 %v7374, 0.0
      %v7704 = vmax.f32 %v7376, 0.0
      %v7705 = vmax.f32 %v7567, 0.0
      %v7706 = vmax.f32 %v7569, 0.0
      %v7707 = vmax.f32 %v7380, 0.0
      %v7708 = vmax.f32 %v7382, 0.0
      %v7709 = vmax.f32 %v7573, 0.0
      %v7710 = vmax.f32 %v7575, 0.0
      %v7711 = vmax.f32 %v7384, 0.0
      %v7712 = vmax.f32 %v7386, 0.0
      %v7713 = vmax.f32 %v7577, 0.0
      %v7714 = vmax.f32 %v7579, 0.0
      %v7715 = vmax.f32 %v7390, 0.0
      %v7716 = vmax.f32 %v7392, 0.0
      %v7717 = vmax.f32 %v7583, 0.0
      %v7718 = vmax.f32 %v7585, 0.0
      %v7719 = vmax.f32 %v7394, 0.0
      %v7720 = vmax.f32 %v7396, 0.0
      %v7721 = vmax.f32 %v7587, 0.0
      %v7722 = vmax.f32 %v7589, 0.0
      %v7723 = vmax.f32 %v7400, 0.0
      %v7724 = vmax.f32 %v7402, 0.0
      %v7725 = vmax.f32 %v7593, 0.0
      %v7726 = vmax.f32 %v7595, 0.0
      %v7727 = vmax.f32 %v7404, 0.0
      %v7728 = vmax.f32 %v7406, 0.0
      %v7729 = vmax.f32 %v7597, 0.0
      %v7730 = vmax.f32 %v7599, 0.0
      %v7731 = vmax.f32 %v7410, 0.0
      %v7732 = vmax.f32 %v7412, 0.0
      %v7733 = vmax.f32 %v7603, 0.0
      %v7734 = vmax.f32 %v7605, 0.0
      %v7735 = vmax.f32 %v7414, 0.0
      %v7736 = vmax.f32 %v7416, 0.0
      %v7737 = vmax.f32 %v7607, 0.0
      %v7738 = vmax.f32 %v7609, 0.0
      %v7739 = vld [vmem:[%s17] sm:$0xff]
      %v7740 = vld [vmem:[%s17 + $0x8] sm:$0xff]
      %v7741 = vld [vmem:[%s17 + $0x10] sm:$0xff]
      %v7742 = vld [vmem:[%s17 + $0x18] sm:$0xf]
      %v7743 = vld [vmem:[%s17 + $0x1c] sm:$0xff]
      %v7744 = vld [vmem:[%s17 + $0x24] sm:$0xff]
      %v7745 = vld [vmem:[%s17 + $0x2c] sm:$0xff]
      %v7746 = vld [vmem:[%s17 + $0x34] sm:$0xf]
      %v7747 = vld [vmem:[%s17 + $0x38] sm:$0xff]
      %v7748 = vld [vmem:[%s17 + $0x40] sm:$0xff]
      %v7749 = vld [vmem:[%s17 + $0x48] sm:$0xff]
      %v7750 = vld [vmem:[%s17 + $0x50] sm:$0xf]
      %v7751 = vld [vmem:[%s17 + $0x54] sm:$0xff]
      %v7752 = vld [vmem:[%s17 + $0x5c] sm:$0xff]
      %v7753 = vld [vmem:[%s17 + $0x64] sm:$0xff]
      %v7754 = vld [vmem:[%s17 + $0x6c] sm:$0xf]
      %v7755 = vld [vmem:[%s17 + $0x70] sm:$0xff]
      %v7756 = vld [vmem:[%s17 + $0x78] sm:$0xff]
      %v7757 = vld [vmem:[%s17 + $0x80] sm:$0xff]
      %v7758 = vld [vmem:[%s17 + $0x88] sm:$0xf]
      %v7759 = vld [vmem:[%s17 + $0x8c] sm:$0xff]
      %v7760 = vld [vmem:[%s17 + $0x94] sm:$0xff]
      %v7761 = vld [vmem:[%s17 + $0x9c] sm:$0xff]
      %v7762 = vld [vmem:[%s17 + $0xa4] sm:$0xf]
      %v7763 = vld [vmem:[%s17 + $0xa8] sm:$0xff]
      %v7764 = vld [vmem:[%s17 + $0xb0] sm:$0xff]
      %v7765 = vld [vmem:[%s17 + $0xb8] sm:$0xff]
      %v7766 = vld [vmem:[%s17 + $0xc0] sm:$0xf]
      %v7767 = vld [vmem:[%s17 + $0xc4] sm:$0xff]
      %v7768 = vld [vmem:[%s17 + $0xcc] sm:$0xff]
      %v7769 = vld [vmem:[%s17 + $0xd4] sm:$0xff]
      %v7770 = vld [vmem:[%s17 + $0xdc] sm:$0xf]
      %v7771 = vld [vmem:[%s17 + $0xe0] sm:$0xff]
      %v7772 = vld [vmem:[%s17 + $0xe8] sm:$0xff]
      %v7773 = vld [vmem:[%s17 + $0xf0] sm:$0xff]
      %v7774 = vld [vmem:[%s17 + $0xf8] sm:$0xf]
      %v7775 = vld [vmem:[%s17 + $0xfc] sm:$0xff]
      %v7776 = vld [vmem:[%s17 + $0x104] sm:$0xff]
      %v7777 = vld [vmem:[%s17 + $0x10c] sm:$0xff]
      %v7778 = vld [vmem:[%s17 + $0x114] sm:$0xf]
      %v7779 = vld [vmem:[%s17 + $0x118] sm:$0xff]
      %v7780 = vld [vmem:[%s17 + $0x120] sm:$0xff]
      %v7781 = vld [vmem:[%s17 + $0x128] sm:$0xff]
      %v7782 = vld [vmem:[%s17 + $0x130] sm:$0xf]
      %v7783 = vld [vmem:[%s17 + $0x134] sm:$0xff]
      %v7784 = vld [vmem:[%s17 + $0x13c] sm:$0xff]
      %v7785 = vld [vmem:[%s17 + $0x144] sm:$0xff]
      %v7786 = vld [vmem:[%s17 + $0x14c] sm:$0xf]
      %v7787 = vld [vmem:[%s17 + $0x150] sm:$0xff]
      %v7788 = vld [vmem:[%s17 + $0x158] sm:$0xff]
      %v7789 = vld [vmem:[%s17 + $0x160] sm:$0xff]
      %v7790 = vld [vmem:[%s17 + $0x168] sm:$0xf]
      %v7791 = vld [vmem:[%s17 + $0x16c] sm:$0xff]
      %v7792 = vld [vmem:[%s17 + $0x174] sm:$0xff]
      %v7793 = vld [vmem:[%s17 + $0x17c] sm:$0xff]
      %v7794 = vld [vmem:[%s17 + $0x184] sm:$0xf]
      %v7795 = vld [vmem:[%s17 + $0x188] sm:$0xff]
      %v7796 = vld [vmem:[%s17 + $0x190] sm:$0xff]
      %v7797 = vld [vmem:[%s17 + $0x198] sm:$0xff]
      %v7798 = vld [vmem:[%s17 + $0x1a0] sm:$0xf]
      %v7799 = vld [vmem:[%s17 + $0x1a4] sm:$0xff]
      %v7800 = vld [vmem:[%s17 + $0x1ac] sm:$0xff]
      %v7801 = vld [vmem:[%s17 + $0x1b4] sm:$0xff]
      %v7802 = vld [vmem:[%s17 + $0x1bc] sm:$0xf]
      %v7803 = vld [vmem:[%s17 + $0x1c0] sm:$0xff]
      %v7804 = vld [vmem:[%s17 + $0x1c8] sm:$0xff]
      %v7805 = vld [vmem:[%s17 + $0x1d0] sm:$0xff]
      %v7806 = vld [vmem:[%s17 + $0x1d8] sm:$0xf]
      %v7807 = vld [vmem:[%s17 + $0x1dc] sm:$0xff]
      %v7808 = vld [vmem:[%s17 + $0x1e4] sm:$0xff]
      %v7809 = vld [vmem:[%s17 + $0x1ec] sm:$0xff]
      %v7810 = vld [vmem:[%s17 + $0x1f4] sm:$0xf]
      %v7811 = vld [vmem:[%s17 + $0x1f8] sm:$0xff]
      %v7812 = vld [vmem:[%s17 + $0x200] sm:$0xff]
      %v7813 = vld [vmem:[%s17 + $0x208] sm:$0xff]
      %v7814 = vld [vmem:[%s17 + $0x210] sm:$0xf]
      %v7815 = vld [vmem:[%s17 + $0x214] sm:$0xff]
      %v7816 = vld [vmem:[%s17 + $0x21c] sm:$0xff]
      %v7817 = vld [vmem:[%s17 + $0x224] sm:$0xff]
      %v7818 = vld [vmem:[%s17 + $0x22c] sm:$0xf]
      %v7819 = vld [vmem:[%s17 + $0x230] sm:$0xff]
      %v7820 = vld [vmem:[%s17 + $0x238] sm:$0xff]
      %v7821 = vld [vmem:[%s17 + $0x240] sm:$0xff]
      %v7822 = vld [vmem:[%s17 + $0x248] sm:$0xf]
      %v7823 = vld [vmem:[%s17 + $0x24c] sm:$0xff]
      %v7824 = vld [vmem:[%s17 + $0x254] sm:$0xff]
      %v7825 = vld [vmem:[%s17 + $0x25c] sm:$0xff]
      %v7826 = vld [vmem:[%s17 + $0x264] sm:$0xf]
      %v7827 = vld [vmem:[%s17 + $0x268] sm:$0xff]
      %v7828 = vld [vmem:[%s17 + $0x270] sm:$0xff]
      %v7829 = vld [vmem:[%s17 + $0x278] sm:$0xff]
      %v7830 = vld [vmem:[%s17 + $0x280] sm:$0xf]
      %v7831 = vld [vmem:[%s17 + $0x284] sm:$0xff]
      %v7832 = vld [vmem:[%s17 + $0x28c] sm:$0xff]
      %v7833 = vld [vmem:[%s17 + $0x294] sm:$0xff]
      %v7834 = vld [vmem:[%s17 + $0x29c] sm:$0xf]
      %v7835 = vld [vmem:[%s17 + $0x2a0] sm:$0xff]
      %v7836 = vld [vmem:[%s17 + $0x2a8] sm:$0xff]
      %v7837 = vld [vmem:[%s17 + $0x2b0] sm:$0xff]
      %v7838 = vld [vmem:[%s17 + $0x2b8] sm:$0xf]
      %v7839 = vld [vmem:[%s17 + $0x2bc] sm:$0xff]
      %v7840 = vld [vmem:[%s17 + $0x2c4] sm:$0xff]
      %v7841 = vld [vmem:[%s17 + $0x2cc] sm:$0xff]
      %v7842 = vld [vmem:[%s17 + $0x2d4] sm:$0xf]
      %v7843 = vld [vmem:[%s17 + $0x2d8] sm:$0xff]
      %v7844 = vld [vmem:[%s17 + $0x2e0] sm:$0xff]
      %v7845 = vld [vmem:[%s17 + $0x2e8] sm:$0xff]
      %v7846 = vld [vmem:[%s17 + $0x2f0] sm:$0xf]
      %v7847 = vld [vmem:[%s17 + $0x2f4] sm:$0xff]
      %v7848 = vld [vmem:[%s17 + $0x2fc] sm:$0xff]
      %v7849 = vld [vmem:[%s17 + $0x304] sm:$0xff]
      %v7850 = vld [vmem:[%s17 + $0x30c] sm:$0xf]
      %v7851 = vld [vmem:[%s17 + $0x310] sm:$0xff]
      %v7852 = vld [vmem:[%s17 + $0x318] sm:$0xff]
      %v7853 = vld [vmem:[%s17 + $0x320] sm:$0xff]
      %v7854 = vld [vmem:[%s17 + $0x328] sm:$0xf]
      %v7855 = vld [vmem:[%s17 + $0x32c] sm:$0xff]
      %v7856 = vld [vmem:[%s17 + $0x334] sm:$0xff]
      %v7857 = vld [vmem:[%s17 + $0x33c] sm:$0xff]
      %v7858 = vld [vmem:[%s17 + $0x344] sm:$0xf]
      %v7859 = vld [vmem:[%s17 + $0x348] sm:$0xff]
      %v7860 = vld [vmem:[%s17 + $0x350] sm:$0xff]
      %v7861 = vld [vmem:[%s17 + $0x358] sm:$0xff]
      %v7862 = vld [vmem:[%s17 + $0x360] sm:$0xf]
      %v7863 = vld [vmem:[%s17 + $0x364] sm:$0xff]
      %v7864 = vld [vmem:[%s17 + $0x36c] sm:$0xff]
      %v7865 = vld [vmem:[%s17 + $0x374] sm:$0xff]
      %v7866 = vld [vmem:[%s17 + $0x37c] sm:$0xf]
      %v7867 = vld [vmem:[%s17 + $0x380] sm:$0xff]
      %v7868 = vld [vmem:[%s17 + $0x388] sm:$0xff]
      %v7869 = vld [vmem:[%s17 + $0x390] sm:$0xff]
      %v7870 = vld [vmem:[%s17 + $0x398] sm:$0xf]
      %v7871 = vld [vmem:[%s17 + $0x39c] sm:$0xff]
      %v7872 = vld [vmem:[%s17 + $0x3a4] sm:$0xff]
      %v7873 = vld [vmem:[%s17 + $0x3ac] sm:$0xff]
      %v7874 = vld [vmem:[%s17 + $0x3b4] sm:$0xf]
      %v7875 = vld [vmem:[%s17 + $0x3b8] sm:$0xff]
      %v7876 = vld [vmem:[%s17 + $0x3c0] sm:$0xff]
      %v7877 = vld [vmem:[%s17 + $0x3c8] sm:$0xff]
      %v7878 = vld [vmem:[%s17 + $0x3d0] sm:$0xf]
      %v7879 = vld [vmem:[%s17 + $0x3d4] sm:$0xff]
      %v7880 = vld [vmem:[%s17 + $0x3dc] sm:$0xff]
      %v7881 = vld [vmem:[%s17 + $0x3e4] sm:$0xff]
      %v7882 = vld [vmem:[%s17 + $0x3ec] sm:$0xf]
      %v7883 = vld [vmem:[%s17 + $0x3f0] sm:$0xff]
      %v7884 = vld [vmem:[%s17 + $0x3f8] sm:$0xff]
      %v7885 = vld [vmem:[%s17 + $0x400] sm:$0xff]
      %v7886 = vld [vmem:[%s17 + $0x408] sm:$0xf]
      %v7887 = vld [vmem:[%s17 + $0x40c] sm:$0xff]
      %v7888 = vld [vmem:[%s17 + $0x414] sm:$0xff]
      %v7889 = vld [vmem:[%s17 + $0x41c] sm:$0xff]
      %v7890 = vld [vmem:[%s17 + $0x424] sm:$0xf]
      %v7891 = vld [vmem:[%s17 + $0x428] sm:$0xff]
      %v7892 = vld [vmem:[%s17 + $0x430] sm:$0xff]
      %v7893 = vld [vmem:[%s17 + $0x438] sm:$0xff]
      %v7894 = vld [vmem:[%s17 + $0x440] sm:$0xf]
      %v7895 = vld [vmem:[%s17 + $0x444] sm:$0xff]
      %v7896 = vld [vmem:[%s17 + $0x44c] sm:$0xff]
      %v7897 = vld [vmem:[%s17 + $0x454] sm:$0xff]
      %v7898 = vld [vmem:[%s17 + $0x45c] sm:$0xf]
      %v7899 = vld [vmem:[%s17 + $0x460] sm:$0xff]
      %v7900 = vld [vmem:[%s17 + $0x468] sm:$0xff]
      %v7901 = vld [vmem:[%s17 + $0x470] sm:$0xff]
      %v7902 = vld [vmem:[%s17 + $0x478] sm:$0xf]
      %v7903 = vld [vmem:[%s17 + $0x47c] sm:$0xff]
      %v7904 = vld [vmem:[%s17 + $0x484] sm:$0xff]
      %v7905 = vld [vmem:[%s17 + $0x48c] sm:$0xff]
      %v7906 = vld [vmem:[%s17 + $0x494] sm:$0xf]
      %v7907 = vld [vmem:[%s17 + $0x498] sm:$0xff]
      %v7908 = vld [vmem:[%s17 + $0x4a0] sm:$0xff]
      %v7909 = vld [vmem:[%s17 + $0x4a8] sm:$0xff]
      %v7910 = vld [vmem:[%s17 + $0x4b0] sm:$0xf]
      %v7911 = vld [vmem:[%s17 + $0x4b4] sm:$0xff]
      %v7912 = vld [vmem:[%s17 + $0x4bc] sm:$0xff]
      %v7913 = vld [vmem:[%s17 + $0x4c4] sm:$0xff]
      %v7914 = vld [vmem:[%s17 + $0x4cc] sm:$0xf]
      %v7915 = vld [vmem:[%s17 + $0x4d0] sm:$0xff]
      %v7916 = vld [vmem:[%s17 + $0x4d8] sm:$0xff]
      %v7917 = vld [vmem:[%s17 + $0x4e0] sm:$0xff]
      %v7918 = vld [vmem:[%s17 + $0x4e8] sm:$0xf]
      %v7919 = vld [vmem:[%s17 + $0x4ec] sm:$0xff]
      %v7920 = vld [vmem:[%s17 + $0x4f4] sm:$0xff]
      %v7921 = vld [vmem:[%s17 + $0x4fc] sm:$0xff]
      %v7922 = vld [vmem:[%s17 + $0x504] sm:$0xf]
      %v7923 = vld [vmem:[%s17 + $0x508] sm:$0xff]
      %v7924 = vld [vmem:[%s17 + $0x510] sm:$0xff]
      %v7925 = vld [vmem:[%s17 + $0x518] sm:$0xff]
      %v7926 = vld [vmem:[%s17 + $0x520] sm:$0xf]
      %v7927 = vld [vmem:[%s17 + $0x524] sm:$0xff]
      %v7928 = vld [vmem:[%s17 + $0x52c] sm:$0xff]
      %v7929 = vld [vmem:[%s17 + $0x534] sm:$0xff]
      %v7930 = vld [vmem:[%s17 + $0x53c] sm:$0xf]
      %v7931 = vld [vmem:[%s17 + $0x540] sm:$0xff]
      %v7932 = vld [vmem:[%s17 + $0x548] sm:$0xff]
      %v7933 = vld [vmem:[%s17 + $0x550] sm:$0xff]
      %v7934 = vld [vmem:[%s17 + $0x558] sm:$0xf]
      %v7935 = vld [vmem:[%s18] sm:$0x7f]
      %v7936 = vpack.c.bf16 %v7615, %v7611
      %v7937 = vpack.c.bf16 %v7616, %v7612
      %v7938 = vpack.c.bf16 %v7617, %v7613
      %v7939 = vpack.c.bf16 %v7618, %v7614
      %v7940 = vpack.c.bf16 %v7623, %v7619
      %v7941 = vpack.c.bf16 %v7624, %v7620
      %v7942 = vpack.c.bf16 %v7625, %v7621
      %v7943 = vpack.c.bf16 %v7626, %v7622
      %v7944 = vpack.c.bf16 %v7631, %v7627
      %v7945 = vpack.c.bf16 %v7632, %v7628
      %v7946 = vpack.c.bf16 %v7633, %v7629
      %v7947 = vpack.c.bf16 %v7634, %v7630
      %v7948 = vpack.c.bf16 %v7639, %v7635
      %v7949 = vpack.c.bf16 %v7640, %v7636
      %v7950 = vpack.c.bf16 %v7641, %v7637
      %v7951 = vpack.c.bf16 %v7642, %v7638
      %v7952 = vpack.c.bf16 %v7647, %v7643
      %v7953 = vpack.c.bf16 %v7648, %v7644
      %v7954 = vpack.c.bf16 %v7649, %v7645
      %v7955 = vpack.c.bf16 %v7650, %v7646
      %v7956 = vpack.c.bf16 %v7655, %v7651
      %v7957 = vpack.c.bf16 %v7656, %v7652
      %v7958 = vpack.c.bf16 %v7657, %v7653
      %v7959 = vpack.c.bf16 %v7658, %v7654
      %v7960 = vpack.c.bf16 %v7663, %v7659
      %v7961 = vpack.c.bf16 %v7664, %v7660
      %v7962 = vpack.c.bf16 %v7665, %v7661
      %v7963 = vpack.c.bf16 %v7666, %v7662
      %v7964 = vpack.c.bf16 %v7671, %v7667
      %v7965 = vpack.c.bf16 %v7672, %v7668
      %v7966 = vpack.c.bf16 %v7673, %v7669
      %v7967 = vpack.c.bf16 %v7674, %v7670
      %v7968 = vpack.c.bf16 %v7679, %v7675
      %v7969 = vpack.c.bf16 %v7680, %v7676
      %v7970 = vpack.c.bf16 %v7681, %v7677
      %v7971 = vpack.c.bf16 %v7682, %v7678
      %v7972 = vpack.c.bf16 %v7687, %v7683
      %v7973 = vpack.c.bf16 %v7688, %v7684
      %v7974 = vpack.c.bf16 %v7689, %v7685
      %v7975 = vpack.c.bf16 %v7690, %v7686
      %v7976 = vpack.c.bf16 %v7695, %v7691
      %v7977 = vpack.c.bf16 %v7696, %v7692
      %v7978 = vpack.c.bf16 %v7697, %v7693
      %v7979 = vpack.c.bf16 %v7698, %v7694
      %v7980 = vpack.c.bf16 %v7703, %v7699
      %v7981 = vpack.c.bf16 %v7704, %v7700
      %v7982 = vpack.c.bf16 %v7705, %v7701
      %v7983 = vpack.c.bf16 %v7706, %v7702
      %v7984 = vpack.c.bf16 %v7711, %v7707
      %v7985 = vpack.c.bf16 %v7712, %v7708
      %v7986 = vpack.c.bf16 %v7713, %v7709
      %v7987 = vpack.c.bf16 %v7714, %v7710
      %v7988 = vpack.c.bf16 %v7719, %v7715
      %v7989 = vpack.c.bf16 %v7720, %v7716
      %v7990 = vpack.c.bf16 %v7721, %v7717
      %v7991 = vpack.c.bf16 %v7722, %v7718
      %v7992 = vpack.c.bf16 %v7727, %v7723
      %v7993 = vpack.c.bf16 %v7728, %v7724
      %v7994 = vpack.c.bf16 %v7729, %v7725
      %v7995 = vpack.c.bf16 %v7730, %v7726
      %v7996 = vpack.c.bf16 %v7735, %v7731
      %v7997 = vpack.c.bf16 %v7736, %v7732
      %v7998 = vpack.c.bf16 %v7737, %v7733
      %v7999 = vpack.c.bf16 %v7738, %v7734
      %v8001 = vlaneseq
      %v8002 = vshrl.u32 %v8001, 7
      %v8003 = vsub.s32 0, %v8002
      %v8004 = vrot.slane %v7935, %v8003
      %v8005 = vlaneseq
      %v8006 = vshrl.u32 %v8005, 7
      %v8007 = vsub.s32 1, %v8006
      %v8008 = vrot.slane %v7935, %v8007
      %v8009 = vlaneseq
      %v8010 = vshrl.u32 %v8009, 7
      %v8011 = vsub.s32 2, %v8010
      %v8012 = vrot.slane %v7935, %v8011
      %v8013 = vlaneseq
      %v8014 = vshrl.u32 %v8013, 7
      %v8015 = vsub.s32 3, %v8014
      %v8016 = vrot.slane %v7935, %v8015
      %v8017 = vlaneseq
      %v8018 = vshrl.u32 %v8017, 7
      %v8019 = vsub.s32 4, %v8018
      %v8020 = vrot.slane %v7935, %v8019
      %v8021 = vlaneseq
      %v8022 = vshrl.u32 %v8021, 7
      %v8023 = vsub.s32 5, %v8022
      %v8024 = vrot.slane %v7935, %v8023
      %v8025 = vlaneseq
      %v8026 = vshrl.u32 %v8025, 7
      %v8027 = vsub.s32 6, %v8026
      %v8028 = vrot.slane %v7935, %v8027
      %v8232 = vunpack.c.l.b16 %v7739
      %v8233 = vunpack.c.h.b16 %v7739
      %v8234 = vunpack.c.l.b16 %v7740
      %v8235 = vunpack.c.h.b16 %v7740
      %v8236 = vunpack.c.l.b16 %v7741
      %v8237 = vunpack.c.h.b16 %v7741
      %v8238 = vunpack.c.l.b16 %v7742
      %v8239 = vunpack.c.l.b16 %v7743
      %v8240 = vunpack.c.h.b16 %v7743
      %v8241 = vunpack.c.l.b16 %v7744
      %v8242 = vunpack.c.h.b16 %v7744
      %v8243 = vunpack.c.l.b16 %v7745
      %v8244 = vunpack.c.h.b16 %v7745
      %v8245 = vunpack.c.l.b16 %v7746
      %v8246 = vunpack.c.l.b16 %v7747
      %v8247 = vunpack.c.h.b16 %v7747
      %v8248 = vunpack.c.l.b16 %v7748
      %v8249 = vunpack.c.h.b16 %v7748
      %v8250 = vunpack.c.l.b16 %v7749
      %v8251 = vunpack.c.h.b16 %v7749
      %v8252 = vunpack.c.l.b16 %v7750
      %v8253 = vunpack.c.l.b16 %v7751
      %v8254 = vunpack.c.h.b16 %v7751
      %v8255 = vunpack.c.l.b16 %v7752
      %v8256 = vunpack.c.h.b16 %v7752
      %v8257 = vunpack.c.l.b16 %v7753
      %v8258 = vunpack.c.h.b16 %v7753
      %v8259 = vunpack.c.l.b16 %v7754
      %v8260 = vunpack.c.l.b16 %v7755
      %v8261 = vunpack.c.h.b16 %v7755
      %v8262 = vunpack.c.l.b16 %v7756
      %v8263 = vunpack.c.h.b16 %v7756
      %v8264 = vunpack.c.l.b16 %v7757
      %v8265 = vunpack.c.h.b16 %v7757
      %v8266 = vunpack.c.l.b16 %v7758
      %v8267 = vunpack.c.l.b16 %v7759
      %v8268 = vunpack.c.h.b16 %v7759
      %v8269 = vunpack.c.l.b16 %v7760
      %v8270 = vunpack.c.h.b16 %v7760
      %v8271 = vunpack.c.l.b16 %v7761
      %v8272 = vunpack.c.h.b16 %v7761
      %v8273 = vunpack.c.l.b16 %v7762
      %v8274 = vunpack.c.l.b16 %v7763
      %v8275 = vunpack.c.h.b16 %v7763
      %v8276 = vunpack.c.l.b16 %v7764
      %v8277 = vunpack.c.h.b16 %v7764
      %v8278 = vunpack.c.l.b16 %v7765
      %v8279 = vunpack.c.h.b16 %v7765
      %v8280 = vunpack.c.l.b16 %v7766
      %v8281 = vunpack.c.l.b16 %v7767
      %v8282 = vunpack.c.h.b16 %v7767
      %v8283 = vunpack.c.l.b16 %v7768
      %v8284 = vunpack.c.h.b16 %v7768
      %v8285 = vunpack.c.l.b16 %v7769
      %v8286 = vunpack.c.h.b16 %v7769
      %v8287 = vunpack.c.l.b16 %v7770
      %v8288 = vunpack.c.l.b16 %v7771
      %v8289 = vunpack.c.h.b16 %v7771
      %v8290 = vunpack.c.l.b16 %v7772
      %v8291 = vunpack.c.h.b16 %v7772
      %v8292 = vunpack.c.l.b16 %v7773
      %v8293 = vunpack.c.h.b16 %v7773
      %v8294 = vunpack.c.l.b16 %v7774
      %v8295 = vunpack.c.l.b16 %v7775
      %v8296 = vunpack.c.h.b16 %v7775
      %v8297 = vunpack.c.l.b16 %v7776
      %v8298 = vunpack.c.h.b16 %v7776
      %v8299 = vunpack.c.l.b16 %v7777
      %v8300 = vunpack.c.h.b16 %v7777
      %v8301 = vunpack.c.l.b16 %v7778
      %v8302 = vunpack.c.l.b16 %v7779
      %v8303 = vunpack.c.h.b16 %v7779
      %v8304 = vunpack.c.l.b16 %v7780
      %v8305 = vunpack.c.h.b16 %v7780
      %v8306 = vunpack.c.l.b16 %v7781
      %v8307 = vunpack.c.h.b16 %v7781
      %v8308 = vunpack.c.l.b16 %v7782
      %v8309 = vunpack.c.l.b16 %v7783
      %v8310 = vunpack.c.h.b16 %v7783
      %v8311 = vunpack.c.l.b16 %v7784
      %v8312 = vunpack.c.h.b16 %v7784
      %v8313 = vunpack.c.l.b16 %v7785
      %v8314 = vunpack.c.h.b16 %v7785
      %v8315 = vunpack.c.l.b16 %v7786
      %v8316 = vunpack.c.l.b16 %v7787
      %v8317 = vunpack.c.h.b16 %v7787
      %v8318 = vunpack.c.l.b16 %v7788
      %v8319 = vunpack.c.h.b16 %v7788
      %v8320 = vunpack.c.l.b16 %v7789
      %v8321 = vunpack.c.h.b16 %v7789
      %v8322 = vunpack.c.l.b16 %v7790
      %v8323 = vunpack.c.l.b16 %v7791
      %v8324 = vunpack.c.h.b16 %v7791
      %v8325 = vunpack.c.l.b16 %v7792
      %v8326 = vunpack.c.h.b16 %v7792
      %v8327 = vunpack.c.l.b16 %v7793
      %v8328 = vunpack.c.h.b16 %v7793
      %v8329 = vunpack.c.l.b16 %v7794
      %v8330 = vunpack.c.l.b16 %v7795
      %v8331 = vunpack.c.h.b16 %v7795
      %v8332 = vunpack.c.l.b16 %v7796
      %v8333 = vunpack.c.h.b16 %v7796
      %v8334 = vunpack.c.l.b16 %v7797
      %v8335 = vunpack.c.h.b16 %v7797
      %v8336 = vunpack.c.l.b16 %v7798
      %v8337 = vunpack.c.l.b16 %v7799
      %v8338 = vunpack.c.h.b16 %v7799
      %v8339 = vunpack.c.l.b16 %v7800
      %v8340 = vunpack.c.h.b16 %v7800
      %v8341 = vunpack.c.l.b16 %v7801
      %v8342 = vunpack.c.h.b16 %v7801
      %v8343 = vunpack.c.l.b16 %v7802
      %v8344 = vunpack.c.l.b16 %v7803
      %v8345 = vunpack.c.h.b16 %v7803
      %v8346 = vunpack.c.l.b16 %v7804
      %v8347 = vunpack.c.h.b16 %v7804
      %v8348 = vunpack.c.l.b16 %v7805
      %v8349 = vunpack.c.h.b16 %v7805
      %v8350 = vunpack.c.l.b16 %v7806
      %v8351 = vunpack.c.l.b16 %v7807
      %v8352 = vunpack.c.h.b16 %v7807
      %v8353 = vunpack.c.l.b16 %v7808
      %v8354 = vunpack.c.h.b16 %v7808
      %v8355 = vunpack.c.l.b16 %v7809
      %v8356 = vunpack.c.h.b16 %v7809
      %v8357 = vunpack.c.l.b16 %v7810
      %v8358 = vunpack.c.l.b16 %v7811
      %v8359 = vunpack.c.h.b16 %v7811
      %v8360 = vunpack.c.l.b16 %v7812
      %v8361 = vunpack.c.h.b16 %v7812
      %v8362 = vunpack.c.l.b16 %v7813
      %v8363 = vunpack.c.h.b16 %v7813
      %v8364 = vunpack.c.l.b16 %v7814
      %v8365 = vunpack.c.l.b16 %v7815
      %v8366 = vunpack.c.h.b16 %v7815
      %v8367 = vunpack.c.l.b16 %v7816
      %v8368 = vunpack.c.h.b16 %v7816
      %v8369 = vunpack.c.l.b16 %v7817
      %v8370 = vunpack.c.h.b16 %v7817
      %v8371 = vunpack.c.l.b16 %v7818
      %v8372 = vunpack.c.l.b16 %v7819
      %v8373 = vunpack.c.h.b16 %v7819
      %v8374 = vunpack.c.l.b16 %v7820
      %v8375 = vunpack.c.h.b16 %v7820
      %v8376 = vunpack.c.l.b16 %v7821
      %v8377 = vunpack.c.h.b16 %v7821
      %v8378 = vunpack.c.l.b16 %v7822
      %v8379 = vunpack.c.l.b16 %v7823
      %v8380 = vunpack.c.h.b16 %v7823
      %v8381 = vunpack.c.l.b16 %v7824
      %v8382 = vunpack.c.h.b16 %v7824
      %v8383 = vunpack.c.l.b16 %v7825
      %v8384 = vunpack.c.h.b16 %v7825
      %v8385 = vunpack.c.l.b16 %v7826
      %v8386 = vunpack.c.l.b16 %v7827
      %v8387 = vunpack.c.h.b16 %v7827
      %v8388 = vunpack.c.l.b16 %v7828
      %v8389 = vunpack.c.h.b16 %v7828
      %v8390 = vunpack.c.l.b16 %v7829
      %v8391 = vunpack.c.h.b16 %v7829
      %v8392 = vunpack.c.l.b16 %v7830
      %v8393 = vunpack.c.l.b16 %v7831
      %v8394 = vunpack.c.h.b16 %v7831
      %v8395 = vunpack.c.l.b16 %v7832
      %v8396 = vunpack.c.h.b16 %v7832
      %v8397 = vunpack.c.l.b16 %v7833
      %v8398 = vunpack.c.h.b16 %v7833
      %v8399 = vunpack.c.l.b16 %v7834
      %v8400 = vunpack.c.l.b16 %v7835
      %v8401 = vunpack.c.h.b16 %v7835
      %v8402 = vunpack.c.l.b16 %v7836
      %v8403 = vunpack.c.h.b16 %v7836
      %v8404 = vunpack.c.l.b16 %v7837
      %v8405 = vunpack.c.h.b16 %v7837
      %v8406 = vunpack.c.l.b16 %v7838
      %v8407 = vunpack.c.l.b16 %v7839
      %v8408 = vunpack.c.h.b16 %v7839
      %v8409 = vunpack.c.l.b16 %v7840
      %v8410 = vunpack.c.h.b16 %v7840
      %v8411 = vunpack.c.l.b16 %v7841
      %v8412 = vunpack.c.h.b16 %v7841
      %v8413 = vunpack.c.l.b16 %v7842
      %v8414 = vunpack.c.l.b16 %v7843
      %v8415 = vunpack.c.h.b16 %v7843
      %v8416 = vunpack.c.l.b16 %v7844
      %v8417 = vunpack.c.h.b16 %v7844
      %v8418 = vunpack.c.l.b16 %v7845
      %v8419 = vunpack.c.h.b16 %v7845
      %v8420 = vunpack.c.l.b16 %v7846
      %v8421 = vunpack.c.l.b16 %v7847
      %v8422 = vunpack.c.h.b16 %v7847
      %v8423 = vunpack.c.l.b16 %v7848
      %v8424 = vunpack.c.h.b16 %v7848
      %v8425 = vunpack.c.l.b16 %v7849
      %v8426 = vunpack.c.h.b16 %v7849
      %v8427 = vunpack.c.l.b16 %v7850
      %v8428 = vunpack.c.l.b16 %v7851
      %v8429 = vunpack.c.h.b16 %v7851
      %v8430 = vunpack.c.l.b16 %v7852
      %v8431 = vunpack.c.h.b16 %v7852
      %v8432 = vunpack.c.l.b16 %v7853
      %v8433 = vunpack.c.h.b16 %v7853
      %v8434 = vunpack.c.l.b16 %v7854
      %v8435 = vunpack.c.l.b16 %v7855
      %v8436 = vunpack.c.h.b16 %v7855
      %v8437 = vunpack.c.l.b16 %v7856
      %v8438 = vunpack.c.h.b16 %v7856
      %v8439 = vunpack.c.l.b16 %v7857
      %v8440 = vunpack.c.h.b16 %v7857
      %v8441 = vunpack.c.l.b16 %v7858
      %v8442 = vunpack.c.l.b16 %v7859
      %v8443 = vunpack.c.h.b16 %v7859
      %v8444 = vunpack.c.l.b16 %v7860
      %v8445 = vunpack.c.h.b16 %v7860
      %v8446 = vunpack.c.l.b16 %v7861
      %v8447 = vunpack.c.h.b16 %v7861
      %v8448 = vunpack.c.l.b16 %v7862
      %v8449 = vunpack.c.l.b16 %v7863
      %v8450 = vunpack.c.h.b16 %v7863
      %v8451 = vunpack.c.l.b16 %v7864
      %v8452 = vunpack.c.h.b16 %v7864
      %v8453 = vunpack.c.l.b16 %v7865
      %v8454 = vunpack.c.h.b16 %v7865
      %v8455 = vunpack.c.l.b16 %v7866
      %v8456 = vunpack.c.l.b16 %v7867
      %v8457 = vunpack.c.h.b16 %v7867
      %v8458 = vunpack.c.l.b16 %v7868
      %v8459 = vunpack.c.h.b16 %v7868
      %v8460 = vunpack.c.l.b16 %v7869
      %v8461 = vunpack.c.h.b16 %v7869
      %v8462 = vunpack.c.l.b16 %v7870
      %v8463 = vunpack.c.l.b16 %v7871
      %v8464 = vunpack.c.h.b16 %v7871
      %v8465 = vunpack.c.l.b16 %v7872
      %v8466 = vunpack.c.h.b16 %v7872
      %v8467 = vunpack.c.l.b16 %v7873
      %v8468 = vunpack.c.h.b16 %v7873
      %v8469 = vunpack.c.l.b16 %v7874
      %v8470 = vunpack.c.l.b16 %v7875
      %v8471 = vunpack.c.h.b16 %v7875
      %v8472 = vunpack.c.l.b16 %v7876
      %v8473 = vunpack.c.h.b16 %v7876
      %v8474 = vunpack.c.l.b16 %v7877
      %v8475 = vunpack.c.h.b16 %v7877
      %v8476 = vunpack.c.l.b16 %v7878
      %v8477 = vunpack.c.l.b16 %v7879
      %v8478 = vunpack.c.h.b16 %v7879
      %v8479 = vunpack.c.l.b16 %v7880
      %v8480 = vunpack.c.h.b16 %v7880
      %v8481 = vunpack.c.l.b16 %v7881
      %v8482 = vunpack.c.h.b16 %v7881
      %v8483 = vunpack.c.l.b16 %v7882
      %v8484 = vunpack.c.l.b16 %v7883
      %v8485 = vunpack.c.h.b16 %v7883
      %v8486 = vunpack.c.l.b16 %v7884
      %v8487 = vunpack.c.h.b16 %v7884
      %v8488 = vunpack.c.l.b16 %v7885
      %v8489 = vunpack.c.h.b16 %v7885
      %v8490 = vunpack.c.l.b16 %v7886
      %v8491 = vunpack.c.l.b16 %v7887
      %v8492 = vunpack.c.h.b16 %v7887
      %v8493 = vunpack.c.l.b16 %v7888
      %v8494 = vunpack.c.h.b16 %v7888
      %v8495 = vunpack.c.l.b16 %v7889
      %v8496 = vunpack.c.h.b16 %v7889
      %v8497 = vunpack.c.l.b16 %v7890
      %v8498 = vunpack.c.l.b16 %v7891
      %v8499 = vunpack.c.h.b16 %v7891
      %v8500 = vunpack.c.l.b16 %v7892
      %v8501 = vunpack.c.h.b16 %v7892
      %v8502 = vunpack.c.l.b16 %v7893
      %v8503 = vunpack.c.h.b16 %v7893
      %v8504 = vunpack.c.l.b16 %v7894
      %v8505 = vunpack.c.l.b16 %v7895
      %v8506 = vunpack.c.h.b16 %v7895
      %v8507 = vunpack.c.l.b16 %v7896
      %v8508 = vunpack.c.h.b16 %v7896
      %v8509 = vunpack.c.l.b16 %v7897
      %v8510 = vunpack.c.h.b16 %v7897
      %v8511 = vunpack.c.l.b16 %v7898
      %v8512 = vunpack.c.l.b16 %v7899
      %v8513 = vunpack.c.h.b16 %v7899
      %v8514 = vunpack.c.l.b16 %v7900
      %v8515 = vunpack.c.h.b16 %v7900
      %v8516 = vunpack.c.l.b16 %v7901
      %v8517 = vunpack.c.h.b16 %v7901
      %v8518 = vunpack.c.l.b16 %v7902
      %v8519 = vunpack.c.l.b16 %v7903
      %v8520 = vunpack.c.h.b16 %v7903
      %v8521 = vunpack.c.l.b16 %v7904
      %v8522 = vunpack.c.h.b16 %v7904
      %v8523 = vunpack.c.l.b16 %v7905
      %v8524 = vunpack.c.h.b16 %v7905
      %v8525 = vunpack.c.l.b16 %v7906
      %v8526 = vunpack.c.l.b16 %v7907
      %v8527 = vunpack.c.h.b16 %v7907
      %v8528 = vunpack.c.l.b16 %v7908
      %v8529 = vunpack.c.h.b16 %v7908
      %v8530 = vunpack.c.l.b16 %v7909
      %v8531 = vunpack.c.h.b16 %v7909
      %v8532 = vunpack.c.l.b16 %v7910
      %v8533 = vunpack.c.l.b16 %v7911
      %v8534 = vunpack.c.h.b16 %v7911
      %v8535 = vunpack.c.l.b16 %v7912
      %v8536 = vunpack.c.h.b16 %v7912
      %v8537 = vunpack.c.l.b16 %v7913
      %v8538 = vunpack.c.h.b16 %v7913
      %v8539 = vunpack.c.l.b16 %v7914
      %v8540 = vunpack.c.l.b16 %v7915
      %v8541 = vunpack.c.h.b16 %v7915
      %v8542 = vunpack.c.l.b16 %v7916
      %v8543 = vunpack.c.h.b16 %v7916
      %v8544 = vunpack.c.l.b16 %v7917
      %v8545 = vunpack.c.h.b16 %v7917
      %v8546 = vunpack.c.l.b16 %v7918
      %v8547 = vunpack.c.l.b16 %v7919
      %v8548 = vunpack.c.h.b16 %v7919
      %v8549 = vunpack.c.l.b16 %v7920
      %v8550 = vunpack.c.h.b16 %v7920
      %v8551 = vunpack.c.l.b16 %v7921
      %v8552 = vunpack.c.h.b16 %v7921
      %v8553 = vunpack.c.l.b16 %v7922
      %v8554 = vunpack.c.l.b16 %v7923
      %v8555 = vunpack.c.h.b16 %v7923
      %v8556 = vunpack.c.l.b16 %v7924
      %v8557 = vunpack.c.h.b16 %v7924
      %v8558 = vunpack.c.l.b16 %v7925
      %v8559 = vunpack.c.h.b16 %v7925
      %v8560 = vunpack.c.l.b16 %v7926
      %v8561 = vunpack.c.l.b16 %v7927
      %v8562 = vunpack.c.h.b16 %v7927
      %v8563 = vunpack.c.l.b16 %v7928
      %v8564 = vunpack.c.h.b16 %v7928
      %v8565 = vunpack.c.l.b16 %v7929
      %v8566 = vunpack.c.h.b16 %v7929
      %v8567 = vunpack.c.l.b16 %v7930
      %v8568 = vunpack.c.l.b16 %v7931
      %v8569 = vunpack.c.h.b16 %v7931
      %v8570 = vunpack.c.l.b16 %v7932
      %v8571 = vunpack.c.h.b16 %v7932
      %v8572 = vunpack.c.l.b16 %v7933
      %v8573 = vunpack.c.h.b16 %v7933
      %v8574 = vunpack.c.l.b16 %v7934
      %v8575 = vpack.c.b16 %v8239, %v8232
      %v8576 = vpack.c.b16 %v8240, %v8233
      %v8577 = vpack.c.b16 %v8241, %v8234
      %v8578 = vpack.c.b16 %v8242, %v8235
      %v8579 = vpack.c.b16 %v8243, %v8236
      %v8580 = vpack.c.b16 %v8244, %v8237
      %v8581 = vpack.c.b16 %v8245, %v8238
      %v8582 = vpack.c.b16 %v8253, %v8246
      %v8583 = vpack.c.b16 %v8254, %v8247
      %v8584 = vpack.c.b16 %v8255, %v8248
      %v8585 = vpack.c.b16 %v8256, %v8249
      %v8586 = vpack.c.b16 %v8257, %v8250
      %v8587 = vpack.c.b16 %v8258, %v8251
      %v8588 = vpack.c.b16 %v8259, %v8252
      %v8589 = vpack.c.b16 %v8267, %v8260
      %v8590 = vpack.c.b16 %v8268, %v8261
      %v8591 = vpack.c.b16 %v8269, %v8262
      %v8592 = vpack.c.b16 %v8270, %v8263
      %v8593 = vpack.c.b16 %v8271, %v8264
      %v8594 = vpack.c.b16 %v8272, %v8265
      %v8595 = vpack.c.b16 %v8273, %v8266
      %v8596 = vpack.c.b16 %v8281, %v8274
      %v8597 = vpack.c.b16 %v8282, %v8275
      %v8598 = vpack.c.b16 %v8283, %v8276
      %v8599 = vpack.c.b16 %v8284, %v8277
      %v8600 = vpack.c.b16 %v8285, %v8278
      %v8601 = vpack.c.b16 %v8286, %v8279
      %v8602 = vpack.c.b16 %v8287, %v8280
      %v8603 = vpack.c.b16 %v8295, %v8288
      %v8604 = vpack.c.b16 %v8296, %v8289
      %v8605 = vpack.c.b16 %v8297, %v8290
      %v8606 = vpack.c.b16 %v8298, %v8291
      %v8607 = vpack.c.b16 %v8299, %v8292
      %v8608 = vpack.c.b16 %v8300, %v8293
      %v8609 = vpack.c.b16 %v8301, %v8294
      %v8610 = vpack.c.b16 %v8309, %v8302
      %v8611 = vpack.c.b16 %v8310, %v8303
      %v8612 = vpack.c.b16 %v8311, %v8304
      %v8613 = vpack.c.b16 %v8312, %v8305
      %v8614 = vpack.c.b16 %v8313, %v8306
      %v8615 = vpack.c.b16 %v8314, %v8307
      %v8616 = vpack.c.b16 %v8315, %v8308
      %v8617 = vpack.c.b16 %v8323, %v8316
      %v8618 = vpack.c.b16 %v8324, %v8317
      %v8619 = vpack.c.b16 %v8325, %v8318
      %v8620 = vpack.c.b16 %v8326, %v8319
      %v8621 = vpack.c.b16 %v8327, %v8320
      %v8622 = vpack.c.b16 %v8328, %v8321
      %v8623 = vpack.c.b16 %v8329, %v8322
      %v8624 = vpack.c.b16 %v8337, %v8330
      %v8625 = vpack.c.b16 %v8338, %v8331
      %v8626 = vpack.c.b16 %v8339, %v8332
      %v8627 = vpack.c.b16 %v8340, %v8333
      %v8628 = vpack.c.b16 %v8341, %v8334
      %v8629 = vpack.c.b16 %v8342, %v8335
      %v8630 = vpack.c.b16 %v8343, %v8336
      %v8631 = vpack.c.b16 %v8351, %v8344
      %v8632 = vpack.c.b16 %v8352, %v8345
      %v8633 = vpack.c.b16 %v8353, %v8346
      %v8634 = vpack.c.b16 %v8354, %v8347
      %v8635 = vpack.c.b16 %v8355, %v8348
      %v8636 = vpack.c.b16 %v8356, %v8349
      %v8637 = vpack.c.b16 %v8357, %v8350
      %v8638 = vpack.c.b16 %v8365, %v8358
      %v8639 = vpack.c.b16 %v8366, %v8359
      %v8640 = vpack.c.b16 %v8367, %v8360
      %v8641 = vpack.c.b16 %v8368, %v8361
      %v8642 = vpack.c.b16 %v8369, %v8362
      %v8643 = vpack.c.b16 %v8370, %v8363
      %v8644 = vpack.c.b16 %v8371, %v8364
      %v8645 = vpack.c.b16 %v8379, %v8372
      %v8646 = vpack.c.b16 %v8380, %v8373
      %v8647 = vpack.c.b16 %v8381, %v8374
      %v8648 = vpack.c.b16 %v8382, %v8375
      %v8649 = vpack.c.b16 %v8383, %v8376
      %v8650 = vpack.c.b16 %v8384, %v8377
      %v8651 = vpack.c.b16 %v8385, %v8378
      %v8652 = vpack.c.b16 %v8393, %v8386
      %v8653 = vpack.c.b16 %v8394, %v8387
      %v8654 = vpack.c.b16 %v8395, %v8388
      %v8655 = vpack.c.b16 %v8396, %v8389
      %v8656 = vpack.c.b16 %v8397, %v8390
      %v8657 = vpack.c.b16 %v8398, %v8391
      %v8658 = vpack.c.b16 %v8399, %v8392
      %v8659 = vpack.c.b16 %v8407, %v8400
      %v8660 = vpack.c.b16 %v8408, %v8401
      %v8661 = vpack.c.b16 %v8409, %v8402
      %v8662 = vpack.c.b16 %v8410, %v8403
      %v8663 = vpack.c.b16 %v8411, %v8404
      %v8664 = vpack.c.b16 %v8412, %v8405
      %v8665 = vpack.c.b16 %v8413, %v8406
      %v8666 = vpack.c.b16 %v8421, %v8414
      %v8667 = vpack.c.b16 %v8422, %v8415
      %v8668 = vpack.c.b16 %v8423, %v8416
      %v8669 = vpack.c.b16 %v8424, %v8417
      %v8670 = vpack.c.b16 %v8425, %v8418
      %v8671 = vpack.c.b16 %v8426, %v8419
      %v8672 = vpack.c.b16 %v8427, %v8420
      %v8673 = vpack.c.b16 %v8435, %v8428
      %v8674 = vpack.c.b16 %v8436, %v8429
      %v8675 = vpack.c.b16 %v8437, %v8430
      %v8676 = vpack.c.b16 %v8438, %v8431
      %v8677 = vpack.c.b16 %v8439, %v8432
      %v8678 = vpack.c.b16 %v8440, %v8433
      %v8679 = vpack.c.b16 %v8441, %v8434
      %v8680 = vpack.c.b16 %v8449, %v8442
      %v8681 = vpack.c.b16 %v8450, %v8443
      %v8682 = vpack.c.b16 %v8451, %v8444
      %v8683 = vpack.c.b16 %v8452, %v8445
      %v8684 = vpack.c.b16 %v8453, %v8446
      %v8685 = vpack.c.b16 %v8454, %v8447
      %v8686 = vpack.c.b16 %v8455, %v8448
      %v8687 = vpack.c.b16 %v8463, %v8456
      %v8688 = vpack.c.b16 %v8464, %v8457
      %v8689 = vpack.c.b16 %v8465, %v8458
      %v8690 = vpack.c.b16 %v8466, %v8459
      %v8691 = vpack.c.b16 %v8467, %v8460
      %v8692 = vpack.c.b16 %v8468, %v8461
      %v8693 = vpack.c.b16 %v8469, %v8462
      %v8694 = vpack.c.b16 %v8477, %v8470
      %v8695 = vpack.c.b16 %v8478, %v8471
      %v8696 = vpack.c.b16 %v8479, %v8472
      %v8697 = vpack.c.b16 %v8480, %v8473
      %v8698 = vpack.c.b16 %v8481, %v8474
      %v8699 = vpack.c.b16 %v8482, %v8475
      %v8700 = vpack.c.b16 %v8483, %v8476
      %v8701 = vpack.c.b16 %v8491, %v8484
      %v8702 = vpack.c.b16 %v8492, %v8485
      %v8703 = vpack.c.b16 %v8493, %v8486
      %v8704 = vpack.c.b16 %v8494, %v8487
      %v8705 = vpack.c.b16 %v8495, %v8488
      %v8706 = vpack.c.b16 %v8496, %v8489
      %v8707 = vpack.c.b16 %v8497, %v8490
      %v8708 = vpack.c.b16 %v8505, %v8498
      %v8709 = vpack.c.b16 %v8506, %v8499
      %v8710 = vpack.c.b16 %v8507, %v8500
      %v8711 = vpack.c.b16 %v8508, %v8501
      %v8712 = vpack.c.b16 %v8509, %v8502
      %v8713 = vpack.c.b16 %v8510, %v8503
      %v8714 = vpack.c.b16 %v8511, %v8504
      %v8715 = vpack.c.b16 %v8519, %v8512
      %v8716 = vpack.c.b16 %v8520, %v8513
      %v8717 = vpack.c.b16 %v8521, %v8514
      %v8718 = vpack.c.b16 %v8522, %v8515
      %v8719 = vpack.c.b16 %v8523, %v8516
      %v8720 = vpack.c.b16 %v8524, %v8517
      %v8721 = vpack.c.b16 %v8525, %v8518
      %v8722 = vpack.c.b16 %v8533, %v8526
      %v8723 = vpack.c.b16 %v8534, %v8527
      %v8724 = vpack.c.b16 %v8535, %v8528
      %v8725 = vpack.c.b16 %v8536, %v8529
      %v8726 = vpack.c.b16 %v8537, %v8530
      %v8727 = vpack.c.b16 %v8538, %v8531
      %v8728 = vpack.c.b16 %v8539, %v8532
      %v8729 = vpack.c.b16 %v8547, %v8540
      %v8730 = vpack.c.b16 %v8548, %v8541
      %v8731 = vpack.c.b16 %v8549, %v8542
      %v8732 = vpack.c.b16 %v8550, %v8543
      %v8733 = vpack.c.b16 %v8551, %v8544
      %v8734 = vpack.c.b16 %v8552, %v8545
      %v8735 = vpack.c.b16 %v8553, %v8546
      %v8736 = vpack.c.b16 %v8561, %v8554
      %v8737 = vpack.c.b16 %v8562, %v8555
      %v8738 = vpack.c.b16 %v8563, %v8556
      %v8739 = vpack.c.b16 %v8564, %v8557
      %v8740 = vpack.c.b16 %v8565, %v8558
      %v8741 = vpack.c.b16 %v8566, %v8559
      %v8742 = vpack.c.b16 %v8567, %v8560
      %v8743 = vpack.c.b16 %v8568, %v8568
      %v8744 = vpack.c.b16 %v8569, %v8569
      %v8745 = vpack.c.b16 %v8570, %v8570
      %v8746 = vpack.c.b16 %v8571, %v8571
      %v8747 = vpack.c.b16 %v8572, %v8572
      %v8748 = vpack.c.b16 %v8573, %v8573
      %v8749 = vpack.c.b16 %v8574, %v8574
      %v8919 = vsel %vm4589, %v7939, 0
      %v8922 = vsel %vm4589, %v7943, 0
      %v8925 = vsel %vm4589, %v7947, 0
      %v8928 = vsel %vm4589, %v7951, 0
      %v8931 = vsel %vm4589, %v7955, 0
      %v8934 = vsel %vm4589, %v7959, 0
      %v8937 = vsel %vm4589, %v7963, 0
      %v8940 = vsel %vm4589, %v7967, 0
      %v8943 = vsel %vm4589, %v7971, 0
      %v8946 = vsel %vm4589, %v7975, 0
      %v8949 = vsel %vm4589, %v7979, 0
      %v8952 = vsel %vm4589, %v7983, 0
      %v8955 = vsel %vm4589, %v7987, 0
      %v8958 = vsel %vm4589, %v7991, 0
      %v8961 = vsel %vm4589, %v7995, 0
      %v8964 = vsel %vm4589, %v7999, 0
      %v8967 = vsel %vm4638, %v8743, 0
      %v8970 = vsel %vm4638, %v8744, 0
      %v8973 = vsel %vm4638, %v8745, 0
      %v8976 = vsel %vm4638, %v8746, 0
      %v8979 = vsel %vm4638, %v8747, 0
      %v8982 = vsel %vm4638, %v8748, 0
      %v8985 = vsel %vm4638, %v8749, 0
      %8987 = vmatprep.subr.bf16.mxu0 %v8576
      %8988 = vmatpush1.bf16.msra.mxu0 %v8575
      %8989 = vmatprep.subr.bf16.mxu0 %v8583
      %8990 = vmatpush1.bf16.msra.mxu0 %v8582
      %8991 = vmatprep.subr.bf16.mxu0 %v8590
      %8992 = vmatpush1.bf16.msra.mxu0 %v8589
      %8993 = vmatprep.subr.bf16.mxu0 %v8597
      %8994 = vmatpush1.bf16.msra.mxu0 %v8596
      %8995 = vmatprep.subr.bf16.mxu0 %v8604
      %8996 = vmatpush1.bf16.msra.mxu0 %v8603
      %8997 = vmatprep.subr.bf16.mxu0 %v8611
      %8998 = vmatpush1.bf16.msra.mxu0 %v8610
      %8999 = vmatprep.subr.bf16.mxu0 %v8618
      %9000 = vmatpush1.bf16.msra.mxu0 %v8617
      %9001 = vmatprep.subr.bf16.mxu0 %v8625
      %9002 = vmatpush1.bf16.msra.mxu0 %v8624
      %9003 = vmatprep.subr.bf16.mxu0 %v8632
      %9004 = vmatpush1.bf16.msra.mxu0 %v8631
      %9005 = vmatprep.subr.bf16.mxu0 %v8639
      %9006 = vmatpush1.bf16.msra.mxu0 %v8638
      %9007 = vmatprep.subr.bf16.mxu0 %v8646
      %9008 = vmatpush1.bf16.msra.mxu0 %v8645
      %9009 = vmatprep.subr.bf16.mxu0 %v8653
      %9010 = vmatpush1.bf16.msra.mxu0 %v8652
      %9011 = vmatprep.subr.bf16.mxu0 %v8660
      %9012 = vmatpush1.bf16.msra.mxu0 %v8659
      %9013 = vmatprep.subr.bf16.mxu0 %v8667
      %9014 = vmatpush1.bf16.msra.mxu0 %v8666
      %9015 = vmatprep.subr.bf16.mxu0 %v8674
      %9016 = vmatpush1.bf16.msra.mxu0 %v8673
      %9017 = vmatprep.subr.bf16.mxu0 %v8681
      %9018 = vmatpush1.bf16.msra.mxu0 %v8680
      %9019 = vmatprep.mubr.bf16.mxu0 %v7937
      %9020 = vmatmul.mubr.bf16.gmra.mrb[0].mxu0 %v7936
      %v9021 = vpop.f32.mrb[0].mxu0
      %v9022 = vadd.f32 %v8004, %v9021
      %v9023 = vpop.f32.mrb[0].mxu0
      %v9024 = vadd.f32 %v8008, %v9023
      %v9025 = vpop.f32.mrb[0].mxu0
      %v9026 = vadd.f32 %v8004, %v9025
      %v9027 = vpop.f32.mrb[0].mxu0
      %v9028 = vadd.f32 %v8008, %v9027
      %9029 = vmatprep.mubr.bf16.mxu0 %v7941
      %9030 = vmatmul.mubr.bf16.gmra.mrb[0].mxu0 %v7940
      %v9031 = vpop.f32.mrb[0].mxu0
      %v9032 = vadd.f32 %v8004, %v9031
      %v9033 = vpop.f32.mrb[0].mxu0
      %v9034 = vadd.f32 %v8008, %v9033
      %v9035 = vpop.f32.mrb[0].mxu0
      %v9036 = vadd.f32 %v8004, %v9035
      %v9037 = vpop.f32.mrb[0].mxu0
      %v9038 = vadd.f32 %v8008, %v9037
      %9039 = vmatprep.mubr.bf16.mxu0 %v7945
      %9040 = vmatmul.mubr.bf16.gmra.mrb[0].mxu0 %v7944
      %v9041 = vpop.f32.mrb[0].mxu0
      %v9042 = vadd.f32 %v8004, %v9041
      %v9043 = vpop.f32.mrb[0].mxu0
      %v9044 = vadd.f32 %v8008, %v9043
      %v9045 = vpop.f32.mrb[0].mxu0
      %v9046 = vadd.f32 %v8004, %v9045
      %v9047 = vpop.f32.mrb[0].mxu0
      %v9048 = vadd.f32 %v8008, %v9047
      %9049 = vmatprep.mubr.bf16.mxu0 %v7949
      %9050 = vmatmul.mubr.bf16.gmra.mrb[0].mxu0 %v7948
      %v9051 = vpop.f32.mrb[0].mxu0
      %v9052 = vadd.f32 %v8004, %v9051
      %v9053 = vpop.f32.mrb[0].mxu0
      %v9054 = vadd.f32 %v8008, %v9053
      %v9055 = vpop.f32.mrb[0].mxu0
      %v9056 = vadd.f32 %v8004, %v9055
      %v9057 = vpop.f32.mrb[0].mxu0
      %v9058 = vadd.f32 %v8008, %v9057
      %9059 = vmatprep.mubr.bf16.mxu0 %v7953
      %9060 = vmatmul.mubr.bf16.gmra.mrb[0].mxu0 %v7952
      %v9061 = vpop.f32.mrb[0].mxu0
      %v9062 = vadd.f32 %v8004, %v9061
      %v9063 = vpop.f32.mrb[0].mxu0
      %v9064 = vadd.f32 %v8008, %v9063
      %v9065 = vpop.f32.mrb[0].mxu0
      %v9066 = vadd.f32 %v8004, %v9065
      %v9067 = vpop.f32.mrb[0].mxu0
      %v9068 = vadd.f32 %v8008, %v9067
      %9069 = vmatprep.mubr.bf16.mxu0 %v7957
      %9070 = vmatmul.mubr.bf16.gmra.mrb[0].mxu0 %v7956
      %v9071 = vpop.f32.mrb[0].mxu0
      %v9072 = vadd.f32 %v8004, %v9071
      %v9073 = vpop.f32.mrb[0].mxu0
      %v9074 = vadd.f32 %v8008, %v9073
      %v9075 = vpop.f32.mrb[0].mxu0
      %v9076 = vadd.f32 %v8004, %v9075
      %v9077 = vpop.f32.mrb[0].mxu0
      %v9078 = vadd.f32 %v8008, %v9077
      %9079 = vmatprep.mubr.bf16.mxu0 %v7961
      %9080 = vmatmul.mubr.bf16.gmra.mrb[0].mxu0 %v7960
      %v9081 = vpop.f32.mrb[0].mxu0
      %v9082 = vadd.f32 %v8004, %v9081
      %v9083 = vpop.f32.mrb[0].mxu0
      %v9084 = vadd.f32 %v8008, %v9083
      %v9085 = vpop.f32.mrb[0].mxu0
      %v9086 = vadd.f32 %v8004, %v9085
      %v9087 = vpop.f32.mrb[0].mxu0
      %v9088 = vadd.f32 %v8008, %v9087
      %9089 = vmatprep.mubr.bf16.mxu0 %v7965
      %9090 = vmatmul.mubr.bf16.gmra.mrb[0].mxu0 %v7964
      %v9091 = vpop.f32.mrb[0].mxu0
      %v9092 = vadd.f32 %v8004, %v9091
      %v9093 = vpop.f32.mrb[0].mxu0
      %v9094 = vadd.f32 %v8008, %v9093
      %v9095 = vpop.f32.mrb[0].mxu0
      %v9096 = vadd.f32 %v8004, %v9095
      %v9097 = vpop.f32.mrb[0].mxu0
      %v9098 = vadd.f32 %v8008, %v9097
      %9099 = vmatprep.mubr.bf16.mxu0 %v7969
      %9100 = vmatmul.mubr.bf16.gmra.mrb[0].mxu0 %v7968
      %v9101 = vpop.f32.mrb[0].mxu0
      %v9102 = vadd.f32 %v8004, %v9101
      %v9103 = vpop.f32.mrb[0].mxu0
      %v9104 = vadd.f32 %v8008, %v9103
      %v9105 = vpop.f32.mrb[0].mxu0
      %v9106 = vadd.f32 %v8004, %v9105
      %v9107 = vpop.f32.mrb[0].mxu0
      %v9108 = vadd.f32 %v8008, %v9107
      %9109 = vmatprep.mubr.bf16.mxu0 %v7973
      %9110 = vmatmul.mubr.bf16.gmra.mrb[0].mxu0 %v7972
      %v9111 = vpop.f32.mrb[0].mxu0
      %v9112 = vadd.f32 %v8004, %v9111
      %v9113 = vpop.f32.mrb[0].mxu0
      %v9114 = vadd.f32 %v8008, %v9113
      %v9115 = vpop.f32.mrb[0].mxu0
      %v9116 = vadd.f32 %v8004, %v9115
      %v9117 = vpop.f32.mrb[0].mxu0
      %v9118 = vadd.f32 %v8008, %v9117
      %9119 = vmatprep.mubr.bf16.mxu0 %v7977
      %9120 = vmatmul.mubr.bf16.gmra.mrb[0].mxu0 %v7976
      %v9121 = vpop.f32.mrb[0].mxu0
      %v9122 = vadd.f32 %v8004, %v9121
      %v9123 = vpop.f32.mrb[0].mxu0
      %v9124 = vadd.f32 %v8008, %v9123
      %v9125 = vpop.f32.mrb[0].mxu0
      %v9126 = vadd.f32 %v8004, %v9125
      %v9127 = vpop.f32.mrb[0].mxu0
      %v9128 = vadd.f32 %v8008, %v9127
      %9129 = vmatprep.mubr.bf16.mxu0 %v7981
      %9130 = vmatmul.mubr.bf16.gmra.mrb[0].mxu0 %v7980
      %v9131 = vpop.f32.mrb[0].mxu0
      %v9132 = vadd.f32 %v8004, %v9131
      %v9133 = vpop.f32.mrb[0].mxu0
      %v9134 = vadd.f32 %v8008, %v9133
      %v9135 = vpop.f32.mrb[0].mxu0
      %v9136 = vadd.f32 %v8004, %v9135
      %v9137 = vpop.f32.mrb[0].mxu0
      %v9138 = vadd.f32 %v8008, %v9137
      %9139 = vmatprep.mubr.bf16.mxu0 %v7985
      %9140 = vmatmul.mubr.bf16.gmra.mrb[0].mxu0 %v7984
      %v9141 = vpop.f32.mrb[0].mxu0
      %v9142 = vadd.f32 %v8004, %v9141
      %v9143 = vpop.f32.mrb[0].mxu0
      %v9144 = vadd.f32 %v8008, %v9143
      %v9145 = vpop.f32.mrb[0].mxu0
      %v9146 = vadd.f32 %v8004, %v9145
      %v9147 = vpop.f32.mrb[0].mxu0
      %v9148 = vadd.f32 %v8008, %v9147
      %9149 = vmatprep.mubr.bf16.mxu0 %v7989
      %9150 = vmatmul.mubr.bf16.gmra.mrb[0].mxu0 %v7988
      %v9151 = vpop.f32.mrb[0].mxu0
      %v9152 = vadd.f32 %v8004, %v9151
      %v9153 = vpop.f32.mrb[0].mxu0
      %v9154 = vadd.f32 %v8008, %v9153
      %v9155 = vpop.f32.mrb[0].mxu0
      %v9156 = vadd.f32 %v8004, %v9155
      %v9157 = vpop.f32.mrb[0].mxu0
      %v9158 = vadd.f32 %v8008, %v9157
      %9159 = vmatprep.mubr.bf16.mxu0 %v7993
      %9160 = vmatmul.mubr.bf16.gmra.mrb[0].mxu0 %v7992
      %v9161 = vpop.f32.mrb[0].mxu0
      %v9162 = vadd.f32 %v8004, %v9161
      %v9163 = vpop.f32.mrb[0].mxu0
      %v9164 = vadd.f32 %v8008, %v9163
      %v9165 = vpop.f32.mrb[0].mxu0
      %v9166 = vadd.f32 %v8004, %v9165
      %v9167 = vpop.f32.mrb[0].mxu0
      %v9168 = vadd.f32 %v8008, %v9167
      %9169 = vmatprep.mubr.bf16.mxu0 %v7997
      %9170 = vmatmul.mubr.bf16.gmra.mrb[0].mxu0 %v7996
      %v9171 = vpop.f32.mrb[0].mxu0
      %v9172 = vadd.f32 %v8004, %v9171
      %v9173 = vpop.f32.mrb[0].mxu0
      %v9174 = vadd.f32 %v8008, %v9173
      %v9175 = vpop.f32.mrb[0].mxu0
      %v9176 = vadd.f32 %v8004, %v9175
      %v9177 = vpop.f32.mrb[0].mxu0
      %v9178 = vadd.f32 %v8008, %v9177
      %9179 = vdwg.mxu0
      %9180 = vmatprep.subr.bf16.mxu0 %v8688
      %9181 = vmatpush1.bf16.msra.mxu0 %v8687
      %9182 = vmatprep.subr.bf16.mxu0 %v8695
      %9183 = vmatpush1.bf16.msra.mxu0 %v8694
      %9184 = vmatprep.subr.bf16.mxu0 %v8702
      %9185 = vmatpush1.bf16.msra.mxu0 %v8701
      %9186 = vmatprep.subr.bf16.mxu0 %v8709
      %9187 = vmatpush1.bf16.msra.mxu0 %v8708
      %9188 = vmatprep.subr.bf16.mxu0 %v8716
      %9189 = vmatpush1.bf16.msra.mxu0 %v8715
      %9190 = vmatprep.subr.bf16.mxu0 %v8723
      %9191 = vmatpush1.bf16.msra.mxu0 %v8722
      %9192 = vmatprep.subr.bf16.mxu0 %v8730
      %9193 = vmatpush1.bf16.msra.mxu0 %v8729
      %9194 = vmatprep.subr.bf16.mxu0 %v8737
      %9195 = vmatpush1.bf16.msra.mxu0 %v8736
      %9196 = vmatprep.subr.bf16.mxu0 %v8970
      %9197 = vmatpush1.bf16.msra.mxu0 %v8967
      %9198 = vmatprep.subr.bf16.mxu0 0
      %9199 = vmatpush1.bf16.msra.mxu0 0
      %9200 = vmatprep.subr.bf16.mxu0 0
      %9201 = vmatpush1.bf16.msra.mxu0 0
      %9202 = vmatprep.subr.bf16.mxu0 0
      %9203 = vmatpush1.bf16.msra.mxu0 0
      %9204 = vmatprep.subr.bf16.mxu0 0
      %9205 = vmatpush1.bf16.msra.mxu0 0
      %9206 = vmatprep.subr.bf16.mxu0 0
      %9207 = vmatpush1.bf16.msra.mxu0 0
      %9208 = vmatprep.subr.bf16.mxu0 0
      %9209 = vmatpush1.bf16.msra.mxu0 0
      %9210 = vmatprep.subr.bf16.mxu0 0
      %9211 = vmatpush1.bf16.msra.mxu0 0
      %9212 = vmatprep.mubr.bf16.mxu0 %v8919
      %9213 = vmatmul.mubr.bf16.gmra.mrb[0].mxu0 %v7938
      %v9214 = vpop.f32.mrb[0].mxu0
      %v9215 = vadd.f32 %v9022, %v9214
      %v9216 = vpop.f32.mrb[0].mxu0
      %v9217 = vadd.f32 %v9024, %v9216
      %v9218 = vpop.f32.mrb[0].mxu0
      %v9219 = vadd.f32 %v9026, %v9218
      %v9220 = vpop.f32.mrb[0].mxu0
      %v9221 = vadd.f32 %v9028, %v9220
      %9222 = vmatprep.mubr.bf16.mxu0 %v8922
      %9223 = vmatmul.mubr.bf16.gmra.mrb[0].mxu0 %v7942
      %v9224 = vpop.f32.mrb[0].mxu0
      %v9225 = vadd.f32 %v9032, %v9224
      %v9226 = vpop.f32.mrb[0].mxu0
      %v9227 = vadd.f32 %v9034, %v9226
      %v9228 = vpop.f32.mrb[0].mxu0
      %v9229 = vadd.f32 %v9036, %v9228
      %v9230 = vpop.f32.mrb[0].mxu0
      %v9231 = vadd.f32 %v9038, %v9230
      %9232 = vmatprep.mubr.bf16.mxu0 %v8925
      %9233 = vmatmul.mubr.bf16.gmra.mrb[0].mxu0 %v7946
      %v9234 = vpop.f32.mrb[0].mxu0
      %v9235 = vadd.f32 %v9042, %v9234
      %v9236 = vpop.f32.mrb[0].mxu0
      %v9237 = vadd.f32 %v9044, %v9236
      %v9238 = vpop.f32.mrb[0].mxu0
      %v9239 = vadd.f32 %v9046, %v9238
      %v9240 = vpop.f32.mrb[0].mxu0
      %v9241 = vadd.f32 %v9048, %v9240
      %9242 = vmatprep.mubr.bf16.mxu0 %v8928
      %9243 = vmatmul.mubr.bf16.gmra.mrb[0].mxu0 %v7950
      %v9244 = vpop.f32.mrb[0].mxu0
      %v9245 = vadd.f32 %v9052, %v9244
      %v9246 = vpop.f32.mrb[0].mxu0
      %v9247 = vadd.f32 %v9054, %v9246
      %v9248 = vpop.f32.mrb[0].mxu0
      %v9249 = vadd.f32 %v9056, %v9248
      %v9250 = vpop.f32.mrb[0].mxu0
      %v9251 = vadd.f32 %v9058, %v9250
      %9252 = vmatprep.mubr.bf16.mxu0 %v8931
      %9253 = vmatmul.mubr.bf16.gmra.mrb[0].mxu0 %v7954
      %v9254 = vpop.f32.mrb[0].mxu0
      %v9255 = vadd.f32 %v9062, %v9254
      %v9256 = vpop.f32.mrb[0].mxu0
      %v9257 = vadd.f32 %v9064, %v9256
      %v9258 = vpop.f32.mrb[0].mxu0
      %v9259 = vadd.f32 %v9066, %v9258
      %v9260 = vpop.f32.mrb[0].mxu0
      %v9261 = vadd.f32 %v9068, %v9260
      %9262 = vmatprep.mubr.bf16.mxu0 %v8934
      %9263 = vmatmul.mubr.bf16.gmra.mrb[0].mxu0 %v7958
      %v9264 = vpop.f32.mrb[0].mxu0
      %v9265 = vadd.f32 %v9072, %v9264
      %v9266 = vpop.f32.mrb[0].mxu0
      %v9267 = vadd.f32 %v9074, %v9266
      %v9268 = vpop.f32.mrb[0].mxu0
      %v9269 = vadd.f32 %v9076, %v9268
      %v9270 = vpop.f32.mrb[0].mxu0
      %v9271 = vadd.f32 %v9078, %v9270
      %9272 = vmatprep.mubr.bf16.mxu0 %v8937
      %9273 = vmatmul.mubr.bf16.gmra.mrb[0].mxu0 %v7962
      %v9274 = vpop.f32.mrb[0].mxu0
      %v9275 = vadd.f32 %v9082, %v9274
      %v9276 = vpop.f32.mrb[0].mxu0
      %v9277 = vadd.f32 %v9084, %v9276
      %v9278 = vpop.f32.mrb[0].mxu0
      %v9279 = vadd.f32 %v9086, %v9278
      %v9280 = vpop.f32.mrb[0].mxu0
      %v9281 = vadd.f32 %v9088, %v9280
      %9282 = vmatprep.mubr.bf16.mxu0 %v8940
      %9283 = vmatmul.mubr.bf16.gmra.mrb[0].mxu0 %v7966
      %v9284 = vpop.f32.mrb[0].mxu0
      %v9285 = vadd.f32 %v9092, %v9284
      %v9286 = vpop.f32.mrb[0].mxu0
      %v9287 = vadd.f32 %v9094, %v9286
      %v9288 = vpop.f32.mrb[0].mxu0
      %v9289 = vadd.f32 %v9096, %v9288
      %v9290 = vpop.f32.mrb[0].mxu0
      %v9291 = vadd.f32 %v9098, %v9290
      %9292 = vmatprep.mubr.bf16.mxu0 %v8943
      %9293 = vmatmul.mubr.bf16.gmra.mrb[0].mxu0 %v7970
      %v9294 = vpop.f32.mrb[0].mxu0
      %v9295 = vadd.f32 %v9102, %v9294
      %v9296 = vpop.f32.mrb[0].mxu0
      %v9297 = vadd.f32 %v9104, %v9296
      %v9298 = vpop.f32.mrb[0].mxu0
      %v9299 = vadd.f32 %v9106, %v9298
      %v9300 = vpop.f32.mrb[0].mxu0
      %v9301 = vadd.f32 %v9108, %v9300
      %9302 = vmatprep.mubr.bf16.mxu0 %v8946
      %9303 = vmatmul.mubr.bf16.gmra.mrb[0].mxu0 %v7974
      %v9304 = vpop.f32.mrb[0].mxu0
      %v9305 = vadd.f32 %v9112, %v9304
      %v9306 = vpop.f32.mrb[0].mxu0
      %v9307 = vadd.f32 %v9114, %v9306
      %v9308 = vpop.f32.mrb[0].mxu0
      %v9309 = vadd.f32 %v9116, %v9308
      %v9310 = vpop.f32.mrb[0].mxu0
      %v9311 = vadd.f32 %v9118, %v9310
      %9312 = vmatprep.mubr.bf16.mxu0 %v8949
      %9313 = vmatmul.mubr.bf16.gmra.mrb[0].mxu0 %v7978
      %v9314 = vpop.f32.mrb[0].mxu0
      %v9315 = vadd.f32 %v9122, %v9314
      %v9316 = vpop.f32.mrb[0].mxu0
      %v9317 = vadd.f32 %v9124, %v9316
      %v9318 = vpop.f32.mrb[0].mxu0
      %v9319 = vadd.f32 %v9126, %v9318
      %v9320 = vpop.f32.mrb[0].mxu0
      %v9321 = vadd.f32 %v9128, %v9320
      %9322 = vmatprep.mubr.bf16.mxu0 %v8952
      %9323 = vmatmul.mubr.bf16.gmra.mrb[0].mxu0 %v7982
      %v9324 = vpop.f32.mrb[0].mxu0
      %v9325 = vadd.f32 %v9132, %v9324
      %v9326 = vpop.f32.mrb[0].mxu0
      %v9327 = vadd.f32 %v9134, %v9326
      %v9328 = vpop.f32.mrb[0].mxu0
      %v9329 = vadd.f32 %v9136, %v9328
      %v9330 = vpop.f32.mrb[0].mxu0
      %v9331 = vadd.f32 %v9138, %v9330
      %9332 = vmatprep.mubr.bf16.mxu0 %v8955
      %9333 = vmatmul.mubr.bf16.gmra.mrb[0].mxu0 %v7986
      %v9334 = vpop.f32.mrb[0].mxu0
      %v9335 = vadd.f32 %v9142, %v9334
      %v9336 = vpop.f32.mrb[0].mxu0
      %v9337 = vadd.f32 %v9144, %v9336
      %v9338 = vpop.f32.mrb[0].mxu0
      %v9339 = vadd.f32 %v9146, %v9338
      %v9340 = vpop.f32.mrb[0].mxu0
      %v9341 = vadd.f32 %v9148, %v9340
      %9342 = vmatprep.mubr.bf16.mxu0 %v8958
      %9343 = vmatmul.mubr.bf16.gmra.mrb[0].mxu0 %v7990
      %v9344 = vpop.f32.mrb[0].mxu0
      %v9345 = vadd.f32 %v9152, %v9344
      %v9346 = vpop.f32.mrb[0].mxu0
      %v9347 = vadd.f32 %v9154, %v9346
      %v9348 = vpop.f32.mrb[0].mxu0
      %v9349 = vadd.f32 %v9156, %v9348
      %v9350 = vpop.f32.mrb[0].mxu0
      %v9351 = vadd.f32 %v9158, %v9350
      %9352 = vmatprep.mubr.bf16.mxu0 %v8961
      %9353 = vmatmul.mubr.bf16.gmra.mrb[0].mxu0 %v7994
      %v9354 = vpop.f32.mrb[0].mxu0
      %v9355 = vadd.f32 %v9162, %v9354
      %v9356 = vpop.f32.mrb[0].mxu0
      %v9357 = vadd.f32 %v9164, %v9356
      %v9358 = vpop.f32.mrb[0].mxu0
      %v9359 = vadd.f32 %v9166, %v9358
      %v9360 = vpop.f32.mrb[0].mxu0
      %v9361 = vadd.f32 %v9168, %v9360
      %9362 = vmatprep.mubr.bf16.mxu0 %v8964
      %9363 = vmatmul.mubr.bf16.gmra.mrb[0].mxu0 %v7998
      %v9364 = vpop.f32.mrb[0].mxu0
      %v9365 = vadd.f32 %v9172, %v9364
      %v9366 = vpop.f32.mrb[0].mxu0
      %v9367 = vadd.f32 %v9174, %v9366
      %v9368 = vpop.f32.mrb[0].mxu0
      %v9369 = vadd.f32 %v9176, %v9368
      %v9370 = vpop.f32.mrb[0].mxu0
      %v9371 = vadd.f32 %v9178, %v9370
      %9372 = vdwg.mxu0
      %9373 = vmatprep.subr.bf16.mxu0 %v8578
      %9374 = vmatpush1.bf16.msra.mxu0 %v8577
      %9375 = vmatprep.subr.bf16.mxu0 %v8585
      %9376 = vmatpush1.bf16.msra.mxu0 %v8584
      %9377 = vmatprep.subr.bf16.mxu0 %v8592
      %9378 = vmatpush1.bf16.msra.mxu0 %v8591
      %9379 = vmatprep.subr.bf16.mxu0 %v8599
      %9380 = vmatpush1.bf16.msra.mxu0 %v8598
      %9381 = vmatprep.subr.bf16.mxu0 %v8606
      %9382 = vmatpush1.bf16.msra.mxu0 %v8605
      %9383 = vmatprep.subr.bf16.mxu0 %v8613
      %9384 = vmatpush1.bf16.msra.mxu0 %v8612
      %9385 = vmatprep.subr.bf16.mxu0 %v8620
      %9386 = vmatpush1.bf16.msra.mxu0 %v8619
      %9387 = vmatprep.subr.bf16.mxu0 %v8627
      %9388 = vmatpush1.bf16.msra.mxu0 %v8626
      %9389 = vmatprep.subr.bf16.mxu0 %v8634
      %9390 = vmatpush1.bf16.msra.mxu0 %v8633
      %9391 = vmatprep.subr.bf16.mxu0 %v8641
      %9392 = vmatpush1.bf16.msra.mxu0 %v8640
      %9393 = vmatprep.subr.bf16.mxu0 %v8648
      %9394 = vmatpush1.bf16.msra.mxu0 %v8647
      %9395 = vmatprep.subr.bf16.mxu0 %v8655
      %9396 = vmatpush1.bf16.msra.mxu0 %v8654
      %9397 = vmatprep.subr.bf16.mxu0 %v8662
      %9398 = vmatpush1.bf16.msra.mxu0 %v8661
      %9399 = vmatprep.subr.bf16.mxu0 %v8669
      %9400 = vmatpush1.bf16.msra.mxu0 %v8668
      %9401 = vmatprep.subr.bf16.mxu0 %v8676
      %9402 = vmatpush1.bf16.msra.mxu0 %v8675
      %9403 = vmatprep.subr.bf16.mxu0 %v8683
      %9404 = vmatpush1.bf16.msra.mxu0 %v8682
      %9405 = vmatprep.mubr.bf16.mxu0 %v7937
      %9406 = vmatmul.mubr.bf16.gmra.mrb[0].mxu0 %v7936
      %v9407 = vpop.f32.mrb[0].mxu0
      %v9408 = vadd.f32 %v8012, %v9407
      %v9409 = vpop.f32.mrb[0].mxu0
      %v9410 = vadd.f32 %v8016, %v9409
      %v9411 = vpop.f32.mrb[0].mxu0
      %v9412 = vadd.f32 %v8012, %v9411
      %v9413 = vpop.f32.mrb[0].mxu0
      %v9414 = vadd.f32 %v8016, %v9413
      %9415 = vmatprep.mubr.bf16.mxu0 %v7941
      %9416 = vmatmul.mubr.bf16.gmra.mrb[0].mxu0 %v7940
      %v9417 = vpop.f32.mrb[0].mxu0
      %v9418 = vadd.f32 %v8012, %v9417
      %v9419 = vpop.f32.mrb[0].mxu0
      %v9420 = vadd.f32 %v8016, %v9419
      %v9421 = vpop.f32.mrb[0].mxu0
      %v9422 = vadd.f32 %v8012, %v9421
      %v9423 = vpop.f32.mrb[0].mxu0
      %v9424 = vadd.f32 %v8016, %v9423
      %9425 = vmatprep.mubr.bf16.mxu0 %v7945
      %9426 = vmatmul.mubr.bf16.gmra.mrb[0].mxu0 %v7944
      %v9427 = vpop.f32.mrb[0].mxu0
      %v9428 = vadd.f32 %v8012, %v9427
      %v9429 = vpop.f32.mrb[0].mxu0
      %v9430 = vadd.f32 %v8016, %v9429
      %v9431 = vpop.f32.mrb[0].mxu0
      %v9432 = vadd.f32 %v8012, %v9431
      %v9433 = vpop.f32.mrb[0].mxu0
      %v9434 = vadd.f32 %v8016, %v9433
      %9435 = vmatprep.mubr.bf16.mxu0 %v7949
      %9436 = vmatmul.mubr.bf16.gmra.mrb[0].mxu0 %v7948
      %v9437 = vpop.f32.mrb[0].mxu0
      %v9438 = vadd.f32 %v8012, %v9437
      %v9439 = vpop.f32.mrb[0].mxu0
      %v9440 = vadd.f32 %v8016, %v9439
      %v9441 = vpop.f32.mrb[0].mxu0
      %v9442 = vadd.f32 %v8012, %v9441
      %v9443 = vpop.f32.mrb[0].mxu0
      %v9444 = vadd.f32 %v8016, %v9443
      %9445 = vmatprep.mubr.bf16.mxu0 %v7953
      %9446 = vmatmul.mubr.bf16.gmra.mrb[0].mxu0 %v7952
      %v9447 = vpop.f32.mrb[0].mxu0
      %v9448 = vadd.f32 %v8012, %v9447
      %v9449 = vpop.f32.mrb[0].mxu0
      %v9450 = vadd.f32 %v8016, %v9449
      %v9451 = vpop.f32.mrb[0].mxu0
      %v9452 = vadd.f32 %v8012, %v9451
      %v9453 = vpop.f32.mrb[0].mxu0
      %v9454 = vadd.f32 %v8016, %v9453
      %9455 = vmatprep.mubr.bf16.mxu0 %v7957
      %9456 = vmatmul.mubr.bf16.gmra.mrb[0].mxu0 %v7956
      %v9457 = vpop.f32.mrb[0].mxu0
      %v9458 = vadd.f32 %v8012, %v9457
      %v9459 = vpop.f32.mrb[0].mxu0
      %v9460 = vadd.f32 %v8016, %v9459
      %v9461 = vpop.f32.mrb[0].mxu0
      %v9462 = vadd.f32 %v8012, %v9461
      %v9463 = vpop.f32.mrb[0].mxu0
      %v9464 = vadd.f32 %v8016, %v9463
      %9465 = vmatprep.mubr.bf16.mxu0 %v7961
      %9466 = vmatmul.mubr.bf16.gmra.mrb[0].mxu0 %v7960
      %v9467 = vpop.f32.mrb[0].mxu0
      %v9468 = vadd.f32 %v8012, %v9467
      %v9469 = vpop.f32.mrb[0].mxu0
      %v9470 = vadd.f32 %v8016, %v9469
      %v9471 = vpop.f32.mrb[0].mxu0
      %v9472 = vadd.f32 %v8012, %v9471
      %v9473 = vpop.f32.mrb[0].mxu0
      %v9474 = vadd.f32 %v8016, %v9473
      %9475 = vmatprep.mubr.bf16.mxu0 %v7965
      %9476 = vmatmul.mubr.bf16.gmra.mrb[0].mxu0 %v7964
      %v9477 = vpop.f32.mrb[0].mxu0
      %v9478 = vadd.f32 %v8012, %v9477
      %v9479 = vpop.f32.mrb[0].mxu0
      %v9480 = vadd.f32 %v8016, %v9479
      %v9481 = vpop.f32.mrb[0].mxu0
      %v9482 = vadd.f32 %v8012, %v9481
      %v9483 = vpop.f32.mrb[0].mxu0
      %v9484 = vadd.f32 %v8016, %v9483
      %9485 = vmatprep.mubr.bf16.mxu0 %v7969
      %9486 = vmatmul.mubr.bf16.gmra.mrb[0].mxu0 %v7968
      %v9487 = vpop.f32.mrb[0].mxu0
      %v9488 = vadd.f32 %v8012, %v9487
      %v9489 = vpop.f32.mrb[0].mxu0
      %v9490 = vadd.f32 %v8016, %v9489
      %v9491 = vpop.f32.mrb[0].mxu0
      %v9492 = vadd.f32 %v8012, %v9491
      %v9493 = vpop.f32.mrb[0].mxu0
      %v9494 = vadd.f32 %v8016, %v9493
      %9495 = vmatprep.mubr.bf16.mxu0 %v7973
      %9496 = vmatmul.mubr.bf16.gmra.mrb[0].mxu0 %v7972
      %v9497 = vpop.f32.mrb[0].mxu0
      %v9498 = vadd.f32 %v8012, %v9497
      %v9499 = vpop.f32.mrb[0].mxu0
      %v9500 = vadd.f32 %v8016, %v9499
      %v9501 = vpop.f32.mrb[0].mxu0
      %v9502 = vadd.f32 %v8012, %v9501
      %v9503 = vpop.f32.mrb[0].mxu0
      %v9504 = vadd.f32 %v8016, %v9503
      %9505 = vmatprep.mubr.bf16.mxu0 %v7977
      %9506 = vmatmul.mubr.bf16.gmra.mrb[0].mxu0 %v7976
      %v9507 = vpop.f32.mrb[0].mxu0
      %v9508 = vadd.f32 %v8012, %v9507
      %v9509 = vpop.f32.mrb[0].mxu0
      %v9510 = vadd.f32 %v8016, %v9509
      %v9511 = vpop.f32.mrb[0].mxu0
      %v9512 = vadd.f32 %v8012, %v9511
      %v9513 = vpop.f32.mrb[0].mxu0
      %v9514 = vadd.f32 %v8016, %v9513
      %9515 = vmatprep.mubr.bf16.mxu0 %v7981
      %9516 = vmatmul.mubr.bf16.gmra.mrb[0].mxu0 %v7980
      %v9517 = vpop.f32.mrb[0].mxu0
      %v9518 = vadd.f32 %v8012, %v9517
      %v9519 = vpop.f32.mrb[0].mxu0
      %v9520 = vadd.f32 %v8016, %v9519
      %v9521 = vpop.f32.mrb[0].mxu0
      %v9522 = vadd.f32 %v8012, %v9521
      %v9523 = vpop.f32.mrb[0].mxu0
      %v9524 = vadd.f32 %v8016, %v9523
      %9525 = vmatprep.mubr.bf16.mxu0 %v7985
      %9526 = vmatmul.mubr.bf16.gmra.mrb[0].mxu0 %v7984
      %v9527 = vpop.f32.mrb[0].mxu0
      %v9528 = vadd.f32 %v8012, %v9527
      %v9529 = vpop.f32.mrb[0].mxu0
      %v9530 = vadd.f32 %v8016, %v9529
      %v9531 = vpop.f32.mrb[0].mxu0
      %v9532 = vadd.f32 %v8012, %v9531
      %v9533 = vpop.f32.mrb[0].mxu0
      %v9534 = vadd.f32 %v8016, %v9533
      %9535 = vmatprep.mubr.bf16.mxu0 %v7989
      %9536 = vmatmul.mubr.bf16.gmra.mrb[0].mxu0 %v7988
      %v9537 = vpop.f32.mrb[0].mxu0
      %v9538 = vadd.f32 %v8012, %v9537
      %v9539 = vpop.f32.mrb[0].mxu0
      %v9540 = vadd.f32 %v8016, %v9539
      %v9541 = vpop.f32.mrb[0].mxu0
      %v9542 = vadd.f32 %v8012, %v9541
      %v9543 = vpop.f32.mrb[0].mxu0
      %v9544 = vadd.f32 %v8016, %v9543
      %9545 = vmatprep.mubr.bf16.mxu0 %v7993
      %9546 = vmatmul.mubr.bf16.gmra.mrb[0].mxu0 %v7992
      %v9547 = vpop.f32.mrb[0].mxu0
      %v9548 = vadd.f32 %v8012, %v9547
      %v9549 = vpop.f32.mrb[0].mxu0
      %v9550 = vadd.f32 %v8016, %v9549
      %v9551 = vpop.f32.mrb[0].mxu0
      %v9552 = vadd.f32 %v8012, %v9551
      %v9553 = vpop.f32.mrb[0].mxu0
      %v9554 = vadd.f32 %v8016, %v9553
      %9555 = vmatprep.mubr.bf16.mxu0 %v7997
      %9556 = vmatmul.mubr.bf16.gmra.mrb[0].mxu0 %v7996
      %v9557 = vpop.f32.mrb[0].mxu0
      %v9558 = vadd.f32 %v8012, %v9557
      %v9559 = vpop.f32.mrb[0].mxu0
      %v9560 = vadd.f32 %v8016, %v9559
      %v9561 = vpop.f32.mrb[0].mxu0
      %v9562 = vadd.f32 %v8012, %v9561
      %v9563 = vpop.f32.mrb[0].mxu0
      %v9564 = vadd.f32 %v8016, %v9563
      %9565 = vdwg.mxu0
      %9566 = vmatprep.subr.bf16.mxu0 %v8690
      %9567 = vmatpush1.bf16.msra.mxu0 %v8689
      %9568 = vmatprep.subr.bf16.mxu0 %v8697
      %9569 = vmatpush1.bf16.msra.mxu0 %v8696
      %9570 = vmatprep.subr.bf16.mxu0 %v8704
      %9571 = vmatpush1.bf16.msra.mxu0 %v8703
      %9572 = vmatprep.subr.bf16.mxu0 %v8711
      %9573 = vmatpush1.bf16.msra.mxu0 %v8710
      %9574 = vmatprep.subr.bf16.mxu0 %v8718
      %9575 = vmatpush1.bf16.msra.mxu0 %v8717
      %9576 = vmatprep.subr.bf16.mxu0 %v8725
      %9577 = vmatpush1.bf16.msra.mxu0 %v8724
      %9578 = vmatprep.subr.bf16.mxu0 %v8732
      %9579 = vmatpush1.bf16.msra.mxu0 %v8731
      %9580 = vmatprep.subr.bf16.mxu0 %v8739
      %9581 = vmatpush1.bf16.msra.mxu0 %v8738
      %9582 = vmatprep.subr.bf16.mxu0 %v8976
      %9583 = vmatpush1.bf16.msra.mxu0 %v8973
      %9584 = vmatprep.subr.bf16.mxu0 0
      %9585 = vmatpush1.bf16.msra.mxu0 0
      %9586 = vmatprep.subr.bf16.mxu0 0
      %9587 = vmatpush1.bf16.msra.mxu0 0
      %9588 = vmatprep.subr.bf16.mxu0 0
      %9589 = vmatpush1.bf16.msra.mxu0 0
      %9590 = vmatprep.subr.bf16.mxu0 0
      %9591 = vmatpush1.bf16.msra.mxu0 0
      %9592 = vmatprep.subr.bf16.mxu0 0
      %9593 = vmatpush1.bf16.msra.mxu0 0
      %9594 = vmatprep.subr.bf16.mxu0 0
      %9595 = vmatpush1.bf16.msra.mxu0 0
      %9596 = vmatprep.subr.bf16.mxu0 0
      %9597 = vmatpush1.bf16.msra.mxu0 0
      %9598 = vmatprep.mubr.bf16.mxu0 %v8919
      %9599 = vmatmul.mubr.bf16.gmra.mrb[0].mxu0 %v7938
      %v9600 = vpop.f32.mrb[0].mxu0
      %v9601 = vadd.f32 %v9408, %v9600
      %v9602 = vpop.f32.mrb[0].mxu0
      %v9603 = vadd.f32 %v9410, %v9602
      %v9604 = vpop.f32.mrb[0].mxu0
      %v9605 = vadd.f32 %v9412, %v9604
      %v9606 = vpop.f32.mrb[0].mxu0
      %v9607 = vadd.f32 %v9414, %v9606
      %9608 = vmatprep.mubr.bf16.mxu0 %v8922
      %9609 = vmatmul.mubr.bf16.gmra.mrb[0].mxu0 %v7942
      %v9610 = vpop.f32.mrb[0].mxu0
      %v9611 = vadd.f32 %v9418, %v9610
      %v9612 = vpop.f32.mrb[0].mxu0
      %v9613 = vadd.f32 %v9420, %v9612
      %v9614 = vpop.f32.mrb[0].mxu0
      %v9615 = vadd.f32 %v9422, %v9614
      %v9616 = vpop.f32.mrb[0].mxu0
      %v9617 = vadd.f32 %v9424, %v9616
      %9618 = vmatprep.mubr.bf16.mxu0 %v8925
      %9619 = vmatmul.mubr.bf16.gmra.mrb[0].mxu0 %v7946
      %v9620 = vpop.f32.mrb[0].mxu0
      %v9621 = vadd.f32 %v9428, %v9620
      %v9622 = vpop.f32.mrb[0].mxu0
      %v9623 = vadd.f32 %v9430, %v9622
      %v9624 = vpop.f32.mrb[0].mxu0
      %v9625 = vadd.f32 %v9432, %v9624
      %v9626 = vpop.f32.mrb[0].mxu0
      %v9627 = vadd.f32 %v9434, %v9626
      %9628 = vmatprep.mubr.bf16.mxu0 %v8928
      %9629 = vmatmul.mubr.bf16.gmra.mrb[0].mxu0 %v7950
      %v9630 = vpop.f32.mrb[0].mxu0
      %v9631 = vadd.f32 %v9438, %v9630
      %v9632 = vpop.f32.mrb[0].mxu0
      %v9633 = vadd.f32 %v9440, %v9632
      %v9634 = vpop.f32.mrb[0].mxu0
      %v9635 = vadd.f32 %v9442, %v9634
      %v9636 = vpop.f32.mrb[0].mxu0
      %v9637 = vadd.f32 %v9444, %v9636
      %9638 = vmatprep.mubr.bf16.mxu0 %v8931
      %9639 = vmatmul.mubr.bf16.gmra.mrb[0].mxu0 %v7954
      %v9640 = vpop.f32.mrb[0].mxu0
      %v9641 = vadd.f32 %v9448, %v9640
      %v9642 = vpop.f32.mrb[0].mxu0
      %v9643 = vadd.f32 %v9450, %v9642
      %v9644 = vpop.f32.mrb[0].mxu0
      %v9645 = vadd.f32 %v9452, %v9644
      %v9646 = vpop.f32.mrb[0].mxu0
      %v9647 = vadd.f32 %v9454, %v9646
      %9648 = vmatprep.mubr.bf16.mxu0 %v8934
      %9649 = vmatmul.mubr.bf16.gmra.mrb[0].mxu0 %v7958
      %v9650 = vpop.f32.mrb[0].mxu0
      %v9651 = vadd.f32 %v9458, %v9650
      %v9652 = vpop.f32.mrb[0].mxu0
      %v9653 = vadd.f32 %v9460, %v9652
      %v9654 = vpop.f32.mrb[0].mxu0
      %v9655 = vadd.f32 %v9462, %v9654
      %v9656 = vpop.f32.mrb[0].mxu0
      %v9657 = vadd.f32 %v9464, %v9656
      %9658 = vmatprep.mubr.bf16.mxu0 %v8937
      %9659 = vmatmul.mubr.bf16.gmra.mrb[0].mxu0 %v7962
      %v9660 = vpop.f32.mrb[0].mxu0
      %v9661 = vadd.f32 %v9468, %v9660
      %v9662 = vpop.f32.mrb[0].mxu0
      %v9663 = vadd.f32 %v9470, %v9662
      %v9664 = vpop.f32.mrb[0].mxu0
      %v9665 = vadd.f32 %v9472, %v9664
      %v9666 = vpop.f32.mrb[0].mxu0
      %v9667 = vadd.f32 %v9474, %v9666
      %9668 = vmatprep.mubr.bf16.mxu0 %v8940
      %9669 = vmatmul.mubr.bf16.gmra.mrb[0].mxu0 %v7966
      %v9670 = vpop.f32.mrb[0].mxu0
      %v9671 = vadd.f32 %v9478, %v9670
      %v9672 = vpop.f32.mrb[0].mxu0
      %v9673 = vadd.f32 %v9480, %v9672
      %v9674 = vpop.f32.mrb[0].mxu0
      %v9675 = vadd.f32 %v9482, %v9674
      %v9676 = vpop.f32.mrb[0].mxu0
      %v9677 = vadd.f32 %v9484, %v9676
      %9678 = vmatprep.mubr.bf16.mxu0 %v8943
      %9679 = vmatmul.mubr.bf16.gmra.mrb[0].mxu0 %v7970
      %v9680 = vpop.f32.mrb[0].mxu0
      %v9681 = vadd.f32 %v9488, %v9680
      %v9682 = vpop.f32.mrb[0].mxu0
      %v9683 = vadd.f32 %v9490, %v9682
      %v9684 = vpop.f32.mrb[0].mxu0
      %v9685 = vadd.f32 %v9492, %v9684
      %v9686 = vpop.f32.mrb[0].mxu0
      %v9687 = vadd.f32 %v9494, %v9686
      %9688 = vmatprep.mubr.bf16.mxu0 %v8946
      %9689 = vmatmul.mubr.bf16.gmra.mrb[0].mxu0 %v7974
      %v9690 = vpop.f32.mrb[0].mxu0
      %v9691 = vadd.f32 %v9498, %v9690
      %v9692 = vpop.f32.mrb[0].mxu0
      %v9693 = vadd.f32 %v9500, %v9692
      %v9694 = vpop.f32.mrb[0].mxu0
      %v9695 = vadd.f32 %v9502, %v9694
      %v9696 = vpop.f32.mrb[0].mxu0
      %v9697 = vadd.f32 %v9504, %v9696
      %9698 = vmatprep.mubr.bf16.mxu0 %v8949
      %9699 = vmatmul.mubr.bf16.gmra.mrb[0].mxu0 %v7978
      %v9700 = vpop.f32.mrb[0].mxu0
      %v9701 = vadd.f32 %v9508, %v9700
      %v9702 = vpop.f32.mrb[0].mxu0
      %v9703 = vadd.f32 %v9510, %v9702
      %v9704 = vpop.f32.mrb[0].mxu0
      %v9705 = vadd.f32 %v9512, %v9704
      %v9706 = vpop.f32.mrb[0].mxu0
      %v9707 = vadd.f32 %v9514, %v9706
      %9708 = vmatprep.mubr.bf16.mxu0 %v8952
      %9709 = vmatmul.mubr.bf16.gmra.mrb[0].mxu0 %v7982
      %v9710 = vpop.f32.mrb[0].mxu0
      %v9711 = vadd.f32 %v9518, %v9710
      %v9712 = vpop.f32.mrb[0].mxu0
      %v9713 = vadd.f32 %v9520, %v9712
      %v9714 = vpop.f32.mrb[0].mxu0
      %v9715 = vadd.f32 %v9522, %v9714
      %v9716 = vpop.f32.mrb[0].mxu0
      %v9717 = vadd.f32 %v9524, %v9716
      %9718 = vmatprep.mubr.bf16.mxu0 %v8955
      %9719 = vmatmul.mubr.bf16.gmra.mrb[0].mxu0 %v7986
      %v9720 = vpop.f32.mrb[0].mxu0
      %v9721 = vadd.f32 %v9528, %v9720
      %v9722 = vpop.f32.mrb[0].mxu0
      %v9723 = vadd.f32 %v9530, %v9722
      %v9724 = vpop.f32.mrb[0].mxu0
      %v9725 = vadd.f32 %v9532, %v9724
      %v9726 = vpop.f32.mrb[0].mxu0
      %v9727 = vadd.f32 %v9534, %v9726
      %9728 = vmatprep.mubr.bf16.mxu0 %v8958
      %9729 = vmatmul.mubr.bf16.gmra.mrb[0].mxu0 %v7990
      %v9730 = vpop.f32.mrb[0].mxu0
      %v9731 = vadd.f32 %v9538, %v9730
      %v9732 = vpop.f32.mrb[0].mxu0
      %v9733 = vadd.f32 %v9540, %v9732
      %v9734 = vpop.f32.mrb[0].mxu0
      %v9735 = vadd.f32 %v9542, %v9734
      %v9736 = vpop.f32.mrb[0].mxu0
      %v9737 = vadd.f32 %v9544, %v9736
      %9738 = vmatprep.mubr.bf16.mxu0 %v8961
      %9739 = vmatmul.mubr.bf16.gmra.mrb[0].mxu0 %v7994
      %v9740 = vpop.f32.mrb[0].mxu0
      %v9741 = vadd.f32 %v9548, %v9740
      %v9742 = vpop.f32.mrb[0].mxu0
      %v9743 = vadd.f32 %v9550, %v9742
      %v9744 = vpop.f32.mrb[0].mxu0
      %v9745 = vadd.f32 %v9552, %v9744
      %v9746 = vpop.f32.mrb[0].mxu0
      %v9747 = vadd.f32 %v9554, %v9746
      %9748 = vmatprep.mubr.bf16.mxu0 %v8964
      %9749 = vmatmul.mubr.bf16.gmra.mrb[0].mxu0 %v7998
      %v9750 = vpop.f32.mrb[0].mxu0
      %v9751 = vadd.f32 %v9558, %v9750
      %v9752 = vpop.f32.mrb[0].mxu0
      %v9753 = vadd.f32 %v9560, %v9752
      %v9754 = vpop.f32.mrb[0].mxu0
      %v9755 = vadd.f32 %v9562, %v9754
      %v9756 = vpop.f32.mrb[0].mxu0
      %v9757 = vadd.f32 %v9564, %v9756
      %9758 = vdwg.mxu0
      %9759 = vmatprep.subr.bf16.mxu0 %v8580
      %9760 = vmatpush1.bf16.msra.mxu0 %v8579
      %9761 = vmatprep.subr.bf16.mxu0 %v8587
      %9762 = vmatpush1.bf16.msra.mxu0 %v8586
      %9763 = vmatprep.subr.bf16.mxu0 %v8594
      %9764 = vmatpush1.bf16.msra.mxu0 %v8593
      %9765 = vmatprep.subr.bf16.mxu0 %v8601
      %9766 = vmatpush1.bf16.msra.mxu0 %v8600
      %9767 = vmatprep.subr.bf16.mxu0 %v8608
      %9768 = vmatpush1.bf16.msra.mxu0 %v8607
      %9769 = vmatprep.subr.bf16.mxu0 %v8615
      %9770 = vmatpush1.bf16.msra.mxu0 %v8614
      %9771 = vmatprep.subr.bf16.mxu0 %v8622
      %9772 = vmatpush1.bf16.msra.mxu0 %v8621
      %9773 = vmatprep.subr.bf16.mxu0 %v8629
      %9774 = vmatpush1.bf16.msra.mxu0 %v8628
      %9775 = vmatprep.subr.bf16.mxu0 %v8636
      %9776 = vmatpush1.bf16.msra.mxu0 %v8635
      %9777 = vmatprep.subr.bf16.mxu0 %v8643
      %9778 = vmatpush1.bf16.msra.mxu0 %v8642
      %9779 = vmatprep.subr.bf16.mxu0 %v8650
      %9780 = vmatpush1.bf16.msra.mxu0 %v8649
      %9781 = vmatprep.subr.bf16.mxu0 %v8657
      %9782 = vmatpush1.bf16.msra.mxu0 %v8656
      %9783 = vmatprep.subr.bf16.mxu0 %v8664
      %9784 = vmatpush1.bf16.msra.mxu0 %v8663
      %9785 = vmatprep.subr.bf16.mxu0 %v8671
      %9786 = vmatpush1.bf16.msra.mxu0 %v8670
      %9787 = vmatprep.subr.bf16.mxu0 %v8678
      %9788 = vmatpush1.bf16.msra.mxu0 %v8677
      %9789 = vmatprep.subr.bf16.mxu0 %v8685
      %9790 = vmatpush1.bf16.msra.mxu0 %v8684
      %9791 = vmatprep.mubr.bf16.mxu0 %v7937
      %9792 = vmatmul.mubr.bf16.gmra.mrb[0].mxu0 %v7936
      %v9793 = vpop.f32.mrb[0].mxu0
      %v9794 = vadd.f32 %v8020, %v9793
      %v9795 = vpop.f32.mrb[0].mxu0
      %v9796 = vadd.f32 %v8024, %v9795
      %v9797 = vpop.f32.mrb[0].mxu0
      %v9798 = vadd.f32 %v8020, %v9797
      %v9799 = vpop.f32.mrb[0].mxu0
      %v9800 = vadd.f32 %v8024, %v9799
      %9801 = vmatprep.mubr.bf16.mxu0 %v7941
      %9802 = vmatmul.mubr.bf16.gmra.mrb[0].mxu0 %v7940
      %v9803 = vpop.f32.mrb[0].mxu0
      %v9804 = vadd.f32 %v8020, %v9803
      %v9805 = vpop.f32.mrb[0].mxu0
      %v9806 = vadd.f32 %v8024, %v9805
      %v9807 = vpop.f32.mrb[0].mxu0
      %v9808 = vadd.f32 %v8020, %v9807
      %v9809 = vpop.f32.mrb[0].mxu0
      %v9810 = vadd.f32 %v8024, %v9809
      %9811 = vmatprep.mubr.bf16.mxu0 %v7945
      %9812 = vmatmul.mubr.bf16.gmra.mrb[0].mxu0 %v7944
      %v9813 = vpop.f32.mrb[0].mxu0
      %v9814 = vadd.f32 %v8020, %v9813
      %v9815 = vpop.f32.mrb[0].mxu0
      %v9816 = vadd.f32 %v8024, %v9815
      %v9817 = vpop.f32.mrb[0].mxu0
      %v9818 = vadd.f32 %v8020, %v9817
      %v9819 = vpop.f32.mrb[0].mxu0
      %v9820 = vadd.f32 %v8024, %v9819
      %9821 = vmatprep.mubr.bf16.mxu0 %v7949
      %9822 = vmatmul.mubr.bf16.gmra.mrb[0].mxu0 %v7948
      %v9823 = vpop.f32.mrb[0].mxu0
      %v9824 = vadd.f32 %v8020, %v9823
      %v9825 = vpop.f32.mrb[0].mxu0
      %v9826 = vadd.f32 %v8024, %v9825
      %v9827 = vpop.f32.mrb[0].mxu0
      %v9828 = vadd.f32 %v8020, %v9827
      %v9829 = vpop.f32.mrb[0].mxu0
      %v9830 = vadd.f32 %v8024, %v9829
      %9831 = vmatprep.mubr.bf16.mxu0 %v7953
      %9832 = vmatmul.mubr.bf16.gmra.mrb[0].mxu0 %v7952
      %v9833 = vpop.f32.mrb[0].mxu0
      %v9834 = vadd.f32 %v8020, %v9833
      %v9835 = vpop.f32.mrb[0].mxu0
      %v9836 = vadd.f32 %v8024, %v9835
      %v9837 = vpop.f32.mrb[0].mxu0
      %v9838 = vadd.f32 %v8020, %v9837
      %v9839 = vpop.f32.mrb[0].mxu0
      %v9840 = vadd.f32 %v8024, %v9839
      %9841 = vmatprep.mubr.bf16.mxu0 %v7957
      %9842 = vmatmul.mubr.bf16.gmra.mrb[0].mxu0 %v7956
      %v9843 = vpop.f32.mrb[0].mxu0
      %v9844 = vadd.f32 %v8020, %v9843
      %v9845 = vpop.f32.mrb[0].mxu0
      %v9846 = vadd.f32 %v8024, %v9845
      %v9847 = vpop.f32.mrb[0].mxu0
      %v9848 = vadd.f32 %v8020, %v9847
      %v9849 = vpop.f32.mrb[0].mxu0
      %v9850 = vadd.f32 %v8024, %v9849
      %9851 = vmatprep.mubr.bf16.mxu0 %v7961
      %9852 = vmatmul.mubr.bf16.gmra.mrb[0].mxu0 %v7960
      %v9853 = vpop.f32.mrb[0].mxu0
      %v9854 = vadd.f32 %v8020, %v9853
      %v9855 = vpop.f32.mrb[0].mxu0
      %v9856 = vadd.f32 %v8024, %v9855
      %v9857 = vpop.f32.mrb[0].mxu0
      %v9858 = vadd.f32 %v8020, %v9857
      %v9859 = vpop.f32.mrb[0].mxu0
      %v9860 = vadd.f32 %v8024, %v9859
      %9861 = vmatprep.mubr.bf16.mxu0 %v7965
      %9862 = vmatmul.mubr.bf16.gmra.mrb[0].mxu0 %v7964
      %v9863 = vpop.f32.mrb[0].mxu0
      %v9864 = vadd.f32 %v8020, %v9863
      %v9865 = vpop.f32.mrb[0].mxu0
      %v9866 = vadd.f32 %v8024, %v9865
      %v9867 = vpop.f32.mrb[0].mxu0
      %v9868 = vadd.f32 %v8020, %v9867
      %v9869 = vpop.f32.mrb[0].mxu0
      %v9870 = vadd.f32 %v8024, %v9869
      %9871 = vmatprep.mubr.bf16.mxu0 %v7969
      %9872 = vmatmul.mubr.bf16.gmra.mrb[0].mxu0 %v7968
      %v9873 = vpop.f32.mrb[0].mxu0
      %v9874 = vadd.f32 %v8020, %v9873
      %v9875 = vpop.f32.mrb[0].mxu0
      %v9876 = vadd.f32 %v8024, %v9875
      %v9877 = vpop.f32.mrb[0].mxu0
      %v9878 = vadd.f32 %v8020, %v9877
      %v9879 = vpop.f32.mrb[0].mxu0
      %v9880 = vadd.f32 %v8024, %v9879
      %9881 = vmatprep.mubr.bf16.mxu0 %v7973
      %9882 = vmatmul.mubr.bf16.gmra.mrb[0].mxu0 %v7972
      %v9883 = vpop.f32.mrb[0].mxu0
      %v9884 = vadd.f32 %v8020, %v9883
      %v9885 = vpop.f32.mrb[0].mxu0
      %v9886 = vadd.f32 %v8024, %v9885
      %v9887 = vpop.f32.mrb[0].mxu0
      %v9888 = vadd.f32 %v8020, %v9887
      %v9889 = vpop.f32.mrb[0].mxu0
      %v9890 = vadd.f32 %v8024, %v9889
      %9891 = vmatprep.mubr.bf16.mxu0 %v7977
      %9892 = vmatmul.mubr.bf16.gmra.mrb[0].mxu0 %v7976
      %v9893 = vpop.f32.mrb[0].mxu0
      %v9894 = vadd.f32 %v8020, %v9893
      %v9895 = vpop.f32.mrb[0].mxu0
      %v9896 = vadd.f32 %v8024, %v9895
      %v9897 = vpop.f32.mrb[0].mxu0
      %v9898 = vadd.f32 %v8020, %v9897
      %v9899 = vpop.f32.mrb[0].mxu0
      %v9900 = vadd.f32 %v8024, %v9899
      %9901 = vmatprep.mubr.bf16.mxu0 %v7981
      %9902 = vmatmul.mubr.bf16.gmra.mrb[0].mxu0 %v7980
      %v9903 = vpop.f32.mrb[0].mxu0
      %v9904 = vadd.f32 %v8020, %v9903
      %v9905 = vpop.f32.mrb[0].mxu0
      %v9906 = vadd.f32 %v8024, %v9905
      %v9907 = vpop.f32.mrb[0].mxu0
      %v9908 = vadd.f32 %v8020, %v9907
      %v9909 = vpop.f32.mrb[0].mxu0
      %v9910 = vadd.f32 %v8024, %v9909
      %9911 = vmatprep.mubr.bf16.mxu0 %v7985
      %9912 = vmatmul.mubr.bf16.gmra.mrb[0].mxu0 %v7984
      %v9913 = vpop.f32.mrb[0].mxu0
      %v9914 = vadd.f32 %v8020, %v9913
      %v9915 = vpop.f32.mrb[0].mxu0
      %v9916 = vadd.f32 %v8024, %v9915
      %v9917 = vpop.f32.mrb[0].mxu0
      %v9918 = vadd.f32 %v8020, %v9917
      %v9919 = vpop.f32.mrb[0].mxu0
      %v9920 = vadd.f32 %v8024, %v9919
      %9921 = vmatprep.mubr.bf16.mxu0 %v7989
      %9922 = vmatmul.mubr.bf16.gmra.mrb[0].mxu0 %v7988
      %v9923 = vpop.f32.mrb[0].mxu0
      %v9924 = vadd.f32 %v8020, %v9923
      %v9925 = vpop.f32.mrb[0].mxu0
      %v9926 = vadd.f32 %v8024, %v9925
      %v9927 = vpop.f32.mrb[0].mxu0
      %v9928 = vadd.f32 %v8020, %v9927
      %v9929 = vpop.f32.mrb[0].mxu0
      %v9930 = vadd.f32 %v8024, %v9929
      %9931 = vmatprep.mubr.bf16.mxu0 %v7993
      %9932 = vmatmul.mubr.bf16.gmra.mrb[0].mxu0 %v7992
      %v9933 = vpop.f32.mrb[0].mxu0
      %v9934 = vadd.f32 %v8020, %v9933
      %v9935 = vpop.f32.mrb[0].mxu0
      %v9936 = vadd.f32 %v8024, %v9935
      %v9937 = vpop.f32.mrb[0].mxu0
      %v9938 = vadd.f32 %v8020, %v9937
      %v9939 = vpop.f32.mrb[0].mxu0
      %v9940 = vadd.f32 %v8024, %v9939
      %9941 = vmatprep.mubr.bf16.mxu0 %v7997
      %9942 = vmatmul.mubr.bf16.gmra.mrb[0].mxu0 %v7996
      %v9943 = vpop.f32.mrb[0].mxu0
      %v9944 = vadd.f32 %v8020, %v9943
      %v9945 = vpop.f32.mrb[0].mxu0
      %v9946 = vadd.f32 %v8024, %v9945
      %v9947 = vpop.f32.mrb[0].mxu0
      %v9948 = vadd.f32 %v8020, %v9947
      %v9949 = vpop.f32.mrb[0].mxu0
      %v9950 = vadd.f32 %v8024, %v9949
      %9951 = vdwg.mxu0
      %9952 = vmatprep.subr.bf16.mxu0 %v8692
      %9953 = vmatpush1.bf16.msra.mxu0 %v8691
      %9954 = vmatprep.subr.bf16.mxu0 %v8699
      %9955 = vmatpush1.bf16.msra.mxu0 %v8698
      %9956 = vmatprep.subr.bf16.mxu0 %v8706
      %9957 = vmatpush1.bf16.msra.mxu0 %v8705
      %9958 = vmatprep.subr.bf16.mxu0 %v8713
      %9959 = vmatpush1.bf16.msra.mxu0 %v8712
      %9960 = vmatprep.subr.bf16.mxu0 %v8720
      %9961 = vmatpush1.bf16.msra.mxu0 %v8719
      %9962 = vmatprep.subr.bf16.mxu0 %v8727
      %9963 = vmatpush1.bf16.msra.mxu0 %v8726
      %9964 = vmatprep.subr.bf16.mxu0 %v8734
      %9965 = vmatpush1.bf16.msra.mxu0 %v8733
      %9966 = vmatprep.subr.bf16.mxu0 %v8741
      %9967 = vmatpush1.bf16.msra.mxu0 %v8740
      %9968 = vmatprep.subr.bf16.mxu0 %v8982
      %9969 = vmatpush1.bf16.msra.mxu0 %v8979
      %9970 = vmatprep.subr.bf16.mxu0 0
      %9971 = vmatpush1.bf16.msra.mxu0 0
      %9972 = vmatprep.subr.bf16.mxu0 0
      %9973 = vmatpush1.bf16.msra.mxu0 0
      %9974 = vmatprep.subr.bf16.mxu0 0
      %9975 = vmatpush1.bf16.msra.mxu0 0
      %9976 = vmatprep.subr.bf16.mxu0 0
      %9977 = vmatpush1.bf16.msra.mxu0 0
      %9978 = vmatprep.subr.bf16.mxu0 0
      %9979 = vmatpush1.bf16.msra.mxu0 0
      %9980 = vmatprep.subr.bf16.mxu0 0
      %9981 = vmatpush1.bf16.msra.mxu0 0
      %9982 = vmatprep.subr.bf16.mxu0 0
      %9983 = vmatpush1.bf16.msra.mxu0 0
      %9984 = vmatprep.mubr.bf16.mxu0 %v8919
      %9985 = vmatmul.mubr.bf16.gmra.mrb[0].mxu0 %v7938
      %v9986 = vpop.f32.mrb[0].mxu0
      %v9987 = vadd.f32 %v9794, %v9986
      %v9988 = vpop.f32.mrb[0].mxu0
      %v9989 = vadd.f32 %v9796, %v9988
      %v9990 = vpop.f32.mrb[0].mxu0
      %v9991 = vadd.f32 %v9798, %v9990
      %v9992 = vpop.f32.mrb[0].mxu0
      %v9993 = vadd.f32 %v9800, %v9992
      %9994 = vmatprep.mubr.bf16.mxu0 %v8922
      %9995 = vmatmul.mubr.bf16.gmra.mrb[0].mxu0 %v7942
      %v9996 = vpop.f32.mrb[0].mxu0
      %v9997 = vadd.f32 %v9804, %v9996
      %v9998 = vpop.f32.mrb[0].mxu0
      %v9999 = vadd.f32 %v9806, %v9998
      %v10000 = vpop.f32.mrb[0].mxu0
      %v10001 = vadd.f32 %v9808, %v10000
      %v10002 = vpop.f32.mrb[0].mxu0
      %v10003 = vadd.f32 %v9810, %v10002
      %10004 = vmatprep.mubr.bf16.mxu0 %v8925
      %10005 = vmatmul.mubr.bf16.gmra.mrb[0].mxu0 %v7946
      %v10006 = vpop.f32.mrb[0].mxu0
      %v10007 = vadd.f32 %v9814, %v10006
      %v10008 = vpop.f32.mrb[0].mxu0
      %v10009 = vadd.f32 %v9816, %v10008
      %v10010 = vpop.f32.mrb[0].mxu0
      %v10011 = vadd.f32 %v9818, %v10010
      %v10012 = vpop.f32.mrb[0].mxu0
      %v10013 = vadd.f32 %v9820, %v10012
      %10014 = vmatprep.mubr.bf16.mxu0 %v8928
      %10015 = vmatmul.mubr.bf16.gmra.mrb[0].mxu0 %v7950
      %v10016 = vpop.f32.mrb[0].mxu0
      %v10017 = vadd.f32 %v9824, %v10016
      %v10018 = vpop.f32.mrb[0].mxu0
      %v10019 = vadd.f32 %v9826, %v10018
      %v10020 = vpop.f32.mrb[0].mxu0
      %v10021 = vadd.f32 %v9828, %v10020
      %v10022 = vpop.f32.mrb[0].mxu0
      %v10023 = vadd.f32 %v9830, %v10022
      %10024 = vmatprep.mubr.bf16.mxu0 %v8931
      %10025 = vmatmul.mubr.bf16.gmra.mrb[0].mxu0 %v7954
      %v10026 = vpop.f32.mrb[0].mxu0
      %v10027 = vadd.f32 %v9834, %v10026
      %v10028 = vpop.f32.mrb[0].mxu0
      %v10029 = vadd.f32 %v9836, %v10028
      %v10030 = vpop.f32.mrb[0].mxu0
      %v10031 = vadd.f32 %v9838, %v10030
      %v10032 = vpop.f32.mrb[0].mxu0
      %v10033 = vadd.f32 %v9840, %v10032
      %10034 = vmatprep.mubr.bf16.mxu0 %v8934
      %10035 = vmatmul.mubr.bf16.gmra.mrb[0].mxu0 %v7958
      %v10036 = vpop.f32.mrb[0].mxu0
      %v10037 = vadd.f32 %v9844, %v10036
      %v10038 = vpop.f32.mrb[0].mxu0
      %v10039 = vadd.f32 %v9846, %v10038
      %v10040 = vpop.f32.mrb[0].mxu0
      %v10041 = vadd.f32 %v9848, %v10040
      %v10042 = vpop.f32.mrb[0].mxu0
      %v10043 = vadd.f32 %v9850, %v10042
      %10044 = vmatprep.mubr.bf16.mxu0 %v8937
      %10045 = vmatmul.mubr.bf16.gmra.mrb[0].mxu0 %v7962
      %v10046 = vpop.f32.mrb[0].mxu0
      %v10047 = vadd.f32 %v9854, %v10046
      %v10048 = vpop.f32.mrb[0].mxu0
      %v10049 = vadd.f32 %v9856, %v10048
      %v10050 = vpop.f32.mrb[0].mxu0
      %v10051 = vadd.f32 %v9858, %v10050
      %v10052 = vpop.f32.mrb[0].mxu0
      %v10053 = vadd.f32 %v9860, %v10052
      %10054 = vmatprep.mubr.bf16.mxu0 %v8940
      %10055 = vmatmul.mubr.bf16.gmra.mrb[0].mxu0 %v7966
      %v10056 = vpop.f32.mrb[0].mxu0
      %v10057 = vadd.f32 %v9864, %v10056
      %v10058 = vpop.f32.mrb[0].mxu0
      %v10059 = vadd.f32 %v9866, %v10058
      %v10060 = vpop.f32.mrb[0].mxu0
      %v10061 = vadd.f32 %v9868, %v10060
      %v10062 = vpop.f32.mrb[0].mxu0
      %v10063 = vadd.f32 %v9870, %v10062
      %10064 = vmatprep.mubr.bf16.mxu0 %v8943
      %10065 = vmatmul.mubr.bf16.gmra.mrb[0].mxu0 %v7970
      %v10066 = vpop.f32.mrb[0].mxu0
      %v10067 = vadd.f32 %v9874, %v10066
      %v10068 = vpop.f32.mrb[0].mxu0
      %v10069 = vadd.f32 %v9876, %v10068
      %v10070 = vpop.f32.mrb[0].mxu0
      %v10071 = vadd.f32 %v9878, %v10070
      %v10072 = vpop.f32.mrb[0].mxu0
      %v10073 = vadd.f32 %v9880, %v10072
      %10074 = vmatprep.mubr.bf16.mxu0 %v8946
      %10075 = vmatmul.mubr.bf16.gmra.mrb[0].mxu0 %v7974
      %v10076 = vpop.f32.mrb[0].mxu0
      %v10077 = vadd.f32 %v9884, %v10076
      %v10078 = vpop.f32.mrb[0].mxu0
      %v10079 = vadd.f32 %v9886, %v10078
      %v10080 = vpop.f32.mrb[0].mxu0
      %v10081 = vadd.f32 %v9888, %v10080
      %v10082 = vpop.f32.mrb[0].mxu0
      %v10083 = vadd.f32 %v9890, %v10082
      %10084 = vmatprep.mubr.bf16.mxu0 %v8949
      %10085 = vmatmul.mubr.bf16.gmra.mrb[0].mxu0 %v7978
      %v10086 = vpop.f32.mrb[0].mxu0
      %v10087 = vadd.f32 %v9894, %v10086
      %v10088 = vpop.f32.mrb[0].mxu0
      %v10089 = vadd.f32 %v9896, %v10088
      %v10090 = vpop.f32.mrb[0].mxu0
      %v10091 = vadd.f32 %v9898, %v10090
      %v10092 = vpop.f32.mrb[0].mxu0
      %v10093 = vadd.f32 %v9900, %v10092
      %10094 = vmatprep.mubr.bf16.mxu0 %v8952
      %10095 = vmatmul.mubr.bf16.gmra.mrb[0].mxu0 %v7982
      %v10096 = vpop.f32.mrb[0].mxu0
      %v10097 = vadd.f32 %v9904, %v10096
      %v10098 = vpop.f32.mrb[0].mxu0
      %v10099 = vadd.f32 %v9906, %v10098
      %v10100 = vpop.f32.mrb[0].mxu0
      %v10101 = vadd.f32 %v9908, %v10100
      %v10102 = vpop.f32.mrb[0].mxu0
      %v10103 = vadd.f32 %v9910, %v10102
      %10104 = vmatprep.mubr.bf16.mxu0 %v8955
      %10105 = vmatmul.mubr.bf16.gmra.mrb[0].mxu0 %v7986
      %v10106 = vpop.f32.mrb[0].mxu0
      %v10107 = vadd.f32 %v9914, %v10106
      %v10108 = vpop.f32.mrb[0].mxu0
      %v10109 = vadd.f32 %v9916, %v10108
      %v10110 = vpop.f32.mrb[0].mxu0
      %v10111 = vadd.f32 %v9918, %v10110
      %v10112 = vpop.f32.mrb[0].mxu0
      %v10113 = vadd.f32 %v9920, %v10112
      %10114 = vmatprep.mubr.bf16.mxu0 %v8958
      %10115 = vmatmul.mubr.bf16.gmra.mrb[0].mxu0 %v7990
      %v10116 = vpop.f32.mrb[0].mxu0
      %v10117 = vadd.f32 %v9924, %v10116
      %v10118 = vpop.f32.mrb[0].mxu0
      %v10119 = vadd.f32 %v9926, %v10118
      %v10120 = vpop.f32.mrb[0].mxu0
      %v10121 = vadd.f32 %v9928, %v10120
      %v10122 = vpop.f32.mrb[0].mxu0
      %v10123 = vadd.f32 %v9930, %v10122
      %10124 = vmatprep.mubr.bf16.mxu0 %v8961
      %10125 = vmatmul.mubr.bf16.gmra.mrb[0].mxu0 %v7994
      %v10126 = vpop.f32.mrb[0].mxu0
      %v10127 = vadd.f32 %v9934, %v10126
      %v10128 = vpop.f32.mrb[0].mxu0
      %v10129 = vadd.f32 %v9936, %v10128
      %v10130 = vpop.f32.mrb[0].mxu0
      %v10131 = vadd.f32 %v9938, %v10130
      %v10132 = vpop.f32.mrb[0].mxu0
      %v10133 = vadd.f32 %v9940, %v10132
      %10134 = vmatprep.mubr.bf16.mxu0 %v8964
      %10135 = vmatmul.mubr.bf16.gmra.mrb[0].mxu0 %v7998
      %v10136 = vpop.f32.mrb[0].mxu0
      %v10137 = vadd.f32 %v9944, %v10136
      %v10138 = vpop.f32.mrb[0].mxu0
      %v10139 = vadd.f32 %v9946, %v10138
      %v10140 = vpop.f32.mrb[0].mxu0
      %v10141 = vadd.f32 %v9948, %v10140
      %v10142 = vpop.f32.mrb[0].mxu0
      %v10143 = vadd.f32 %v9950, %v10142
      %10144 = vdwg.mxu0
      %10145 = vmatprep.subr.bf16.mxu0 0
      %10146 = vmatpush1.bf16.msra.mxu0 %v8581
      %10147 = vmatprep.subr.bf16.mxu0 0
      %10148 = vmatpush1.bf16.msra.mxu0 %v8588
      %10149 = vmatprep.subr.bf16.mxu0 0
      %10150 = vmatpush1.bf16.msra.mxu0 %v8595
      %10151 = vmatprep.subr.bf16.mxu0 0
      %10152 = vmatpush1.bf16.msra.mxu0 %v8602
      %10153 = vmatprep.subr.bf16.mxu0 0
      %10154 = vmatpush1.bf16.msra.mxu0 %v8609
      %10155 = vmatprep.subr.bf16.mxu0 0
      %10156 = vmatpush1.bf16.msra.mxu0 %v8616
      %10157 = vmatprep.subr.bf16.mxu0 0
      %10158 = vmatpush1.bf16.msra.mxu0 %v8623
      %10159 = vmatprep.subr.bf16.mxu0 0
      %10160 = vmatpush1.bf16.msra.mxu0 %v8630
      %10161 = vmatprep.subr.bf16.mxu0 0
      %10162 = vmatpush1.bf16.msra.mxu0 %v8637
      %10163 = vmatprep.subr.bf16.mxu0 0
      %10164 = vmatpush1.bf16.msra.mxu0 %v8644
      %10165 = vmatprep.subr.bf16.mxu0 0
      %10166 = vmatpush1.bf16.msra.mxu0 %v8651
      %10167 = vmatprep.subr.bf16.mxu0 0
      %10168 = vmatpush1.bf16.msra.mxu0 %v8658
      %10169 = vmatprep.subr.bf16.mxu0 0
      %10170 = vmatpush1.bf16.msra.mxu0 %v8665
      %10171 = vmatprep.subr.bf16.mxu0 0
      %10172 = vmatpush1.bf16.msra.mxu0 %v8672
      %10173 = vmatprep.subr.bf16.mxu0 0
      %10174 = vmatpush1.bf16.msra.mxu0 %v8679
      %10175 = vmatprep.subr.bf16.mxu0 0
      %10176 = vmatpush1.bf16.msra.mxu0 %v8686
      %10177 = vmatprep.mubr.bf16.mxu0 %v7937
      %10178 = vmatmul.mubr.bf16.gmra.mrb[0].mxu0 %v7936
      %v10179 = vpop.f32.mrb[0].mxu0
      %v10180 = vadd.f32 %v8028, %v10179
      %v10181 = vpop.f32.mrb[0].mxu0
      %v10182 = vpop.f32.mrb[0].mxu0
      %v10183 = vadd.f32 %v8028, %v10182
      %v10184 = vpop.f32.mrb[0].mxu0
      %10185 = vmatprep.mubr.bf16.mxu0 %v7941
      %10186 = vmatmul.mubr.bf16.gmra.mrb[0].mxu0 %v7940
      %v10187 = vpop.f32.mrb[0].mxu0
      %v10188 = vadd.f32 %v8028, %v10187
      %v10189 = vpop.f32.mrb[0].mxu0
      %v10190 = vpop.f32.mrb[0].mxu0
      %v10191 = vadd.f32 %v8028, %v10190
      %v10192 = vpop.f32.mrb[0].mxu0
      %10193 = vmatprep.mubr.bf16.mxu0 %v7945
      %10194 = vmatmul.mubr.bf16.gmra.mrb[0].mxu0 %v7944
      %v10195 = vpop.f32.mrb[0].mxu0
      %v10196 = vadd.f32 %v8028, %v10195
      %v10197 = vpop.f32.mrb[0].mxu0
      %v10198 = vpop.f32.mrb[0].mxu0
      %v10199 = vadd.f32 %v8028, %v10198
      %v10200 = vpop.f32.mrb[0].mxu0
      %10201 = vmatprep.mubr.bf16.mxu0 %v7949
      %10202 = vmatmul.mubr.bf16.gmra.mrb[0].mxu0 %v7948
      %v10203 = vpop.f32.mrb[0].mxu0
      %v10204 = vadd.f32 %v8028, %v10203
      %v10205 = vpop.f32.mrb[0].mxu0
      %v10206 = vpop.f32.mrb[0].mxu0
      %v10207 = vadd.f32 %v8028, %v10206
      %v10208 = vpop.f32.mrb[0].mxu0
      %10209 = vmatprep.mubr.bf16.mxu0 %v7953
      %10210 = vmatmul.mubr.bf16.gmra.mrb[0].mxu0 %v7952
      %v10211 = vpop.f32.mrb[0].mxu0
      %v10212 = vadd.f32 %v8028, %v10211
      %v10213 = vpop.f32.mrb[0].mxu0
      %v10214 = vpop.f32.mrb[0].mxu0
      %v10215 = vadd.f32 %v8028, %v10214
      %v10216 = vpop.f32.mrb[0].mxu0
      %10217 = vmatprep.mubr.bf16.mxu0 %v7957
      %10218 = vmatmul.mubr.bf16.gmra.mrb[0].mxu0 %v7956
      %v10219 = vpop.f32.mrb[0].mxu0
      %v10220 = vadd.f32 %v8028, %v10219
      %v10221 = vpop.f32.mrb[0].mxu0
      %v10222 = vpop.f32.mrb[0].mxu0
      %v10223 = vadd.f32 %v8028, %v10222
      %v10224 = vpop.f32.mrb[0].mxu0
      %10225 = vmatprep.mubr.bf16.mxu0 %v7961
      %10226 = vmatmul.mubr.bf16.gmra.mrb[0].mxu0 %v7960
      %v10227 = vpop.f32.mrb[0].mxu0
      %v10228 = vadd.f32 %v8028, %v10227
      %v10229 = vpop.f32.mrb[0].mxu0
      %v10230 = vpop.f32.mrb[0].mxu0
      %v10231 = vadd.f32 %v8028, %v10230
      %v10232 = vpop.f32.mrb[0].mxu0
      %10233 = vmatprep.mubr.bf16.mxu0 %v7965
      %10234 = vmatmul.mubr.bf16.gmra.mrb[0].mxu0 %v7964
      %v10235 = vpop.f32.mrb[0].mxu0
      %v10236 = vadd.f32 %v8028, %v10235
      %v10237 = vpop.f32.mrb[0].mxu0
      %v10238 = vpop.f32.mrb[0].mxu0
      %v10239 = vadd.f32 %v8028, %v10238
      %v10240 = vpop.f32.mrb[0].mxu0
      %10241 = vmatprep.mubr.bf16.mxu0 %v7969
      %10242 = vmatmul.mubr.bf16.gmra.mrb[0].mxu0 %v7968
      %v10243 = vpop.f32.mrb[0].mxu0
      %v10244 = vadd.f32 %v8028, %v10243
      %v10245 = vpop.f32.mrb[0].mxu0
      %v10246 = vpop.f32.mrb[0].mxu0
      %v10247 = vadd.f32 %v8028, %v10246
      %v10248 = vpop.f32.mrb[0].mxu0
      %10249 = vmatprep.mubr.bf16.mxu0 %v7973
      %10250 = vmatmul.mubr.bf16.gmra.mrb[0].mxu0 %v7972
      %v10251 = vpop.f32.mrb[0].mxu0
      %v10252 = vadd.f32 %v8028, %v10251
      %v10253 = vpop.f32.mrb[0].mxu0
      %v10254 = vpop.f32.mrb[0].mxu0
      %v10255 = vadd.f32 %v8028, %v10254
      %v10256 = vpop.f32.mrb[0].mxu0
      %10257 = vmatprep.mubr.bf16.mxu0 %v7977
      %10258 = vmatmul.mubr.bf16.gmra.mrb[0].mxu0 %v7976
      %v10259 = vpop.f32.mrb[0].mxu0
      %v10260 = vadd.f32 %v8028, %v10259
      %v10261 = vpop.f32.mrb[0].mxu0
      %v10262 = vpop.f32.mrb[0].mxu0
      %v10263 = vadd.f32 %v8028, %v10262
      %v10264 = vpop.f32.mrb[0].mxu0
      %10265 = vmatprep.mubr.bf16.mxu0 %v7981
      %10266 = vmatmul.mubr.bf16.gmra.mrb[0].mxu0 %v7980
      %v10267 = vpop.f32.mrb[0].mxu0
      %v10268 = vadd.f32 %v8028, %v10267
      %v10269 = vpop.f32.mrb[0].mxu0
      %v10270 = vpop.f32.mrb[0].mxu0
      %v10271 = vadd.f32 %v8028, %v10270
      %v10272 = vpop.f32.mrb[0].mxu0
      %10273 = vmatprep.mubr.bf16.mxu0 %v7985
      %10274 = vmatmul.mubr.bf16.gmra.mrb[0].mxu0 %v7984
      %v10275 = vpop.f32.mrb[0].mxu0
      %v10276 = vadd.f32 %v8028, %v10275
      %v10277 = vpop.f32.mrb[0].mxu0
      %v10278 = vpop.f32.mrb[0].mxu0
      %v10279 = vadd.f32 %v8028, %v10278
      %v10280 = vpop.f32.mrb[0].mxu0
      %10281 = vmatprep.mubr.bf16.mxu0 %v7989
      %10282 = vmatmul.mubr.bf16.gmra.mrb[0].mxu0 %v7988
      %v10283 = vpop.f32.mrb[0].mxu0
      %v10284 = vadd.f32 %v8028, %v10283
      %v10285 = vpop.f32.mrb[0].mxu0
      %v10286 = vpop.f32.mrb[0].mxu0
      %v10287 = vadd.f32 %v8028, %v10286
      %v10288 = vpop.f32.mrb[0].mxu0
      %10289 = vmatprep.mubr.bf16.mxu0 %v7993
      %10290 = vmatmul.mubr.bf16.gmra.mrb[0].mxu0 %v7992
      %v10291 = vpop.f32.mrb[0].mxu0
      %v10292 = vadd.f32 %v8028, %v10291
      %v10293 = vpop.f32.mrb[0].mxu0
      %v10294 = vpop.f32.mrb[0].mxu0
      %v10295 = vadd.f32 %v8028, %v10294
      %v10296 = vpop.f32.mrb[0].mxu0
      %10297 = vmatprep.mubr.bf16.mxu0 %v7997
      %10298 = vmatmul.mubr.bf16.gmra.mrb[0].mxu0 %v7996
      %v10299 = vpop.f32.mrb[0].mxu0
      %v10300 = vadd.f32 %v8028, %v10299
      %v10301 = vpop.f32.mrb[0].mxu0
      %v10302 = vpop.f32.mrb[0].mxu0
      %v10303 = vadd.f32 %v8028, %v10302
      %v10304 = vpop.f32.mrb[0].mxu0
      %10305 = vdwg.mxu0
      %10306 = vmatprep.subr.bf16.mxu0 0
      %10307 = vmatpush1.bf16.msra.mxu0 %v8693
      %10308 = vmatprep.subr.bf16.mxu0 0
      %10309 = vmatpush1.bf16.msra.mxu0 %v8700
      %10310 = vmatprep.subr.bf16.mxu0 0
      %10311 = vmatpush1.bf16.msra.mxu0 %v8707
      %10312 = vmatprep.subr.bf16.mxu0 0
      %10313 = vmatpush1.bf16.msra.mxu0 %v8714
      %10314 = vmatprep.subr.bf16.mxu0 0
      %10315 = vmatpush1.bf16.msra.mxu0 %v8721
      %10316 = vmatprep.subr.bf16.mxu0 0
      %10317 = vmatpush1.bf16.msra.mxu0 %v8728
      %10318 = vmatprep.subr.bf16.mxu0 0
      %10319 = vmatpush1.bf16.msra.mxu0 %v8735
      %10320 = vmatprep.subr.bf16.mxu0 0
      %10321 = vmatpush1.bf16.msra.mxu0 %v8742
      %10322 = vmatprep.subr.bf16.mxu0 0
      %10323 = vmatpush1.bf16.msra.mxu0 %v8985
      %10324 = vmatprep.subr.bf16.mxu0 0
      %10325 = vmatpush1.bf16.msra.mxu0 0
      %10326 = vmatprep.subr.bf16.mxu0 0
      %10327 = vmatpush1.bf16.msra.mxu0 0
      %10328 = vmatprep.subr.bf16.mxu0 0
      %10329 = vmatpush1.bf16.msra.mxu0 0
      %10330 = vmatprep.subr.bf16.mxu0 0
      %10331 = vmatpush1.bf16.msra.mxu0 0
      %10332 = vmatprep.subr.bf16.mxu0 0
      %10333 = vmatpush1.bf16.msra.mxu0 0
      %10334 = vmatprep.subr.bf16.mxu0 0
      %10335 = vmatpush1.bf16.msra.mxu0 0
      %10336 = vmatprep.subr.bf16.mxu0 0
      %10337 = vmatpush1.bf16.msra.mxu0 0
      %10338 = vmatprep.mubr.bf16.mxu0 %v8919
      %10339 = vmatmul.mubr.bf16.gmra.mrb[0].mxu0 %v7938
      %v10340 = vpop.f32.mrb[0].mxu0
      %v10341 = vadd.f32 %v10180, %v10340
      %v10342 = vpop.f32.mrb[0].mxu0
      %v10343 = vpop.f32.mrb[0].mxu0
      %v10344 = vadd.f32 %v10183, %v10343
      %v10345 = vpop.f32.mrb[0].mxu0
      %10346 = vmatprep.mubr.bf16.mxu0 %v8922
      %10347 = vmatmul.mubr.bf16.gmra.mrb[0].mxu0 %v7942
      %v10348 = vpop.f32.mrb[0].mxu0
      %v10349 = vadd.f32 %v10188, %v10348
      %v10350 = vpop.f32.mrb[0].mxu0
      %v10351 = vpop.f32.mrb[0].mxu0
      %v10352 = vadd.f32 %v10191, %v10351
      %v10353 = vpop.f32.mrb[0].mxu0
      %10354 = vmatprep.mubr.bf16.mxu0 %v8925
      %10355 = vmatmul.mubr.bf16.gmra.mrb[0].mxu0 %v7946
      %v10356 = vpop.f32.mrb[0].mxu0
      %v10357 = vadd.f32 %v10196, %v10356
      %v10358 = vpop.f32.mrb[0].mxu0
      %v10359 = vpop.f32.mrb[0].mxu0
      %v10360 = vadd.f32 %v10199, %v10359
      %v10361 = vpop.f32.mrb[0].mxu0
      %10362 = vmatprep.mubr.bf16.mxu0 %v8928
      %10363 = vmatmul.mubr.bf16.gmra.mrb[0].mxu0 %v7950
      %v10364 = vpop.f32.mrb[0].mxu0
      %v10365 = vadd.f32 %v10204, %v10364
      %v10366 = vpop.f32.mrb[0].mxu0
      %v10367 = vpop.f32.mrb[0].mxu0
      %v10368 = vadd.f32 %v10207, %v10367
      %v10369 = vpop.f32.mrb[0].mxu0
      %10370 = vmatprep.mubr.bf16.mxu0 %v8931
      %10371 = vmatmul.mubr.bf16.gmra.mrb[0].mxu0 %v7954
      %v10372 = vpop.f32.mrb[0].mxu0
      %v10373 = vadd.f32 %v10212, %v10372
      %v10374 = vpop.f32.mrb[0].mxu0
      %v10375 = vpop.f32.mrb[0].mxu0
      %v10376 = vadd.f32 %v10215, %v10375
      %v10377 = vpop.f32.mrb[0].mxu0
      %10378 = vmatprep.mubr.bf16.mxu0 %v8934
      %10379 = vmatmul.mubr.bf16.gmra.mrb[0].mxu0 %v7958
      %v10380 = vpop.f32.mrb[0].mxu0
      %v10381 = vadd.f32 %v10220, %v10380
      %v10382 = vpop.f32.mrb[0].mxu0
      %v10383 = vpop.f32.mrb[0].mxu0
      %v10384 = vadd.f32 %v10223, %v10383
      %v10385 = vpop.f32.mrb[0].mxu0
      %10386 = vmatprep.mubr.bf16.mxu0 %v8937
      %10387 = vmatmul.mubr.bf16.gmra.mrb[0].mxu0 %v7962
      %v10388 = vpop.f32.mrb[0].mxu0
      %v10389 = vadd.f32 %v10228, %v10388
      %v10390 = vpop.f32.mrb[0].mxu0
      %v10391 = vpop.f32.mrb[0].mxu0
      %v10392 = vadd.f32 %v10231, %v10391
      %v10393 = vpop.f32.mrb[0].mxu0
      %10394 = vmatprep.mubr.bf16.mxu0 %v8940
      %10395 = vmatmul.mubr.bf16.gmra.mrb[0].mxu0 %v7966
      %v10396 = vpop.f32.mrb[0].mxu0
      %v10397 = vadd.f32 %v10236, %v10396
      %v10398 = vpop.f32.mrb[0].mxu0
      %v10399 = vpop.f32.mrb[0].mxu0
      %v10400 = vadd.f32 %v10239, %v10399
      %v10401 = vpop.f32.mrb[0].mxu0
      %10402 = vmatprep.mubr.bf16.mxu0 %v8943
      %10403 = vmatmul.mubr.bf16.gmra.mrb[0].mxu0 %v7970
      %v10404 = vpop.f32.mrb[0].mxu0
      %v10405 = vadd.f32 %v10244, %v10404
      %v10406 = vpop.f32.mrb[0].mxu0
      %v10407 = vpop.f32.mrb[0].mxu0
      %v10408 = vadd.f32 %v10247, %v10407
      %v10409 = vpop.f32.mrb[0].mxu0
      %10410 = vmatprep.mubr.bf16.mxu0 %v8946
      %10411 = vmatmul.mubr.bf16.gmra.mrb[0].mxu0 %v7974
      %v10412 = vpop.f32.mrb[0].mxu0
      %v10413 = vadd.f32 %v10252, %v10412
      %v10414 = vpop.f32.mrb[0].mxu0
      %v10415 = vpop.f32.mrb[0].mxu0
      %v10416 = vadd.f32 %v10255, %v10415
      %v10417 = vpop.f32.mrb[0].mxu0
      %10418 = vmatprep.mubr.bf16.mxu0 %v8949
      %10419 = vmatmul.mubr.bf16.gmra.mrb[0].mxu0 %v7978
      %v10420 = vpop.f32.mrb[0].mxu0
      %v10421 = vadd.f32 %v10260, %v10420
      %v10422 = vpop.f32.mrb[0].mxu0
      %v10423 = vpop.f32.mrb[0].mxu0
      %v10424 = vadd.f32 %v10263, %v10423
      %v10425 = vpop.f32.mrb[0].mxu0
      %10426 = vmatprep.mubr.bf16.mxu0 %v8952
      %10427 = vmatmul.mubr.bf16.gmra.mrb[0].mxu0 %v7982
      %v10428 = vpop.f32.mrb[0].mxu0
      %v10429 = vadd.f32 %v10268, %v10428
      %v10430 = vpop.f32.mrb[0].mxu0
      %v10431 = vpop.f32.mrb[0].mxu0
      %v10432 = vadd.f32 %v10271, %v10431
      %v10433 = vpop.f32.mrb[0].mxu0
      %10434 = vmatprep.mubr.bf16.mxu0 %v8955
      %10435 = vmatmul.mubr.bf16.gmra.mrb[0].mxu0 %v7986
      %v10436 = vpop.f32.mrb[0].mxu0
      %v10437 = vadd.f32 %v10276, %v10436
      %v10438 = vpop.f32.mrb[0].mxu0
      %v10439 = vpop.f32.mrb[0].mxu0
      %v10440 = vadd.f32 %v10279, %v10439
      %v10441 = vpop.f32.mrb[0].mxu0
      %10442 = vmatprep.mubr.bf16.mxu0 %v8958
      %10443 = vmatmul.mubr.bf16.gmra.mrb[0].mxu0 %v7990
      %v10444 = vpop.f32.mrb[0].mxu0
      %v10445 = vadd.f32 %v10284, %v10444
      %v10446 = vpop.f32.mrb[0].mxu0
      %v10447 = vpop.f32.mrb[0].mxu0
      %v10448 = vadd.f32 %v10287, %v10447
      %v10449 = vpop.f32.mrb[0].mxu0
      %10450 = vmatprep.mubr.bf16.mxu0 %v8961
      %10451 = vmatmul.mubr.bf16.gmra.mrb[0].mxu0 %v7994
      %v10452 = vpop.f32.mrb[0].mxu0
      %v10453 = vadd.f32 %v10292, %v10452
      %v10454 = vpop.f32.mrb[0].mxu0
      %v10455 = vpop.f32.mrb[0].mxu0
      %v10456 = vadd.f32 %v10295, %v10455
      %v10457 = vpop.f32.mrb[0].mxu0
      %10458 = vmatprep.mubr.bf16.mxu0 %v8964
      %10459 = vmatmul.mubr.bf16.gmra.mrb[0].mxu0 %v7998
      %v10460 = vpop.f32.mrb[0].mxu0
      %v10461 = vadd.f32 %v10300, %v10460
      %v10462 = vpop.f32.mrb[0].mxu0
      %v10463 = vpop.f32.mrb[0].mxu0
      %v10464 = vadd.f32 %v10303, %v10463
      %v10465 = vpop.f32.mrb[0].mxu0
      %10466 = vdwg.mxu0
      %v10467 = vtanh.pop %v9215
      %v10468 = vtanh.pop %v9217
      %v10469 = vtanh.pop %v9601
      %v10470 = vtanh.pop %v9603
      %v10471 = vtanh.pop %v9987
      %v10472 = vtanh.pop %v9989
      %v10473 = vtanh.pop %v10341
      %v10474 = vtanh.pop %v9219
      %v10475 = vtanh.pop %v9221
      %v10476 = vtanh.pop %v9605
      %v10477 = vtanh.pop %v9607
      %v10478 = vtanh.pop %v9991
      %v10479 = vtanh.pop %v9993
      %v10480 = vtanh.pop %v10344
      %v10481 = vtanh.pop %v9225
      %v10482 = vtanh.pop %v9227
      %v10483 = vtanh.pop %v9611
      %v10484 = vtanh.pop %v9613
      %v10485 = vtanh.pop %v9997
      %v10486 = vtanh.pop %v9999
      %v10487 = vtanh.pop %v10349
      %v10488 = vtanh.pop %v9229
      %v10489 = vtanh.pop %v9231
      %v10490 = vtanh.pop %v9615
      %v10491 = vtanh.pop %v9617
      %v10492 = vtanh.pop %v10001
      %v10493 = vtanh.pop %v10003
      %v10494 = vtanh.pop %v10352
      %v10495 = vtanh.pop %v9235
      %v10496 = vtanh.pop %v9237
      %v10497 = vtanh.pop %v9621
      %v10498 = vtanh.pop %v9623
      %v10499 = vtanh.pop %v10007
      %v10500 = vtanh.pop %v10009
      %v10501 = vtanh.pop %v10357
      %v10502 = vtanh.pop %v9239
      %v10503 = vtanh.pop %v9241
      %v10504 = vtanh.pop %v9625
      %v10505 = vtanh.pop %v9627
      %v10506 = vtanh.pop %v10011
      %v10507 = vtanh.pop %v10013
      %v10508 = vtanh.pop %v10360
      %v10509 = vtanh.pop %v9245
      %v10510 = vtanh.pop %v9247
      %v10511 = vtanh.pop %v9631
      %v10512 = vtanh.pop %v9633
      %v10513 = vtanh.pop %v10017
      %v10514 = vtanh.pop %v10019
      %v10515 = vtanh.pop %v10365
      %v10516 = vtanh.pop %v9249
      %v10517 = vtanh.pop %v9251
      %v10518 = vtanh.pop %v9635
      %v10519 = vtanh.pop %v9637
      %v10520 = vtanh.pop %v10021
      %v10521 = vtanh.pop %v10023
      %v10522 = vtanh.pop %v10368
      %v10523 = vtanh.pop %v9255
      %v10524 = vtanh.pop %v9257
      %v10525 = vtanh.pop %v9641
      %v10526 = vtanh.pop %v9643
      %v10527 = vtanh.pop %v10027
      %v10528 = vtanh.pop %v10029
      %v10529 = vtanh.pop %v10373
      %v10530 = vtanh.pop %v9259
      %v10531 = vtanh.pop %v9261
      %v10532 = vtanh.pop %v9645
      %v10533 = vtanh.pop %v9647
      %v10534 = vtanh.pop %v10031
      %v10535 = vtanh.pop %v10033
      %v10536 = vtanh.pop %v10376
      %v10537 = vtanh.pop %v9265
      %v10538 = vtanh.pop %v9267
      %v10539 = vtanh.pop %v9651
      %v10540 = vtanh.pop %v9653
      %v10541 = vtanh.pop %v10037
      %v10542 = vtanh.pop %v10039
      %v10543 = vtanh.pop %v10381
      %v10544 = vtanh.pop %v9269
      %v10545 = vtanh.pop %v9271
      %v10546 = vtanh.pop %v9655
      %v10547 = vtanh.pop %v9657
      %v10548 = vtanh.pop %v10041
      %v10549 = vtanh.pop %v10043
      %v10550 = vtanh.pop %v10384
      %v10551 = vtanh.pop %v9275
      %v10552 = vtanh.pop %v9277
      %v10553 = vtanh.pop %v9661
      %v10554 = vtanh.pop %v9663
      %v10555 = vtanh.pop %v10047
      %v10556 = vtanh.pop %v10049
      %v10557 = vtanh.pop %v10389
      %v10558 = vtanh.pop %v9279
      %v10559 = vtanh.pop %v9281
      %v10560 = vtanh.pop %v9665
      %v10561 = vtanh.pop %v9667
      %v10562 = vtanh.pop %v10051
      %v10563 = vtanh.pop %v10053
      %v10564 = vtanh.pop %v10392
      %v10565 = vtanh.pop %v9285
      %v10566 = vtanh.pop %v9287
      %v10567 = vtanh.pop %v9671
      %v10568 = vtanh.pop %v9673
      %v10569 = vtanh.pop %v10057
      %v10570 = vtanh.pop %v10059
      %v10571 = vtanh.pop %v10397
      %v10572 = vtanh.pop %v9289
      %v10573 = vtanh.pop %v9291
      %v10574 = vtanh.pop %v9675
      %v10575 = vtanh.pop %v9677
      %v10576 = vtanh.pop %v10061
      %v10577 = vtanh.pop %v10063
      %v10578 = vtanh.pop %v10400
      %v10579 = vtanh.pop %v9295
      %v10580 = vtanh.pop %v9297
      %v10581 = vtanh.pop %v9681
      %v10582 = vtanh.pop %v9683
      %v10583 = vtanh.pop %v10067
      %v10584 = vtanh.pop %v10069
      %v10585 = vtanh.pop %v10405
      %v10586 = vtanh.pop %v9299
      %v10587 = vtanh.pop %v9301
      %v10588 = vtanh.pop %v9685
      %v10589 = vtanh.pop %v9687
      %v10590 = vtanh.pop %v10071
      %v10591 = vtanh.pop %v10073
      %v10592 = vtanh.pop %v10408
      %v10593 = vtanh.pop %v9305
      %v10594 = vtanh.pop %v9307
      %v10595 = vtanh.pop %v9691
      %v10596 = vtanh.pop %v9693
      %v10597 = vtanh.pop %v10077
      %v10598 = vtanh.pop %v10079
      %v10599 = vtanh.pop %v10413
      %v10600 = vtanh.pop %v9309
      %v10601 = vtanh.pop %v9311
      %v10602 = vtanh.pop %v9695
      %v10603 = vtanh.pop %v9697
      %v10604 = vtanh.pop %v10081
      %v10605 = vtanh.pop %v10083
      %v10606 = vtanh.pop %v10416
      %v10607 = vtanh.pop %v9315
      %v10608 = vtanh.pop %v9317
      %v10609 = vtanh.pop %v9701
      %v10610 = vtanh.pop %v9703
      %v10611 = vtanh.pop %v10087
      %v10612 = vtanh.pop %v10089
      %v10613 = vtanh.pop %v10421
      %v10614 = vtanh.pop %v9319
      %v10615 = vtanh.pop %v9321
      %v10616 = vtanh.pop %v9705
      %v10617 = vtanh.pop %v9707
      %v10618 = vtanh.pop %v10091
      %v10619 = vtanh.pop %v10093
      %v10620 = vtanh.pop %v10424
      %v10621 = vtanh.pop %v9325
      %v10622 = vtanh.pop %v9327
      %v10623 = vtanh.pop %v9711
      %v10624 = vtanh.pop %v9713
      %v10625 = vtanh.pop %v10097
      %v10626 = vtanh.pop %v10099
      %v10627 = vtanh.pop %v10429
      %v10628 = vtanh.pop %v9329
      %v10629 = vtanh.pop %v9331
      %v10630 = vtanh.pop %v9715
      %v10631 = vtanh.pop %v9717
      %v10632 = vtanh.pop %v10101
      %v10633 = vtanh.pop %v10103
      %v10634 = vtanh.pop %v10432
      %v10635 = vtanh.pop %v9335
      %v10636 = vtanh.pop %v9337
      %v10637 = vtanh.pop %v9721
      %v10638 = vtanh.pop %v9723
      %v10639 = vtanh.pop %v10107
      %v10640 = vtanh.pop %v10109
      %v10641 = vtanh.pop %v10437
      %v10642 = vtanh.pop %v9339
      %v10643 = vtanh.pop %v9341
      %v10644 = vtanh.pop %v9725
      %v10645 = vtanh.pop %v9727
      %v10646 = vtanh.pop %v10111
      %v10647 = vtanh.pop %v10113
      %v10648 = vtanh.pop %v10440
      %v10649 = vtanh.pop %v9345
      %v10650 = vtanh.pop %v9347
      %v10651 = vtanh.pop %v9731
      %v10652 = vtanh.pop %v9733
      %v10653 = vtanh.pop %v10117
      %v10654 = vtanh.pop %v10119
      %v10655 = vtanh.pop %v10445
      %v10656 = vtanh.pop %v9349
      %v10657 = vtanh.pop %v9351
      %v10658 = vtanh.pop %v9735
      %v10659 = vtanh.pop %v9737
      %v10660 = vtanh.pop %v10121
      %v10661 = vtanh.pop %v10123
      %v10662 = vtanh.pop %v10448
      %v10663 = vtanh.pop %v9355
      %v10664 = vtanh.pop %v9357
      %v10665 = vtanh.pop %v9741
      %v10666 = vtanh.pop %v9743
      %v10667 = vtanh.pop %v10127
      %v10668 = vtanh.pop %v10129
      %v10669 = vtanh.pop %v10453
      %v10670 = vtanh.pop %v9359
      %v10671 = vtanh.pop %v9361
      %v10672 = vtanh.pop %v9745
      %v10673 = vtanh.pop %v9747
      %v10674 = vtanh.pop %v10131
      %v10675 = vtanh.pop %v10133
      %v10676 = vtanh.pop %v10456
      %v10677 = vtanh.pop %v9365
      %v10678 = vtanh.pop %v9367
      %v10679 = vtanh.pop %v9751
      %v10680 = vtanh.pop %v9753
      %v10681 = vtanh.pop %v10137
      %v10682 = vtanh.pop %v10139
      %v10683 = vtanh.pop %v10461
      %v10684 = vtanh.pop %v9369
      %v10685 = vtanh.pop %v9371
      %v10686 = vtanh.pop %v9755
      %v10687 = vtanh.pop %v9757
      %v10688 = vtanh.pop %v10141
      %v10689 = vtanh.pop %v10143
      %v10690 = vtanh.pop %v10464
      %10691 = vst [vmem:[%s609] sm:$0xff] %v10467
      %10692 = vst [vmem:[%s609 + $0x8] sm:$0xff] %v10468
      %10693 = vst [vmem:[%s609 + $0x10] sm:$0xff] %v10469
      %10694 = vst [vmem:[%s609 + $0x18] sm:$0xff] %v10470
      %10695 = vst [vmem:[%s609 + $0x20] sm:$0xff] %v10471
      %10696 = vst [vmem:[%s609 + $0x28] sm:$0xff] %v10472
      %10697 = vst.msk [vmem:[%s609 + $0x30] sm:$0xff] %vm2498, %v10473
      %10698 = vst [vmem:[%s609 + $0x38] sm:$0xff] %v10474
      %10699 = vst [vmem:[%s609 + $0x40] sm:$0xff] %v10475
      %10700 = vst [vmem:[%s609 + $0x48] sm:$0xff] %v10476
      %10701 = vst [vmem:[%s609 + $0x50] sm:$0xff] %v10477
      %10702 = vst [vmem:[%s609 + $0x58] sm:$0xff] %v10478
      %10703 = vst [vmem:[%s609 + $0x60] sm:$0xff] %v10479
      %10704 = vst.msk [vmem:[%s609 + $0x68] sm:$0xff] %vm2498, %v10480
      %10705 = vst [vmem:[%s609 + $0x70] sm:$0xff] %v10481
      %10706 = vst [vmem:[%s609 + $0x78] sm:$0xff] %v10482
      %10707 = vst [vmem:[%s609 + $0x80] sm:$0xff] %v10483
      %10708 = vst [vmem:[%s609 + $0x88] sm:$0xff] %v10484
      %10709 = vst [vmem:[%s609 + $0x90] sm:$0xff] %v10485
      %10710 = vst [vmem:[%s609 + $0x98] sm:$0xff] %v10486
      %10711 = vst.msk [vmem:[%s609 + $0xa0] sm:$0xff] %vm2498, %v10487
      %10712 = vst [vmem:[%s609 + $0xa8] sm:$0xff] %v10488
      %10713 = vst [vmem:[%s609 + $0xb0] sm:$0xff] %v10489
      %10714 = vst [vmem:[%s609 + $0xb8] sm:$0xff] %v10490
      %10715 = vst [vmem:[%s609 + $0xc0] sm:$0xff] %v10491
      %10716 = vst [vmem:[%s609 + $0xc8] sm:$0xff] %v10492
      %10717 = vst [vmem:[%s609 + $0xd0] sm:$0xff] %v10493
      %10718 = vst.msk [vmem:[%s609 + $0xd8] sm:$0xff] %vm2498, %v10494
      %10719 = vst [vmem:[%s609 + $0xe0] sm:$0xff] %v10495
      %10720 = vst [vmem:[%s609 + $0xe8] sm:$0xff] %v10496
      %10721 = vst [vmem:[%s609 + $0xf0] sm:$0xff] %v10497
      %10722 = vst [vmem:[%s609 + $0xf8] sm:$0xff] %v10498
      %10723 = vst [vmem:[%s609 + $0x100] sm:$0xff] %v10499
      %10724 = vst [vmem:[%s609 + $0x108] sm:$0xff] %v10500
      %10725 = vst.msk [vmem:[%s609 + $0x110] sm:$0xff] %vm2498, %v10501
      %10726 = vst [vmem:[%s609 + $0x118] sm:$0xff] %v10502
      %10727 = vst [vmem:[%s609 + $0x120] sm:$0xff] %v10503
      %10728 = vst [vmem:[%s609 + $0x128] sm:$0xff] %v10504
      %10729 = vst [vmem:[%s609 + $0x130] sm:$0xff] %v10505
      %10730 = vst [vmem:[%s609 + $0x138] sm:$0xff] %v10506
      %10731 = vst [vmem:[%s609 + $0x140] sm:$0xff] %v10507
      %10732 = vst.msk [vmem:[%s609 + $0x148] sm:$0xff] %vm2498, %v10508
      %10733 = vst [vmem:[%s609 + $0x150] sm:$0xff] %v10509
      %10734 = vst [vmem:[%s609 + $0x158] sm:$0xff] %v10510
      %10735 = vst [vmem:[%s609 + $0x160] sm:$0xff] %v10511
      %10736 = vst [vmem:[%s609 + $0x168] sm:$0xff] %v10512
      %10737 = vst [vmem:[%s609 + $0x170] sm:$0xff] %v10513
      %10738 = vst [vmem:[%s609 + $0x178] sm:$0xff] %v10514
      %10739 = vst.msk [vmem:[%s609 + $0x180] sm:$0xff] %vm2498, %v10515
      %10740 = vst [vmem:[%s609 + $0x188] sm:$0xff] %v10516
      %10741 = vst [vmem:[%s609 + $0x190] sm:$0xff] %v10517
      %10742 = vst [vmem:[%s609 + $0x198] sm:$0xff] %v10518
      %10743 = vst [vmem:[%s609 + $0x1a0] sm:$0xff] %v10519
      %10744 = vst [vmem:[%s609 + $0x1a8] sm:$0xff] %v10520
      %10745 = vst [vmem:[%s609 + $0x1b0] sm:$0xff] %v10521
      %10746 = vst.msk [vmem:[%s609 + $0x1b8] sm:$0xff] %vm2498, %v10522
      %10747 = vst [vmem:[%s609 + $0x1c0] sm:$0xff] %v10523
      %10748 = vst [vmem:[%s609 + $0x1c8] sm:$0xff] %v10524
      %10749 = vst [vmem:[%s609 + $0x1d0] sm:$0xff] %v10525
      %10750 = vst [vmem:[%s609 + $0x1d8] sm:$0xff] %v10526
      %10751 = vst [vmem:[%s609 + $0x1e0] sm:$0xff] %v10527
      %10752 = vst [vmem:[%s609 + $0x1e8] sm:$0xff] %v10528
      %10753 = vst.msk [vmem:[%s609 + $0x1f0] sm:$0xff] %vm2498, %v10529
      %10754 = vst [vmem:[%s609 + $0x1f8] sm:$0xff] %v10530
      %10755 = vst [vmem:[%s609 + $0x200] sm:$0xff] %v10531
      %10756 = vst [vmem:[%s609 + $0x208] sm:$0xff] %v10532
      %10757 = vst [vmem:[%s609 + $0x210] sm:$0xff] %v10533
      %10758 = vst [vmem:[%s609 + $0x218] sm:$0xff] %v10534
      %10759 = vst [vmem:[%s609 + $0x220] sm:$0xff] %v10535
      %10760 = vst.msk [vmem:[%s609 + $0x228] sm:$0xff] %vm2498, %v10536
      %10761 = vst [vmem:[%s609 + $0x230] sm:$0xff] %v10537
      %10762 = vst [vmem:[%s609 + $0x238] sm:$0xff] %v10538
      %10763 = vst [vmem:[%s609 + $0x240] sm:$0xff] %v10539
      %10764 = vst [vmem:[%s609 + $0x248] sm:$0xff] %v10540
      %10765 = vst [vmem:[%s609 + $0x250] sm:$0xff] %v10541
      %10766 = vst [vmem:[%s609 + $0x258] sm:$0xff] %v10542
      %10767 = vst.msk [vmem:[%s609 + $0x260] sm:$0xff] %vm2498, %v10543
      %10768 = vst [vmem:[%s609 + $0x268] sm:$0xff] %v10544
      %10769 = vst [vmem:[%s609 + $0x270] sm:$0xff] %v10545
      %10770 = vst [vmem:[%s609 + $0x278] sm:$0xff] %v10546
      %10771 = vst [vmem:[%s609 + $0x280] sm:$0xff] %v10547
      %10772 = vst [vmem:[%s609 + $0x288] sm:$0xff] %v10548
      %10773 = vst [vmem:[%s609 + $0x290] sm:$0xff] %v10549
      %10774 = vst.msk [vmem:[%s609 + $0x298] sm:$0xff] %vm2498, %v10550
      %10775 = vst [vmem:[%s609 + $0x2a0] sm:$0xff] %v10551
      %10776 = vst [vmem:[%s609 + $0x2a8] sm:$0xff] %v10552
      %10777 = vst [vmem:[%s609 + $0x2b0] sm:$0xff] %v10553
      %10778 = vst [vmem:[%s609 + $0x2b8] sm:$0xff] %v10554
      %10779 = vst [vmem:[%s609 + $0x2c0] sm:$0xff] %v10555
      %10780 = vst [vmem:[%s609 + $0x2c8] sm:$0xff] %v10556
      %10781 = vst.msk [vmem:[%s609 + $0x2d0] sm:$0xff] %vm2498, %v10557
      %10782 = vst [vmem:[%s609 + $0x2d8] sm:$0xff] %v10558
      %10783 = vst [vmem:[%s609 + $0x2e0] sm:$0xff] %v10559
      %10784 = vst [vmem:[%s609 + $0x2e8] sm:$0xff] %v10560
      %10785 = vst [vmem:[%s609 + $0x2f0] sm:$0xff] %v10561
      %10786 = vst [vmem:[%s609 + $0x2f8] sm:$0xff] %v10562
      %10787 = vst [vmem:[%s609 + $0x300] sm:$0xff] %v10563
      %10788 = vst.msk [vmem:[%s609 + $0x308] sm:$0xff] %vm2498, %v10564
      %10789 = vst [vmem:[%s609 + $0x310] sm:$0xff] %v10565
      %10790 = vst [vmem:[%s609 + $0x318] sm:$0xff] %v10566
      %10791 = vst [vmem:[%s609 + $0x320] sm:$0xff] %v10567
      %10792 = vst [vmem:[%s609 + $0x328] sm:$0xff] %v10568
      %10793 = vst [vmem:[%s609 + $0x330] sm:$0xff] %v10569
      %10794 = vst [vmem:[%s609 + $0x338] sm:$0xff] %v10570
      %10795 = vst.msk [vmem:[%s609 + $0x340] sm:$0xff] %vm2498, %v10571
      %10796 = vst [vmem:[%s609 + $0x348] sm:$0xff] %v10572
      %10797 = vst [vmem:[%s609 + $0x350] sm:$0xff] %v10573
      %10798 = vst [vmem:[%s609 + $0x358] sm:$0xff] %v10574
      %10799 = vst [vmem:[%s609 + $0x360] sm:$0xff] %v10575
      %10800 = vst [vmem:[%s609 + $0x368] sm:$0xff] %v10576
      %10801 = vst [vmem:[%s609 + $0x370] sm:$0xff] %v10577
      %10802 = vst.msk [vmem:[%s609 + $0x378] sm:$0xff] %vm2498, %v10578
      %10803 = vst [vmem:[%s609 + $0x380] sm:$0xff] %v10579
      %10804 = vst [vmem:[%s609 + $0x388] sm:$0xff] %v10580
      %10805 = vst [vmem:[%s609 + $0x390] sm:$0xff] %v10581
      %10806 = vst [vmem:[%s609 + $0x398] sm:$0xff] %v10582
      %10807 = vst [vmem:[%s609 + $0x3a0] sm:$0xff] %v10583
      %10808 = vst [vmem:[%s609 + $0x3a8] sm:$0xff] %v10584
      %10809 = vst.msk [vmem:[%s609 + $0x3b0] sm:$0xff] %vm2498, %v10585
      %10810 = vst [vmem:[%s609 + $0x3b8] sm:$0xff] %v10586
      %10811 = vst [vmem:[%s609 + $0x3c0] sm:$0xff] %v10587
      %10812 = vst [vmem:[%s609 + $0x3c8] sm:$0xff] %v10588
      %10813 = vst [vmem:[%s609 + $0x3d0] sm:$0xff] %v10589
      %10814 = vst [vmem:[%s609 + $0x3d8] sm:$0xff] %v10590
      %10815 = vst [vmem:[%s609 + $0x3e0] sm:$0xff] %v10591
      %10816 = vst.msk [vmem:[%s609 + $0x3e8] sm:$0xff] %vm2498, %v10592
      %10817 = vst [vmem:[%s609 + $0x3f0] sm:$0xff] %v10593
      %10818 = vst [vmem:[%s609 + $0x3f8] sm:$0xff] %v10594
      %10819 = vst [vmem:[%s609 + $0x400] sm:$0xff] %v10595
      %10820 = vst [vmem:[%s609 + $0x408] sm:$0xff] %v10596
      %10821 = vst [vmem:[%s609 + $0x410] sm:$0xff] %v10597
      %10822 = vst [vmem:[%s609 + $0x418] sm:$0xff] %v10598
      %10823 = vst.msk [vmem:[%s609 + $0x420] sm:$0xff] %vm2498, %v10599
      %10824 = vst [vmem:[%s609 + $0x428] sm:$0xff] %v10600
      %10825 = vst [vmem:[%s609 + $0x430] sm:$0xff] %v10601
      %10826 = vst [vmem:[%s609 + $0x438] sm:$0xff] %v10602
      %10827 = vst [vmem:[%s609 + $0x440] sm:$0xff] %v10603
      %10828 = vst [vmem:[%s609 + $0x448] sm:$0xff] %v10604
      %10829 = vst [vmem:[%s609 + $0x450] sm:$0xff] %v10605
      %10830 = vst.msk [vmem:[%s609 + $0x458] sm:$0xff] %vm2498, %v10606
      %10831 = vst [vmem:[%s609 + $0x460] sm:$0xff] %v10607
      %10832 = vst [vmem:[%s609 + $0x468] sm:$0xff] %v10608
      %10833 = vst [vmem:[%s609 + $0x470] sm:$0xff] %v10609
      %10834 = vst [vmem:[%s609 + $0x478] sm:$0xff] %v10610
      %10835 = vst [vmem:[%s609 + $0x480] sm:$0xff] %v10611
      %10836 = vst [vmem:[%s609 + $0x488] sm:$0xff] %v10612
      %10837 = vst.msk [vmem:[%s609 + $0x490] sm:$0xff] %vm2498, %v10613
      %10838 = vst [vmem:[%s609 + $0x498] sm:$0xff] %v10614
      %10839 = vst [vmem:[%s609 + $0x4a0] sm:$0xff] %v10615
      %10840 = vst [vmem:[%s609 + $0x4a8] sm:$0xff] %v10616
      %10841 = vst [vmem:[%s609 + $0x4b0] sm:$0xff] %v10617
      %10842 = vst [vmem:[%s609 + $0x4b8] sm:$0xff] %v10618
      %10843 = vst [vmem:[%s609 + $0x4c0] sm:$0xff] %v10619
      %10844 = vst.msk [vmem:[%s609 + $0x4c8] sm:$0xff] %vm2498, %v10620
      %10845 = vst [vmem:[%s609 + $0x4d0] sm:$0xff] %v10621
      %10846 = vst [vmem:[%s609 + $0x4d8] sm:$0xff] %v10622
      %10847 = vst [vmem:[%s609 + $0x4e0] sm:$0xff] %v10623
      %10848 = vst [vmem:[%s609 + $0x4e8] sm:$0xff] %v10624
      %10849 = vst [vmem:[%s609 + $0x4f0] sm:$0xff] %v10625
      %10850 = vst [vmem:[%s609 + $0x4f8] sm:$0xff] %v10626
      %10851 = vst.msk [vmem:[%s609 + $0x500] sm:$0xff] %vm2498, %v10627
      %10852 = vst [vmem:[%s609 + $0x508] sm:$0xff] %v10628
      %10853 = vst [vmem:[%s609 + $0x510] sm:$0xff] %v10629
      %10854 = vst [vmem:[%s609 + $0x518] sm:$0xff] %v10630
      %10855 = vst [vmem:[%s609 + $0x520] sm:$0xff] %v10631
      %10856 = vst [vmem:[%s609 + $0x528] sm:$0xff] %v10632
      %10857 = vst [vmem:[%s609 + $0x530] sm:$0xff] %v10633
      %10858 = vst.msk [vmem:[%s609 + $0x538] sm:$0xff] %vm2498, %v10634
      %10859 = vst [vmem:[%s609 + $0x540] sm:$0xff] %v10635
      %10860 = vst [vmem:[%s609 + $0x548] sm:$0xff] %v10636
      %10861 = vst [vmem:[%s609 + $0x550] sm:$0xff] %v10637
      %10862 = vst [vmem:[%s609 + $0x558] sm:$0xff] %v10638
      %10863 = vst [vmem:[%s609 + $0x560] sm:$0xff] %v10639
      %10864 = vst [vmem:[%s609 + $0x568] sm:$0xff] %v10640
      %10865 = vst.msk [vmem:[%s609 + $0x570] sm:$0xff] %vm2498, %v10641
      %10866 = vst [vmem:[%s609 + $0x578] sm:$0xff] %v10642
      %10867 = vst [vmem:[%s609 + $0x580] sm:$0xff] %v10643
      %10868 = vst [vmem:[%s609 + $0x588] sm:$0xff] %v10644
      %10869 = vst [vmem:[%s609 + $0x590] sm:$0xff] %v10645
      %10870 = vst [vmem:[%s609 + $0x598] sm:$0xff] %v10646
      %10871 = vst [vmem:[%s609 + $0x5a0] sm:$0xff] %v10647
      %10872 = vst.msk [vmem:[%s609 + $0x5a8] sm:$0xff] %vm2498, %v10648
      %10873 = vst [vmem:[%s609 + $0x5b0] sm:$0xff] %v10649
      %10874 = vst [vmem:[%s609 + $0x5b8] sm:$0xff] %v10650
      %10875 = vst [vmem:[%s609 + $0x5c0] sm:$0xff] %v10651
      %10876 = vst [vmem:[%s609 + $0x5c8] sm:$0xff] %v10652
      %10877 = vst [vmem:[%s609 + $0x5d0] sm:$0xff] %v10653
      %10878 = vst [vmem:[%s609 + $0x5d8] sm:$0xff] %v10654
      %10879 = vst.msk [vmem:[%s609 + $0x5e0] sm:$0xff] %vm2498, %v10655
      %10880 = vst [vmem:[%s609 + $0x5e8] sm:$0xff] %v10656
      %10881 = vst [vmem:[%s609 + $0x5f0] sm:$0xff] %v10657
      %10882 = vst [vmem:[%s609 + $0x5f8] sm:$0xff] %v10658
      %10883 = vst [vmem:[%s609 + $0x600] sm:$0xff] %v10659
      %10884 = vst [vmem:[%s609 + $0x608] sm:$0xff] %v10660
      %10885 = vst [vmem:[%s609 + $0x610] sm:$0xff] %v10661
      %10886 = vst.msk [vmem:[%s609 + $0x618] sm:$0xff] %vm2498, %v10662
      %10887 = vst [vmem:[%s609 + $0x620] sm:$0xff] %v10663
      %10888 = vst [vmem:[%s609 + $0x628] sm:$0xff] %v10664
      %10889 = vst [vmem:[%s609 + $0x630] sm:$0xff] %v10665
      %10890 = vst [vmem:[%s609 + $0x638] sm:$0xff] %v10666
      %10891 = vst [vmem:[%s609 + $0x640] sm:$0xff] %v10667
      %10892 = vst [vmem:[%s609 + $0x648] sm:$0xff] %v10668
      %10893 = vst.msk [vmem:[%s609 + $0x650] sm:$0xff] %vm2498, %v10669
      %10894 = vst [vmem:[%s609 + $0x658] sm:$0xff] %v10670
      %10895 = vst [vmem:[%s609 + $0x660] sm:$0xff] %v10671
      %10896 = vst [vmem:[%s609 + $0x668] sm:$0xff] %v10672
      %10897 = vst [vmem:[%s609 + $0x670] sm:$0xff] %v10673
      %10898 = vst [vmem:[%s609 + $0x678] sm:$0xff] %v10674
      %10899 = vst [vmem:[%s609 + $0x680] sm:$0xff] %v10675
      %10900 = vst.msk [vmem:[%s609 + $0x688] sm:$0xff] %vm2498, %v10676
      %10901 = vst [vmem:[%s609 + $0x690] sm:$0xff] %v10677
      %10902 = vst [vmem:[%s609 + $0x698] sm:$0xff] %v10678
      %10903 = vst [vmem:[%s609 + $0x6a0] sm:$0xff] %v10679
      %10904 = vst [vmem:[%s609 + $0x6a8] sm:$0xff] %v10680
      %10905 = vst [vmem:[%s609 + $0x6b0] sm:$0xff] %v10681
      %10906 = vst [vmem:[%s609 + $0x6b8] sm:$0xff] %v10682
      %10907 = vst.msk [vmem:[%s609 + $0x6c0] sm:$0xff] %vm2498, %v10683
      %10908 = vst [vmem:[%s609 + $0x6c8] sm:$0xff] %v10684
      %10909 = vst [vmem:[%s609 + $0x6d0] sm:$0xff] %v10685
      %10910 = vst [vmem:[%s609 + $0x6d8] sm:$0xff] %v10686
      %10911 = vst [vmem:[%s609 + $0x6e0] sm:$0xff] %v10687
      %10912 = vst [vmem:[%s609 + $0x6e8] sm:$0xff] %v10688
      %10913 = vst [vmem:[%s609 + $0x6f0] sm:$0xff] %v10689
      %10914 = vst.msk [vmem:[%s609 + $0x6f8] sm:$0xff] %vm2498, %v10690
      %s10915 = smul.u32 32, %s30
      %p10916 = scmp.lt.s32.totalorder %s10915, 63
      %s10917 = scalar_select %p10916, %s10915, 63
      %s10918 = smul.addr %s10917, 7
      %s10919 = smul.addr %s10918, 8
      %s10920 = scalar_lea.vmem %s19, %s10919
      // Predicated region
      $region97: #{autoencoder_forward.1} parent=95 // pred_check
        %p10921 = pneg %p452
      $region98: #{autoencoder_forward.1} parent=95 // pred_check_branch
        %10923 = sbr.rel (%p10921) target = $region100
      $region99: #{autoencoder_forward.1} parent=95 // pred_region
        %s10924 = smul.u32 32, %s30
      $region100: #{autoencoder_forward.1} parent=95 // pred_fallthru
        _
    $region96: #{autoencoder_forward.1} parent=5 // pred_fallthru
      _
    %p10925 = scmp.le.s32.totalorder 2, %s25
    // Predicated region
    $region101: #{autoencoder_forward.1} parent=5 // pred_check
      %p10926 = pneg %p10925
    $region102: #{autoencoder_forward.1} parent=5 // pred_check_branch
      %10928 = sbr.rel (%p10926) target = $region104
    $region103: #{autoencoder_forward.1} parent=5 // pred_region
      %s10929 = ssub.s32 %s25, 2
      // Predicated region
      $region105: #{autoencoder_forward.1} parent=103 // pred_check
        %p10930 = pneg %p458
      $region106: #{autoencoder_forward.1} parent=103 // pred_check_branch
        %10932 = sbr.rel (%p10930) target = $region108
      $region107: #{autoencoder_forward.1} parent=103 // pred_region
        %s10933 = smul.u32 32, %s31
        %p10934 = scmp.lt.s32.totalorder %s10933, 63
        %s10935 = scalar_select %p10934, %s10933, 63
        %s10936 = smul.addr %s10935, 7
        %s10937 = smul.addr %s10936, 8
        %s10938 = scalar_lea.vmem %s19, %s10937
      $region108: #{autoencoder_forward.1} parent=103 // pred_fallthru
        _
    $region104: #{autoencoder_forward.1} parent=5 // pred_fallthru
      _
  $region6: #{autoencoder_forward.1} parent=0 // loop_footer
    %s29 = sadd.s32 1, %s25
  $region7: #{autoencoder_forward.1} parent=0 // loop_footer_branch
    %24 = sbr.rel target = $region3
  $region8: #{autoencoder_forward.1} parent=0 // loop_exit
    _

</llo_original>
